<compile_context>
chip_gen: v5e
topology: v5e:2x2
jax: 0.10.0
libtpu: 0.0.40
codegen_flags: <defaults>
</compile_context>

<pallas_src>
import functools
import math

import jax
import jax.numpy as jnp
from jax.experimental import pallas as pl
from jax.experimental.pallas import tpu as pltpu

BN_EPS = 1e-5
VMEM_LIMIT = 64 * 1024 * 1024  # fits v7x (64 MiB) and raises v5e/v6e scoped default


def _round_up(x, m):
    return ((x + m - 1) // m) * m


# ----------------------------- Pallas kernels ------------------------------

def _matmul_kernel(a_ref, b_ref, o_ref, acc_ref):
    """Tiled matmul with f32 VMEM accumulator over the K grid axis."""
    @pl.when(pl.program_id(2) == 0)
    def _():
        acc_ref[...] = jnp.zeros_like(acc_ref)

    acc_ref[...] += jnp.dot(a_ref[...], b_ref[...],
                            preferred_element_type=jnp.float32)

    @pl.when(pl.program_id(2) == pl.num_programs(2) - 1)
    def _():
        o_ref[...] = acc_ref[...].astype(o_ref.dtype)


def _bn_stats_kernel(x_ref, sum_ref, sq_ref):
    """Per-channel sum and sum-of-squares, accumulated across M tiles."""
    @pl.when(pl.program_id(0) == 0)
    def _():
        sum_ref[...] = jnp.zeros_like(sum_ref)
        sq_ref[...] = jnp.zeros_like(sq_ref)

    x = x_ref[...]
    sum_ref[...] += jnp.sum(x, axis=0, keepdims=True)
    sq_ref[...] += jnp.sum(x * x, axis=0, keepdims=True)


def _bn_apply_kernel(*refs, relu, has_res):
    """y = x*scale + shift (+ residual) (+ ReLU), tiled over M."""
    if has_res:
        x_ref, scale_ref, shift_ref, r_ref, o_ref = refs
    else:
        x_ref, scale_ref, shift_ref, o_ref = refs
        r_ref = None
    y = x_ref[...] * scale_ref[...] + shift_ref[...]
    if has_res:
        y = y + r_ref[...]
    if relu:
        y = jnp.maximum(y, 0.0)
    o_ref[...] = y


# ----------------------------- Pallas wrappers ------------------------------

def pallas_matmul(a, b):
    """[M,K] @ [K,N] -> [M,N] f32. bf16 MXU inputs, f32 accumulation, tiled grid."""
    M, K = a.shape
    K2, N = b.shape
    assert K == K2
    a = a.astype(jnp.bfloat16)
    b = b.astype(jnp.bfloat16)

    # Tile selection: full-extent blocks for small dims (no padding); only pad
    # to the tile edge when a dim is actually tiled.
    if M <= 512:
        tm = min(512, _round_up(M, 16))   # bf16-friendly sublane multiple
    else:
        tm = 512
    Mp = _round_up(M, tm)

    if K <= 2048:
        tk, Kp = K, K                      # full extent, no pad
    else:
        tk = 512
        Kp = _round_up(K, tk)

    if N <= 512:
        tn, Np = N, N                      # full extent, no pad
    else:
        tn = 256
        Np = _round_up(N, tn)

    if (Mp, Kp) != (M, K):
        a = jnp.pad(a, ((0, Mp - M), (0, Kp - K)))
    if (Kp, Np) != (K, N):
        b = jnp.pad(b, ((0, Kp - K), (0, Np - N)))

    grid = (Mp // tm, Np // tn, Kp // tk)
    cost = pl.CostEstimate(
        flops=2 * Mp * Np * Kp,
        transcendentals=0,
        bytes_accessed=2 * Mp * Kp + 2 * Kp * Np + 4 * Mp * Np,
    )

    out = pl.pallas_call(
        _matmul_kernel,
        out_shape=jax.ShapeDtypeStruct((Mp, Np), jnp.float32),
        grid_spec=pltpu.PrefetchScalarGridSpec(
            num_scalar_prefetch=0,
            grid=grid,
            in_specs=[pl.BlockSpec((tm, tk), lambda i, j, k: (i, k)),
                      pl.BlockSpec((tk, tn), lambda i, j, k: (k, j))],
            out_specs=pl.BlockSpec((tm, tn), lambda i, j, k: (i, j)),
            scratch_shapes=[pltpu.VMEM((tm, tn), jnp.float32)]),
        compiler_params=pltpu.CompilerParams(
            dimension_semantics=("parallel", "parallel", "arbitrary"),
            vmem_limit_bytes=VMEM_LIMIT),
        cost_estimate=cost,
    )(a, b)

    if (Mp, Np) != (M, N):
        out = out[:M, :N]
    return out


def pallas_bn_stats(x_flat):
    """[M,C] f32 -> (sum, sum_sq) each [1,C] f32, tiled reduction over M."""
    M, C = x_flat.shape
    tm = min(1024, _round_up(M, 8))
    Mp = _round_up(M, tm)
    if Mp != M:
        # zero rows contribute nothing to sum / sum-of-squares
        x_flat = jnp.pad(x_flat, ((0, Mp - M), (0, 0)))
    s, sq = pl.pallas_call(
        _bn_stats_kernel,
        out_shape=(jax.ShapeDtypeStruct((1, C), jnp.float32),
                   jax.ShapeDtypeStruct((1, C), jnp.float32)),
        grid=(Mp // tm,),
        in_specs=[pl.BlockSpec((tm, C), lambda i: (i, 0))],
        out_specs=(pl.BlockSpec((1, C), lambda i: (0, 0)),
                   pl.BlockSpec((1, C), lambda i: (0, 0))),
        compiler_params=pltpu.CompilerParams(
            dimension_semantics=("arbitrary",),
            vmem_limit_bytes=VMEM_LIMIT),
    )(x_flat)
    return s, sq


def pallas_bn_apply(x_flat, scale, shift, residual, relu):
    """y = x*scale + shift (+res)(+ReLU) over [M,C], tiled & pipelined over M."""
    M, C = x_flat.shape
    tm = min(1024, _round_up(M, 8))
    Mp = _round_up(M, tm)
    pad = Mp - M
    if pad:
        x_flat = jnp.pad(x_flat, ((0, pad), (0, 0)))
    args = [x_flat, scale, shift]
    in_specs = [pl.BlockSpec((tm, C), lambda i: (i, 0)),
                pl.BlockSpec((1, C), lambda i: (0, 0)),
                pl.BlockSpec((1, C), lambda i: (0, 0))]
    has_res = residual is not None
    if has_res:
        if pad:
            residual = jnp.pad(residual, ((0, pad), (0, 0)))
        args.append(residual)
        in_specs.append(pl.BlockSpec((tm, C), lambda i: (i, 0)))
    kernel = functools.partial(_bn_apply_kernel, relu=relu, has_res=has_res)
    out = pl.pallas_call(
        kernel,
        out_shape=jax.ShapeDtypeStruct((Mp, C), jnp.float32),
        grid=(Mp // tm,),
        in_specs=in_specs,
        out_specs=pl.BlockSpec((tm, C), lambda i: (i, 0)),
        compiler_params=pltpu.CompilerParams(
            dimension_semantics=("parallel",),
            vmem_limit_bytes=VMEM_LIMIT),
    )(*args)
    return out[:M] if pad else out


# ------------------------------ NN building blocks --------------------------

def conv2d(x_nhwc, wp, stride=1, padding=0, pad_mode="zero"):
    """Conv2d (no bias). wp = dict(w_mat=[KH*KW*IC, OC] bf16, kh, kw).

    Patch extraction stays as XLA glue (fused under jit); the matmul runs in
    the tiled Pallas kernel with bf16 inputs / f32 accumulation.
    """
    # TODO(synk): eliminate the im2col HBM materialization entirely by doing
    # shifted-window DMAs from an HBM ref inside the matmul kernel.
    kh, kw = wp["kh"], wp["kw"]
    x = x_nhwc.astype(jnp.bfloat16)
    if padding > 0:
        mode = "edge" if pad_mode == "replicate" else "constant"
        x = jnp.pad(x, ((0, 0), (padding, padding), (padding, padding), (0, 0)),
                    mode=mode)
    N, Hp, Wp, C = x.shape
    OH = (Hp - kh) // stride + 1
    OW = (Wp - kw) // stride + 1
    if kh == 1 and kw == 1:
        patches = x[:, ::stride, ::stride, :].reshape(N * OH * OW, C)
    else:
        cols = []
        for dy in range(kh):
            for dx in range(kw):
                cols.append(x[:,
                              dy:dy + (OH - 1) * stride + 1:stride,
                              dx:dx + (OW - 1) * stride + 1:stride, :])
        patches = jnp.concatenate(cols, axis=-1).reshape(N * OH * OW, kh * kw * C)
    out = pallas_matmul(patches, wp["w_mat"])
    return out.reshape(N, OH, OW, wp["w_mat"].shape[1])


def batchnorm(x_nhwc, gamma, beta, residual=None, relu=True):
    """BatchNorm (batch statistics, biased var) + optional residual + ReLU."""
    N, H, W, C = x_nhwc.shape
    M = N * H * W
    x_flat = x_nhwc.reshape(M, C)
    s, sq = pallas_bn_stats(x_flat)
    mean = s / M
    var = sq / M - mean * mean
    scale = (gamma.reshape(1, C).astype(jnp.float32)
             * jax.lax.rsqrt(var + BN_EPS))
    shift = beta.reshape(1, C).astype(jnp.float32) - mean * scale
    res_flat = residual.reshape(M, C) if residual is not None else None
    y = pallas_bn_apply(x_flat, scale, shift, res_flat, relu)
    return y.reshape(N, H, W, C)


def maxpool_3x3_s2_reppad(x_nhwc):
    """nn.ReplicationPad2d(1) + nn.MaxPool2d(kernel_size=3, stride=2).

    Per perf review: do the 9-tap max tree directly in the wrapper so XLA fuses
    it elementwise, instead of materializing a [9, M, C] stack through HBM.
    """
    x = jnp.pad(x_nhwc, ((0, 0), (1, 1), (1, 1), (0, 0)), mode="edge")
    N, Hp, Wp, C = x.shape
    OH = (Hp - 3) // 2 + 1
    OW = (Wp - 3) // 2 + 1
    out = None
    for dy in range(3):
        for dx in range(3):
            tap = x[:,
                    dy:dy + (OH - 1) * 2 + 1:2,
                    dx:dx + (OW - 1) * 2 + 1:2, :]
            out = tap if out is None else jnp.maximum(out, tap)
    return out


def basic_block(x, p):
    """torchvision BasicBlock: conv3x3-BN-ReLU, conv3x3-BN, (+downsample), add, ReLU."""
    stride = p["stride"]
    identity = x
    out = conv2d(x, p["conv1"], stride=stride, padding=1)
    out = batchnorm(out, p["bn1_g"], p["bn1_b"], relu=True)
    out = conv2d(out, p["conv2"], stride=1, padding=1)
    if "ds_conv" in p:
        identity = conv2d(x, p["ds_conv"], stride=stride, padding=0)
        identity = batchnorm(identity, p["ds_bn_g"], p["ds_bn_b"], relu=False)
    out = batchnorm(out, p["bn2_g"], p["bn2_b"], residual=identity, relu=True)
    return out


def resnet_forward(x_nchw, params):
    """ResNet.forward(x, mode=0): returns dict d1..d5 (NCHW, like PyTorch)."""
    x = jnp.transpose(x_nchw, (0, 2, 3, 1)).astype(jnp.float32)
    outputs = {}
    # layer0: ReplicationPad2d(1) + Conv3x3 stride2 (no pad) + BN + ReLU
    y = conv2d(x, params["layer0"]["conv"], stride=2, padding=1,
               pad_mode="replicate")
    y = batchnorm(y, params["layer0"]["bn_g"], params["layer0"]["bn_b"], relu=True)
    outputs["d1"] = y
    # maxpool: ReplicationPad2d(1) + MaxPool2d(3, stride=2)
    y = maxpool_3x3_s2_reppad(y)
    outputs["d2"] = y
    for idx, name in zip((3, 4, 5), ("layer1", "layer2", "layer3")):
        for blk in params[name]:
            y = basic_block(y, blk)
        outputs["d{}".format(idx)] = y
    return {k: jnp.transpose(v, (0, 3, 1, 2)) for k, v in outputs.items()}


# ------------------------------ parameter init -------------------------------

def _conv_init(key, oc, ic, kh, kw):
    n = kh * kw * oc
    return jax.random.normal(key, (oc, ic, kh, kw), jnp.float32) * math.sqrt(2.0 / n)


def init_params(key, layers=(1, 1, 1), width=1, in_channel=3):
    base = int(64 * width)
    inplanes = max(int(64 * width), 64)
    params = {}
    key, k0 = jax.random.split(key)
    params["layer0"] = dict(conv_w=_conv_init(k0, inplanes, in_channel, 3, 3),
                            bn_g=jnp.ones((inplanes,), jnp.float32),
                            bn_b=jnp.zeros((inplanes,), jnp.float32))

    def make_layer(key, inplanes, planes, blocks, stride):
        blks = []
        for b in range(blocks):
            s = stride if b == 0 else 1
            key, k1, k2, k3 = jax.random.split(key, 4)
            blk = dict(stride=s,
                       conv1_w=_conv_init(k1, planes, inplanes, 3, 3),
                       bn1_g=jnp.ones((planes,), jnp.float32),
                       bn1_b=jnp.zeros((planes,), jnp.float32),
                       conv2_w=_conv_init(k2, planes, planes, 3, 3),
                       bn2_g=jnp.ones((planes,), jnp.float32),
                       bn2_b=jnp.zeros((planes,), jnp.float32))
            if s != 1 or inplanes != planes:  # block.expansion == 1
                blk["ds_conv_w"] = _conv_init(k3, planes, inplanes, 1, 1)
                blk["ds_bn_g"] = jnp.ones((planes,), jnp.float32)
                blk["ds_bn_b"] = jnp.zeros((planes,), jnp.float32)
            inplanes = planes
            blks.append(blk)
        return key, inplanes, blks

    key, inplanes, params["layer1"] = make_layer(key, inplanes, base, layers[0], 1)
    key, inplanes, params["layer2"] = make_layer(key, inplanes, base * 2, layers[1], 2)
    key, inplanes, params["layer3"] = make_layer(key, inplanes, base * 4, layers[2], 2)
    return params


def _prep_conv(w_oihw):
    """OIHW f32 -> matmul-ready [KH*KW*IC, OC] bf16 (done once at prepare time)."""
    oc, ic, kh, kw = w_oihw.shape
    w_mat = jnp.transpose(w_oihw, (2, 3, 1, 0)).reshape(kh * kw * ic, oc)
    return dict(w_mat=w_mat.astype(jnp.bfloat16), kh=kh, kw=kw)


def prepare_params(raw):
    """Pre-reshape/cast conv weights once so no per-forward layout shuffles."""
    p = {"layer0": dict(conv=_prep_conv(raw["layer0"]["conv_w"]),
                        bn_g=raw["layer0"]["bn_g"],
                        bn_b=raw["layer0"]["bn_b"])}
    for name in ("layer1", "layer2", "layer3"):
        blks = []
        for b in raw[name]:
            nb = dict(stride=b["stride"],
                      conv1=_prep_conv(b["conv1_w"]),
                      bn1_g=b["bn1_g"], bn1_b=b["bn1_b"],
                      conv2=_prep_conv(b["conv2_w"]),
                      bn2_g=b["bn2_g"], bn2_b=b["bn2_b"])
            if "ds_conv_w" in b:
                nb["ds_conv"] = _prep_conv(b["ds_conv_w"])
                nb["ds_bn_g"] = b["ds_bn_g"]
                nb["ds_bn_b"] = b["ds_bn_b"]
            blks.append(nb)
        p[name] = blks
    return p


# ----------------------------------- main ------------------------------------

if __name__ == "__main__":
    key = jax.random.PRNGKey(0)
    pkey, xkey = jax.random.split(key)
    raw_params = init_params(pkey, layers=(1, 1, 1), width=1, in_channel=3)
    params = prepare_params(raw_params)
    x = jax.random.normal(xkey, (2, 3, 16, 16), jnp.float32)  # NCHW like PyTorch

    fwd = jax.jit(lambda inp: resnet_forward(inp, params))
    outs = fwd(x)
    for k in sorted(outs):
        jax.block_until_ready(outs[k])

    expected = {"d1": (2, 64, 8, 8), "d2": (2, 64, 4, 4), "d3": (2, 64, 4, 4),
                "d4": (2, 128, 2, 2), "d5": (2, 256, 1, 1)}
    for k, shp in expected.items():
        assert outs[k].shape == shp, (k, outs[k].shape, shp)

    print("KERNEL_OK")
</pallas_src>

<mosaic_0001>
module attributes {stable_mosaic.version = 11 : i64} {
  func.func @_bn_stats_kernel(%arg0: i32, %arg1: memref<128x64xf32, #tpu.memory_space<vmem>>, %arg2: memref<1x64xf32, #tpu.memory_space<vmem>>, %arg3: memref<1x64xf32, #tpu.memory_space<vmem>>) attributes {dimension_semantics = [#tpu.dimension_semantics<arbitrary>], iteration_bounds = array<i64: 1>, scalar_prefetch = 0 : i64, scratch_operands = 0 : i64, tpu.core_type = #tpu.core_type<tc>, window_params = [{transform_indices = @transform_0, window_bounds = array<i64: 128, 64>}, {pipeline_mode = #tpu.pipeline_mode<synchronous>, transform_indices = @transform_1, window_bounds = array<i64: 1, 64>}, {pipeline_mode = #tpu.pipeline_mode<synchronous>, transform_indices = @transform_2, window_bounds = array<i64: 1, 64>}]} {
    %c0_i32 = arith.constant 0 : i32
    %0 = arith.cmpi eq, %arg0, %c0_i32 : i32
    %1 = arith.extui %0 : i1 to i32
    %c0_i32_0 = arith.constant 0 : i32
    %2 = arith.cmpi ne, %1, %c0_i32_0 : i32
    scf.if %2 {
      %cst_11 = arith.constant 0.000000e+00 : f32
      %15 = vector.broadcast %cst_11 : f32 to vector<1x64xf32>
      %c0_12 = arith.constant 0 : index
      %c0_13 = arith.constant 0 : index
      %16 = vector.load %arg2[%c0_12, %c0_13] : memref<1x64xf32, #tpu.memory_space<vmem>>, vector<1x64xf32>
      tpu.vector_store %arg2[%c0_12, %c0_13], %15 {strides = array<i32>} : memref<1x64xf32, #tpu.memory_space<vmem>>, vector<1x64xf32>,
      %cst_14 = arith.constant 0.000000e+00 : f32
      %17 = vector.broadcast %cst_14 : f32 to vector<1x64xf32>
      %c0_15 = arith.constant 0 : index
      %c0_16 = arith.constant 0 : index
      %18 = vector.load %arg3[%c0_15, %c0_16] : memref<1x64xf32, #tpu.memory_space<vmem>>, vector<1x64xf32>
      tpu.vector_store %arg3[%c0_15, %c0_16], %17 {strides = array<i32>} : memref<1x64xf32, #tpu.memory_space<vmem>>, vector<1x64xf32>,
    } else {
    }
    %c0 = arith.constant 0 : index
    %c0_1 = arith.constant 0 : index
    %3 = vector.load %arg1[%c0, %c0_1] : memref<128x64xf32, #tpu.memory_space<vmem>>, vector<128x64xf32>
    %c0_2 = arith.constant 0 : index
    %c0_3 = arith.constant 0 : index
    %4 = vector.load %arg2[%c0_2, %c0_3] : memref<1x64xf32, #tpu.memory_space<vmem>>, vector<1x64xf32>
    %cst = arith.constant dense<0.000000e+00> : vector<64xf32>
    %5 = vector.multi_reduction <add>, %3, %cst [0] : vector<128x64xf32> to vector<64xf32>
    %6 = vector.shape_cast %5 : vector<64xf32> to vector<1x64xf32>
    %7 = arith.addf %4, %6 : vector<1x64xf32>
    %c0_4 = arith.constant 0 : index
    %c0_5 = arith.constant 0 : index
    %8 = vector.load %arg2[%c0_4, %c0_5] : memref<1x64xf32, #tpu.memory_space<vmem>>, vector<1x64xf32>
    tpu.vector_store %arg2[%c0_4, %c0_5], %7 {strides = array<i32>} : memref<1x64xf32, #tpu.memory_space<vmem>>, vector<1x64xf32>,
    %c0_6 = arith.constant 0 : index
    %c0_7 = arith.constant 0 : index
    %9 = vector.load %arg3[%c0_6, %c0_7] : memref<1x64xf32, #tpu.memory_space<vmem>>, vector<1x64xf32>
    %10 = arith.mulf %3, %3 : vector<128x64xf32>
    %cst_8 = arith.constant dense<0.000000e+00> : vector<64xf32>
    %11 = vector.multi_reduction <add>, %10, %cst_8 [0] : vector<128x64xf32> to vector<64xf32>
    %12 = vector.shape_cast %11 : vector<64xf32> to vector<1x64xf32>
    %13 = arith.addf %9, %12 : vector<1x64xf32>
    %c0_9 = arith.constant 0 : index
    %c0_10 = arith.constant 0 : index
    %14 = vector.load %arg3[%c0_9, %c0_10] : memref<1x64xf32, #tpu.memory_space<vmem>>, vector<1x64xf32>
    tpu.vector_store %arg3[%c0_9, %c0_10], %13 {strides = array<i32>} : memref<1x64xf32, #tpu.memory_space<vmem>>, vector<1x64xf32>,
    return
  }
  func.func @transform_0(%arg0: i32) -> (i32, i32) {
    %c0_i32 = arith.constant 0 : i32
    %c0_i32_0 = arith.constant 0 : i32
    return %arg0, %c0_i32 : i32, i32
  }
  func.func @transform_1(%arg0: i32) -> (i32, i32) {
    %c0_i32 = arith.constant 0 : i32
    %c0_i32_0 = arith.constant 0 : i32
    %c0_i32_1 = arith.constant 0 : i32
    return %c0_i32, %c0_i32_0 : i32, i32
  }
  func.func @transform_2(%arg0: i32) -> (i32, i32) {
    %c0_i32 = arith.constant 0 : i32
    %c0_i32_0 = arith.constant 0 : i32
    %c0_i32_1 = arith.constant 0 : i32
    return %c0_i32, %c0_i32_0 : i32, i32
  }
}

module attributes {stable_mosaic.version = 11 : i64} {
  func.func @_matmul_kernel(%arg0: i32, %arg1: i32, %arg2: i32, %arg3: memref<128x27xbf16, #tpu.memory_space<vmem>>, %arg4: memref<27x64xbf16, #tpu.memory_space<vmem>>, %arg5: memref<128x64xf32, #tpu.memory_space<vmem>>, %arg6: memref<128x64xf32, #tpu.memory_space<vmem>>) attributes {dimension_semantics = [#tpu.dimension_semantics<parallel>, #tpu.dimension_semantics<parallel>, #tpu.dimension_semantics<arbitrary>], iteration_bounds = array<i64: 1, 1, 1>, scalar_prefetch = 0 : i64, scratch_operands = 1 : i64, tpu.core_type = #tpu.core_type<tc>, window_params = [{transform_indices = @transform_0, window_bounds = array<i64: 128, 27>}, {transform_indices = @transform_1, window_bounds = array<i64: 27, 64>}, {transform_indices = @transform_2, window_bounds = array<i64: 128, 64>}]} {
    %c0_i32 = arith.constant 0 : i32
    %0 = arith.cmpi eq, %arg2, %c0_i32 : i32
    %1 = arith.extui %0 : i1 to i32
    %c0_i32_0 = arith.constant 0 : i32
    %2 = arith.cmpi ne, %1, %c0_i32_0 : i32
    scf.if %2 {
      %cst_10 = arith.constant 0.000000e+00 : f32
      %12 = vector.broadcast %cst_10 : f32 to vector<128x64xf32>
      %c0_11 = arith.constant 0 : index
      %c0_12 = arith.constant 0 : index
      %13 = vector.load %arg6[%c0_11, %c0_12] : memref<128x64xf32, #tpu.memory_space<vmem>>, vector<128x64xf32>
      tpu.vector_store %arg6[%c0_11, %c0_12], %12 {strides = array<i32>} : memref<128x64xf32, #tpu.memory_space<vmem>>, vector<128x64xf32>,
    } else {
    }
    %c0 = arith.constant 0 : index
    %c0_1 = arith.constant 0 : index
    %3 = vector.load %arg6[%c0, %c0_1] : memref<128x64xf32, #tpu.memory_space<vmem>>, vector<128x64xf32>
    %c0_2 = arith.constant 0 : index
    %c0_3 = arith.constant 0 : index
    %4 = vector.load %arg3[%c0_2, %c0_3] : memref<128x27xbf16, #tpu.memory_space<vmem>>, vector<128x27xbf16>
    %c0_4 = arith.constant 0 : index
    %c0_5 = arith.constant 0 : index
    %5 = vector.load %arg4[%c0_4, %c0_5] : memref<27x64xbf16, #tpu.memory_space<vmem>>, vector<27x64xbf16>
    %cst = arith.constant dense<0.000000e+00> : vector<128x64xf32>
    %6 = tpu.matmul %4, %5, %cst {dimension_numbers = #tpu.dot_dimension_numbers<[1], [0], [0], [1], [0, 0, 1, 1], [], []>} : vector<128x27xbf16>, vector<27x64xbf16>, vector<128x64xf32> -> vector<128x64xf32>
    %7 = arith.addf %3, %6 : vector<128x64xf32>
    %c0_6 = arith.constant 0 : index
    %c0_7 = arith.constant 0 : index
    %8 = vector.load %arg6[%c0_6, %c0_7] : memref<128x64xf32, #tpu.memory_space<vmem>>, vector<128x64xf32>
    tpu.vector_store %arg6[%c0_6, %c0_7], %7 {strides = array<i32>} : memref<128x64xf32, #tpu.memory_space<vmem>>, vector<128x64xf32>,
    %c0_i32_8 = arith.constant 0 : i32
    %9 = arith.cmpi eq, %arg2, %c0_i32_8 : i32
    %10 = arith.extui %9 : i1 to i32
    %c0_i32_9 = arith.constant 0 : i32
    %11 = arith.cmpi ne, %10, %c0_i32_9 : i32
    scf.if %11 {
      %c0_10 = arith.constant 0 : index
      %c0_11 = arith.constant 0 : index
      %12 = vector.load %arg6[%c0_10, %c0_11] : memref<128x64xf32, #tpu.memory_space<vmem>>, vector<128x64xf32>
      %c0_12 = arith.constant 0 : index
      %c0_13 = arith.constant 0 : index
      %13 = vector.load %arg5[%c0_12, %c0_13] : memref<128x64xf32, #tpu.memory_space<vmem>>, vector<128x64xf32>
      tpu.vector_store %arg5[%c0_12, %c0_13], %12 {strides = array<i32>} : memref<128x64xf32, #tpu.memory_space<vmem>>, vector<128x64xf32>,
    } else {
    }
    return
  }
  func.func @transform_0(%arg0: i32, %arg1: i32, %arg2: i32) -> (i32, i32) {
    %c0_i32 = arith.constant 0 : i32
    return %arg0, %arg2 : i32, i32
  }
  func.func @transform_1(%arg0: i32, %arg1: i32, %arg2: i32) -> (i32, i32) {
    %c0_i32 = arith.constant 0 : i32
    return %arg2, %arg1 : i32, i32
  }
  func.func @transform_2(%arg0: i32, %arg1: i32, %arg2: i32) -> (i32, i32) {
    %c0_i32 = arith.constant 0 : i32
    return %arg0, %arg1 : i32, i32
  }
}

module attributes {stable_mosaic.version = 11 : i64} {
  func.func @_bn_apply_kernel(%arg0: i32, %arg1: memref<128x64xf32, #tpu.memory_space<vmem>>, %arg2: memref<1x64xf32, #tpu.memory_space<vmem>>, %arg3: memref<1x64xf32, #tpu.memory_space<vmem>>, %arg4: memref<128x64xf32, #tpu.memory_space<vmem>>) attributes {dimension_semantics = [#tpu.dimension_semantics<parallel>], iteration_bounds = array<i64: 1>, scalar_prefetch = 0 : i64, scratch_operands = 0 : i64, tpu.core_type = #tpu.core_type<tc>, window_params = [{transform_indices = @transform_0, window_bounds = array<i64: 128, 64>}, {pipeline_mode = #tpu.pipeline_mode<synchronous>, transform_indices = @transform_1, window_bounds = array<i64: 1, 64>}, {pipeline_mode = #tpu.pipeline_mode<synchronous>, transform_indices = @transform_2, window_bounds = array<i64: 1, 64>}, {transform_indices = @transform_3, window_bounds = array<i64: 128, 64>}]} {
    %c0 = arith.constant 0 : index
    %c0_0 = arith.constant 0 : index
    %0 = vector.load %arg1[%c0, %c0_0] : memref<128x64xf32, #tpu.memory_space<vmem>>, vector<128x64xf32>
    %c0_1 = arith.constant 0 : index
    %c0_2 = arith.constant 0 : index
    %1 = vector.load %arg2[%c0_1, %c0_2] : memref<1x64xf32, #tpu.memory_space<vmem>>, vector<1x64xf32>
    %2 = vector.broadcast %1 : vector<1x64xf32> to vector<128x64xf32>
    %3 = arith.mulf %0, %2 : vector<128x64xf32>
    %c0_3 = arith.constant 0 : index
    %c0_4 = arith.constant 0 : index
    %4 = vector.load %arg3[%c0_3, %c0_4] : memref<1x64xf32, #tpu.memory_space<vmem>>, vector<1x64xf32>
    %5 = vector.broadcast %4 : vector<1x64xf32> to vector<128x64xf32>
    %6 = arith.addf %3, %5 : vector<128x64xf32>
    %cst = arith.constant 0.000000e+00 : f32
    %7 = vector.broadcast %cst : f32 to vector<128x64xf32>
    %8 = arith.maximumf %6, %7 : vector<128x64xf32>
    %c0_5 = arith.constant 0 : index
    %c0_6 = arith.constant 0 : index
    %9 = vector.load %arg4[%c0_5, %c0_6] : memref<128x64xf32, #tpu.memory_space<vmem>>, vector<128x64xf32>
    tpu.vector_store %arg4[%c0_5, %c0_6], %8 {strides = array<i32>} : memref<128x64xf32, #tpu.memory_space<vmem>>, vector<128x64xf32>,
    return
  }
  func.func @transform_0(%arg0: i32) -> (i32, i32) {
    %c0_i32 = arith.constant 0 : i32
    %c0_i32_0 = arith.constant 0 : i32
    return %arg0, %c0_i32 : i32, i32
  }
  func.func @transform_1(%arg0: i32) -> (i32, i32) {
    %c0_i32 = arith.constant 0 : i32
    %c0_i32_0 = arith.constant 0 : i32
    %c0_i32_1 = arith.constant 0 : i32
    return %c0_i32, %c0_i32_0 : i32, i32
  }
  func.func @transform_2(%arg0: i32) -> (i32, i32) {
    %c0_i32 = arith.constant 0 : i32
    %c0_i32_0 = arith.constant 0 : i32
    %c0_i32_1 = arith.constant 0 : i32
    return %c0_i32, %c0_i32_0 : i32, i32
  }
  func.func @transform_3(%arg0: i32) -> (i32, i32) {
    %c0_i32 = arith.constant 0 : i32
    %c0_i32_0 = arith.constant 0 : i32
    return %arg0, %c0_i32 : i32, i32
  }
}

module attributes {stable_mosaic.version = 11 : i64} {
  func.func @_bn_stats_kernel(%arg0: i32, %arg1: memref<32x64xf32, #tpu.memory_space<vmem>>, %arg2: memref<1x64xf32, #tpu.memory_space<vmem>>, %arg3: memref<1x64xf32, #tpu.memory_space<vmem>>) attributes {dimension_semantics = [#tpu.dimension_semantics<arbitrary>], iteration_bounds = array<i64: 1>, scalar_prefetch = 0 : i64, scratch_operands = 0 : i64, tpu.core_type = #tpu.core_type<tc>, window_params = [{transform_indices = @transform_0, window_bounds = array<i64: 32, 64>}, {pipeline_mode = #tpu.pipeline_mode<synchronous>, transform_indices = @transform_1, window_bounds = array<i64: 1, 64>}, {pipeline_mode = #tpu.pipeline_mode<synchronous>, transform_indices = @transform_2, window_bounds = array<i64: 1, 64>}]} {
    %c0_i32 = arith.constant 0 : i32
    %0 = arith.cmpi eq, %arg0, %c0_i32 : i32
    %1 = arith.extui %0 : i1 to i32
    %c0_i32_0 = arith.constant 0 : i32
    %2 = arith.cmpi ne, %1, %c0_i32_0 : i32
    scf.if %2 {
      %cst_11 = arith.constant 0.000000e+00 : f32
      %15 = vector.broadcast %cst_11 : f32 to vector<1x64xf32>
      %c0_12 = arith.constant 0 : index
      %c0_13 = arith.constant 0 : index
      %16 = vector.load %arg2[%c0_12, %c0_13] : memref<1x64xf32, #tpu.memory_space<vmem>>, vector<1x64xf32>
      tpu.vector_store %arg2[%c0_12, %c0_13], %15 {strides = array<i32>} : memref<1x64xf32, #tpu.memory_space<vmem>>, vector<1x64xf32>,
      %cst_14 = arith.constant 0.000000e+00 : f32
      %17 = vector.broadcast %cst_14 : f32 to vector<1x64xf32>
      %c0_15 = arith.constant 0 : index
      %c0_16 = arith.constant 0 : index
      %18 = vector.load %arg3[%c0_15, %c0_16] : memref<1x64xf32, #tpu.memory_space<vmem>>, vector<1x64xf32>
      tpu.vector_store %arg3[%c0_15, %c0_16], %17 {strides = array<i32>} : memref<1x64xf32, #tpu.memory_space<vmem>>, vector<1x64xf32>,
    } else {
    }
    %c0 = arith.constant 0 : index
    %c0_1 = arith.constant 0 : index
    %3 = vector.load %arg1[%c0, %c0_1] : memref<32x64xf32, #tpu.memory_space<vmem>>, vector<32x64xf32>
    %c0_2 = arith.constant 0 : index
    %c0_3 = arith.constant 0 : index
    %4 = vector.load %arg2[%c0_2, %c0_3] : memref<1x64xf32, #tpu.memory_space<vmem>>, vector<1x64xf32>
    %cst = arith.constant dense<0.000000e+00> : vector<64xf32>
    %5 = vector.multi_reduction <add>, %3, %cst [0] : vector<32x64xf32> to vector<64xf32>
    %6 = vector.shape_cast %5 : vector<64xf32> to vector<1x64xf32>
    %7 = arith.addf %4, %6 : vector<1x64xf32>
    %c0_4 = arith.constant 0 : index
    %c0_5 = arith.constant 0 : index
    %8 = vector.load %arg2[%c0_4, %c0_5] : memref<1x64xf32, #tpu.memory_space<vmem>>, vector<1x64xf32>
    tpu.vector_store %arg2[%c0_4, %c0_5], %7 {strides = array<i32>} : memref<1x64xf32, #tpu.memory_space<vmem>>, vector<1x64xf32>,
    %c0_6 = arith.constant 0 : index
    %c0_7 = arith.constant 0 : index
    %9 = vector.load %arg3[%c0_6, %c0_7] : memref<1x64xf32, #tpu.memory_space<vmem>>, vector<1x64xf32>
    %10 = arith.mulf %3, %3 : vector<32x64xf32>
    %cst_8 = arith.constant dense<0.000000e+00> : vector<64xf32>
    %11 = vector.multi_reduction <add>, %10, %cst_8 [0] : vector<32x64xf32> to vector<64xf32>
    %12 = vector.shape_cast %11 : vector<64xf32> to vector<1x64xf32>
    %13 = arith.addf %9, %12 : vector<1x64xf32>
    %c0_9 = arith.constant 0 : index
    %c0_10 = arith.constant 0 : index
    %14 = vector.load %arg3[%c0_9, %c0_10] : memref<1x64xf32, #tpu.memory_space<vmem>>, vector<1x64xf32>
    tpu.vector_store %arg3[%c0_9, %c0_10], %13 {strides = array<i32>} : memref<1x64xf32, #tpu.memory_space<vmem>>, vector<1x64xf32>,
    return
  }
  func.func @transform_0(%arg0: i32) -> (i32, i32) {
    %c0_i32 = arith.constant 0 : i32
    %c0_i32_0 = arith.constant 0 : i32
    return %arg0, %c0_i32 : i32, i32
  }
  func.func @transform_1(%arg0: i32) -> (i32, i32) {
    %c0_i32 = arith.constant 0 : i32
    %c0_i32_0 = arith.constant 0 : i32
    %c0_i32_1 = arith.constant 0 : i32
    return %c0_i32, %c0_i32_0 : i32, i32
  }
  func.func @transform_2(%arg0: i32) -> (i32, i32) {
    %c0_i32 = arith.constant 0 : i32
    %c0_i32_0 = arith.constant 0 : i32
    %c0_i32_1 = arith.constant 0 : i32
    return %c0_i32, %c0_i32_0 : i32, i32
  }
}

module attributes {stable_mosaic.version = 11 : i64} {
  func.func @_matmul_kernel(%arg0: i32, %arg1: i32, %arg2: i32, %arg3: memref<32x576xbf16, #tpu.memory_space<vmem>>, %arg4: memref<576x64xbf16, #tpu.memory_space<vmem>>, %arg5: memref<32x64xf32, #tpu.memory_space<vmem>>, %arg6: memref<32x64xf32, #tpu.memory_space<vmem>>) attributes {dimension_semantics = [#tpu.dimension_semantics<parallel>, #tpu.dimension_semantics<parallel>, #tpu.dimension_semantics<arbitrary>], iteration_bounds = array<i64: 1, 1, 1>, scalar_prefetch = 0 : i64, scratch_operands = 1 : i64, tpu.core_type = #tpu.core_type<tc>, window_params = [{transform_indices = @transform_0, window_bounds = array<i64: 32, 576>}, {transform_indices = @transform_1, window_bounds = array<i64: 576, 64>}, {transform_indices = @transform_2, window_bounds = array<i64: 32, 64>}]} {
    %c0_i32 = arith.constant 0 : i32
    %0 = arith.cmpi eq, %arg2, %c0_i32 : i32
    %1 = arith.extui %0 : i1 to i32
    %c0_i32_0 = arith.constant 0 : i32
    %2 = arith.cmpi ne, %1, %c0_i32_0 : i32
    scf.if %2 {
      %cst_10 = arith.constant 0.000000e+00 : f32
      %12 = vector.broadcast %cst_10 : f32 to vector<32x64xf32>
      %c0_11 = arith.constant 0 : index
      %c0_12 = arith.constant 0 : index
      %13 = vector.load %arg6[%c0_11, %c0_12] : memref<32x64xf32, #tpu.memory_space<vmem>>, vector<32x64xf32>
      tpu.vector_store %arg6[%c0_11, %c0_12], %12 {strides = array<i32>} : memref<32x64xf32, #tpu.memory_space<vmem>>, vector<32x64xf32>,
    } else {
    }
    %c0 = arith.constant 0 : index
    %c0_1 = arith.constant 0 : index
    %3 = vector.load %arg6[%c0, %c0_1] : memref<32x64xf32, #tpu.memory_space<vmem>>, vector<32x64xf32>
    %c0_2 = arith.constant 0 : index
    %c0_3 = arith.constant 0 : index
    %4 = vector.load %arg3[%c0_2, %c0_3] : memref<32x576xbf16, #tpu.memory_space<vmem>>, vector<32x576xbf16>
    %c0_4 = arith.constant 0 : index
    %c0_5 = arith.constant 0 : index
    %5 = vector.load %arg4[%c0_4, %c0_5] : memref<576x64xbf16, #tpu.memory_space<vmem>>, vector<576x64xbf16>
    %cst = arith.constant dense<0.000000e+00> : vector<32x64xf32>
    %6 = tpu.matmul %4, %5, %cst {dimension_numbers = #tpu.dot_dimension_numbers<[1], [0], [0], [1], [0, 0, 1, 1], [], []>} : vector<32x576xbf16>, vector<576x64xbf16>, vector<32x64xf32> -> vector<32x64xf32>
    %7 = arith.addf %3, %6 : vector<32x64xf32>
    %c0_6 = arith.constant 0 : index
    %c0_7 = arith.constant 0 : index
    %8 = vector.load %arg6[%c0_6, %c0_7] : memref<32x64xf32, #tpu.memory_space<vmem>>, vector<32x64xf32>
    tpu.vector_store %arg6[%c0_6, %c0_7], %7 {strides = array<i32>} : memref<32x64xf32, #tpu.memory_space<vmem>>, vector<32x64xf32>,
    %c0_i32_8 = arith.constant 0 : i32
    %9 = arith.cmpi eq, %arg2, %c0_i32_8 : i32
    %10 = arith.extui %9 : i1 to i32
    %c0_i32_9 = arith.constant 0 : i32
    %11 = arith.cmpi ne, %10, %c0_i32_9 : i32
    scf.if %11 {
      %c0_10 = arith.constant 0 : index
      %c0_11 = arith.constant 0 : index
      %12 = vector.load %arg6[%c0_10, %c0_11] : memref<32x64xf32, #tpu.memory_space<vmem>>, vector<32x64xf32>
      %c0_12 = arith.constant 0 : index
      %c0_13 = arith.constant 0 : index
      %13 = vector.load %arg5[%c0_12, %c0_13] : memref<32x64xf32, #tpu.memory_space<vmem>>, vector<32x64xf32>
      tpu.vector_store %arg5[%c0_12, %c0_13], %12 {strides = array<i32>} : memref<32x64xf32, #tpu.memory_space<vmem>>, vector<32x64xf32>,
    } else {
    }
    return
  }
  func.func @transform_0(%arg0: i32, %arg1: i32, %arg2: i32) -> (i32, i32) {
    %c0_i32 = arith.constant 0 : i32
    return %arg0, %arg2 : i32, i32
  }
  func.func @transform_1(%arg0: i32, %arg1: i32, %arg2: i32) -> (i32, i32) {
    %c0_i32 = arith.constant 0 : i32
    return %arg2, %arg1 : i32, i32
  }
  func.func @transform_2(%arg0: i32, %arg1: i32, %arg2: i32) -> (i32, i32) {
    %c0_i32 = arith.constant 0 : i32
    return %arg0, %arg1 : i32, i32
  }
}

module attributes {stable_mosaic.version = 11 : i64} {
  func.func @_bn_apply_kernel(%arg0: i32, %arg1: memref<32x64xf32, #tpu.memory_space<vmem>>, %arg2: memref<1x64xf32, #tpu.memory_space<vmem>>, %arg3: memref<1x64xf32, #tpu.memory_space<vmem>>, %arg4: memref<32x64xf32, #tpu.memory_space<vmem>>) attributes {dimension_semantics = [#tpu.dimension_semantics<parallel>], iteration_bounds = array<i64: 1>, scalar_prefetch = 0 : i64, scratch_operands = 0 : i64, tpu.core_type = #tpu.core_type<tc>, window_params = [{transform_indices = @transform_0, window_bounds = array<i64: 32, 64>}, {pipeline_mode = #tpu.pipeline_mode<synchronous>, transform_indices = @transform_1, window_bounds = array<i64: 1, 64>}, {pipeline_mode = #tpu.pipeline_mode<synchronous>, transform_indices = @transform_2, window_bounds = array<i64: 1, 64>}, {transform_indices = @transform_3, window_bounds = array<i64: 32, 64>}]} {
    %c0 = arith.constant 0 : index
    %c0_0 = arith.constant 0 : index
    %0 = vector.load %arg1[%c0, %c0_0] : memref<32x64xf32, #tpu.memory_space<vmem>>, vector<32x64xf32>
    %c0_1 = arith.constant 0 : index
    %c0_2 = arith.constant 0 : index
    %1 = vector.load %arg2[%c0_1, %c0_2] : memref<1x64xf32, #tpu.memory_space<vmem>>, vector<1x64xf32>
    %2 = vector.broadcast %1 : vector<1x64xf32> to vector<32x64xf32>
    %3 = arith.mulf %0, %2 : vector<32x64xf32>
    %c0_3 = arith.constant 0 : index
    %c0_4 = arith.constant 0 : index
    %4 = vector.load %arg3[%c0_3, %c0_4] : memref<1x64xf32, #tpu.memory_space<vmem>>, vector<1x64xf32>
    %5 = vector.broadcast %4 : vector<1x64xf32> to vector<32x64xf32>
    %6 = arith.addf %3, %5 : vector<32x64xf32>
    %cst = arith.constant 0.000000e+00 : f32
    %7 = vector.broadcast %cst : f32 to vector<32x64xf32>
    %8 = arith.maximumf %6, %7 : vector<32x64xf32>
    %c0_5 = arith.constant 0 : index
    %c0_6 = arith.constant 0 : index
    %9 = vector.load %arg4[%c0_5, %c0_6] : memref<32x64xf32, #tpu.memory_space<vmem>>, vector<32x64xf32>
    tpu.vector_store %arg4[%c0_5, %c0_6], %8 {strides = array<i32>} : memref<32x64xf32, #tpu.memory_space<vmem>>, vector<32x64xf32>,
    return
  }
  func.func @transform_0(%arg0: i32) -> (i32, i32) {
    %c0_i32 = arith.constant 0 : i32
    %c0_i32_0 = arith.constant 0 : i32
    return %arg0, %c0_i32 : i32, i32
  }
  func.func @transform_1(%arg0: i32) -> (i32, i32) {
    %c0_i32 = arith.constant 0 : i32
    %c0_i32_0 = arith.constant 0 : i32
    %c0_i32_1 = arith.constant 0 : i32
    return %c0_i32, %c0_i32_0 : i32, i32
  }
  func.func @transform_2(%arg0: i32) -> (i32, i32) {
    %c0_i32 = arith.constant 0 : i32
    %c0_i32_0 = arith.constant 0 : i32
    %c0_i32_1 = arith.constant 0 : i32
    return %c0_i32, %c0_i32_0 : i32, i32
  }
  func.func @transform_3(%arg0: i32) -> (i32, i32) {
    %c0_i32 = arith.constant 0 : i32
    %c0_i32_0 = arith.constant 0 : i32
    return %arg0, %c0_i32 : i32, i32
  }
}

module attributes {stable_mosaic.version = 11 : i64} {
  func.func @_bn_apply_kernel(%arg0: i32, %arg1: memref<32x64xf32, #tpu.memory_space<vmem>>, %arg2: memref<1x64xf32, #tpu.memory_space<vmem>>, %arg3: memref<1x64xf32, #tpu.memory_space<vmem>>, %arg4: memref<32x64xf32, #tpu.memory_space<vmem>>, %arg5: memref<32x64xf32, #tpu.memory_space<vmem>>) attributes {dimension_semantics = [#tpu.dimension_semantics<parallel>], iteration_bounds = array<i64: 1>, scalar_prefetch = 0 : i64, scratch_operands = 0 : i64, tpu.core_type = #tpu.core_type<tc>, window_params = [{transform_indices = @transform_0, window_bounds = array<i64: 32, 64>}, {pipeline_mode = #tpu.pipeline_mode<synchronous>, transform_indices = @transform_1, window_bounds = array<i64: 1, 64>}, {pipeline_mode = #tpu.pipeline_mode<synchronous>, transform_indices = @transform_2, window_bounds = array<i64: 1, 64>}, {transform_indices = @transform_3, window_bounds = array<i64: 32, 64>}, {transform_indices = @transform_4, window_bounds = array<i64: 32, 64>}]} {
    %c0 = arith.constant 0 : index
    %c0_0 = arith.constant 0 : index
    %0 = vector.load %arg1[%c0, %c0_0] : memref<32x64xf32, #tpu.memory_space<vmem>>, vector<32x64xf32>
    %c0_1 = arith.constant 0 : index
    %c0_2 = arith.constant 0 : index
    %1 = vector.load %arg2[%c0_1, %c0_2] : memref<1x64xf32, #tpu.memory_space<vmem>>, vector<1x64xf32>
    %2 = vector.broadcast %1 : vector<1x64xf32> to vector<32x64xf32>
    %3 = arith.mulf %0, %2 : vector<32x64xf32>
    %c0_3 = arith.constant 0 : index
    %c0_4 = arith.constant 0 : index
    %4 = vector.load %arg3[%c0_3, %c0_4] : memref<1x64xf32, #tpu.memory_space<vmem>>, vector<1x64xf32>
    %5 = vector.broadcast %4 : vector<1x64xf32> to vector<32x64xf32>
    %6 = arith.addf %3, %5 : vector<32x64xf32>
    %c0_5 = arith.constant 0 : index
    %c0_6 = arith.constant 0 : index
    %7 = vector.load %arg4[%c0_5, %c0_6] : memref<32x64xf32, #tpu.memory_space<vmem>>, vector<32x64xf32>
    %8 = arith.addf %6, %7 : vector<32x64xf32>
    %cst = arith.constant 0.000000e+00 : f32
    %9 = vector.broadcast %cst : f32 to vector<32x64xf32>
    %10 = arith.maximumf %8, %9 : vector<32x64xf32>
    %c0_7 = arith.constant 0 : index
    %c0_8 = arith.constant 0 : index
    %11 = vector.load %arg5[%c0_7, %c0_8] : memref<32x64xf32, #tpu.memory_space<vmem>>, vector<32x64xf32>
    tpu.vector_store %arg5[%c0_7, %c0_8], %10 {strides = array<i32>} : memref<32x64xf32, #tpu.memory_space<vmem>>, vector<32x64xf32>,
    return
  }
  func.func @transform_0(%arg0: i32) -> (i32, i32) {
    %c0_i32 = arith.constant 0 : i32
    %c0_i32_0 = arith.constant 0 : i32
    return %arg0, %c0_i32 : i32, i32
  }
  func.func @transform_1(%arg0: i32) -> (i32, i32) {
    %c0_i32 = arith.constant 0 : i32
    %c0_i32_0 = arith.constant 0 : i32
    %c0_i32_1 = arith.constant 0 : i32
    return %c0_i32, %c0_i32_0 : i32, i32
  }
  func.func @transform_2(%arg0: i32) -> (i32, i32) {
    %c0_i32 = arith.constant 0 : i32
    %c0_i32_0 = arith.constant 0 : i32
    %c0_i32_1 = arith.constant 0 : i32
    return %c0_i32, %c0_i32_0 : i32, i32
  }
  func.func @transform_3(%arg0: i32) -> (i32, i32) {
    %c0_i32 = arith.constant 0 : i32
    %c0_i32_0 = arith.constant 0 : i32
    return %arg0, %c0_i32 : i32, i32
  }
  func.func @transform_4(%arg0: i32) -> (i32, i32) {
    %c0_i32 = arith.constant 0 : i32
    %c0_i32_0 = arith.constant 0 : i32
    return %arg0, %c0_i32 : i32, i32
  }
}

module attributes {stable_mosaic.version = 11 : i64} {
  func.func @_matmul_kernel(%arg0: i32, %arg1: i32, %arg2: i32, %arg3: memref<16x64xbf16, #tpu.memory_space<vmem>>, %arg4: memref<64x128xbf16, #tpu.memory_space<vmem>>, %arg5: memref<16x128xf32, #tpu.memory_space<vmem>>, %arg6: memref<16x128xf32, #tpu.memory_space<vmem>>) attributes {dimension_semantics = [#tpu.dimension_semantics<parallel>, #tpu.dimension_semantics<parallel>, #tpu.dimension_semantics<arbitrary>], iteration_bounds = array<i64: 1, 1, 1>, scalar_prefetch = 0 : i64, scratch_operands = 1 : i64, tpu.core_type = #tpu.core_type<tc>, window_params = [{transform_indices = @transform_0, window_bounds = array<i64: 16, 64>}, {transform_indices = @transform_1, window_bounds = array<i64: 64, 128>}, {transform_indices = @transform_2, window_bounds = array<i64: 16, 128>}]} {
    %c0_i32 = arith.constant 0 : i32
    %0 = arith.cmpi eq, %arg2, %c0_i32 : i32
    %1 = arith.extui %0 : i1 to i32
    %c0_i32_0 = arith.constant 0 : i32
    %2 = arith.cmpi ne, %1, %c0_i32_0 : i32
    scf.if %2 {
      %cst_10 = arith.constant 0.000000e+00 : f32
      %12 = vector.broadcast %cst_10 : f32 to vector<16x128xf32>
      %c0_11 = arith.constant 0 : index
      %c0_12 = arith.constant 0 : index
      %13 = vector.load %arg6[%c0_11, %c0_12] : memref<16x128xf32, #tpu.memory_space<vmem>>, vector<16x128xf32>
      tpu.vector_store %arg6[%c0_11, %c0_12], %12 {strides = array<i32>} : memref<16x128xf32, #tpu.memory_space<vmem>>, vector<16x128xf32>,
    } else {
    }
    %c0 = arith.constant 0 : index
    %c0_1 = arith.constant 0 : index
    %3 = vector.load %arg6[%c0, %c0_1] : memref<16x128xf32, #tpu.memory_space<vmem>>, vector<16x128xf32>
    %c0_2 = arith.constant 0 : index
    %c0_3 = arith.constant 0 : index
    %4 = vector.load %arg3[%c0_2, %c0_3] : memref<16x64xbf16, #tpu.memory_space<vmem>>, vector<16x64xbf16>
    %c0_4 = arith.constant 0 : index
    %c0_5 = arith.constant 0 : index
    %5 = vector.load %arg4[%c0_4, %c0_5] : memref<64x128xbf16, #tpu.memory_space<vmem>>, vector<64x128xbf16>
    %cst = arith.constant dense<0.000000e+00> : vector<16x128xf32>
    %6 = tpu.matmul %4, %5, %cst {dimension_numbers = #tpu.dot_dimension_numbers<[1], [0], [0], [1], [0, 0, 1, 1], [], []>} : vector<16x64xbf16>, vector<64x128xbf16>, vector<16x128xf32> -> vector<16x128xf32>
    %7 = arith.addf %3, %6 : vector<16x128xf32>
    %c0_6 = arith.constant 0 : index
    %c0_7 = arith.constant 0 : index
    %8 = vector.load %arg6[%c0_6, %c0_7] : memref<16x128xf32, #tpu.memory_space<vmem>>, vector<16x128xf32>
    tpu.vector_store %arg6[%c0_6, %c0_7], %7 {strides = array<i32>} : memref<16x128xf32, #tpu.memory_space<vmem>>, vector<16x128xf32>,
    %c0_i32_8 = arith.constant 0 : i32
    %9 = arith.cmpi eq, %arg2, %c0_i32_8 : i32
    %10 = arith.extui %9 : i1 to i32
    %c0_i32_9 = arith.constant 0 : i32
    %11 = arith.cmpi ne, %10, %c0_i32_9 : i32
    scf.if %11 {
      %c0_10 = arith.constant 0 : index
      %c0_11 = arith.constant 0 : index
      %12 = vector.load %arg6[%c0_10, %c0_11] : memref<16x128xf32, #tpu.memory_space<vmem>>, vector<16x128xf32>
      %c0_12 = arith.constant 0 : index
      %c0_13 = arith.constant 0 : index
      %13 = vector.load %arg5[%c0_12, %c0_13] : memref<16x128xf32, #tpu.memory_space<vmem>>, vector<16x128xf32>
      tpu.vector_store %arg5[%c0_12, %c0_13], %12 {strides = array<i32>} : memref<16x128xf32, #tpu.memory_space<vmem>>, vector<16x128xf32>,
    } else {
    }
    return
  }
  func.func @transform_0(%arg0: i32, %arg1: i32, %arg2: i32) -> (i32, i32) {
    %c0_i32 = arith.constant 0 : i32
    return %arg0, %arg2 : i32, i32
  }
  func.func @transform_1(%arg0: i32, %arg1: i32, %arg2: i32) -> (i32, i32) {
    %c0_i32 = arith.constant 0 : i32
    return %arg2, %arg1 : i32, i32
  }
  func.func @transform_2(%arg0: i32, %arg1: i32, %arg2: i32) -> (i32, i32) {
    %c0_i32 = arith.constant 0 : i32
    return %arg0, %arg1 : i32, i32
  }
}

module attributes {stable_mosaic.version = 11 : i64} {
  func.func @_bn_stats_kernel(%arg0: i32, %arg1: memref<8x128xf32, #tpu.memory_space<vmem>>, %arg2: memref<1x128xf32, #tpu.memory_space<vmem>>, %arg3: memref<1x128xf32, #tpu.memory_space<vmem>>) attributes {dimension_semantics = [#tpu.dimension_semantics<arbitrary>], iteration_bounds = array<i64: 1>, scalar_prefetch = 0 : i64, scratch_operands = 0 : i64, tpu.core_type = #tpu.core_type<tc>, window_params = [{transform_indices = @transform_0, window_bounds = array<i64: 8, 128>}, {pipeline_mode = #tpu.pipeline_mode<synchronous>, transform_indices = @transform_1, window_bounds = array<i64: 1, 128>}, {pipeline_mode = #tpu.pipeline_mode<synchronous>, transform_indices = @transform_2, window_bounds = array<i64: 1, 128>}]} {
    %c0_i32 = arith.constant 0 : i32
    %0 = arith.cmpi eq, %arg0, %c0_i32 : i32
    %1 = arith.extui %0 : i1 to i32
    %c0_i32_0 = arith.constant 0 : i32
    %2 = arith.cmpi ne, %1, %c0_i32_0 : i32
    scf.if %2 {
      %cst_11 = arith.constant 0.000000e+00 : f32
      %15 = vector.broadcast %cst_11 : f32 to vector<1x128xf32>
      %c0_12 = arith.constant 0 : index
      %c0_13 = arith.constant 0 : index
      %16 = vector.load %arg2[%c0_12, %c0_13] : memref<1x128xf32, #tpu.memory_space<vmem>>, vector<1x128xf32>
      tpu.vector_store %arg2[%c0_12, %c0_13], %15 {strides = array<i32>} : memref<1x128xf32, #tpu.memory_space<vmem>>, vector<1x128xf32>,
      %cst_14 = arith.constant 0.000000e+00 : f32
      %17 = vector.broadcast %cst_14 : f32 to vector<1x128xf32>
      %c0_15 = arith.constant 0 : index
      %c0_16 = arith.constant 0 : index
      %18 = vector.load %arg3[%c0_15, %c0_16] : memref<1x128xf32, #tpu.memory_space<vmem>>, vector<1x128xf32>
      tpu.vector_store %arg3[%c0_15, %c0_16], %17 {strides = array<i32>} : memref<1x128xf32, #tpu.memory_space<vmem>>, vector<1x128xf32>,
    } else {
    }
    %c0 = arith.constant 0 : index
    %c0_1 = arith.constant 0 : index
    %3 = vector.load %arg1[%c0, %c0_1] : memref<8x128xf32, #tpu.memory_space<vmem>>, vector<8x128xf32>
    %c0_2 = arith.constant 0 : index
    %c0_3 = arith.constant 0 : index
    %4 = vector.load %arg2[%c0_2, %c0_3] : memref<1x128xf32, #tpu.memory_space<vmem>>, vector<1x128xf32>
    %cst = arith.constant dense<0.000000e+00> : vector<128xf32>
    %5 = vector.multi_reduction <add>, %3, %cst [0] : vector<8x128xf32> to vector<128xf32>
    %6 = vector.shape_cast %5 : vector<128xf32> to vector<1x128xf32>
    %7 = arith.addf %4, %6 : vector<1x128xf32>
    %c0_4 = arith.constant 0 : index
    %c0_5 = arith.constant 0 : index
    %8 = vector.load %arg2[%c0_4, %c0_5] : memref<1x128xf32, #tpu.memory_space<vmem>>, vector<1x128xf32>
    tpu.vector_store %arg2[%c0_4, %c0_5], %7 {strides = array<i32>} : memref<1x128xf32, #tpu.memory_space<vmem>>, vector<1x128xf32>,
    %c0_6 = arith.constant 0 : index
    %c0_7 = arith.constant 0 : index
    %9 = vector.load %arg3[%c0_6, %c0_7] : memref<1x128xf32, #tpu.memory_space<vmem>>, vector<1x128xf32>
    %10 = arith.mulf %3, %3 : vector<8x128xf32>
    %cst_8 = arith.constant dense<0.000000e+00> : vector<128xf32>
    %11 = vector.multi_reduction <add>, %10, %cst_8 [0] : vector<8x128xf32> to vector<128xf32>
    %12 = vector.shape_cast %11 : vector<128xf32> to vector<1x128xf32>
    %13 = arith.addf %9, %12 : vector<1x128xf32>
    %c0_9 = arith.constant 0 : index
    %c0_10 = arith.constant 0 : index
    %14 = vector.load %arg3[%c0_9, %c0_10] : memref<1x128xf32, #tpu.memory_space<vmem>>, vector<1x128xf32>
    tpu.vector_store %arg3[%c0_9, %c0_10], %13 {strides = array<i32>} : memref<1x128xf32, #tpu.memory_space<vmem>>, vector<1x128xf32>,
    return
  }
  func.func @transform_0(%arg0: i32) -> (i32, i32) {
    %c0_i32 = arith.constant 0 : i32
    %c0_i32_0 = arith.constant 0 : i32
    return %arg0, %c0_i32 : i32, i32
  }
  func.func @transform_1(%arg0: i32) -> (i32, i32) {
    %c0_i32 = arith.constant 0 : i32
    %c0_i32_0 = arith.constant 0 : i32
    %c0_i32_1 = arith.constant 0 : i32
    return %c0_i32, %c0_i32_0 : i32, i32
  }
  func.func @transform_2(%arg0: i32) -> (i32, i32) {
    %c0_i32 = arith.constant 0 : i32
    %c0_i32_0 = arith.constant 0 : i32
    %c0_i32_1 = arith.constant 0 : i32
    return %c0_i32, %c0_i32_0 : i32, i32
  }
}

module attributes {stable_mosaic.version = 11 : i64} {
  func.func @_bn_apply_kernel(%arg0: i32, %arg1: memref<8x128xf32, #tpu.memory_space<vmem>>, %arg2: memref<1x128xf32, #tpu.memory_space<vmem>>, %arg3: memref<1x128xf32, #tpu.memory_space<vmem>>, %arg4: memref<8x128xf32, #tpu.memory_space<vmem>>) attributes {dimension_semantics = [#tpu.dimension_semantics<parallel>], iteration_bounds = array<i64: 1>, scalar_prefetch = 0 : i64, scratch_operands = 0 : i64, tpu.core_type = #tpu.core_type<tc>, window_params = [{transform_indices = @transform_0, window_bounds = array<i64: 8, 128>}, {pipeline_mode = #tpu.pipeline_mode<synchronous>, transform_indices = @transform_1, window_bounds = array<i64: 1, 128>}, {pipeline_mode = #tpu.pipeline_mode<synchronous>, transform_indices = @transform_2, window_bounds = array<i64: 1, 128>}, {transform_indices = @transform_3, window_bounds = array<i64: 8, 128>}]} {
    %c0 = arith.constant 0 : index
    %c0_0 = arith.constant 0 : index
    %0 = vector.load %arg1[%c0, %c0_0] : memref<8x128xf32, #tpu.memory_space<vmem>>, vector<8x128xf32>
    %c0_1 = arith.constant 0 : index
    %c0_2 = arith.constant 0 : index
    %1 = vector.load %arg2[%c0_1, %c0_2] : memref<1x128xf32, #tpu.memory_space<vmem>>, vector<1x128xf32>
    %2 = vector.broadcast %1 : vector<1x128xf32> to vector<8x128xf32>
    %3 = arith.mulf %0, %2 : vector<8x128xf32>
    %c0_3 = arith.constant 0 : index
    %c0_4 = arith.constant 0 : index
    %4 = vector.load %arg3[%c0_3, %c0_4] : memref<1x128xf32, #tpu.memory_space<vmem>>, vector<1x128xf32>
    %5 = vector.broadcast %4 : vector<1x128xf32> to vector<8x128xf32>
    %6 = arith.addf %3, %5 : vector<8x128xf32>
    %c0_5 = arith.constant 0 : index
    %c0_6 = arith.constant 0 : index
    %7 = vector.load %arg4[%c0_5, %c0_6] : memref<8x128xf32, #tpu.memory_space<vmem>>, vector<8x128xf32>
    tpu.vector_store %arg4[%c0_5, %c0_6], %6 {strides = array<i32>} : memref<8x128xf32, #tpu.memory_space<vmem>>, vector<8x128xf32>,
    return
  }
  func.func @transform_0(%arg0: i32) -> (i32, i32) {
    %c0_i32 = arith.constant 0 : i32
    %c0_i32_0 = arith.constant 0 : i32
    return %arg0, %c0_i32 : i32, i32
  }
  func.func @transform_1(%arg0: i32) -> (i32, i32) {
    %c0_i32 = arith.constant 0 : i32
    %c0_i32_0 = arith.constant 0 : i32
    %c0_i32_1 = arith.constant 0 : i32
    return %c0_i32, %c0_i32_0 : i32, i32
  }
  func.func @transform_2(%arg0: i32) -> (i32, i32) {
    %c0_i32 = arith.constant 0 : i32
    %c0_i32_0 = arith.constant 0 : i32
    %c0_i32_1 = arith.constant 0 : i32
    return %c0_i32, %c0_i32_0 : i32, i32
  }
  func.func @transform_3(%arg0: i32) -> (i32, i32) {
    %c0_i32 = arith.constant 0 : i32
    %c0_i32_0 = arith.constant 0 : i32
    return %arg0, %c0_i32 : i32, i32
  }
}

module attributes {stable_mosaic.version = 11 : i64} {
  func.func @_matmul_kernel(%arg0: i32, %arg1: i32, %arg2: i32, %arg3: memref<16x576xbf16, #tpu.memory_space<vmem>>, %arg4: memref<576x128xbf16, #tpu.memory_space<vmem>>, %arg5: memref<16x128xf32, #tpu.memory_space<vmem>>, %arg6: memref<16x128xf32, #tpu.memory_space<vmem>>) attributes {dimension_semantics = [#tpu.dimension_semantics<parallel>, #tpu.dimension_semantics<parallel>, #tpu.dimension_semantics<arbitrary>], iteration_bounds = array<i64: 1, 1, 1>, scalar_prefetch = 0 : i64, scratch_operands = 1 : i64, tpu.core_type = #tpu.core_type<tc>, window_params = [{transform_indices = @transform_0, window_bounds = array<i64: 16, 576>}, {transform_indices = @transform_1, window_bounds = array<i64: 576, 128>}, {transform_indices = @transform_2, window_bounds = array<i64: 16, 128>}]} {
    %c0_i32 = arith.constant 0 : i32
    %0 = arith.cmpi eq, %arg2, %c0_i32 : i32
    %1 = arith.extui %0 : i1 to i32
    %c0_i32_0 = arith.constant 0 : i32
    %2 = arith.cmpi ne, %1, %c0_i32_0 : i32
    scf.if %2 {
      %cst_10 = arith.constant 0.000000e+00 : f32
      %12 = vector.broadcast %cst_10 : f32 to vector<16x128xf32>
      %c0_11 = arith.constant 0 : index
      %c0_12 = arith.constant 0 : index
      %13 = vector.load %arg6[%c0_11, %c0_12] : memref<16x128xf32, #tpu.memory_space<vmem>>, vector<16x128xf32>
      tpu.vector_store %arg6[%c0_11, %c0_12], %12 {strides = array<i32>} : memref<16x128xf32, #tpu.memory_space<vmem>>, vector<16x128xf32>,
    } else {
    }
    %c0 = arith.constant 0 : index
    %c0_1 = arith.constant 0 : index
    %3 = vector.load %arg6[%c0, %c0_1] : memref<16x128xf32, #tpu.memory_space<vmem>>, vector<16x128xf32>
    %c0_2 = arith.constant 0 : index
    %c0_3 = arith.constant 0 : index
    %4 = vector.load %arg3[%c0_2, %c0_3] : memref<16x576xbf16, #tpu.memory_space<vmem>>, vector<16x576xbf16>
    %c0_4 = arith.constant 0 : index
    %c0_5 = arith.constant 0 : index
    %5 = vector.load %arg4[%c0_4, %c0_5] : memref<576x128xbf16, #tpu.memory_space<vmem>>, vector<576x128xbf16>
    %cst = arith.constant dense<0.000000e+00> : vector<16x128xf32>
    %6 = tpu.matmul %4, %5, %cst {dimension_numbers = #tpu.dot_dimension_numbers<[1], [0], [0], [1], [0, 0, 1, 1], [], []>} : vector<16x576xbf16>, vector<576x128xbf16>, vector<16x128xf32> -> vector<16x128xf32>
    %7 = arith.addf %3, %6 : vector<16x128xf32>
    %c0_6 = arith.constant 0 : index
    %c0_7 = arith.constant 0 : index
    %8 = vector.load %arg6[%c0_6, %c0_7] : memref<16x128xf32, #tpu.memory_space<vmem>>, vector<16x128xf32>
    tpu.vector_store %arg6[%c0_6, %c0_7], %7 {strides = array<i32>} : memref<16x128xf32, #tpu.memory_space<vmem>>, vector<16x128xf32>,
    %c0_i32_8 = arith.constant 0 : i32
    %9 = arith.cmpi eq, %arg2, %c0_i32_8 : i32
    %10 = arith.extui %9 : i1 to i32
    %c0_i32_9 = arith.constant 0 : i32
    %11 = arith.cmpi ne, %10, %c0_i32_9 : i32
    scf.if %11 {
      %c0_10 = arith.constant 0 : index
      %c0_11 = arith.constant 0 : index
      %12 = vector.load %arg6[%c0_10, %c0_11] : memref<16x128xf32, #tpu.memory_space<vmem>>, vector<16x128xf32>
      %c0_12 = arith.constant 0 : index
      %c0_13 = arith.constant 0 : index
      %13 = vector.load %arg5[%c0_12, %c0_13] : memref<16x128xf32, #tpu.memory_space<vmem>>, vector<16x128xf32>
      tpu.vector_store %arg5[%c0_12, %c0_13], %12 {strides = array<i32>} : memref<16x128xf32, #tpu.memory_space<vmem>>, vector<16x128xf32>,
    } else {
    }
    return
  }
  func.func @transform_0(%arg0: i32, %arg1: i32, %arg2: i32) -> (i32, i32) {
    %c0_i32 = arith.constant 0 : i32
    return %arg0, %arg2 : i32, i32
  }
  func.func @transform_1(%arg0: i32, %arg1: i32, %arg2: i32) -> (i32, i32) {
    %c0_i32 = arith.constant 0 : i32
    return %arg2, %arg1 : i32, i32
  }
  func.func @transform_2(%arg0: i32, %arg1: i32, %arg2: i32) -> (i32, i32) {
    %c0_i32 = arith.constant 0 : i32
    return %arg0, %arg1 : i32, i32
  }
}

module attributes {stable_mosaic.version = 11 : i64} {
  func.func @_bn_apply_kernel(%arg0: i32, %arg1: memref<8x128xf32, #tpu.memory_space<vmem>>, %arg2: memref<1x128xf32, #tpu.memory_space<vmem>>, %arg3: memref<1x128xf32, #tpu.memory_space<vmem>>, %arg4: memref<8x128xf32, #tpu.memory_space<vmem>>) attributes {dimension_semantics = [#tpu.dimension_semantics<parallel>], iteration_bounds = array<i64: 1>, scalar_prefetch = 0 : i64, scratch_operands = 0 : i64, tpu.core_type = #tpu.core_type<tc>, window_params = [{transform_indices = @transform_0, window_bounds = array<i64: 8, 128>}, {pipeline_mode = #tpu.pipeline_mode<synchronous>, transform_indices = @transform_1, window_bounds = array<i64: 1, 128>}, {pipeline_mode = #tpu.pipeline_mode<synchronous>, transform_indices = @transform_2, window_bounds = array<i64: 1, 128>}, {transform_indices = @transform_3, window_bounds = array<i64: 8, 128>}]} {
    %c0 = arith.constant 0 : index
    %c0_0 = arith.constant 0 : index
    %0 = vector.load %arg1[%c0, %c0_0] : memref<8x128xf32, #tpu.memory_space<vmem>>, vector<8x128xf32>
    %c0_1 = arith.constant 0 : index
    %c0_2 = arith.constant 0 : index
    %1 = vector.load %arg2[%c0_1, %c0_2] : memref<1x128xf32, #tpu.memory_space<vmem>>, vector<1x128xf32>
    %2 = vector.broadcast %1 : vector<1x128xf32> to vector<8x128xf32>
    %3 = arith.mulf %0, %2 : vector<8x128xf32>
    %c0_3 = arith.constant 0 : index
    %c0_4 = arith.constant 0 : index
    %4 = vector.load %arg3[%c0_3, %c0_4] : memref<1x128xf32, #tpu.memory_space<vmem>>, vector<1x128xf32>
    %5 = vector.broadcast %4 : vector<1x128xf32> to vector<8x128xf32>
    %6 = arith.addf %3, %5 : vector<8x128xf32>
    %cst = arith.constant 0.000000e+00 : f32
    %7 = vector.broadcast %cst : f32 to vector<8x128xf32>
    %8 = arith.maximumf %6, %7 : vector<8x128xf32>
    %c0_5 = arith.constant 0 : index
    %c0_6 = arith.constant 0 : index
    %9 = vector.load %arg4[%c0_5, %c0_6] : memref<8x128xf32, #tpu.memory_space<vmem>>, vector<8x128xf32>
    tpu.vector_store %arg4[%c0_5, %c0_6], %8 {strides = array<i32>} : memref<8x128xf32, #tpu.memory_space<vmem>>, vector<8x128xf32>,
    return
  }
  func.func @transform_0(%arg0: i32) -> (i32, i32) {
    %c0_i32 = arith.constant 0 : i32
    %c0_i32_0 = arith.constant 0 : i32
    return %arg0, %c0_i32 : i32, i32
  }
  func.func @transform_1(%arg0: i32) -> (i32, i32) {
    %c0_i32 = arith.constant 0 : i32
    %c0_i32_0 = arith.constant 0 : i32
    %c0_i32_1 = arith.constant 0 : i32
    return %c0_i32, %c0_i32_0 : i32, i32
  }
  func.func @transform_2(%arg0: i32) -> (i32, i32) {
    %c0_i32 = arith.constant 0 : i32
    %c0_i32_0 = arith.constant 0 : i32
    %c0_i32_1 = arith.constant 0 : i32
    return %c0_i32, %c0_i32_0 : i32, i32
  }
  func.func @transform_3(%arg0: i32) -> (i32, i32) {
    %c0_i32 = arith.constant 0 : i32
    %c0_i32_0 = arith.constant 0 : i32
    return %arg0, %c0_i32 : i32, i32
  }
}

module attributes {stable_mosaic.version = 11 : i64} {
  func.func @_matmul_kernel(%arg0: i32, %arg1: i32, %arg2: i32, %arg3: memref<16x1152xbf16, #tpu.memory_space<vmem>>, %arg4: memref<1152x128xbf16, #tpu.memory_space<vmem>>, %arg5: memref<16x128xf32, #tpu.memory_space<vmem>>, %arg6: memref<16x128xf32, #tpu.memory_space<vmem>>) attributes {dimension_semantics = [#tpu.dimension_semantics<parallel>, #tpu.dimension_semantics<parallel>, #tpu.dimension_semantics<arbitrary>], iteration_bounds = array<i64: 1, 1, 1>, scalar_prefetch = 0 : i64, scratch_operands = 1 : i64, tpu.core_type = #tpu.core_type<tc>, window_params = [{transform_indices = @transform_0, window_bounds = array<i64: 16, 1152>}, {transform_indices = @transform_1, window_bounds = array<i64: 1152, 128>}, {transform_indices = @transform_2, window_bounds = array<i64: 16, 128>}]} {
    %c0_i32 = arith.constant 0 : i32
    %0 = arith.cmpi eq, %arg2, %c0_i32 : i32
    %1 = arith.extui %0 : i1 to i32
    %c0_i32_0 = arith.constant 0 : i32
    %2 = arith.cmpi ne, %1, %c0_i32_0 : i32
    scf.if %2 {
      %cst_10 = arith.constant 0.000000e+00 : f32
      %12 = vector.broadcast %cst_10 : f32 to vector<16x128xf32>
      %c0_11 = arith.constant 0 : index
      %c0_12 = arith.constant 0 : index
      %13 = vector.load %arg6[%c0_11, %c0_12] : memref<16x128xf32, #tpu.memory_space<vmem>>, vector<16x128xf32>
      tpu.vector_store %arg6[%c0_11, %c0_12], %12 {strides = array<i32>} : memref<16x128xf32, #tpu.memory_space<vmem>>, vector<16x128xf32>,
    } else {
    }
    %c0 = arith.constant 0 : index
    %c0_1 = arith.constant 0 : index
    %3 = vector.load %arg6[%c0, %c0_1] : memref<16x128xf32, #tpu.memory_space<vmem>>, vector<16x128xf32>
    %c0_2 = arith.constant 0 : index
    %c0_3 = arith.constant 0 : index
    %4 = vector.load %arg3[%c0_2, %c0_3] : memref<16x1152xbf16, #tpu.memory_space<vmem>>, vector<16x1152xbf16>
    %c0_4 = arith.constant 0 : index
    %c0_5 = arith.constant 0 : index
    %5 = vector.load %arg4[%c0_4, %c0_5] : memref<1152x128xbf16, #tpu.memory_space<vmem>>, vector<1152x128xbf16>
    %cst = arith.constant dense<0.000000e+00> : vector<16x128xf32>
    %6 = tpu.matmul %4, %5, %cst {dimension_numbers = #tpu.dot_dimension_numbers<[1], [0], [0], [1], [0, 0, 1, 1], [], []>} : vector<16x1152xbf16>, vector<1152x128xbf16>, vector<16x128xf32> -> vector<16x128xf32>
    %7 = arith.addf %3, %6 : vector<16x128xf32>
    %c0_6 = arith.constant 0 : index
    %c0_7 = arith.constant 0 : index
    %8 = vector.load %arg6[%c0_6, %c0_7] : memref<16x128xf32, #tpu.memory_space<vmem>>, vector<16x128xf32>
    tpu.vector_store %arg6[%c0_6, %c0_7], %7 {strides = array<i32>} : memref<16x128xf32, #tpu.memory_space<vmem>>, vector<16x128xf32>,
    %c0_i32_8 = arith.constant 0 : i32
    %9 = arith.cmpi eq, %arg2, %c0_i32_8 : i32
    %10 = arith.extui %9 : i1 to i32
    %c0_i32_9 = arith.constant 0 : i32
    %11 = arith.cmpi ne, %10, %c0_i32_9 : i32
    scf.if %11 {
      %c0_10 = arith.constant 0 : index
      %c0_11 = arith.constant 0 : index
      %12 = vector.load %arg6[%c0_10, %c0_11] : memref<16x128xf32, #tpu.memory_space<vmem>>, vector<16x128xf32>
      %c0_12 = arith.constant 0 : index
      %c0_13 = arith.constant 0 : index
      %13 = vector.load %arg5[%c0_12, %c0_13] : memref<16x128xf32, #tpu.memory_space<vmem>>, vector<16x128xf32>
      tpu.vector_store %arg5[%c0_12, %c0_13], %12 {strides = array<i32>} : memref<16x128xf32, #tpu.memory_space<vmem>>, vector<16x128xf32>,
    } else {
    }
    return
  }
  func.func @transform_0(%arg0: i32, %arg1: i32, %arg2: i32) -> (i32, i32) {
    %c0_i32 = arith.constant 0 : i32
    return %arg0, %arg2 : i32, i32
  }
  func.func @transform_1(%arg0: i32, %arg1: i32, %arg2: i32) -> (i32, i32) {
    %c0_i32 = arith.constant 0 : i32
    return %arg2, %arg1 : i32, i32
  }
  func.func @transform_2(%arg0: i32, %arg1: i32, %arg2: i32) -> (i32, i32) {
    %c0_i32 = arith.constant 0 : i32
    return %arg0, %arg1 : i32, i32
  }
}

module attributes {stable_mosaic.version = 11 : i64} {
  func.func @_bn_apply_kernel(%arg0: i32, %arg1: memref<8x128xf32, #tpu.memory_space<vmem>>, %arg2: memref<1x128xf32, #tpu.memory_space<vmem>>, %arg3: memref<1x128xf32, #tpu.memory_space<vmem>>, %arg4: memref<8x128xf32, #tpu.memory_space<vmem>>, %arg5: memref<8x128xf32, #tpu.memory_space<vmem>>) attributes {dimension_semantics = [#tpu.dimension_semantics<parallel>], iteration_bounds = array<i64: 1>, scalar_prefetch = 0 : i64, scratch_operands = 0 : i64, tpu.core_type = #tpu.core_type<tc>, window_params = [{transform_indices = @transform_0, window_bounds = array<i64: 8, 128>}, {pipeline_mode = #tpu.pipeline_mode<synchronous>, transform_indices = @transform_1, window_bounds = array<i64: 1, 128>}, {pipeline_mode = #tpu.pipeline_mode<synchronous>, transform_indices = @transform_2, window_bounds = array<i64: 1, 128>}, {transform_indices = @transform_3, window_bounds = array<i64: 8, 128>}, {transform_indices = @transform_4, window_bounds = array<i64: 8, 128>}]} {
    %c0 = arith.constant 0 : index
    %c0_0 = arith.constant 0 : index
    %0 = vector.load %arg1[%c0, %c0_0] : memref<8x128xf32, #tpu.memory_space<vmem>>, vector<8x128xf32>
    %c0_1 = arith.constant 0 : index
    %c0_2 = arith.constant 0 : index
    %1 = vector.load %arg2[%c0_1, %c0_2] : memref<1x128xf32, #tpu.memory_space<vmem>>, vector<1x128xf32>
    %2 = vector.broadcast %1 : vector<1x128xf32> to vector<8x128xf32>
    %3 = arith.mulf %0, %2 : vector<8x128xf32>
    %c0_3 = arith.constant 0 : index
    %c0_4 = arith.constant 0 : index
    %4 = vector.load %arg3[%c0_3, %c0_4] : memref<1x128xf32, #tpu.memory_space<vmem>>, vector<1x128xf32>
    %5 = vector.broadcast %4 : vector<1x128xf32> to vector<8x128xf32>
    %6 = arith.addf %3, %5 : vector<8x128xf32>
    %c0_5 = arith.constant 0 : index
    %c0_6 = arith.constant 0 : index
    %7 = vector.load %arg4[%c0_5, %c0_6] : memref<8x128xf32, #tpu.memory_space<vmem>>, vector<8x128xf32>
    %8 = arith.addf %6, %7 : vector<8x128xf32>
    %cst = arith.constant 0.000000e+00 : f32
    %9 = vector.broadcast %cst : f32 to vector<8x128xf32>
    %10 = arith.maximumf %8, %9 : vector<8x128xf32>
    %c0_7 = arith.constant 0 : index
    %c0_8 = arith.constant 0 : index
    %11 = vector.load %arg5[%c0_7, %c0_8] : memref<8x128xf32, #tpu.memory_space<vmem>>, vector<8x128xf32>
    tpu.vector_store %arg5[%c0_7, %c0_8], %10 {strides = array<i32>} : memref<8x128xf32, #tpu.memory_space<vmem>>, vector<8x128xf32>,
    return
  }
  func.func @transform_0(%arg0: i32) -> (i32, i32) {
    %c0_i32 = arith.constant 0 : i32
    %c0_i32_0 = arith.constant 0 : i32
    return %arg0, %c0_i32 : i32, i32
  }
  func.func @transform_1(%arg0: i32) -> (i32, i32) {
    %c0_i32 = arith.constant 0 : i32
    %c0_i32_0 = arith.constant 0 : i32
    %c0_i32_1 = arith.constant 0 : i32
    return %c0_i32, %c0_i32_0 : i32, i32
  }
  func.func @transform_2(%arg0: i32) -> (i32, i32) {
    %c0_i32 = arith.constant 0 : i32
    %c0_i32_0 = arith.constant 0 : i32
    %c0_i32_1 = arith.constant 0 : i32
    return %c0_i32, %c0_i32_0 : i32, i32
  }
  func.func @transform_3(%arg0: i32) -> (i32, i32) {
    %c0_i32 = arith.constant 0 : i32
    %c0_i32_0 = arith.constant 0 : i32
    return %arg0, %c0_i32 : i32, i32
  }
  func.func @transform_4(%arg0: i32) -> (i32, i32) {
    %c0_i32 = arith.constant 0 : i32
    %c0_i32_0 = arith.constant 0 : i32
    return %arg0, %c0_i32 : i32, i32
  }
}

module attributes {stable_mosaic.version = 11 : i64} {
  func.func @_matmul_kernel(%arg0: i32, %arg1: i32, %arg2: i32, %arg3: memref<16x1152xbf16, #tpu.memory_space<vmem>>, %arg4: memref<1152x256xbf16, #tpu.memory_space<vmem>>, %arg5: memref<16x256xf32, #tpu.memory_space<vmem>>, %arg6: memref<16x256xf32, #tpu.memory_space<vmem>>) attributes {dimension_semantics = [#tpu.dimension_semantics<parallel>, #tpu.dimension_semantics<parallel>, #tpu.dimension_semantics<arbitrary>], iteration_bounds = array<i64: 1, 1, 1>, scalar_prefetch = 0 : i64, scratch_operands = 1 : i64, tpu.core_type = #tpu.core_type<tc>, window_params = [{transform_indices = @transform_0, window_bounds = array<i64: 16, 1152>}, {transform_indices = @transform_1, window_bounds = array<i64: 1152, 256>}, {transform_indices = @transform_2, window_bounds = array<i64: 16, 256>}]} {
    %c0_i32 = arith.constant 0 : i32
    %0 = arith.cmpi eq, %arg2, %c0_i32 : i32
    %1 = arith.extui %0 : i1 to i32
    %c0_i32_0 = arith.constant 0 : i32
    %2 = arith.cmpi ne, %1, %c0_i32_0 : i32
    scf.if %2 {
      %cst_10 = arith.constant 0.000000e+00 : f32
      %12 = vector.broadcast %cst_10 : f32 to vector<16x256xf32>
      %c0_11 = arith.constant 0 : index
      %c0_12 = arith.constant 0 : index
      %13 = vector.load %arg6[%c0_11, %c0_12] : memref<16x256xf32, #tpu.memory_space<vmem>>, vector<16x256xf32>
      tpu.vector_store %arg6[%c0_11, %c0_12], %12 {strides = array<i32>} : memref<16x256xf32, #tpu.memory_space<vmem>>, vector<16x256xf32>,
    } else {
    }
    %c0 = arith.constant 0 : index
    %c0_1 = arith.constant 0 : index
    %3 = vector.load %arg6[%c0, %c0_1] : memref<16x256xf32, #tpu.memory_space<vmem>>, vector<16x256xf32>
    %c0_2 = arith.constant 0 : index
    %c0_3 = arith.constant 0 : index
    %4 = vector.load %arg3[%c0_2, %c0_3] : memref<16x1152xbf16, #tpu.memory_space<vmem>>, vector<16x1152xbf16>
    %c0_4 = arith.constant 0 : index
    %c0_5 = arith.constant 0 : index
    %5 = vector.load %arg4[%c0_4, %c0_5] : memref<1152x256xbf16, #tpu.memory_space<vmem>>, vector<1152x256xbf16>
    %cst = arith.constant dense<0.000000e+00> : vector<16x256xf32>
    %6 = tpu.matmul %4, %5, %cst {dimension_numbers = #tpu.dot_dimension_numbers<[1], [0], [0], [1], [0, 0, 1, 1], [], []>} : vector<16x1152xbf16>, vector<1152x256xbf16>, vector<16x256xf32> -> vector<16x256xf32>
    %7 = arith.addf %3, %6 : vector<16x256xf32>
    %c0_6 = arith.constant 0 : index
    %c0_7 = arith.constant 0 : index
    %8 = vector.load %arg6[%c0_6, %c0_7] : memref<16x256xf32, #tpu.memory_space<vmem>>, vector<16x256xf32>
    tpu.vector_store %arg6[%c0_6, %c0_7], %7 {strides = array<i32>} : memref<16x256xf32, #tpu.memory_space<vmem>>, vector<16x256xf32>,
    %c0_i32_8 = arith.constant 0 : i32
    %9 = arith.cmpi eq, %arg2, %c0_i32_8 : i32
    %10 = arith.extui %9 : i1 to i32
    %c0_i32_9 = arith.constant 0 : i32
    %11 = arith.cmpi ne, %10, %c0_i32_9 : i32
    scf.if %11 {
      %c0_10 = arith.constant 0 : index
      %c0_11 = arith.constant 0 : index
      %12 = vector.load %arg6[%c0_10, %c0_11] : memref<16x256xf32, #tpu.memory_space<vmem>>, vector<16x256xf32>
      %c0_12 = arith.constant 0 : index
      %c0_13 = arith.constant 0 : index
      %13 = vector.load %arg5[%c0_12, %c0_13] : memref<16x256xf32, #tpu.memory_space<vmem>>, vector<16x256xf32>
      tpu.vector_store %arg5[%c0_12, %c0_13], %12 {strides = array<i32>} : memref<16x256xf32, #tpu.memory_space<vmem>>, vector<16x256xf32>,
    } else {
    }
    return
  }
  func.func @transform_0(%arg0: i32, %arg1: i32, %arg2: i32) -> (i32, i32) {
    %c0_i32 = arith.constant 0 : i32
    return %arg0, %arg2 : i32, i32
  }
  func.func @transform_1(%arg0: i32, %arg1: i32, %arg2: i32) -> (i32, i32) {
    %c0_i32 = arith.constant 0 : i32
    return %arg2, %arg1 : i32, i32
  }
  func.func @transform_2(%arg0: i32, %arg1: i32, %arg2: i32) -> (i32, i32) {
    %c0_i32 = arith.constant 0 : i32
    return %arg0, %arg1 : i32, i32
  }
}

module attributes {stable_mosaic.version = 11 : i64} {
  func.func @_matmul_kernel(%arg0: i32, %arg1: i32, %arg2: i32, %arg3: memref<16x128xbf16, #tpu.memory_space<vmem>>, %arg4: memref<128x256xbf16, #tpu.memory_space<vmem>>, %arg5: memref<16x256xf32, #tpu.memory_space<vmem>>, %arg6: memref<16x256xf32, #tpu.memory_space<vmem>>) attributes {dimension_semantics = [#tpu.dimension_semantics<parallel>, #tpu.dimension_semantics<parallel>, #tpu.dimension_semantics<arbitrary>], iteration_bounds = array<i64: 1, 1, 1>, scalar_prefetch = 0 : i64, scratch_operands = 1 : i64, tpu.core_type = #tpu.core_type<tc>, window_params = [{transform_indices = @transform_0, window_bounds = array<i64: 16, 128>}, {transform_indices = @transform_1, window_bounds = array<i64: 128, 256>}, {transform_indices = @transform_2, window_bounds = array<i64: 16, 256>}]} {
    %c0_i32 = arith.constant 0 : i32
    %0 = arith.cmpi eq, %arg2, %c0_i32 : i32
    %1 = arith.extui %0 : i1 to i32
    %c0_i32_0 = arith.constant 0 : i32
    %2 = arith.cmpi ne, %1, %c0_i32_0 : i32
    scf.if %2 {
      %cst_10 = arith.constant 0.000000e+00 : f32
      %12 = vector.broadcast %cst_10 : f32 to vector<16x256xf32>
      %c0_11 = arith.constant 0 : index
      %c0_12 = arith.constant 0 : index
      %13 = vector.load %arg6[%c0_11, %c0_12] : memref<16x256xf32, #tpu.memory_space<vmem>>, vector<16x256xf32>
      tpu.vector_store %arg6[%c0_11, %c0_12], %12 {strides = array<i32>} : memref<16x256xf32, #tpu.memory_space<vmem>>, vector<16x256xf32>,
    } else {
    }
    %c0 = arith.constant 0 : index
    %c0_1 = arith.constant 0 : index
    %3 = vector.load %arg6[%c0, %c0_1] : memref<16x256xf32, #tpu.memory_space<vmem>>, vector<16x256xf32>
    %c0_2 = arith.constant 0 : index
    %c0_3 = arith.constant 0 : index
    %4 = vector.load %arg3[%c0_2, %c0_3] : memref<16x128xbf16, #tpu.memory_space<vmem>>, vector<16x128xbf16>
    %c0_4 = arith.constant 0 : index
    %c0_5 = arith.constant 0 : index
    %5 = vector.load %arg4[%c0_4, %c0_5] : memref<128x256xbf16, #tpu.memory_space<vmem>>, vector<128x256xbf16>
    %cst = arith.constant dense<0.000000e+00> : vector<16x256xf32>
    %6 = tpu.matmul %4, %5, %cst {dimension_numbers = #tpu.dot_dimension_numbers<[1], [0], [0], [1], [0, 0, 1, 1], [], []>} : vector<16x128xbf16>, vector<128x256xbf16>, vector<16x256xf32> -> vector<16x256xf32>
    %7 = arith.addf %3, %6 : vector<16x256xf32>
    %c0_6 = arith.constant 0 : index
    %c0_7 = arith.constant 0 : index
    %8 = vector.load %arg6[%c0_6, %c0_7] : memref<16x256xf32, #tpu.memory_space<vmem>>, vector<16x256xf32>
    tpu.vector_store %arg6[%c0_6, %c0_7], %7 {strides = array<i32>} : memref<16x256xf32, #tpu.memory_space<vmem>>, vector<16x256xf32>,
    %c0_i32_8 = arith.constant 0 : i32
    %9 = arith.cmpi eq, %arg2, %c0_i32_8 : i32
    %10 = arith.extui %9 : i1 to i32
    %c0_i32_9 = arith.constant 0 : i32
    %11 = arith.cmpi ne, %10, %c0_i32_9 : i32
    scf.if %11 {
      %c0_10 = arith.constant 0 : index
      %c0_11 = arith.constant 0 : index
      %12 = vector.load %arg6[%c0_10, %c0_11] : memref<16x256xf32, #tpu.memory_space<vmem>>, vector<16x256xf32>
      %c0_12 = arith.constant 0 : index
      %c0_13 = arith.constant 0 : index
      %13 = vector.load %arg5[%c0_12, %c0_13] : memref<16x256xf32, #tpu.memory_space<vmem>>, vector<16x256xf32>
      tpu.vector_store %arg5[%c0_12, %c0_13], %12 {strides = array<i32>} : memref<16x256xf32, #tpu.memory_space<vmem>>, vector<16x256xf32>,
    } else {
    }
    return
  }
  func.func @transform_0(%arg0: i32, %arg1: i32, %arg2: i32) -> (i32, i32) {
    %c0_i32 = arith.constant 0 : i32
    return %arg0, %arg2 : i32, i32
  }
  func.func @transform_1(%arg0: i32, %arg1: i32, %arg2: i32) -> (i32, i32) {
    %c0_i32 = arith.constant 0 : i32
    return %arg2, %arg1 : i32, i32
  }
  func.func @transform_2(%arg0: i32, %arg1: i32, %arg2: i32) -> (i32, i32) {
    %c0_i32 = arith.constant 0 : i32
    return %arg0, %arg1 : i32, i32
  }
}

module attributes {stable_mosaic.version = 11 : i64} {
  func.func @_bn_stats_kernel(%arg0: i32, %arg1: memref<8x256xf32, #tpu.memory_space<vmem>>, %arg2: memref<1x256xf32, #tpu.memory_space<vmem>>, %arg3: memref<1x256xf32, #tpu.memory_space<vmem>>) attributes {dimension_semantics = [#tpu.dimension_semantics<arbitrary>], iteration_bounds = array<i64: 1>, scalar_prefetch = 0 : i64, scratch_operands = 0 : i64, tpu.core_type = #tpu.core_type<tc>, window_params = [{transform_indices = @transform_0, window_bounds = array<i64: 8, 256>}, {pipeline_mode = #tpu.pipeline_mode<synchronous>, transform_indices = @transform_1, window_bounds = array<i64: 1, 256>}, {pipeline_mode = #tpu.pipeline_mode<synchronous>, transform_indices = @transform_2, window_bounds = array<i64: 1, 256>}]} {
    %c0_i32 = arith.constant 0 : i32
    %0 = arith.cmpi eq, %arg0, %c0_i32 : i32
    %1 = arith.extui %0 : i1 to i32
    %c0_i32_0 = arith.constant 0 : i32
    %2 = arith.cmpi ne, %1, %c0_i32_0 : i32
    scf.if %2 {
      %cst_11 = arith.constant 0.000000e+00 : f32
      %15 = vector.broadcast %cst_11 : f32 to vector<1x256xf32>
      %c0_12 = arith.constant 0 : index
      %c0_13 = arith.constant 0 : index
      %16 = vector.load %arg2[%c0_12, %c0_13] : memref<1x256xf32, #tpu.memory_space<vmem>>, vector<1x256xf32>
      tpu.vector_store %arg2[%c0_12, %c0_13], %15 {strides = array<i32>} : memref<1x256xf32, #tpu.memory_space<vmem>>, vector<1x256xf32>,
      %cst_14 = arith.constant 0.000000e+00 : f32
      %17 = vector.broadcast %cst_14 : f32 to vector<1x256xf32>
      %c0_15 = arith.constant 0 : index
      %c0_16 = arith.constant 0 : index
      %18 = vector.load %arg3[%c0_15, %c0_16] : memref<1x256xf32, #tpu.memory_space<vmem>>, vector<1x256xf32>
      tpu.vector_store %arg3[%c0_15, %c0_16], %17 {strides = array<i32>} : memref<1x256xf32, #tpu.memory_space<vmem>>, vector<1x256xf32>,
    } else {
    }
    %c0 = arith.constant 0 : index
    %c0_1 = arith.constant 0 : index
    %3 = vector.load %arg1[%c0, %c0_1] : memref<8x256xf32, #tpu.memory_space<vmem>>, vector<8x256xf32>
    %c0_2 = arith.constant 0 : index
    %c0_3 = arith.constant 0 : index
    %4 = vector.load %arg2[%c0_2, %c0_3] : memref<1x256xf32, #tpu.memory_space<vmem>>, vector<1x256xf32>
    %cst = arith.constant dense<0.000000e+00> : vector<256xf32>
    %5 = vector.multi_reduction <add>, %3, %cst [0] : vector<8x256xf32> to vector<256xf32>
    %6 = vector.shape_cast %5 : vector<256xf32> to vector<1x256xf32>
    %7 = arith.addf %4, %6 : vector<1x256xf32>
    %c0_4 = arith.constant 0 : index
    %c0_5 = arith.constant 0 : index
    %8 = vector.load %arg2[%c0_4, %c0_5] : memref<1x256xf32, #tpu.memory_space<vmem>>, vector<1x256xf32>
    tpu.vector_store %arg2[%c0_4, %c0_5], %7 {strides = array<i32>} : memref<1x256xf32, #tpu.memory_space<vmem>>, vector<1x256xf32>,
    %c0_6 = arith.constant 0 : index
    %c0_7 = arith.constant 0 : index
    %9 = vector.load %arg3[%c0_6, %c0_7] : memref<1x256xf32, #tpu.memory_space<vmem>>, vector<1x256xf32>
    %10 = arith.mulf %3, %3 : vector<8x256xf32>
    %cst_8 = arith.constant dense<0.000000e+00> : vector<256xf32>
    %11 = vector.multi_reduction <add>, %10, %cst_8 [0] : vector<8x256xf32> to vector<256xf32>
    %12 = vector.shape_cast %11 : vector<256xf32> to vector<1x256xf32>
    %13 = arith.addf %9, %12 : vector<1x256xf32>
    %c0_9 = arith.constant 0 : index
    %c0_10 = arith.constant 0 : index
    %14 = vector.load %arg3[%c0_9, %c0_10] : memref<1x256xf32, #tpu.memory_space<vmem>>, vector<1x256xf32>
    tpu.vector_store %arg3[%c0_9, %c0_10], %13 {strides = array<i32>} : memref<1x256xf32, #tpu.memory_space<vmem>>, vector<1x256xf32>,
    return
  }
  func.func @transform_0(%arg0: i32) -> (i32, i32) {
    %c0_i32 = arith.constant 0 : i32
    %c0_i32_0 = arith.constant 0 : i32
    return %arg0, %c0_i32 : i32, i32
  }
  func.func @transform_1(%arg0: i32) -> (i32, i32) {
    %c0_i32 = arith.constant 0 : i32
    %c0_i32_0 = arith.constant 0 : i32
    %c0_i32_1 = arith.constant 0 : i32
    return %c0_i32, %c0_i32_0 : i32, i32
  }
  func.func @transform_2(%arg0: i32) -> (i32, i32) {
    %c0_i32 = arith.constant 0 : i32
    %c0_i32_0 = arith.constant 0 : i32
    %c0_i32_1 = arith.constant 0 : i32
    return %c0_i32, %c0_i32_0 : i32, i32
  }
}

module attributes {stable_mosaic.version = 11 : i64} {
  func.func @_bn_apply_kernel(%arg0: i32, %arg1: memref<8x256xf32, #tpu.memory_space<vmem>>, %arg2: memref<1x256xf32, #tpu.memory_space<vmem>>, %arg3: memref<1x256xf32, #tpu.memory_space<vmem>>, %arg4: memref<8x256xf32, #tpu.memory_space<vmem>>) attributes {dimension_semantics = [#tpu.dimension_semantics<parallel>], iteration_bounds = array<i64: 1>, scalar_prefetch = 0 : i64, scratch_operands = 0 : i64, tpu.core_type = #tpu.core_type<tc>, window_params = [{transform_indices = @transform_0, window_bounds = array<i64: 8, 256>}, {pipeline_mode = #tpu.pipeline_mode<synchronous>, transform_indices = @transform_1, window_bounds = array<i64: 1, 256>}, {pipeline_mode = #tpu.pipeline_mode<synchronous>, transform_indices = @transform_2, window_bounds = array<i64: 1, 256>}, {transform_indices = @transform_3, window_bounds = array<i64: 8, 256>}]} {
    %c0 = arith.constant 0 : index
    %c0_0 = arith.constant 0 : index
    %0 = vector.load %arg1[%c0, %c0_0] : memref<8x256xf32, #tpu.memory_space<vmem>>, vector<8x256xf32>
    %c0_1 = arith.constant 0 : index
    %c0_2 = arith.constant 0 : index
    %1 = vector.load %arg2[%c0_1, %c0_2] : memref<1x256xf32, #tpu.memory_space<vmem>>, vector<1x256xf32>
    %2 = vector.broadcast %1 : vector<1x256xf32> to vector<8x256xf32>
    %3 = arith.mulf %0, %2 : vector<8x256xf32>
    %c0_3 = arith.constant 0 : index
    %c0_4 = arith.constant 0 : index
    %4 = vector.load %arg3[%c0_3, %c0_4] : memref<1x256xf32, #tpu.memory_space<vmem>>, vector<1x256xf32>
    %5 = vector.broadcast %4 : vector<1x256xf32> to vector<8x256xf32>
    %6 = arith.addf %3, %5 : vector<8x256xf32>
    %c0_5 = arith.constant 0 : index
    %c0_6 = arith.constant 0 : index
    %7 = vector.load %arg4[%c0_5, %c0_6] : memref<8x256xf32, #tpu.memory_space<vmem>>, vector<8x256xf32>
    tpu.vector_store %arg4[%c0_5, %c0_6], %6 {strides = array<i32>} : memref<8x256xf32, #tpu.memory_space<vmem>>, vector<8x256xf32>,
    return
  }
  func.func @transform_0(%arg0: i32) -> (i32, i32) {
    %c0_i32 = arith.constant 0 : i32
    %c0_i32_0 = arith.constant 0 : i32
    return %arg0, %c0_i32 : i32, i32
  }
  func.func @transform_1(%arg0: i32) -> (i32, i32) {
    %c0_i32 = arith.constant 0 : i32
    %c0_i32_0 = arith.constant 0 : i32
    %c0_i32_1 = arith.constant 0 : i32
    return %c0_i32, %c0_i32_0 : i32, i32
  }
  func.func @transform_2(%arg0: i32) -> (i32, i32) {
    %c0_i32 = arith.constant 0 : i32
    %c0_i32_0 = arith.constant 0 : i32
    %c0_i32_1 = arith.constant 0 : i32
    return %c0_i32, %c0_i32_0 : i32, i32
  }
  func.func @transform_3(%arg0: i32) -> (i32, i32) {
    %c0_i32 = arith.constant 0 : i32
    %c0_i32_0 = arith.constant 0 : i32
    return %arg0, %c0_i32 : i32, i32
  }
}

module attributes {stable_mosaic.version = 11 : i64} {
  func.func @_bn_apply_kernel(%arg0: i32, %arg1: memref<8x256xf32, #tpu.memory_space<vmem>>, %arg2: memref<1x256xf32, #tpu.memory_space<vmem>>, %arg3: memref<1x256xf32, #tpu.memory_space<vmem>>, %arg4: memref<8x256xf32, #tpu.memory_space<vmem>>) attributes {dimension_semantics = [#tpu.dimension_semantics<parallel>], iteration_bounds = array<i64: 1>, scalar_prefetch = 0 : i64, scratch_operands = 0 : i64, tpu.core_type = #tpu.core_type<tc>, window_params = [{transform_indices = @transform_0, window_bounds = array<i64: 8, 256>}, {pipeline_mode = #tpu.pipeline_mode<synchronous>, transform_indices = @transform_1, window_bounds = array<i64: 1, 256>}, {pipeline_mode = #tpu.pipeline_mode<synchronous>, transform_indices = @transform_2, window_bounds = array<i64: 1, 256>}, {transform_indices = @transform_3, window_bounds = array<i64: 8, 256>}]} {
    %c0 = arith.constant 0 : index
    %c0_0 = arith.constant 0 : index
    %0 = vector.load %arg1[%c0, %c0_0] : memref<8x256xf32, #tpu.memory_space<vmem>>, vector<8x256xf32>
    %c0_1 = arith.constant 0 : index
    %c0_2 = arith.constant 0 : index
    %1 = vector.load %arg2[%c0_1, %c0_2] : memref<1x256xf32, #tpu.memory_space<vmem>>, vector<1x256xf32>
    %2 = vector.broadcast %1 : vector<1x256xf32> to vector<8x256xf32>
    %3 = arith.mulf %0, %2 : vector<8x256xf32>
    %c0_3 = arith.constant 0 : index
    %c0_4 = arith.constant 0 : index
    %4 = vector.load %arg3[%c0_3, %c0_4] : memref<1x256xf32, #tpu.memory_space<vmem>>, vector<1x256xf32>
    %5 = vector.broadcast %4 : vector<1x256xf32> to vector<8x256xf32>
    %6 = arith.addf %3, %5 : vector<8x256xf32>
    %cst = arith.constant 0.000000e+00 : f32
    %7 = vector.broadcast %cst : f32 to vector<8x256xf32>
    %8 = arith.maximumf %6, %7 : vector<8x256xf32>
    %c0_5 = arith.constant 0 : index
    %c0_6 = arith.constant 0 : index
    %9 = vector.load %arg4[%c0_5, %c0_6] : memref<8x256xf32, #tpu.memory_space<vmem>>, vector<8x256xf32>
    tpu.vector_store %arg4[%c0_5, %c0_6], %8 {strides = array<i32>} : memref<8x256xf32, #tpu.memory_space<vmem>>, vector<8x256xf32>,
    return
  }
  func.func @transform_0(%arg0: i32) -> (i32, i32) {
    %c0_i32 = arith.constant 0 : i32
    %c0_i32_0 = arith.constant 0 : i32
    return %arg0, %c0_i32 : i32, i32
  }
  func.func @transform_1(%arg0: i32) -> (i32, i32) {
    %c0_i32 = arith.constant 0 : i32
    %c0_i32_0 = arith.constant 0 : i32
    %c0_i32_1 = arith.constant 0 : i32
    return %c0_i32, %c0_i32_0 : i32, i32
  }
  func.func @transform_2(%arg0: i32) -> (i32, i32) {
    %c0_i32 = arith.constant 0 : i32
    %c0_i32_0 = arith.constant 0 : i32
    %c0_i32_1 = arith.constant 0 : i32
    return %c0_i32, %c0_i32_0 : i32, i32
  }
  func.func @transform_3(%arg0: i32) -> (i32, i32) {
    %c0_i32 = arith.constant 0 : i32
    %c0_i32_0 = arith.constant 0 : i32
    return %arg0, %c0_i32 : i32, i32
  }
}

module attributes {stable_mosaic.version = 11 : i64} {
  func.func @_matmul_kernel(%arg0: i32, %arg1: i32, %arg2: i32, %arg3: memref<16x512xbf16, #tpu.memory_space<vmem>>, %arg4: memref<512x256xbf16, #tpu.memory_space<vmem>>, %arg5: memref<16x256xf32, #tpu.memory_space<vmem>>, %arg6: memref<16x256xf32, #tpu.memory_space<vmem>>) attributes {dimension_semantics = [#tpu.dimension_semantics<parallel>, #tpu.dimension_semantics<parallel>, #tpu.dimension_semantics<arbitrary>], iteration_bounds = array<i64: 1, 1, 5>, scalar_prefetch = 0 : i64, scratch_operands = 1 : i64, tpu.core_type = #tpu.core_type<tc>, window_params = [{transform_indices = @transform_0, window_bounds = array<i64: 16, 512>}, {transform_indices = @transform_1, window_bounds = array<i64: 512, 256>}, {transform_indices = @transform_2, window_bounds = array<i64: 16, 256>}]} {
    %c0_i32 = arith.constant 0 : i32
    %0 = arith.cmpi eq, %arg2, %c0_i32 : i32
    %1 = arith.extui %0 : i1 to i32
    %c0_i32_0 = arith.constant 0 : i32
    %2 = arith.cmpi ne, %1, %c0_i32_0 : i32
    scf.if %2 {
      %cst_9 = arith.constant 0.000000e+00 : f32
      %12 = vector.broadcast %cst_9 : f32 to vector<16x256xf32>
      %c0_10 = arith.constant 0 : index
      %c0_11 = arith.constant 0 : index
      %13 = vector.load %arg6[%c0_10, %c0_11] : memref<16x256xf32, #tpu.memory_space<vmem>>, vector<16x256xf32>
      tpu.vector_store %arg6[%c0_10, %c0_11], %12 {strides = array<i32>} : memref<16x256xf32, #tpu.memory_space<vmem>>, vector<16x256xf32>,
    } else {
    }
    %c0 = arith.constant 0 : index
    %c0_1 = arith.constant 0 : index
    %3 = vector.load %arg6[%c0, %c0_1] : memref<16x256xf32, #tpu.memory_space<vmem>>, vector<16x256xf32>
    %c0_2 = arith.constant 0 : index
    %c0_3 = arith.constant 0 : index
    %4 = vector.load %arg3[%c0_2, %c0_3] : memref<16x512xbf16, #tpu.memory_space<vmem>>, vector<16x512xbf16>
    %c0_4 = arith.constant 0 : index
    %c0_5 = arith.constant 0 : index
    %5 = vector.load %arg4[%c0_4, %c0_5] : memref<512x256xbf16, #tpu.memory_space<vmem>>, vector<512x256xbf16>
    %cst = arith.constant dense<0.000000e+00> : vector<16x256xf32>
    %6 = tpu.matmul %4, %5, %cst {dimension_numbers = #tpu.dot_dimension_numbers<[1], [0], [0], [1], [0, 0, 1, 1], [], []>} : vector<16x512xbf16>, vector<512x256xbf16>, vector<16x256xf32> -> vector<16x256xf32>
    %7 = arith.addf %3, %6 : vector<16x256xf32>
    %c0_6 = arith.constant 0 : index
    %c0_7 = arith.constant 0 : index
    %8 = vector.load %arg6[%c0_6, %c0_7] : memref<16x256xf32, #tpu.memory_space<vmem>>, vector<16x256xf32>
    tpu.vector_store %arg6[%c0_6, %c0_7], %7 {strides = array<i32>} : memref<16x256xf32, #tpu.memory_space<vmem>>, vector<16x256xf32>,
    %c4_i32 = arith.constant 4 : i32
    %9 = arith.cmpi eq, %arg2, %c4_i32 : i32
    %10 = arith.extui %9 : i1 to i32
    %c0_i32_8 = arith.constant 0 : i32
    %11 = arith.cmpi ne, %10, %c0_i32_8 : i32
    scf.if %11 {
      %c0_9 = arith.constant 0 : index
      %c0_10 = arith.constant 0 : index
      %12 = vector.load %arg6[%c0_9, %c0_10] : memref<16x256xf32, #tpu.memory_space<vmem>>, vector<16x256xf32>
      %c0_11 = arith.constant 0 : index
      %c0_12 = arith.constant 0 : index
      %13 = vector.load %arg5[%c0_11, %c0_12] : memref<16x256xf32, #tpu.memory_space<vmem>>, vector<16x256xf32>
      tpu.vector_store %arg5[%c0_11, %c0_12], %12 {strides = array<i32>} : memref<16x256xf32, #tpu.memory_space<vmem>>, vector<16x256xf32>,
    } else {
    }
    return
  }
  func.func @transform_0(%arg0: i32, %arg1: i32, %arg2: i32) -> (i32, i32) {
    %c0_i32 = arith.constant 0 : i32
    return %arg0, %arg2 : i32, i32
  }
  func.func @transform_1(%arg0: i32, %arg1: i32, %arg2: i32) -> (i32, i32) {
    %c0_i32 = arith.constant 0 : i32
    return %arg2, %arg1 : i32, i32
  }
  func.func @transform_2(%arg0: i32, %arg1: i32, %arg2: i32) -> (i32, i32) {
    %c0_i32 = arith.constant 0 : i32
    return %arg0, %arg1 : i32, i32
  }
}

module attributes {stable_mosaic.version = 11 : i64} {
  func.func @_bn_apply_kernel(%arg0: i32, %arg1: memref<8x256xf32, #tpu.memory_space<vmem>>, %arg2: memref<1x256xf32, #tpu.memory_space<vmem>>, %arg3: memref<1x256xf32, #tpu.memory_space<vmem>>, %arg4: memref<8x256xf32, #tpu.memory_space<vmem>>, %arg5: memref<8x256xf32, #tpu.memory_space<vmem>>) attributes {dimension_semantics = [#tpu.dimension_semantics<parallel>], iteration_bounds = array<i64: 1>, scalar_prefetch = 0 : i64, scratch_operands = 0 : i64, tpu.core_type = #tpu.core_type<tc>, window_params = [{transform_indices = @transform_0, window_bounds = array<i64: 8, 256>}, {pipeline_mode = #tpu.pipeline_mode<synchronous>, transform_indices = @transform_1, window_bounds = array<i64: 1, 256>}, {pipeline_mode = #tpu.pipeline_mode<synchronous>, transform_indices = @transform_2, window_bounds = array<i64: 1, 256>}, {transform_indices = @transform_3, window_bounds = array<i64: 8, 256>}, {transform_indices = @transform_4, window_bounds = array<i64: 8, 256>}]} {
    %c0 = arith.constant 0 : index
    %c0_0 = arith.constant 0 : index
    %0 = vector.load %arg1[%c0, %c0_0] : memref<8x256xf32, #tpu.memory_space<vmem>>, vector<8x256xf32>
    %c0_1 = arith.constant 0 : index
    %c0_2 = arith.constant 0 : index
    %1 = vector.load %arg2[%c0_1, %c0_2] : memref<1x256xf32, #tpu.memory_space<vmem>>, vector<1x256xf32>
    %2 = vector.broadcast %1 : vector<1x256xf32> to vector<8x256xf32>
    %3 = arith.mulf %0, %2 : vector<8x256xf32>
    %c0_3 = arith.constant 0 : index
    %c0_4 = arith.constant 0 : index
    %4 = vector.load %arg3[%c0_3, %c0_4] : memref<1x256xf32, #tpu.memory_space<vmem>>, vector<1x256xf32>
    %5 = vector.broadcast %4 : vector<1x256xf32> to vector<8x256xf32>
    %6 = arith.addf %3, %5 : vector<8x256xf32>
    %c0_5 = arith.constant 0 : index
    %c0_6 = arith.constant 0 : index
    %7 = vector.load %arg4[%c0_5, %c0_6] : memref<8x256xf32, #tpu.memory_space<vmem>>, vector<8x256xf32>
    %8 = arith.addf %6, %7 : vector<8x256xf32>
    %cst = arith.constant 0.000000e+00 : f32
    %9 = vector.broadcast %cst : f32 to vector<8x256xf32>
    %10 = arith.maximumf %8, %9 : vector<8x256xf32>
    %c0_7 = arith.constant 0 : index
    %c0_8 = arith.constant 0 : index
    %11 = vector.load %arg5[%c0_7, %c0_8] : memref<8x256xf32, #tpu.memory_space<vmem>>, vector<8x256xf32>
    tpu.vector_store %arg5[%c0_7, %c0_8], %10 {strides = array<i32>} : memref<8x256xf32, #tpu.memory_space<vmem>>, vector<8x256xf32>,
    return
  }
  func.func @transform_0(%arg0: i32) -> (i32, i32) {
    %c0_i32 = arith.constant 0 : i32
    %c0_i32_0 = arith.constant 0 : i32
    return %arg0, %c0_i32 : i32, i32
  }
  func.func @transform_1(%arg0: i32) -> (i32, i32) {
    %c0_i32 = arith.constant 0 : i32
    %c0_i32_0 = arith.constant 0 : i32
    %c0_i32_1 = arith.constant 0 : i32
    return %c0_i32, %c0_i32_0 : i32, i32
  }
  func.func @transform_2(%arg0: i32) -> (i32, i32) {
    %c0_i32 = arith.constant 0 : i32
    %c0_i32_0 = arith.constant 0 : i32
    %c0_i32_1 = arith.constant 0 : i32
    return %c0_i32, %c0_i32_0 : i32, i32
  }
  func.func @transform_3(%arg0: i32) -> (i32, i32) {
    %c0_i32 = arith.constant 0 : i32
    %c0_i32_0 = arith.constant 0 : i32
    return %arg0, %c0_i32 : i32, i32
  }
  func.func @transform_4(%arg0: i32) -> (i32, i32) {
    %c0_i32 = arith.constant 0 : i32
    %c0_i32_0 = arith.constant 0 : i32
    return %arg0, %c0_i32 : i32, i32
  }
}

</mosaic_0001>

<llo_original>
// kernel: _lambda_.28
$region0: #{_lambda_.28}
  #allocation0 [shape = 'u32[]', space=smem, size = 0x4, offset = 0x4, fixed_abs, tag = 'smem constant byte address 0x4 - core index']
  #allocation1 [shape = 'u32[72,128]{1,0:T(1,128)}', space=vmem, size = 0x9000, scoped, tag = 'internal scratch']
  %s0 = inlined_call_operand.vmem [shape: f32[128,64], index: 0, kind: input, shape index: {}]
  %s1 = inlined_call_operand.vmem [shape: f32[1,64], index: 1, kind: output, shape index: {0}]
  %s2 = inlined_call_operand.vmem [shape: f32[1,64], index: 2, kind: output, shape index: {1}]
  %3 = xla_tuple %s1, %s2
  %s4 = sld [smem:[#allocation0]]
  $region26: #{_lambda_.28} parent=0
    _
  %s6 = ssub.s32 1, %s4
  %s7 = scalar_select 0, %s6, %s4
  // Predicated region
  $region2: #{_lambda_.28} parent=0 // pred_check
    _
  $region3: #{_lambda_.28} parent=0 // pred_check_branch
    %9 = sbr.rel (0) target = $region5
  $region4: #{_lambda_.28} parent=0 // pred_region
    _
  $region5: #{_lambda_.28} parent=0 // pred_fallthru
    _
  %p10 = scmp.eq.s32.totalorder 0, 0
  // Predicated region
  $region6: #{_lambda_.28} parent=0 // pred_check
    %p11 = pneg %p10
  $region7: #{_lambda_.28} parent=0 // pred_check_branch
    %13 = sbr.rel (%p11) target = $region9
  $region8: #{_lambda_.28} parent=0 // pred_region
    %vm14 = vcmask 516096
    %15 = vst.msk [vmem:[%s1] sm:$0x1] %vm14, 0.0
    %16 = vst.msk [vmem:[%s2] sm:$0x1] %vm14, 0.0
  $region9: #{_lambda_.28} parent=0 // pred_fallthru
    _
  %v17 = vld [vmem:[%s0] sm:$0xff]
  %v18 = vld [vmem:[%s0 + $0x8] sm:$0xff]
  %v19 = vld [vmem:[%s0 + $0x10] sm:$0xff]
  %v20 = vld [vmem:[%s0 + $0x18] sm:$0xff]
  %v21 = vld [vmem:[%s0 + $0x20] sm:$0xff]
  %v22 = vld [vmem:[%s0 + $0x28] sm:$0xff]
  %v23 = vld [vmem:[%s0 + $0x30] sm:$0xff]
  %v24 = vld [vmem:[%s0 + $0x38] sm:$0xff]
  %v25 = vld [vmem:[%s0 + $0x40] sm:$0xff]
  %v26 = vld [vmem:[%s0 + $0x48] sm:$0xff]
  %v27 = vld [vmem:[%s0 + $0x50] sm:$0xff]
  %v28 = vld [vmem:[%s0 + $0x58] sm:$0xff]
  %v29 = vld [vmem:[%s0 + $0x60] sm:$0xff]
  %v30 = vld [vmem:[%s0 + $0x68] sm:$0xff]
  %v31 = vld [vmem:[%s0 + $0x70] sm:$0xff]
  %v32 = vld [vmem:[%s0 + $0x78] sm:$0xff]
  %v33 = vld [vmem:[%s1] sm:$0x1]
  %vm34 = vcmask 523264
  %v35 = vsel %vm34, %v17, 0.0
  %v36 = vsel %vm34, %v18, 0.0
  %v37 = vadd.f32 %v35, %v36
  %v38 = vsel %vm34, %v19, 0.0
  %v39 = vadd.f32 %v37, %v38
  %v40 = vsel %vm34, %v20, 0.0
  %v41 = vadd.f32 %v39, %v40
  %v42 = vsel %vm34, %v21, 0.0
  %v43 = vadd.f32 %v41, %v42
  %v44 = vsel %vm34, %v22, 0.0
  %v45 = vadd.f32 %v43, %v44
  %v46 = vsel %vm34, %v23, 0.0
  %v47 = vadd.f32 %v45, %v46
  %v48 = vsel %vm34, %v24, 0.0
  %v49 = vadd.f32 %v47, %v48
  %v50 = vsel %vm34, %v25, 0.0
  %v51 = vadd.f32 %v49, %v50
  %v52 = vsel %vm34, %v26, 0.0
  %v53 = vadd.f32 %v51, %v52
  %v54 = vsel %vm34, %v27, 0.0
  %v55 = vadd.f32 %v53, %v54
  %v56 = vsel %vm34, %v28, 0.0
  %v57 = vadd.f32 %v55, %v56
  %v58 = vsel %vm34, %v29, 0.0
  %v59 = vadd.f32 %v57, %v58
  %v60 = vsel %vm34, %v30, 0.0
  %v61 = vadd.f32 %v59, %v60
  %v62 = vsel %vm34, %v31, 0.0
  %v63 = vadd.f32 %v61, %v62
  %v64 = vsel %vm34, %v32, 0.0
  %v65 = vadd.f32 %v63, %v64
  %v66 = vrot.slane %v65, 4
  %v67 = vadd.f32 %v65, %v66
  %v68 = vrot.slane %v67, 2
  %v69 = vadd.f32 %v67, %v68
  %v70 = vrot.slane %v69, 1
  %v71 = vadd.f32 %v69, %v70
  %v72 = vadd.f32 %v33, %v71
  %vm73 = vcmask 516096
  %74 = vst.msk [vmem:[%s1] sm:$0x1] %vm73, %v72
  %v75 = vld [vmem:[%s2] sm:$0x1]
  %v76 = vmul.f32 %v17, %v17
  %v77 = vmul.f32 %v18, %v18
  %v78 = vmul.f32 %v19, %v19
  %v79 = vmul.f32 %v20, %v20
  %v80 = vmul.f32 %v21, %v21
  %v81 = vmul.f32 %v22, %v22
  %v82 = vmul.f32 %v23, %v23
  %v83 = vmul.f32 %v24, %v24
  %v84 = vmul.f32 %v25, %v25
  %v85 = vmul.f32 %v26, %v26
  %v86 = vmul.f32 %v27, %v27
  %v87 = vmul.f32 %v28, %v28
  %v88 = vmul.f32 %v29, %v29
  %v89 = vmul.f32 %v30, %v30
  %v90 = vmul.f32 %v31, %v31
  %v91 = vmul.f32 %v32, %v32
  %v92 = vsel %vm34, %v76, 0.0
  %v93 = vsel %vm34, %v77, 0.0
  %v94 = vadd.f32 %v92, %v93
  %v95 = vsel %vm34, %v78, 0.0
  %v96 = vadd.f32 %v94, %v95
  %v97 = vsel %vm34, %v79, 0.0
  %v98 = vadd.f32 %v96, %v97
  %v99 = vsel %vm34, %v80, 0.0
  %v100 = vadd.f32 %v98, %v99
  %v101 = vsel %vm34, %v81, 0.0
  %v102 = vadd.f32 %v100, %v101
  %v103 = vsel %vm34, %v82, 0.0
  %v104 = vadd.f32 %v102, %v103
  %v105 = vsel %vm34, %v83, 0.0
  %v106 = vadd.f32 %v104, %v105
  %v107 = vsel %vm34, %v84, 0.0
  %v108 = vadd.f32 %v106, %v107
  %v109 = vsel %vm34, %v85, 0.0
  %v110 = vadd.f32 %v108, %v109
  %v111 = vsel %vm34, %v86, 0.0
  %v112 = vadd.f32 %v110, %v111
  %v113 = vsel %vm34, %v87, 0.0
  %v114 = vadd.f32 %v112, %v113
  %v115 = vsel %vm34, %v88, 0.0
  %v116 = vadd.f32 %v114, %v115
  %v117 = vsel %vm34, %v89, 0.0
  %v118 = vadd.f32 %v116, %v117
  %v119 = vsel %vm34, %v90, 0.0
  %v120 = vadd.f32 %v118, %v119
  %v121 = vsel %vm34, %v91, 0.0
  %v122 = vadd.f32 %v120, %v121
  %v123 = vrot.slane %v122, 4
  %v124 = vadd.f32 %v122, %v123
  %v125 = vrot.slane %v124, 2
  %v126 = vadd.f32 %v124, %v125
  %v127 = vrot.slane %v126, 1
  %v128 = vadd.f32 %v126, %v127
  %v129 = vadd.f32 %v75, %v128
  %130 = vst.msk [vmem:[%s2] sm:$0x1] %vm73, %v129
  // Predicated region
  $region10: #{_lambda_.28} parent=0 // pred_check
    _
  $region11: #{_lambda_.28} parent=0 // pred_check_branch
    %132 = sbr.rel (0) target = $region13
  $region12: #{_lambda_.28} parent=0 // pred_region
    _
  $region13: #{_lambda_.28} parent=0 // pred_fallthru
    _
  // Predicated region
  $region14: #{_lambda_.28} parent=0 // pred_check
    _
  $region15: #{_lambda_.28} parent=0 // pred_check_branch
    %134 = sbr.rel (0) target = $region17
  $region16: #{_lambda_.28} parent=0 // pred_region
    _
  $region17: #{_lambda_.28} parent=0 // pred_fallthru
    _
  // Predicated region
  $region18: #{_lambda_.28} parent=0 // pred_check
    _
  $region19: #{_lambda_.28} parent=0 // pred_check_branch
    %136 = sbr.rel (0) target = $region21
  $region20: #{_lambda_.28} parent=0 // pred_region
    _
  $region21: #{_lambda_.28} parent=0 // pred_fallthru
    _
  // Predicated region
  $region22: #{_lambda_.28} parent=0 // pred_check
    _
  $region23: #{_lambda_.28} parent=0 // pred_check_branch
    %138 = sbr.rel (0) target = $region25
  $region24: #{_lambda_.28} parent=0 // pred_region
    _
  $region25: #{_lambda_.28} parent=0 // pred_fallthru
    _

// kernel: _lambda_.29
$region0: #{_lambda_.29}
  #allocation0 [shape = 'u32[]', space=smem, size = 0x4, offset = 0x4, fixed_abs, tag = 'smem constant byte address 0x4 - core index']
  #allocation1 [shape = 'u32[72,128]{1,0:T(1,128)}', space=vmem, size = 0x9000, scoped, tag = 'internal scratch']
  %s0 = inlined_call_operand.vmem [shape: f32[128,64], index: 0, kind: input, shape index: {}]
  %s1 = inlined_call_operand.vmem [shape: f32[1,64], index: 1, kind: input, shape index: {}]
  %s2 = inlined_call_operand.vmem [shape: f32[1,64], index: 2, kind: input, shape index: {}]
  %s3 = inlined_call_operand.vmem [shape: f32[128,64], index: 3, kind: output, shape index: {}]
  %s4 = sld [smem:[#allocation0]]
  $region22: #{_lambda_.29} parent=0
    _
  %s6 = ssub.s32 1, %s4
  %s7 = scalar_select 0, %s6, %s4
  // Predicated region
  $region2: #{_lambda_.29} parent=0 // pred_check
    _
  $region3: #{_lambda_.29} parent=0 // pred_check_branch
    %9 = sbr.rel (0) target = $region5
  $region4: #{_lambda_.29} parent=0 // pred_region
    _
  $region5: #{_lambda_.29} parent=0 // pred_fallthru
    _
  // Predicated region
  $region6: #{_lambda_.29} parent=0 // pred_check
    _
  $region7: #{_lambda_.29} parent=0 // pred_check_branch
    %11 = sbr.rel (0) target = $region9
  $region8: #{_lambda_.29} parent=0 // pred_region
    _
  $region9: #{_lambda_.29} parent=0 // pred_fallthru
    _
  // Predicated region
  $region10: #{_lambda_.29} parent=0 // pred_check
    _
  $region11: #{_lambda_.29} parent=0 // pred_check_branch
    %13 = sbr.rel (0) target = $region13
  $region12: #{_lambda_.29} parent=0 // pred_region
    _
  $region13: #{_lambda_.29} parent=0 // pred_fallthru
    _
  %v14 = vld [vmem:[%s0] sm:$0xff]
  %v15 = vld [vmem:[%s0 + $0x8] sm:$0xff]
  %v16 = vld [vmem:[%s0 + $0x10] sm:$0xff]
  %v17 = vld [vmem:[%s0 + $0x18] sm:$0xff]
  %v18 = vld [vmem:[%s0 + $0x20] sm:$0xff]
  %v19 = vld [vmem:[%s0 + $0x28] sm:$0xff]
  %v20 = vld [vmem:[%s0 + $0x30] sm:$0xff]
  %v21 = vld [vmem:[%s0 + $0x38] sm:$0xff]
  %v22 = vld [vmem:[%s0 + $0x40] sm:$0xff]
  %v23 = vld [vmem:[%s0 + $0x48] sm:$0xff]
  %v24 = vld [vmem:[%s0 + $0x50] sm:$0xff]
  %v25 = vld [vmem:[%s0 + $0x58] sm:$0xff]
  %v26 = vld [vmem:[%s0 + $0x60] sm:$0xff]
  %v27 = vld [vmem:[%s0 + $0x68] sm:$0xff]
  %v28 = vld [vmem:[%s0 + $0x70] sm:$0xff]
  %v29 = vld [vmem:[%s0 + $0x78] sm:$0xff]
  %v30 = vld [vmem:[%s1] sm:$0x1]
  %v32 = vperm.slane %v30, 0
  %v34 = vmul.f32 %v14, %v32
  %v35 = vmul.f32 %v15, %v32
  %v36 = vmul.f32 %v16, %v32
  %v37 = vmul.f32 %v17, %v32
  %v38 = vmul.f32 %v18, %v32
  %v39 = vmul.f32 %v19, %v32
  %v40 = vmul.f32 %v20, %v32
  %v41 = vmul.f32 %v21, %v32
  %v42 = vmul.f32 %v22, %v32
  %v43 = vmul.f32 %v23, %v32
  %v44 = vmul.f32 %v24, %v32
  %v45 = vmul.f32 %v25, %v32
  %v46 = vmul.f32 %v26, %v32
  %v47 = vmul.f32 %v27, %v32
  %v48 = vmul.f32 %v28, %v32
  %v49 = vmul.f32 %v29, %v32
  %v50 = vld [vmem:[%s2] sm:$0x1]
  %v52 = vperm.slane %v50, 0
  %v54 = vadd.f32 %v34, %v52
  %v55 = vadd.f32 %v35, %v52
  %v56 = vadd.f32 %v36, %v52
  %v57 = vadd.f32 %v37, %v52
  %v58 = vadd.f32 %v38, %v52
  %v59 = vadd.f32 %v39, %v52
  %v60 = vadd.f32 %v40, %v52
  %v61 = vadd.f32 %v41, %v52
  %v62 = vadd.f32 %v42, %v52
  %v63 = vadd.f32 %v43, %v52
  %v64 = vadd.f32 %v44, %v52
  %v65 = vadd.f32 %v45, %v52
  %v66 = vadd.f32 %v46, %v52
  %v67 = vadd.f32 %v47, %v52
  %v68 = vadd.f32 %v48, %v52
  %v69 = vadd.f32 %v49, %v52
  %v70 = vmax.f32 %v54, 0.0
  %v71 = vmax.f32 %v55, 0.0
  %v72 = vmax.f32 %v56, 0.0
  %v73 = vmax.f32 %v57, 0.0
  %v74 = vmax.f32 %v58, 0.0
  %v75 = vmax.f32 %v59, 0.0
  %v76 = vmax.f32 %v60, 0.0
  %v77 = vmax.f32 %v61, 0.0
  %v78 = vmax.f32 %v62, 0.0
  %v79 = vmax.f32 %v63, 0.0
  %v80 = vmax.f32 %v64, 0.0
  %v81 = vmax.f32 %v65, 0.0
  %v82 = vmax.f32 %v66, 0.0
  %v83 = vmax.f32 %v67, 0.0
  %v84 = vmax.f32 %v68, 0.0
  %v85 = vmax.f32 %v69, 0.0
  %vm86 = vcmask 523264
  %87 = vst.msk [vmem:[%s3] sm:$0xff] %vm86, %v70
  %88 = vst.msk [vmem:[%s3 + $0x8] sm:$0xff] %vm86, %v71
  %89 = vst.msk [vmem:[%s3 + $0x10] sm:$0xff] %vm86, %v72
  %90 = vst.msk [vmem:[%s3 + $0x18] sm:$0xff] %vm86, %v73
  %91 = vst.msk [vmem:[%s3 + $0x20] sm:$0xff] %vm86, %v74
  %92 = vst.msk [vmem:[%s3 + $0x28] sm:$0xff] %vm86, %v75
  %93 = vst.msk [vmem:[%s3 + $0x30] sm:$0xff] %vm86, %v76
  %94 = vst.msk [vmem:[%s3 + $0x38] sm:$0xff] %vm86, %v77
  %95 = vst.msk [vmem:[%s3 + $0x40] sm:$0xff] %vm86, %v78
  %96 = vst.msk [vmem:[%s3 + $0x48] sm:$0xff] %vm86, %v79
  %97 = vst.msk [vmem:[%s3 + $0x50] sm:$0xff] %vm86, %v80
  %98 = vst.msk [vmem:[%s3 + $0x58] sm:$0xff] %vm86, %v81
  %99 = vst.msk [vmem:[%s3 + $0x60] sm:$0xff] %vm86, %v82
  %100 = vst.msk [vmem:[%s3 + $0x68] sm:$0xff] %vm86, %v83
  %101 = vst.msk [vmem:[%s3 + $0x70] sm:$0xff] %vm86, %v84
  %102 = vst.msk [vmem:[%s3 + $0x78] sm:$0xff] %vm86, %v85
  // Predicated region
  $region14: #{_lambda_.29} parent=0 // pred_check
    _
  $region15: #{_lambda_.29} parent=0 // pred_check_branch
    %104 = sbr.rel (0) target = $region17
  $region16: #{_lambda_.29} parent=0 // pred_region
    _
  $region17: #{_lambda_.29} parent=0 // pred_fallthru
    _
  // Predicated region
  $region18: #{_lambda_.29} parent=0 // pred_check
    _
  $region19: #{_lambda_.29} parent=0 // pred_check_branch
    %106 = sbr.rel (0) target = $region21
  $region20: #{_lambda_.29} parent=0 // pred_region
    _
  $region21: #{_lambda_.29} parent=0 // pred_fallthru
    _

// kernel: _lambda_.27
$region0: #{_lambda_.27}
  #allocation0 [shape = 'u32[]', space=smem, size = 0x4, offset = 0x4, fixed_abs, tag = 'smem constant byte address 0x4 - core index']
  #allocation1 [shape = 'u32[72,128]{1,0:T(1,128)}', space=vmem, size = 0x9000, scoped, tag = 'internal scratch']
  #allocation2 [shape = 'f32[128,64]{1,0:T(8,128)}', space=vmem, size = 0x10000, scoped, tag = 'scratch operand']
  %s0 = inlined_call_operand.vmem [shape: bf16[128,27], index: 0, kind: input, shape index: {}]
  %s1 = inlined_call_operand.vmem [shape: bf16[27,64], index: 1, kind: input, shape index: {}]
  %s2 = inlined_call_operand.vmem [shape: f32[128,64], index: 2, kind: output, shape index: {}]
  %s3 = sld [smem:[#allocation0]]
  $region26: #{_lambda_.27} parent=0
    _
  %s5 = ssub.s32 1, %s3
  %s6 = scalar_select 0, %s5, %s3
  // Predicated region
  $region2: #{_lambda_.27} parent=0 // pred_check
    _
  $region3: #{_lambda_.27} parent=0 // pred_check_branch
    %8 = sbr.rel (0) target = $region5
  $region4: #{_lambda_.27} parent=0 // pred_region
    _
  $region5: #{_lambda_.27} parent=0 // pred_fallthru
    _
  // Predicated region
  $region6: #{_lambda_.27} parent=0 // pred_check
    _
  $region7: #{_lambda_.27} parent=0 // pred_check_branch
    %10 = sbr.rel (0) target = $region9
  $region8: #{_lambda_.27} parent=0 // pred_region
    _
  $region9: #{_lambda_.27} parent=0 // pred_fallthru
    _
  %p12 = scmp.eq.s32.totalorder 0, 0
  // Predicated region
  $region10: #{_lambda_.27} parent=0 // pred_check
    %p13 = pneg %p12
  $region11: #{_lambda_.27} parent=0 // pred_check_branch
    %15 = sbr.rel (%p13) target = $region13
  $region12: #{_lambda_.27} parent=0 // pred_region
    %vm16 = vcmask 523264
    %17 = vst.msk [vmem:[#allocation2] sm:$0xff] %vm16, 0.0
    %18 = vst.msk [vmem:[#allocation2 + $0x8] sm:$0xff] %vm16, 0.0
    %19 = vst.msk [vmem:[#allocation2 + $0x10] sm:$0xff] %vm16, 0.0
    %20 = vst.msk [vmem:[#allocation2 + $0x18] sm:$0xff] %vm16, 0.0
    %21 = vst.msk [vmem:[#allocation2 + $0x20] sm:$0xff] %vm16, 0.0
    %22 = vst.msk [vmem:[#allocation2 + $0x28] sm:$0xff] %vm16, 0.0
    %23 = vst.msk [vmem:[#allocation2 + $0x30] sm:$0xff] %vm16, 0.0
    %24 = vst.msk [vmem:[#allocation2 + $0x38] sm:$0xff] %vm16, 0.0
    %25 = vst.msk [vmem:[#allocation2 + $0x40] sm:$0xff] %vm16, 0.0
    %26 = vst.msk [vmem:[#allocation2 + $0x48] sm:$0xff] %vm16, 0.0
    %27 = vst.msk [vmem:[#allocation2 + $0x50] sm:$0xff] %vm16, 0.0
    %28 = vst.msk [vmem:[#allocation2 + $0x58] sm:$0xff] %vm16, 0.0
    %29 = vst.msk [vmem:[#allocation2 + $0x60] sm:$0xff] %vm16, 0.0
    %30 = vst.msk [vmem:[#allocation2 + $0x68] sm:$0xff] %vm16, 0.0
    %31 = vst.msk [vmem:[#allocation2 + $0x70] sm:$0xff] %vm16, 0.0
    %32 = vst.msk [vmem:[#allocation2 + $0x78] sm:$0xff] %vm16, 0.0
  $region13: #{_lambda_.27} parent=0 // pred_fallthru
    _
  %v33 = vld [vmem:[#allocation2] sm:$0xff]
  %v34 = vld [vmem:[#allocation2 + $0x8] sm:$0xff]
  %v35 = vld [vmem:[#allocation2 + $0x10] sm:$0xff]
  %v36 = vld [vmem:[#allocation2 + $0x18] sm:$0xff]
  %v37 = vld [vmem:[#allocation2 + $0x20] sm:$0xff]
  %v38 = vld [vmem:[#allocation2 + $0x28] sm:$0xff]
  %v39 = vld [vmem:[#allocation2 + $0x30] sm:$0xff]
  %v40 = vld [vmem:[#allocation2 + $0x38] sm:$0xff]
  %v41 = vld [vmem:[#allocation2 + $0x40] sm:$0xff]
  %v42 = vld [vmem:[#allocation2 + $0x48] sm:$0xff]
  %v43 = vld [vmem:[#allocation2 + $0x50] sm:$0xff]
  %v44 = vld [vmem:[#allocation2 + $0x58] sm:$0xff]
  %v45 = vld [vmem:[#allocation2 + $0x60] sm:$0xff]
  %v46 = vld [vmem:[#allocation2 + $0x68] sm:$0xff]
  %v47 = vld [vmem:[#allocation2 + $0x70] sm:$0xff]
  %v48 = vld [vmem:[#allocation2 + $0x78] sm:$0xff]
  %v49 = vld [vmem:[%s0] sm:$0xf]
  %v50 = vld [vmem:[%s0 + $0x4] sm:$0xf]
  %v51 = vld [vmem:[%s0 + $0x8] sm:$0xf]
  %v52 = vld [vmem:[%s0 + $0xc] sm:$0xf]
  %v53 = vld [vmem:[%s0 + $0x10] sm:$0xf]
  %v54 = vld [vmem:[%s0 + $0x14] sm:$0xf]
  %v55 = vld [vmem:[%s0 + $0x18] sm:$0xf]
  %v56 = vld [vmem:[%s0 + $0x1c] sm:$0xf]
  %v57 = vld [vmem:[%s0 + $0x20] sm:$0xf]
  %v58 = vld [vmem:[%s0 + $0x24] sm:$0xf]
  %v59 = vld [vmem:[%s0 + $0x28] sm:$0xf]
  %v60 = vld [vmem:[%s0 + $0x2c] sm:$0xf]
  %v61 = vld [vmem:[%s0 + $0x30] sm:$0xf]
  %v62 = vld [vmem:[%s0 + $0x34] sm:$0xf]
  %v63 = vld [vmem:[%s0 + $0x38] sm:$0xf]
  %v64 = vld [vmem:[%s0 + $0x3c] sm:$0xf]
  %v65 = vld [vmem:[%s1] sm:$0xf]
  %v66 = vld [vmem:[%s1 + $0x4] sm:$0xf]
  %v67 = vld [vmem:[%s1 + $0x8] sm:$0xf]
  %v68 = vld [vmem:[%s1 + $0xc] sm:$0x3]
  %v85 = vunpack.c.l.b16 %v49
  %v86 = vunpack.c.l.b16 %v50
  %v87 = vunpack.c.l.b16 %v51
  %v88 = vunpack.c.l.b16 %v52
  %v89 = vunpack.c.l.b16 %v53
  %v90 = vunpack.c.l.b16 %v54
  %v91 = vunpack.c.l.b16 %v55
  %v92 = vunpack.c.l.b16 %v56
  %v93 = vunpack.c.l.b16 %v57
  %v94 = vunpack.c.l.b16 %v58
  %v95 = vunpack.c.l.b16 %v59
  %v96 = vunpack.c.l.b16 %v60
  %v97 = vunpack.c.l.b16 %v61
  %v98 = vunpack.c.l.b16 %v62
  %v99 = vunpack.c.l.b16 %v63
  %v100 = vunpack.c.l.b16 %v64
  %v101 = vpack.c.b16 %v86, %v85
  %v102 = vpack.c.b16 %v88, %v87
  %v103 = vpack.c.b16 %v90, %v89
  %v104 = vpack.c.b16 %v92, %v91
  %v105 = vpack.c.b16 %v94, %v93
  %v106 = vpack.c.b16 %v96, %v95
  %v107 = vpack.c.b16 %v98, %v97
  %v108 = vpack.c.b16 %v100, %v99
  %v113 = vunpack.c.l.b16 %v65
  %v114 = vunpack.c.l.b16 %v66
  %v115 = vunpack.c.l.b16 %v67
  %v116 = vunpack.c.l.b16 %v68
  %v117 = vpack.c.b16 %v114, %v113
  %v118 = vpack.c.b16 %v116, %v115
  %vm120 = vcmask 220160
  %v122 = vsel %vm120, %v101, 0
  %v125 = vsel %vm120, %v102, 0
  %v128 = vsel %vm120, %v103, 0
  %v131 = vsel %vm120, %v104, 0
  %v134 = vsel %vm120, %v105, 0
  %v137 = vsel %vm120, %v106, 0
  %v140 = vsel %vm120, %v107, 0
  %v143 = vsel %vm120, %v108, 0
  %vm145 = vcmask 1044480
  %vm146 = vcmask 1045504
  %v147 = vsel %vm145, 4294967295, 65535
  %v148 = vsel %vm146, %v147, 0
  %v150 = vand.u32 %v118, %v148
  %152 = vmatpush.bf16.msra.mxu0 0
  %153 = vmatpush.bf16.msra.mxu0 0
  %154 = vmatpush.bf16.msra.mxu0 0
  %155 = vmatpush.bf16.msra.mxu0 0
  %156 = vmatpush.bf16.msra.mxu0 0
  %157 = vmatpush.bf16.msra.mxu0 0
  %158 = vmatpush.bf16.msra.mxu0 %v150
  %159 = vmatpush.bf16.msra.mxu0 %v117
  %160 = vmatmul.bf16.gmra.mxu0 %v122
  %v161 = vpop.f32.mrf.mxu0
  %v162 = vadd.f32 0.0, %v161
  %v163 = vpop.f32.mrf.mxu0
  %v164 = vadd.f32 0.0, %v163
  %165 = vmatmul.bf16.gmra.mxu0 %v125
  %v166 = vpop.f32.mrf.mxu0
  %v167 = vadd.f32 0.0, %v166
  %v168 = vpop.f32.mrf.mxu0
  %v169 = vadd.f32 0.0, %v168
  %170 = vmatmul.bf16.gmra.mxu0 %v128
  %v171 = vpop.f32.mrf.mxu0
  %v172 = vadd.f32 0.0, %v171
  %v173 = vpop.f32.mrf.mxu0
  %v174 = vadd.f32 0.0, %v173
  %175 = vmatmul.bf16.gmra.mxu0 %v131
  %v176 = vpop.f32.mrf.mxu0
  %v177 = vadd.f32 0.0, %v176
  %v178 = vpop.f32.mrf.mxu0
  %v179 = vadd.f32 0.0, %v178
  %180 = vmatmul.bf16.gmra.mxu0 %v134
  %v181 = vpop.f32.mrf.mxu0
  %v182 = vadd.f32 0.0, %v181
  %v183 = vpop.f32.mrf.mxu0
  %v184 = vadd.f32 0.0, %v183
  %185 = vmatmul.bf16.gmra.mxu0 %v137
  %v186 = vpop.f32.mrf.mxu0
  %v187 = vadd.f32 0.0, %v186
  %v188 = vpop.f32.mrf.mxu0
  %v189 = vadd.f32 0.0, %v188
  %190 = vmatmul.bf16.gmra.mxu0 %v140
  %v191 = vpop.f32.mrf.mxu0
  %v192 = vadd.f32 0.0, %v191
  %v193 = vpop.f32.mrf.mxu0
  %v194 = vadd.f32 0.0, %v193
  %195 = vmatmul.bf16.gmra.mxu0 %v143
  %v196 = vpop.f32.mrf.mxu0
  %v197 = vadd.f32 0.0, %v196
  %v198 = vpop.f32.mrf.mxu0
  %v199 = vadd.f32 0.0, %v198
  %200 = vdwg.mxu0
  %v201 = vadd.f32 %v33, %v162
  %v202 = vadd.f32 %v34, %v164
  %v203 = vadd.f32 %v35, %v167
  %v204 = vadd.f32 %v36, %v169
  %v205 = vadd.f32 %v37, %v172
  %v206 = vadd.f32 %v38, %v174
  %v207 = vadd.f32 %v39, %v177
  %v208 = vadd.f32 %v40, %v179
  %v209 = vadd.f32 %v41, %v182
  %v210 = vadd.f32 %v42, %v184
  %v211 = vadd.f32 %v43, %v187
  %v212 = vadd.f32 %v44, %v189
  %v213 = vadd.f32 %v45, %v192
  %v214 = vadd.f32 %v46, %v194
  %v215 = vadd.f32 %v47, %v197
  %v216 = vadd.f32 %v48, %v199
  %vm217 = vcmask 523264
  %218 = vst.msk [vmem:[#allocation2] sm:$0xff] %vm217, %v201
  %219 = vst.msk [vmem:[#allocation2 + $0x8] sm:$0xff] %vm217, %v202
  %220 = vst.msk [vmem:[#allocation2 + $0x10] sm:$0xff] %vm217, %v203
  %221 = vst.msk [vmem:[#allocation2 + $0x18] sm:$0xff] %vm217, %v204
  %222 = vst.msk [vmem:[#allocation2 + $0x20] sm:$0xff] %vm217, %v205
  %223 = vst.msk [vmem:[#allocation2 + $0x28] sm:$0xff] %vm217, %v206
  %224 = vst.msk [vmem:[#allocation2 + $0x30] sm:$0xff] %vm217, %v207
  %225 = vst.msk [vmem:[#allocation2 + $0x38] sm:$0xff] %vm217, %v208
  %226 = vst.msk [vmem:[#allocation2 + $0x40] sm:$0xff] %vm217, %v209
  %227 = vst.msk [vmem:[#allocation2 + $0x48] sm:$0xff] %vm217, %v210
  %228 = vst.msk [vmem:[#allocation2 + $0x50] sm:$0xff] %vm217, %v211
  %229 = vst.msk [vmem:[#allocation2 + $0x58] sm:$0xff] %vm217, %v212
  %230 = vst.msk [vmem:[#allocation2 + $0x60] sm:$0xff] %vm217, %v213
  %231 = vst.msk [vmem:[#allocation2 + $0x68] sm:$0xff] %vm217, %v214
  %232 = vst.msk [vmem:[#allocation2 + $0x70] sm:$0xff] %vm217, %v215
  %233 = vst.msk [vmem:[#allocation2 + $0x78] sm:$0xff] %vm217, %v216
  // Predicated region
  $region14: #{_lambda_.27} parent=0 // pred_check
    %p234 = pneg %p12
  $region15: #{_lambda_.27} parent=0 // pred_check_branch
    %236 = sbr.rel (%p234) target = $region17
  $region16: #{_lambda_.27} parent=0 // pred_region
    %v237 = vld [vmem:[#allocation2] sm:$0xff]
    %v238 = vld [vmem:[#allocation2 + $0x8] sm:$0xff]
    %v239 = vld [vmem:[#allocation2 + $0x10] sm:$0xff]
    %v240 = vld [vmem:[#allocation2 + $0x18] sm:$0xff]
    %v241 = vld [vmem:[#allocation2 + $0x20] sm:$0xff]
    %v242 = vld [vmem:[#allocation2 + $0x28] sm:$0xff]
    %v243 = vld [vmem:[#allocation2 + $0x30] sm:$0xff]
    %v244 = vld [vmem:[#allocation2 + $0x38] sm:$0xff]
    %v245 = vld [vmem:[#allocation2 + $0x40] sm:$0xff]
    %v246 = vld [vmem:[#allocation2 + $0x48] sm:$0xff]
    %v247 = vld [vmem:[#allocation2 + $0x50] sm:$0xff]
    %v248 = vld [vmem:[#allocation2 + $0x58] sm:$0xff]
    %v249 = vld [vmem:[#allocation2 + $0x60] sm:$0xff]
    %v250 = vld [vmem:[#allocation2 + $0x68] sm:$0xff]
    %v251 = vld [vmem:[#allocation2 + $0x70] sm:$0xff]
    %v252 = vld [vmem:[#allocation2 + $0x78] sm:$0xff]
    %253 = vst.msk [vmem:[%s2] sm:$0xff] %vm217, %v237
    %254 = vst.msk [vmem:[%s2 + $0x8] sm:$0xff] %vm217, %v238
    %255 = vst.msk [vmem:[%s2 + $0x10] sm:$0xff] %vm217, %v239
    %256 = vst.msk [vmem:[%s2 + $0x18] sm:$0xff] %vm217, %v240
    %257 = vst.msk [vmem:[%s2 + $0x20] sm:$0xff] %vm217, %v241
    %258 = vst.msk [vmem:[%s2 + $0x28] sm:$0xff] %vm217, %v242
    %259 = vst.msk [vmem:[%s2 + $0x30] sm:$0xff] %vm217, %v243
    %260 = vst.msk [vmem:[%s2 + $0x38] sm:$0xff] %vm217, %v244
    %261 = vst.msk [vmem:[%s2 + $0x40] sm:$0xff] %vm217, %v245
    %262 = vst.msk [vmem:[%s2 + $0x48] sm:$0xff] %vm217, %v246
    %263 = vst.msk [vmem:[%s2 + $0x50] sm:$0xff] %vm217, %v247
    %264 = vst.msk [vmem:[%s2 + $0x58] sm:$0xff] %vm217, %v248
    %265 = vst.msk [vmem:[%s2 + $0x60] sm:$0xff] %vm217, %v249
    %266 = vst.msk [vmem:[%s2 + $0x68] sm:$0xff] %vm217, %v250
    %267 = vst.msk [vmem:[%s2 + $0x70] sm:$0xff] %vm217, %v251
    %268 = vst.msk [vmem:[%s2 + $0x78] sm:$0xff] %vm217, %v252
  $region17: #{_lambda_.27} parent=0 // pred_fallthru
    _
  // Predicated region
  $region18: #{_lambda_.27} parent=0 // pred_check
    _
  $region19: #{_lambda_.27} parent=0 // pred_check_branch
    %270 = sbr.rel (0) target = $region21
  $region20: #{_lambda_.27} parent=0 // pred_region
    _
  $region21: #{_lambda_.27} parent=0 // pred_fallthru
    _
  // Predicated region
  $region22: #{_lambda_.27} parent=0 // pred_check
    _
  $region23: #{_lambda_.27} parent=0 // pred_check_branch
    %272 = sbr.rel (0) target = $region25
  $region24: #{_lambda_.27} parent=0 // pred_region
    _
  $region25: #{_lambda_.27} parent=0 // pred_fallthru
    _

// kernel: _lambda_.31
$region0: #{_lambda_.31}
  #allocation0 [shape = 'u32[]', space=smem, size = 0x4, offset = 0x4, fixed_abs, tag = 'smem constant byte address 0x4 - core index']
  #allocation1 [shape = 'u32[72,128]{1,0:T(1,128)}', space=vmem, size = 0x9000, scoped, tag = 'internal scratch']
  %s0 = inlined_call_operand.vmem [shape: f32[32,64], index: 0, kind: input, shape index: {}]
  %s1 = inlined_call_operand.vmem [shape: f32[1,64], index: 1, kind: output, shape index: {0}]
  %s2 = inlined_call_operand.vmem [shape: f32[1,64], index: 2, kind: output, shape index: {1}]
  %3 = xla_tuple %s1, %s2
  %s4 = sld [smem:[#allocation0]]
  $region26: #{_lambda_.31} parent=0
    _
  %s6 = ssub.s32 1, %s4
  %s7 = scalar_select 0, %s6, %s4
  // Predicated region
  $region2: #{_lambda_.31} parent=0 // pred_check
    _
  $region3: #{_lambda_.31} parent=0 // pred_check_branch
    %9 = sbr.rel (0) target = $region5
  $region4: #{_lambda_.31} parent=0 // pred_region
    _
  $region5: #{_lambda_.31} parent=0 // pred_fallthru
    _
  %p10 = scmp.eq.s32.totalorder 0, 0
  // Predicated region
  $region6: #{_lambda_.31} parent=0 // pred_check
    %p11 = pneg %p10
  $region7: #{_lambda_.31} parent=0 // pred_check_branch
    %13 = sbr.rel (%p11) target = $region9
  $region8: #{_lambda_.31} parent=0 // pred_region
    %vm14 = vcmask 516096
    %15 = vst.msk [vmem:[%s1] sm:$0x1] %vm14, 0.0
    %16 = vst.msk [vmem:[%s2] sm:$0x1] %vm14, 0.0
  $region9: #{_lambda_.31} parent=0 // pred_fallthru
    _
  %v17 = vld [vmem:[%s0] sm:$0xff]
  %v18 = vld [vmem:[%s0 + $0x8] sm:$0xff]
  %v19 = vld [vmem:[%s0 + $0x10] sm:$0xff]
  %v20 = vld [vmem:[%s0 + $0x18] sm:$0xff]
  %v21 = vld [vmem:[%s1] sm:$0x1]
  %vm22 = vcmask 523264
  %v23 = vsel %vm22, %v17, 0.0
  %v24 = vsel %vm22, %v18, 0.0
  %v25 = vadd.f32 %v23, %v24
  %v26 = vsel %vm22, %v19, 0.0
  %v27 = vadd.f32 %v25, %v26
  %v28 = vsel %vm22, %v20, 0.0
  %v29 = vadd.f32 %v27, %v28
  %v30 = vrot.slane %v29, 4
  %v31 = vadd.f32 %v29, %v30
  %v32 = vrot.slane %v31, 2
  %v33 = vadd.f32 %v31, %v32
  %v34 = vrot.slane %v33, 1
  %v35 = vadd.f32 %v33, %v34
  %v36 = vadd.f32 %v21, %v35
  %vm37 = vcmask 516096
  %38 = vst.msk [vmem:[%s1] sm:$0x1] %vm37, %v36
  %v39 = vld [vmem:[%s2] sm:$0x1]
  %v40 = vmul.f32 %v17, %v17
  %v41 = vmul.f32 %v18, %v18
  %v42 = vmul.f32 %v19, %v19
  %v43 = vmul.f32 %v20, %v20
  %v44 = vsel %vm22, %v40, 0.0
  %v45 = vsel %vm22, %v41, 0.0
  %v46 = vadd.f32 %v44, %v45
  %v47 = vsel %vm22, %v42, 0.0
  %v48 = vadd.f32 %v46, %v47
  %v49 = vsel %vm22, %v43, 0.0
  %v50 = vadd.f32 %v48, %v49
  %v51 = vrot.slane %v50, 4
  %v52 = vadd.f32 %v50, %v51
  %v53 = vrot.slane %v52, 2
  %v54 = vadd.f32 %v52, %v53
  %v55 = vrot.slane %v54, 1
  %v56 = vadd.f32 %v54, %v55
  %v57 = vadd.f32 %v39, %v56
  %58 = vst.msk [vmem:[%s2] sm:$0x1] %vm37, %v57
  // Predicated region
  $region10: #{_lambda_.31} parent=0 // pred_check
    _
  $region11: #{_lambda_.31} parent=0 // pred_check_branch
    %60 = sbr.rel (0) target = $region13
  $region12: #{_lambda_.31} parent=0 // pred_region
    _
  $region13: #{_lambda_.31} parent=0 // pred_fallthru
    _
  // Predicated region
  $region14: #{_lambda_.31} parent=0 // pred_check
    _
  $region15: #{_lambda_.31} parent=0 // pred_check_branch
    %62 = sbr.rel (0) target = $region17
  $region16: #{_lambda_.31} parent=0 // pred_region
    _
  $region17: #{_lambda_.31} parent=0 // pred_fallthru
    _
  // Predicated region
  $region18: #{_lambda_.31} parent=0 // pred_check
    _
  $region19: #{_lambda_.31} parent=0 // pred_check_branch
    %64 = sbr.rel (0) target = $region21
  $region20: #{_lambda_.31} parent=0 // pred_region
    _
  $region21: #{_lambda_.31} parent=0 // pred_fallthru
    _
  // Predicated region
  $region22: #{_lambda_.31} parent=0 // pred_check
    _
  $region23: #{_lambda_.31} parent=0 // pred_check_branch
    %66 = sbr.rel (0) target = $region25
  $region24: #{_lambda_.31} parent=0 // pred_region
    _
  $region25: #{_lambda_.31} parent=0 // pred_fallthru
    _

// kernel: _lambda_.32
$region0: #{_lambda_.32}
  #allocation0 [shape = 'u32[]', space=smem, size = 0x4, offset = 0x4, fixed_abs, tag = 'smem constant byte address 0x4 - core index']
  #allocation1 [shape = 'u32[72,128]{1,0:T(1,128)}', space=vmem, size = 0x9000, scoped, tag = 'internal scratch']
  %s0 = inlined_call_operand.vmem [shape: f32[32,64], index: 0, kind: input, shape index: {}]
  %s1 = inlined_call_operand.vmem [shape: f32[1,64], index: 1, kind: input, shape index: {}]
  %s2 = inlined_call_operand.vmem [shape: f32[1,64], index: 2, kind: input, shape index: {}]
  %s3 = inlined_call_operand.vmem [shape: f32[32,64], index: 3, kind: output, shape index: {}]
  %s4 = sld [smem:[#allocation0]]
  $region22: #{_lambda_.32} parent=0
    _
  %s6 = ssub.s32 1, %s4
  %s7 = scalar_select 0, %s6, %s4
  // Predicated region
  $region2: #{_lambda_.32} parent=0 // pred_check
    _
  $region3: #{_lambda_.32} parent=0 // pred_check_branch
    %9 = sbr.rel (0) target = $region5
  $region4: #{_lambda_.32} parent=0 // pred_region
    _
  $region5: #{_lambda_.32} parent=0 // pred_fallthru
    _
  // Predicated region
  $region6: #{_lambda_.32} parent=0 // pred_check
    _
  $region7: #{_lambda_.32} parent=0 // pred_check_branch
    %11 = sbr.rel (0) target = $region9
  $region8: #{_lambda_.32} parent=0 // pred_region
    _
  $region9: #{_lambda_.32} parent=0 // pred_fallthru
    _
  // Predicated region
  $region10: #{_lambda_.32} parent=0 // pred_check
    _
  $region11: #{_lambda_.32} parent=0 // pred_check_branch
    %13 = sbr.rel (0) target = $region13
  $region12: #{_lambda_.32} parent=0 // pred_region
    _
  $region13: #{_lambda_.32} parent=0 // pred_fallthru
    _
  %v14 = vld [vmem:[%s0] sm:$0xff]
  %v15 = vld [vmem:[%s0 + $0x8] sm:$0xff]
  %v16 = vld [vmem:[%s0 + $0x10] sm:$0xff]
  %v17 = vld [vmem:[%s0 + $0x18] sm:$0xff]
  %v18 = vld [vmem:[%s1] sm:$0x1]
  %v20 = vperm.slane %v18, 0
  %v22 = vmul.f32 %v14, %v20
  %v23 = vmul.f32 %v15, %v20
  %v24 = vmul.f32 %v16, %v20
  %v25 = vmul.f32 %v17, %v20
  %v26 = vld [vmem:[%s2] sm:$0x1]
  %v28 = vperm.slane %v26, 0
  %v30 = vadd.f32 %v22, %v28
  %v31 = vadd.f32 %v23, %v28
  %v32 = vadd.f32 %v24, %v28
  %v33 = vadd.f32 %v25, %v28
  %v34 = vmax.f32 %v30, 0.0
  %v35 = vmax.f32 %v31, 0.0
  %v36 = vmax.f32 %v32, 0.0
  %v37 = vmax.f32 %v33, 0.0
  %vm38 = vcmask 523264
  %39 = vst.msk [vmem:[%s3] sm:$0xff] %vm38, %v34
  %40 = vst.msk [vmem:[%s3 + $0x8] sm:$0xff] %vm38, %v35
  %41 = vst.msk [vmem:[%s3 + $0x10] sm:$0xff] %vm38, %v36
  %42 = vst.msk [vmem:[%s3 + $0x18] sm:$0xff] %vm38, %v37
  // Predicated region
  $region14: #{_lambda_.32} parent=0 // pred_check
    _
  $region15: #{_lambda_.32} parent=0 // pred_check_branch
    %44 = sbr.rel (0) target = $region17
  $region16: #{_lambda_.32} parent=0 // pred_region
    _
  $region17: #{_lambda_.32} parent=0 // pred_fallthru
    _
  // Predicated region
  $region18: #{_lambda_.32} parent=0 // pred_check
    _
  $region19: #{_lambda_.32} parent=0 // pred_check_branch
    %46 = sbr.rel (0) target = $region21
  $region20: #{_lambda_.32} parent=0 // pred_region
    _
  $region21: #{_lambda_.32} parent=0 // pred_fallthru
    _

// kernel: _lambda_.35
$region0: #{_lambda_.35}
  #allocation0 [shape = 'u32[]', space=smem, size = 0x4, offset = 0x4, fixed_abs, tag = 'smem constant byte address 0x4 - core index']
  #allocation1 [shape = 'u32[72,128]{1,0:T(1,128)}', space=vmem, size = 0x9000, scoped, tag = 'internal scratch']
  %s0 = inlined_call_operand.vmem [shape: f32[32,64], index: 0, kind: input, shape index: {}]
  %s1 = inlined_call_operand.vmem [shape: f32[1,64], index: 1, kind: input, shape index: {}]
  %s2 = inlined_call_operand.vmem [shape: f32[1,64], index: 2, kind: input, shape index: {}]
  %s3 = inlined_call_operand.vmem [shape: f32[32,64], index: 3, kind: input, shape index: {}]
  %s4 = inlined_call_operand.vmem [shape: f32[32,64], index: 4, kind: output, shape index: {}]
  %s5 = sld [smem:[#allocation0]]
  $region26: #{_lambda_.35} parent=0
    _
  %s7 = ssub.s32 1, %s5
  %s8 = scalar_select 0, %s7, %s5
  // Predicated region
  $region2: #{_lambda_.35} parent=0 // pred_check
    _
  $region3: #{_lambda_.35} parent=0 // pred_check_branch
    %10 = sbr.rel (0) target = $region5
  $region4: #{_lambda_.35} parent=0 // pred_region
    _
  $region5: #{_lambda_.35} parent=0 // pred_fallthru
    _
  // Predicated region
  $region6: #{_lambda_.35} parent=0 // pred_check
    _
  $region7: #{_lambda_.35} parent=0 // pred_check_branch
    %12 = sbr.rel (0) target = $region9
  $region8: #{_lambda_.35} parent=0 // pred_region
    _
  $region9: #{_lambda_.35} parent=0 // pred_fallthru
    _
  // Predicated region
  $region10: #{_lambda_.35} parent=0 // pred_check
    _
  $region11: #{_lambda_.35} parent=0 // pred_check_branch
    %14 = sbr.rel (0) target = $region13
  $region12: #{_lambda_.35} parent=0 // pred_region
    _
  $region13: #{_lambda_.35} parent=0 // pred_fallthru
    _
  // Predicated region
  $region14: #{_lambda_.35} parent=0 // pred_check
    _
  $region15: #{_lambda_.35} parent=0 // pred_check_branch
    %16 = sbr.rel (0) target = $region17
  $region16: #{_lambda_.35} parent=0 // pred_region
    _
  $region17: #{_lambda_.35} parent=0 // pred_fallthru
    _
  %v17 = vld [vmem:[%s0] sm:$0xff]
  %v18 = vld [vmem:[%s0 + $0x8] sm:$0xff]
  %v19 = vld [vmem:[%s0 + $0x10] sm:$0xff]
  %v20 = vld [vmem:[%s0 + $0x18] sm:$0xff]
  %v21 = vld [vmem:[%s1] sm:$0x1]
  %v23 = vperm.slane %v21, 0
  %v25 = vmul.f32 %v17, %v23
  %v26 = vmul.f32 %v18, %v23
  %v27 = vmul.f32 %v19, %v23
  %v28 = vmul.f32 %v20, %v23
  %v29 = vld [vmem:[%s2] sm:$0x1]
  %v31 = vperm.slane %v29, 0
  %v33 = vadd.f32 %v25, %v31
  %v34 = vadd.f32 %v26, %v31
  %v35 = vadd.f32 %v27, %v31
  %v36 = vadd.f32 %v28, %v31
  %v37 = vld [vmem:[%s3] sm:$0xff]
  %v38 = vld [vmem:[%s3 + $0x8] sm:$0xff]
  %v39 = vld [vmem:[%s3 + $0x10] sm:$0xff]
  %v40 = vld [vmem:[%s3 + $0x18] sm:$0xff]
  %v41 = vadd.f32 %v33, %v37
  %v42 = vadd.f32 %v34, %v38
  %v43 = vadd.f32 %v35, %v39
  %v44 = vadd.f32 %v36, %v40
  %v45 = vmax.f32 %v41, 0.0
  %v46 = vmax.f32 %v42, 0.0
  %v47 = vmax.f32 %v43, 0.0
  %v48 = vmax.f32 %v44, 0.0
  %vm49 = vcmask 523264
  %50 = vst.msk [vmem:[%s4] sm:$0xff] %vm49, %v45
  %51 = vst.msk [vmem:[%s4 + $0x8] sm:$0xff] %vm49, %v46
  %52 = vst.msk [vmem:[%s4 + $0x10] sm:$0xff] %vm49, %v47
  %53 = vst.msk [vmem:[%s4 + $0x18] sm:$0xff] %vm49, %v48
  // Predicated region
  $region18: #{_lambda_.35} parent=0 // pred_check
    _
  $region19: #{_lambda_.35} parent=0 // pred_check_branch
    %55 = sbr.rel (0) target = $region21
  $region20: #{_lambda_.35} parent=0 // pred_region
    _
  $region21: #{_lambda_.35} parent=0 // pred_fallthru
    _
  // Predicated region
  $region22: #{_lambda_.35} parent=0 // pred_check
    _
  $region23: #{_lambda_.35} parent=0 // pred_check_branch
    %57 = sbr.rel (0) target = $region25
  $region24: #{_lambda_.35} parent=0 // pred_region
    _
  $region25: #{_lambda_.35} parent=0 // pred_fallthru
    _

// kernel: _lambda_.30
$region0: #{_lambda_.30}
  #allocation0 [shape = 'u32[]', space=smem, size = 0x4, offset = 0x4, fixed_abs, tag = 'smem constant byte address 0x4 - core index']
  #allocation1 [shape = 'u32[72,128]{1,0:T(1,128)}', space=vmem, size = 0x9000, scoped, tag = 'internal scratch']
  #allocation2 [shape = 'f32[32,64]{1,0:T(8,128)}', space=vmem, size = 0x4000, scoped, tag = 'scratch operand']
  %s0 = inlined_call_operand.vmem [shape: bf16[32,576], index: 0, kind: input, shape index: {}]
  %s1 = inlined_call_operand.vmem [shape: bf16[576,64], index: 1, kind: input, shape index: {}]
  %s2 = inlined_call_operand.vmem [shape: f32[32,64], index: 2, kind: output, shape index: {}]
  %s3 = sld [smem:[#allocation0]]
  $region26: #{_lambda_.30} parent=0
    _
  %s5 = ssub.s32 1, %s3
  %s6 = scalar_select 0, %s5, %s3
  // Predicated region
  $region2: #{_lambda_.30} parent=0 // pred_check
    _
  $region3: #{_lambda_.30} parent=0 // pred_check_branch
    %8 = sbr.rel (0) target = $region5
  $region4: #{_lambda_.30} parent=0 // pred_region
    _
  $region5: #{_lambda_.30} parent=0 // pred_fallthru
    _
  // Predicated region
  $region6: #{_lambda_.30} parent=0 // pred_check
    _
  $region7: #{_lambda_.30} parent=0 // pred_check_branch
    %10 = sbr.rel (0) target = $region9
  $region8: #{_lambda_.30} parent=0 // pred_region
    _
  $region9: #{_lambda_.30} parent=0 // pred_fallthru
    _
  %p12 = scmp.eq.s32.totalorder 0, 0
  // Predicated region
  $region10: #{_lambda_.30} parent=0 // pred_check
    %p13 = pneg %p12
  $region11: #{_lambda_.30} parent=0 // pred_check_branch
    %15 = sbr.rel (%p13) target = $region13
  $region12: #{_lambda_.30} parent=0 // pred_region
    %vm16 = vcmask 523264
    %17 = vst.msk [vmem:[#allocation2] sm:$0xff] %vm16, 0.0
    %18 = vst.msk [vmem:[#allocation2 + $0x8] sm:$0xff] %vm16, 0.0
    %19 = vst.msk [vmem:[#allocation2 + $0x10] sm:$0xff] %vm16, 0.0
    %20 = vst.msk [vmem:[#allocation2 + $0x18] sm:$0xff] %vm16, 0.0
  $region13: #{_lambda_.30} parent=0 // pred_fallthru
    _
  %v21 = vld [vmem:[#allocation2] sm:$0xff]
  %v22 = vld [vmem:[#allocation2 + $0x8] sm:$0xff]
  %v23 = vld [vmem:[#allocation2 + $0x10] sm:$0xff]
  %v24 = vld [vmem:[#allocation2 + $0x18] sm:$0xff]
  %v25 = vld [vmem:[%s0] sm:$0xff]
  %v26 = vld [vmem:[%s0 + $0x8] sm:$0xff]
  %v27 = vld [vmem:[%s0 + $0x10] sm:$0xf]
  %v28 = vld [vmem:[%s0 + $0x14] sm:$0xff]
  %v29 = vld [vmem:[%s0 + $0x1c] sm:$0xff]
  %v30 = vld [vmem:[%s0 + $0x24] sm:$0xf]
  %v31 = vld [vmem:[%s0 + $0x28] sm:$0xff]
  %v32 = vld [vmem:[%s0 + $0x30] sm:$0xff]
  %v33 = vld [vmem:[%s0 + $0x38] sm:$0xf]
  %v34 = vld [vmem:[%s0 + $0x3c] sm:$0xff]
  %v35 = vld [vmem:[%s0 + $0x44] sm:$0xff]
  %v36 = vld [vmem:[%s0 + $0x4c] sm:$0xf]
  %v37 = vld [vmem:[%s1] sm:$0xf]
  %v38 = vld [vmem:[%s1 + $0x4] sm:$0xf]
  %v39 = vld [vmem:[%s1 + $0x8] sm:$0xf]
  %v40 = vld [vmem:[%s1 + $0xc] sm:$0xf]
  %v41 = vld [vmem:[%s1 + $0x10] sm:$0xf]
  %v42 = vld [vmem:[%s1 + $0x14] sm:$0xf]
  %v43 = vld [vmem:[%s1 + $0x18] sm:$0xf]
  %v44 = vld [vmem:[%s1 + $0x1c] sm:$0xf]
  %v45 = vld [vmem:[%s1 + $0x20] sm:$0xf]
  %v46 = vld [vmem:[%s1 + $0x24] sm:$0xf]
  %v47 = vld [vmem:[%s1 + $0x28] sm:$0xf]
  %v48 = vld [vmem:[%s1 + $0x2c] sm:$0xf]
  %v49 = vld [vmem:[%s1 + $0x30] sm:$0xf]
  %v50 = vld [vmem:[%s1 + $0x34] sm:$0xf]
  %v51 = vld [vmem:[%s1 + $0x38] sm:$0xf]
  %v52 = vld [vmem:[%s1 + $0x3c] sm:$0xf]
  %v53 = vld [vmem:[%s1 + $0x40] sm:$0xf]
  %v54 = vld [vmem:[%s1 + $0x44] sm:$0xf]
  %v55 = vld [vmem:[%s1 + $0x48] sm:$0xf]
  %v56 = vld [vmem:[%s1 + $0x4c] sm:$0xf]
  %v57 = vld [vmem:[%s1 + $0x50] sm:$0xf]
  %v58 = vld [vmem:[%s1 + $0x54] sm:$0xf]
  %v59 = vld [vmem:[%s1 + $0x58] sm:$0xf]
  %v60 = vld [vmem:[%s1 + $0x5c] sm:$0xf]
  %v61 = vld [vmem:[%s1 + $0x60] sm:$0xf]
  %v62 = vld [vmem:[%s1 + $0x64] sm:$0xf]
  %v63 = vld [vmem:[%s1 + $0x68] sm:$0xf]
  %v64 = vld [vmem:[%s1 + $0x6c] sm:$0xf]
  %v65 = vld [vmem:[%s1 + $0x70] sm:$0xf]
  %v66 = vld [vmem:[%s1 + $0x74] sm:$0xf]
  %v67 = vld [vmem:[%s1 + $0x78] sm:$0xf]
  %v68 = vld [vmem:[%s1 + $0x7c] sm:$0xf]
  %v69 = vld [vmem:[%s1 + $0x80] sm:$0xf]
  %v70 = vld [vmem:[%s1 + $0x84] sm:$0xf]
  %v71 = vld [vmem:[%s1 + $0x88] sm:$0xf]
  %v72 = vld [vmem:[%s1 + $0x8c] sm:$0xf]
  %v73 = vld [vmem:[%s1 + $0x90] sm:$0xf]
  %v74 = vld [vmem:[%s1 + $0x94] sm:$0xf]
  %v75 = vld [vmem:[%s1 + $0x98] sm:$0xf]
  %v76 = vld [vmem:[%s1 + $0x9c] sm:$0xf]
  %v77 = vld [vmem:[%s1 + $0xa0] sm:$0xf]
  %v78 = vld [vmem:[%s1 + $0xa4] sm:$0xf]
  %v79 = vld [vmem:[%s1 + $0xa8] sm:$0xf]
  %v80 = vld [vmem:[%s1 + $0xac] sm:$0xf]
  %v81 = vld [vmem:[%s1 + $0xb0] sm:$0xf]
  %v82 = vld [vmem:[%s1 + $0xb4] sm:$0xf]
  %v83 = vld [vmem:[%s1 + $0xb8] sm:$0xf]
  %v84 = vld [vmem:[%s1 + $0xbc] sm:$0xf]
  %v85 = vld [vmem:[%s1 + $0xc0] sm:$0xf]
  %v86 = vld [vmem:[%s1 + $0xc4] sm:$0xf]
  %v87 = vld [vmem:[%s1 + $0xc8] sm:$0xf]
  %v88 = vld [vmem:[%s1 + $0xcc] sm:$0xf]
  %v89 = vld [vmem:[%s1 + $0xd0] sm:$0xf]
  %v90 = vld [vmem:[%s1 + $0xd4] sm:$0xf]
  %v91 = vld [vmem:[%s1 + $0xd8] sm:$0xf]
  %v92 = vld [vmem:[%s1 + $0xdc] sm:$0xf]
  %v93 = vld [vmem:[%s1 + $0xe0] sm:$0xf]
  %v94 = vld [vmem:[%s1 + $0xe4] sm:$0xf]
  %v95 = vld [vmem:[%s1 + $0xe8] sm:$0xf]
  %v96 = vld [vmem:[%s1 + $0xec] sm:$0xf]
  %v97 = vld [vmem:[%s1 + $0xf0] sm:$0xf]
  %v98 = vld [vmem:[%s1 + $0xf4] sm:$0xf]
  %v99 = vld [vmem:[%s1 + $0xf8] sm:$0xf]
  %v100 = vld [vmem:[%s1 + $0xfc] sm:$0xf]
  %v101 = vld [vmem:[%s1 + $0x100] sm:$0xf]
  %v102 = vld [vmem:[%s1 + $0x104] sm:$0xf]
  %v103 = vld [vmem:[%s1 + $0x108] sm:$0xf]
  %v104 = vld [vmem:[%s1 + $0x10c] sm:$0xf]
  %v105 = vld [vmem:[%s1 + $0x110] sm:$0xf]
  %v106 = vld [vmem:[%s1 + $0x114] sm:$0xf]
  %v107 = vld [vmem:[%s1 + $0x118] sm:$0xf]
  %v108 = vld [vmem:[%s1 + $0x11c] sm:$0xf]
  %v121 = vunpack.c.l.b16 %v25
  %v122 = vunpack.c.h.b16 %v25
  %v123 = vunpack.c.l.b16 %v26
  %v124 = vunpack.c.h.b16 %v26
  %v125 = vunpack.c.l.b16 %v27
  %v126 = vunpack.c.l.b16 %v28
  %v127 = vunpack.c.h.b16 %v28
  %v128 = vunpack.c.l.b16 %v29
  %v129 = vunpack.c.h.b16 %v29
  %v130 = vunpack.c.l.b16 %v30
  %v131 = vunpack.c.l.b16 %v31
  %v132 = vunpack.c.h.b16 %v31
  %v133 = vunpack.c.l.b16 %v32
  %v134 = vunpack.c.h.b16 %v32
  %v135 = vunpack.c.l.b16 %v33
  %v136 = vunpack.c.l.b16 %v34
  %v137 = vunpack.c.h.b16 %v34
  %v138 = vunpack.c.l.b16 %v35
  %v139 = vunpack.c.h.b16 %v35
  %v140 = vunpack.c.l.b16 %v36
  %v141 = vpack.c.b16 %v126, %v121
  %v142 = vpack.c.b16 %v127, %v122
  %v143 = vpack.c.b16 %v128, %v123
  %v144 = vpack.c.b16 %v129, %v124
  %v145 = vpack.c.b16 %v130, %v125
  %v146 = vpack.c.b16 %v136, %v131
  %v147 = vpack.c.b16 %v137, %v132
  %v148 = vpack.c.b16 %v138, %v133
  %v149 = vpack.c.b16 %v139, %v134
  %v150 = vpack.c.b16 %v140, %v135
  %v231 = vunpack.c.l.b16 %v37
  %v232 = vunpack.c.l.b16 %v38
  %v233 = vunpack.c.l.b16 %v39
  %v234 = vunpack.c.l.b16 %v40
  %v235 = vunpack.c.l.b16 %v41
  %v236 = vunpack.c.l.b16 %v42
  %v237 = vunpack.c.l.b16 %v43
  %v238 = vunpack.c.l.b16 %v44
  %v239 = vunpack.c.l.b16 %v45
  %v240 = vunpack.c.l.b16 %v46
  %v241 = vunpack.c.l.b16 %v47
  %v242 = vunpack.c.l.b16 %v48
  %v243 = vunpack.c.l.b16 %v49
  %v244 = vunpack.c.l.b16 %v50
  %v245 = vunpack.c.l.b16 %v51
  %v246 = vunpack.c.l.b16 %v52
  %v247 = vunpack.c.l.b16 %v53
  %v248 = vunpack.c.l.b16 %v54
  %v249 = vunpack.c.l.b16 %v55
  %v250 = vunpack.c.l.b16 %v56
  %v251 = vunpack.c.l.b16 %v57
  %v252 = vunpack.c.l.b16 %v58
  %v253 = vunpack.c.l.b16 %v59
  %v254 = vunpack.c.l.b16 %v60
  %v255 = vunpack.c.l.b16 %v61
  %v256 = vunpack.c.l.b16 %v62
  %v257 = vunpack.c.l.b16 %v63
  %v258 = vunpack.c.l.b16 %v64
  %v259 = vunpack.c.l.b16 %v65
  %v260 = vunpack.c.l.b16 %v66
  %v261 = vunpack.c.l.b16 %v67
  %v262 = vunpack.c.l.b16 %v68
  %v263 = vunpack.c.l.b16 %v69
  %v264 = vunpack.c.l.b16 %v70
  %v265 = vunpack.c.l.b16 %v71
  %v266 = vunpack.c.l.b16 %v72
  %v267 = vunpack.c.l.b16 %v73
  %v268 = vunpack.c.l.b16 %v74
  %v269 = vunpack.c.l.b16 %v75
  %v270 = vunpack.c.l.b16 %v76
  %v271 = vunpack.c.l.b16 %v77
  %v272 = vunpack.c.l.b16 %v78
  %v273 = vunpack.c.l.b16 %v79
  %v274 = vunpack.c.l.b16 %v80
  %v275 = vunpack.c.l.b16 %v81
  %v276 = vunpack.c.l.b16 %v82
  %v277 = vunpack.c.l.b16 %v83
  %v278 = vunpack.c.l.b16 %v84
  %v279 = vunpack.c.l.b16 %v85
  %v280 = vunpack.c.l.b16 %v86
  %v281 = vunpack.c.l.b16 %v87
  %v282 = vunpack.c.l.b16 %v88
  %v283 = vunpack.c.l.b16 %v89
  %v284 = vunpack.c.l.b16 %v90
  %v285 = vunpack.c.l.b16 %v91
  %v286 = vunpack.c.l.b16 %v92
  %v287 = vunpack.c.l.b16 %v93
  %v288 = vunpack.c.l.b16 %v94
  %v289 = vunpack.c.l.b16 %v95
  %v290 = vunpack.c.l.b16 %v96
  %v291 = vunpack.c.l.b16 %v97
  %v292 = vunpack.c.l.b16 %v98
  %v293 = vunpack.c.l.b16 %v99
  %v294 = vunpack.c.l.b16 %v100
  %v295 = vunpack.c.l.b16 %v101
  %v296 = vunpack.c.l.b16 %v102
  %v297 = vunpack.c.l.b16 %v103
  %v298 = vunpack.c.l.b16 %v104
  %v299 = vunpack.c.l.b16 %v105
  %v300 = vunpack.c.l.b16 %v106
  %v301 = vunpack.c.l.b16 %v107
  %v302 = vunpack.c.l.b16 %v108
  %v303 = vpack.c.b16 %v232, %v231
  %v304 = vpack.c.b16 %v234, %v233
  %v305 = vpack.c.b16 %v236, %v235
  %v306 = vpack.c.b16 %v238, %v237
  %v307 = vpack.c.b16 %v240, %v239
  %v308 = vpack.c.b16 %v242, %v241
  %v309 = vpack.c.b16 %v244, %v243
  %v310 = vpack.c.b16 %v246, %v245
  %v311 = vpack.c.b16 %v248, %v247
  %v312 = vpack.c.b16 %v250, %v249
  %v313 = vpack.c.b16 %v252, %v251
  %v314 = vpack.c.b16 %v254, %v253
  %v315 = vpack.c.b16 %v256, %v255
  %v316 = vpack.c.b16 %v258, %v257
  %v317 = vpack.c.b16 %v260, %v259
  %v318 = vpack.c.b16 %v262, %v261
  %v319 = vpack.c.b16 %v264, %v263
  %v320 = vpack.c.b16 %v266, %v265
  %v321 = vpack.c.b16 %v268, %v267
  %v322 = vpack.c.b16 %v270, %v269
  %v323 = vpack.c.b16 %v272, %v271
  %v324 = vpack.c.b16 %v274, %v273
  %v325 = vpack.c.b16 %v276, %v275
  %v326 = vpack.c.b16 %v278, %v277
  %v327 = vpack.c.b16 %v280, %v279
  %v328 = vpack.c.b16 %v282, %v281
  %v329 = vpack.c.b16 %v284, %v283
  %v330 = vpack.c.b16 %v286, %v285
  %v331 = vpack.c.b16 %v288, %v287
  %v332 = vpack.c.b16 %v290, %v289
  %v333 = vpack.c.b16 %v292, %v291
  %v334 = vpack.c.b16 %v294, %v293
  %v335 = vpack.c.b16 %v296, %v295
  %v336 = vpack.c.b16 %v298, %v297
  %v337 = vpack.c.b16 %v300, %v299
  %v338 = vpack.c.b16 %v302, %v301
  %vm375 = vcmask 523264
  %v377 = vsel %vm375, %v145, 0
  %v380 = vsel %vm375, %v150, 0
  %382 = vmatpush.bf16.msra.mxu0 %v310
  %383 = vmatpush.bf16.msra.mxu0 %v309
  %384 = vmatpush.bf16.msra.mxu0 %v308
  %385 = vmatpush.bf16.msra.mxu0 %v307
  %386 = vmatpush.bf16.msra.mxu0 %v306
  %387 = vmatpush.bf16.msra.mxu0 %v305
  %388 = vmatpush.bf16.msra.mxu0 %v304
  %389 = vmatpush.bf16.msra.mxu0 %v303
  %390 = vmatmul.bf16.gmra.mxu0 %v141
  %v391 = vpop.f32.mrf.mxu0
  %v392 = vadd.f32 0.0, %v391
  %v393 = vpop.f32.mrf.mxu0
  %v394 = vadd.f32 0.0, %v393
  %395 = vmatmul.bf16.gmra.mxu0 %v146
  %v396 = vpop.f32.mrf.mxu0
  %v397 = vadd.f32 0.0, %v396
  %v398 = vpop.f32.mrf.mxu0
  %v399 = vadd.f32 0.0, %v398
  %400 = vdwg.mxu0
  %401 = vmatpush.bf16.msra.mxu0 %v318
  %402 = vmatpush.bf16.msra.mxu0 %v317
  %403 = vmatpush.bf16.msra.mxu0 %v316
  %404 = vmatpush.bf16.msra.mxu0 %v315
  %405 = vmatpush.bf16.msra.mxu0 %v314
  %406 = vmatpush.bf16.msra.mxu0 %v313
  %407 = vmatpush.bf16.msra.mxu0 %v312
  %408 = vmatpush.bf16.msra.mxu0 %v311
  %409 = vmatmul.bf16.gmra.mxu0 %v142
  %v410 = vpop.f32.mrf.mxu0
  %v411 = vadd.f32 %v392, %v410
  %v412 = vpop.f32.mrf.mxu0
  %v413 = vadd.f32 %v394, %v412
  %414 = vmatmul.bf16.gmra.mxu0 %v147
  %v415 = vpop.f32.mrf.mxu0
  %v416 = vadd.f32 %v397, %v415
  %v417 = vpop.f32.mrf.mxu0
  %v418 = vadd.f32 %v399, %v417
  %419 = vdwg.mxu0
  %420 = vmatpush.bf16.msra.mxu0 %v326
  %421 = vmatpush.bf16.msra.mxu0 %v325
  %422 = vmatpush.bf16.msra.mxu0 %v324
  %423 = vmatpush.bf16.msra.mxu0 %v323
  %424 = vmatpush.bf16.msra.mxu0 %v322
  %425 = vmatpush.bf16.msra.mxu0 %v321
  %426 = vmatpush.bf16.msra.mxu0 %v320
  %427 = vmatpush.bf16.msra.mxu0 %v319
  %428 = vmatmul.bf16.gmra.mxu0 %v143
  %v429 = vpop.f32.mrf.mxu0
  %v430 = vadd.f32 %v411, %v429
  %v431 = vpop.f32.mrf.mxu0
  %v432 = vadd.f32 %v413, %v431
  %433 = vmatmul.bf16.gmra.mxu0 %v148
  %v434 = vpop.f32.mrf.mxu0
  %v435 = vadd.f32 %v416, %v434
  %v436 = vpop.f32.mrf.mxu0
  %v437 = vadd.f32 %v418, %v436
  %438 = vdwg.mxu0
  %439 = vmatpush.bf16.msra.mxu0 %v334
  %440 = vmatpush.bf16.msra.mxu0 %v333
  %441 = vmatpush.bf16.msra.mxu0 %v332
  %442 = vmatpush.bf16.msra.mxu0 %v331
  %443 = vmatpush.bf16.msra.mxu0 %v330
  %444 = vmatpush.bf16.msra.mxu0 %v329
  %445 = vmatpush.bf16.msra.mxu0 %v328
  %446 = vmatpush.bf16.msra.mxu0 %v327
  %447 = vmatmul.bf16.gmra.mxu0 %v144
  %v448 = vpop.f32.mrf.mxu0
  %v449 = vadd.f32 %v430, %v448
  %v450 = vpop.f32.mrf.mxu0
  %v451 = vadd.f32 %v432, %v450
  %452 = vmatmul.bf16.gmra.mxu0 %v149
  %v453 = vpop.f32.mrf.mxu0
  %v454 = vadd.f32 %v435, %v453
  %v455 = vpop.f32.mrf.mxu0
  %v456 = vadd.f32 %v437, %v455
  %457 = vdwg.mxu0
  %458 = vmatpush.bf16.msra.mxu0 0
  %459 = vmatpush.bf16.msra.mxu0 0
  %460 = vmatpush.bf16.msra.mxu0 0
  %461 = vmatpush.bf16.msra.mxu0 0
  %462 = vmatpush.bf16.msra.mxu0 %v338
  %463 = vmatpush.bf16.msra.mxu0 %v337
  %464 = vmatpush.bf16.msra.mxu0 %v336
  %465 = vmatpush.bf16.msra.mxu0 %v335
  %466 = vmatmul.bf16.gmra.mxu0 %v377
  %v467 = vpop.f32.mrf.mxu0
  %v468 = vadd.f32 %v449, %v467
  %v469 = vpop.f32.mrf.mxu0
  %v470 = vadd.f32 %v451, %v469
  %471 = vmatmul.bf16.gmra.mxu0 %v380
  %v472 = vpop.f32.mrf.mxu0
  %v473 = vadd.f32 %v454, %v472
  %v474 = vpop.f32.mrf.mxu0
  %v475 = vadd.f32 %v456, %v474
  %476 = vdwg.mxu0
  %v477 = vadd.f32 %v21, %v468
  %v478 = vadd.f32 %v22, %v470
  %v479 = vadd.f32 %v23, %v473
  %v480 = vadd.f32 %v24, %v475
  %481 = vst.msk [vmem:[#allocation2] sm:$0xff] %vm375, %v477
  %482 = vst.msk [vmem:[#allocation2 + $0x8] sm:$0xff] %vm375, %v478
  %483 = vst.msk [vmem:[#allocation2 + $0x10] sm:$0xff] %vm375, %v479
  %484 = vst.msk [vmem:[#allocation2 + $0x18] sm:$0xff] %vm375, %v480
  // Predicated region
  $region14: #{_lambda_.30} parent=0 // pred_check
    %p485 = pneg %p12
  $region15: #{_lambda_.30} parent=0 // pred_check_branch
    %487 = sbr.rel (%p485) target = $region17
  $region16: #{_lambda_.30} parent=0 // pred_region
    %v488 = vld [vmem:[#allocation2] sm:$0xff]
    %v489 = vld [vmem:[#allocation2 + $0x8] sm:$0xff]
    %v490 = vld [vmem:[#allocation2 + $0x10] sm:$0xff]
    %v491 = vld [vmem:[#allocation2 + $0x18] sm:$0xff]
    %492 = vst.msk [vmem:[%s2] sm:$0xff] %vm375, %v488
    %493 = vst.msk [vmem:[%s2 + $0x8] sm:$0xff] %vm375, %v489
    %494 = vst.msk [vmem:[%s2 + $0x10] sm:$0xff] %vm375, %v490
    %495 = vst.msk [vmem:[%s2 + $0x18] sm:$0xff] %vm375, %v491
  $region17: #{_lambda_.30} parent=0 // pred_fallthru
    _
  // Predicated region
  $region18: #{_lambda_.30} parent=0 // pred_check
    _
  $region19: #{_lambda_.30} parent=0 // pred_check_branch
    %497 = sbr.rel (0) target = $region21
  $region20: #{_lambda_.30} parent=0 // pred_region
    _
  $region21: #{_lambda_.30} parent=0 // pred_fallthru
    _
  // Predicated region
  $region22: #{_lambda_.30} parent=0 // pred_check
    _
  $region23: #{_lambda_.30} parent=0 // pred_check_branch
    %499 = sbr.rel (0) target = $region25
  $region24: #{_lambda_.30} parent=0 // pred_region
    _
  $region25: #{_lambda_.30} parent=0 // pred_fallthru
    _

// kernel: _lambda_.40
$region0: #{_lambda_.40}
  #allocation0 [shape = 'u32[]', space=smem, size = 0x4, offset = 0x4, fixed_abs, tag = 'smem constant byte address 0x4 - core index']
  #allocation1 [shape = 'u32[72,128]{1,0:T(1,128)}', space=vmem, size = 0x9000, scoped, tag = 'internal scratch']
  #allocation2 [shape = 'f32[16,128]{1,0:T(8,128)}', space=vmem, size = 0x2000, scoped, tag = 'scratch operand']
  %s0 = inlined_call_operand.vmem [shape: bf16[16,64], index: 0, kind: input, shape index: {}]
  %s1 = inlined_call_operand.vmem [shape: bf16[64,128], index: 1, kind: input, shape index: {}]
  %s2 = inlined_call_operand.vmem [shape: f32[16,128], index: 2, kind: output, shape index: {}]
  %s3 = sld [smem:[#allocation0]]
  $region26: #{_lambda_.40} parent=0
    _
  %s5 = ssub.s32 1, %s3
  %s6 = scalar_select 0, %s5, %s3
  // Predicated region
  $region2: #{_lambda_.40} parent=0 // pred_check
    _
  $region3: #{_lambda_.40} parent=0 // pred_check_branch
    %8 = sbr.rel (0) target = $region5
  $region4: #{_lambda_.40} parent=0 // pred_region
    _
  $region5: #{_lambda_.40} parent=0 // pred_fallthru
    _
  // Predicated region
  $region6: #{_lambda_.40} parent=0 // pred_check
    _
  $region7: #{_lambda_.40} parent=0 // pred_check_branch
    %10 = sbr.rel (0) target = $region9
  $region8: #{_lambda_.40} parent=0 // pred_region
    _
  $region9: #{_lambda_.40} parent=0 // pred_fallthru
    _
  %p12 = scmp.eq.s32.totalorder 0, 0
  // Predicated region
  $region10: #{_lambda_.40} parent=0 // pred_check
    %p13 = pneg %p12
  $region11: #{_lambda_.40} parent=0 // pred_check_branch
    %15 = sbr.rel (%p13) target = $region13
  $region12: #{_lambda_.40} parent=0 // pred_region
    %16 = vst [vmem:[#allocation2] sm:$0xff] 0.0
    %17 = vst [vmem:[#allocation2 + $0x8] sm:$0xff] 0.0
  $region13: #{_lambda_.40} parent=0 // pred_fallthru
    _
  %v18 = vld [vmem:[#allocation2] sm:$0xff]
  %v19 = vld [vmem:[#allocation2 + $0x8] sm:$0xff]
  %v20 = vld [vmem:[%s0] sm:$0xf]
  %v21 = vld [vmem:[%s0 + $0x4] sm:$0xf]
  %v22 = vld [vmem:[%s1] sm:$0xf]
  %v23 = vld [vmem:[%s1 + $0x4] sm:$0xf]
  %v24 = vld [vmem:[%s1 + $0x8] sm:$0xf]
  %v25 = vld [vmem:[%s1 + $0xc] sm:$0xf]
  %v26 = vld [vmem:[%s1 + $0x10] sm:$0xf]
  %v27 = vld [vmem:[%s1 + $0x14] sm:$0xf]
  %v28 = vld [vmem:[%s1 + $0x18] sm:$0xf]
  %v29 = vld [vmem:[%s1 + $0x1c] sm:$0xf]
  %v32 = vunpack.c.l.b16 %v20
  %v33 = vunpack.c.l.b16 %v21
  %v34 = vpack.c.b16 %v33, %v32
  %v43 = vunpack.c.l.b16 %v22
  %v44 = vunpack.c.l.b16 %v23
  %v45 = vunpack.c.l.b16 %v24
  %v46 = vunpack.c.l.b16 %v25
  %v47 = vunpack.c.l.b16 %v26
  %v48 = vunpack.c.l.b16 %v27
  %v49 = vunpack.c.l.b16 %v28
  %v50 = vunpack.c.l.b16 %v29
  %v51 = vpack.c.b16 %v44, %v43
  %v52 = vpack.c.b16 %v46, %v45
  %v53 = vpack.c.b16 %v48, %v47
  %v54 = vpack.c.b16 %v50, %v49
  %vm59 = vcmask 523264
  %v61 = vsel %vm59, %v34, 0
  %63 = vmatpush.bf16.msra.mxu0 0
  %64 = vmatpush.bf16.msra.mxu0 0
  %65 = vmatpush.bf16.msra.mxu0 0
  %66 = vmatpush.bf16.msra.mxu0 0
  %67 = vmatpush.bf16.msra.mxu0 %v54
  %68 = vmatpush.bf16.msra.mxu0 %v53
  %69 = vmatpush.bf16.msra.mxu0 %v52
  %70 = vmatpush.bf16.msra.mxu0 %v51
  %71 = vmatmul.bf16.gmra.mxu0 %v61
  %v72 = vpop.f32.mrf.mxu0
  %v73 = vadd.f32 0.0, %v72
  %v74 = vpop.f32.mrf.mxu0
  %v75 = vadd.f32 0.0, %v74
  %76 = vdwg.mxu0
  %v77 = vadd.f32 %v18, %v73
  %v78 = vadd.f32 %v19, %v75
  %79 = vst [vmem:[#allocation2] sm:$0xff] %v77
  %80 = vst [vmem:[#allocation2 + $0x8] sm:$0xff] %v78
  // Predicated region
  $region14: #{_lambda_.40} parent=0 // pred_check
    %p81 = pneg %p12
  $region15: #{_lambda_.40} parent=0 // pred_check_branch
    %83 = sbr.rel (%p81) target = $region17
  $region16: #{_lambda_.40} parent=0 // pred_region
    %v84 = vld [vmem:[#allocation2] sm:$0xff]
    %v85 = vld [vmem:[#allocation2 + $0x8] sm:$0xff]
    %86 = vst [vmem:[%s2] sm:$0xff] %v84
    %87 = vst [vmem:[%s2 + $0x8] sm:$0xff] %v85
  $region17: #{_lambda_.40} parent=0 // pred_fallthru
    _
  // Predicated region
  $region18: #{_lambda_.40} parent=0 // pred_check
    _
  $region19: #{_lambda_.40} parent=0 // pred_check_branch
    %89 = sbr.rel (0) target = $region21
  $region20: #{_lambda_.40} parent=0 // pred_region
    _
  $region21: #{_lambda_.40} parent=0 // pred_fallthru
    _
  // Predicated region
  $region22: #{_lambda_.40} parent=0 // pred_check
    _
  $region23: #{_lambda_.40} parent=0 // pred_check_branch
    %91 = sbr.rel (0) target = $region25
  $region24: #{_lambda_.40} parent=0 // pred_region
    _
  $region25: #{_lambda_.40} parent=0 // pred_fallthru
    _

// kernel: _lambda_.41
$region0: #{_lambda_.41}
  #allocation0 [shape = 'u32[]', space=smem, size = 0x4, offset = 0x4, fixed_abs, tag = 'smem constant byte address 0x4 - core index']
  #allocation1 [shape = 'u32[72,128]{1,0:T(1,128)}', space=vmem, size = 0x9000, scoped, tag = 'internal scratch']
  %s0 = inlined_call_operand.vmem [shape: f32[8,128], index: 0, kind: input, shape index: {}]
  %s1 = inlined_call_operand.vmem [shape: f32[1,128], index: 1, kind: output, shape index: {0}]
  %s2 = inlined_call_operand.vmem [shape: f32[1,128], index: 2, kind: output, shape index: {1}]
  %3 = xla_tuple %s1, %s2
  %s4 = sld [smem:[#allocation0]]
  $region26: #{_lambda_.41} parent=0
    _
  %s6 = ssub.s32 1, %s4
  %s7 = scalar_select 0, %s6, %s4
  // Predicated region
  $region2: #{_lambda_.41} parent=0 // pred_check
    _
  $region3: #{_lambda_.41} parent=0 // pred_check_branch
    %9 = sbr.rel (0) target = $region5
  $region4: #{_lambda_.41} parent=0 // pred_region
    _
  $region5: #{_lambda_.41} parent=0 // pred_fallthru
    _
  %p10 = scmp.eq.s32.totalorder 0, 0
  // Predicated region
  $region6: #{_lambda_.41} parent=0 // pred_check
    %p11 = pneg %p10
  $region7: #{_lambda_.41} parent=0 // pred_check_branch
    %13 = sbr.rel (%p11) target = $region9
  $region8: #{_lambda_.41} parent=0 // pred_region
    %14 = vst [vmem:[%s1] sm:$0x1] 0.0
    %15 = vst [vmem:[%s2] sm:$0x1] 0.0
  $region9: #{_lambda_.41} parent=0 // pred_fallthru
    _
  %v16 = vld [vmem:[%s0] sm:$0xff]
  %v17 = vld [vmem:[%s1] sm:$0x1]
  %v18 = vrot.slane %v16, 4
  %v19 = vadd.f32 %v16, %v18
  %v20 = vrot.slane %v19, 2
  %v21 = vadd.f32 %v19, %v20
  %v22 = vrot.slane %v21, 1
  %v23 = vadd.f32 %v21, %v22
  %v24 = vadd.f32 %v17, %v23
  %25 = vst [vmem:[%s1] sm:$0x1] %v24
  %v26 = vld [vmem:[%s2] sm:$0x1]
  %v27 = vmul.f32 %v16, %v16
  %v28 = vrot.slane %v27, 4
  %v29 = vadd.f32 %v27, %v28
  %v30 = vrot.slane %v29, 2
  %v31 = vadd.f32 %v29, %v30
  %v32 = vrot.slane %v31, 1
  %v33 = vadd.f32 %v31, %v32
  %v34 = vadd.f32 %v26, %v33
  %35 = vst [vmem:[%s2] sm:$0x1] %v34
  // Predicated region
  $region10: #{_lambda_.41} parent=0 // pred_check
    _
  $region11: #{_lambda_.41} parent=0 // pred_check_branch
    %37 = sbr.rel (0) target = $region13
  $region12: #{_lambda_.41} parent=0 // pred_region
    _
  $region13: #{_lambda_.41} parent=0 // pred_fallthru
    _
  // Predicated region
  $region14: #{_lambda_.41} parent=0 // pred_check
    _
  $region15: #{_lambda_.41} parent=0 // pred_check_branch
    %39 = sbr.rel (0) target = $region17
  $region16: #{_lambda_.41} parent=0 // pred_region
    _
  $region17: #{_lambda_.41} parent=0 // pred_fallthru
    _
  // Predicated region
  $region18: #{_lambda_.41} parent=0 // pred_check
    _
  $region19: #{_lambda_.41} parent=0 // pred_check_branch
    %41 = sbr.rel (0) target = $region21
  $region20: #{_lambda_.41} parent=0 // pred_region
    _
  $region21: #{_lambda_.41} parent=0 // pred_fallthru
    _
  // Predicated region
  $region22: #{_lambda_.41} parent=0 // pred_check
    _
  $region23: #{_lambda_.41} parent=0 // pred_check_branch
    %43 = sbr.rel (0) target = $region25
  $region24: #{_lambda_.41} parent=0 // pred_region
    _
  $region25: #{_lambda_.41} parent=0 // pred_fallthru
    _

// kernel: _lambda_.42
$region0: #{_lambda_.42}
  #allocation0 [shape = 'u32[]', space=smem, size = 0x4, offset = 0x4, fixed_abs, tag = 'smem constant byte address 0x4 - core index']
  #allocation1 [shape = 'u32[72,128]{1,0:T(1,128)}', space=vmem, size = 0x9000, scoped, tag = 'internal scratch']
  %s0 = inlined_call_operand.vmem [shape: f32[8,128], index: 0, kind: input, shape index: {}]
  %s1 = inlined_call_operand.vmem [shape: f32[1,128], index: 1, kind: input, shape index: {}]
  %s2 = inlined_call_operand.vmem [shape: f32[1,128], index: 2, kind: input, shape index: {}]
  %s3 = inlined_call_operand.vmem [shape: f32[8,128], index: 3, kind: output, shape index: {}]
  %s4 = sld [smem:[#allocation0]]
  $region22: #{_lambda_.42} parent=0
    _
  %s6 = ssub.s32 1, %s4
  %s7 = scalar_select 0, %s6, %s4
  // Predicated region
  $region2: #{_lambda_.42} parent=0 // pred_check
    _
  $region3: #{_lambda_.42} parent=0 // pred_check_branch
    %9 = sbr.rel (0) target = $region5
  $region4: #{_lambda_.42} parent=0 // pred_region
    _
  $region5: #{_lambda_.42} parent=0 // pred_fallthru
    _
  // Predicated region
  $region6: #{_lambda_.42} parent=0 // pred_check
    _
  $region7: #{_lambda_.42} parent=0 // pred_check_branch
    %11 = sbr.rel (0) target = $region9
  $region8: #{_lambda_.42} parent=0 // pred_region
    _
  $region9: #{_lambda_.42} parent=0 // pred_fallthru
    _
  // Predicated region
  $region10: #{_lambda_.42} parent=0 // pred_check
    _
  $region11: #{_lambda_.42} parent=0 // pred_check_branch
    %13 = sbr.rel (0) target = $region13
  $region12: #{_lambda_.42} parent=0 // pred_region
    _
  $region13: #{_lambda_.42} parent=0 // pred_fallthru
    _
  %v14 = vld [vmem:[%s0] sm:$0xff]
  %v15 = vld [vmem:[%s1] sm:$0x1]
  %v17 = vperm.slane %v15, 0
  %v19 = vmul.f32 %v14, %v17
  %v20 = vld [vmem:[%s2] sm:$0x1]
  %v22 = vperm.slane %v20, 0
  %v24 = vadd.f32 %v19, %v22
  %25 = vst [vmem:[%s3] sm:$0xff] %v24
  // Predicated region
  $region14: #{_lambda_.42} parent=0 // pred_check
    _
  $region15: #{_lambda_.42} parent=0 // pred_check_branch
    %27 = sbr.rel (0) target = $region17
  $region16: #{_lambda_.42} parent=0 // pred_region
    _
  $region17: #{_lambda_.42} parent=0 // pred_fallthru
    _
  // Predicated region
  $region18: #{_lambda_.42} parent=0 // pred_check
    _
  $region19: #{_lambda_.42} parent=0 // pred_check_branch
    %29 = sbr.rel (0) target = $region21
  $region20: #{_lambda_.42} parent=0 // pred_region
    _
  $region21: #{_lambda_.42} parent=0 // pred_fallthru
    _

// kernel: _lambda_.38
$region0: #{_lambda_.38}
  #allocation0 [shape = 'u32[]', space=smem, size = 0x4, offset = 0x4, fixed_abs, tag = 'smem constant byte address 0x4 - core index']
  #allocation1 [shape = 'u32[72,128]{1,0:T(1,128)}', space=vmem, size = 0x9000, scoped, tag = 'internal scratch']
  %s0 = inlined_call_operand.vmem [shape: f32[8,128], index: 0, kind: input, shape index: {}]
  %s1 = inlined_call_operand.vmem [shape: f32[1,128], index: 1, kind: input, shape index: {}]
  %s2 = inlined_call_operand.vmem [shape: f32[1,128], index: 2, kind: input, shape index: {}]
  %s3 = inlined_call_operand.vmem [shape: f32[8,128], index: 3, kind: output, shape index: {}]
  %s4 = sld [smem:[#allocation0]]
  $region22: #{_lambda_.38} parent=0
    _
  %s6 = ssub.s32 1, %s4
  %s7 = scalar_select 0, %s6, %s4
  // Predicated region
  $region2: #{_lambda_.38} parent=0 // pred_check
    _
  $region3: #{_lambda_.38} parent=0 // pred_check_branch
    %9 = sbr.rel (0) target = $region5
  $region4: #{_lambda_.38} parent=0 // pred_region
    _
  $region5: #{_lambda_.38} parent=0 // pred_fallthru
    _
  // Predicated region
  $region6: #{_lambda_.38} parent=0 // pred_check
    _
  $region7: #{_lambda_.38} parent=0 // pred_check_branch
    %11 = sbr.rel (0) target = $region9
  $region8: #{_lambda_.38} parent=0 // pred_region
    _
  $region9: #{_lambda_.38} parent=0 // pred_fallthru
    _
  // Predicated region
  $region10: #{_lambda_.38} parent=0 // pred_check
    _
  $region11: #{_lambda_.38} parent=0 // pred_check_branch
    %13 = sbr.rel (0) target = $region13
  $region12: #{_lambda_.38} parent=0 // pred_region
    _
  $region13: #{_lambda_.38} parent=0 // pred_fallthru
    _
  %v14 = vld [vmem:[%s0] sm:$0xff]
  %v15 = vld [vmem:[%s1] sm:$0x1]
  %v17 = vperm.slane %v15, 0
  %v19 = vmul.f32 %v14, %v17
  %v20 = vld [vmem:[%s2] sm:$0x1]
  %v22 = vperm.slane %v20, 0
  %v24 = vadd.f32 %v19, %v22
  %v25 = vmax.f32 %v24, 0.0
  %26 = vst [vmem:[%s3] sm:$0xff] %v25
  // Predicated region
  $region14: #{_lambda_.38} parent=0 // pred_check
    _
  $region15: #{_lambda_.38} parent=0 // pred_check_branch
    %28 = sbr.rel (0) target = $region17
  $region16: #{_lambda_.38} parent=0 // pred_region
    _
  $region17: #{_lambda_.38} parent=0 // pred_fallthru
    _
  // Predicated region
  $region18: #{_lambda_.38} parent=0 // pred_check
    _
  $region19: #{_lambda_.38} parent=0 // pred_check_branch
    %30 = sbr.rel (0) target = $region21
  $region20: #{_lambda_.38} parent=0 // pred_region
    _
  $region21: #{_lambda_.38} parent=0 // pred_fallthru
    _

// kernel: _lambda_.36
$region0: #{_lambda_.36}
  #allocation0 [shape = 'u32[]', space=smem, size = 0x4, offset = 0x4, fixed_abs, tag = 'smem constant byte address 0x4 - core index']
  #allocation1 [shape = 'u32[72,128]{1,0:T(1,128)}', space=vmem, size = 0x9000, scoped, tag = 'internal scratch']
  #allocation2 [shape = 'f32[16,128]{1,0:T(8,128)}', space=vmem, size = 0x2000, scoped, tag = 'scratch operand']
  %s0 = inlined_call_operand.vmem [shape: bf16[16,576], index: 0, kind: input, shape index: {}]
  %s1 = inlined_call_operand.vmem [shape: bf16[576,128], index: 1, kind: input, shape index: {}]
  %s2 = inlined_call_operand.vmem [shape: f32[16,128], index: 2, kind: output, shape index: {}]
  %s3 = sld [smem:[#allocation0]]
  $region26: #{_lambda_.36} parent=0
    _
  %s5 = ssub.s32 1, %s3
  %s6 = scalar_select 0, %s5, %s3
  // Predicated region
  $region2: #{_lambda_.36} parent=0 // pred_check
    _
  $region3: #{_lambda_.36} parent=0 // pred_check_branch
    %8 = sbr.rel (0) target = $region5
  $region4: #{_lambda_.36} parent=0 // pred_region
    _
  $region5: #{_lambda_.36} parent=0 // pred_fallthru
    _
  // Predicated region
  $region6: #{_lambda_.36} parent=0 // pred_check
    _
  $region7: #{_lambda_.36} parent=0 // pred_check_branch
    %10 = sbr.rel (0) target = $region9
  $region8: #{_lambda_.36} parent=0 // pred_region
    _
  $region9: #{_lambda_.36} parent=0 // pred_fallthru
    _
  %p12 = scmp.eq.s32.totalorder 0, 0
  // Predicated region
  $region10: #{_lambda_.36} parent=0 // pred_check
    %p13 = pneg %p12
  $region11: #{_lambda_.36} parent=0 // pred_check_branch
    %15 = sbr.rel (%p13) target = $region13
  $region12: #{_lambda_.36} parent=0 // pred_region
    %16 = vst [vmem:[#allocation2] sm:$0xff] 0.0
    %17 = vst [vmem:[#allocation2 + $0x8] sm:$0xff] 0.0
  $region13: #{_lambda_.36} parent=0 // pred_fallthru
    _
  %v18 = vld [vmem:[#allocation2] sm:$0xff]
  %v19 = vld [vmem:[#allocation2 + $0x8] sm:$0xff]
  %v20 = vld [vmem:[%s0] sm:$0xff]
  %v21 = vld [vmem:[%s0 + $0x8] sm:$0xff]
  %v22 = vld [vmem:[%s0 + $0x10] sm:$0xf]
  %v23 = vld [vmem:[%s0 + $0x14] sm:$0xff]
  %v24 = vld [vmem:[%s0 + $0x1c] sm:$0xff]
  %v25 = vld [vmem:[%s0 + $0x24] sm:$0xf]
  %v26 = vld [vmem:[%s1] sm:$0xf]
  %v27 = vld [vmem:[%s1 + $0x4] sm:$0xf]
  %v28 = vld [vmem:[%s1 + $0x8] sm:$0xf]
  %v29 = vld [vmem:[%s1 + $0xc] sm:$0xf]
  %v30 = vld [vmem:[%s1 + $0x10] sm:$0xf]
  %v31 = vld [vmem:[%s1 + $0x14] sm:$0xf]
  %v32 = vld [vmem:[%s1 + $0x18] sm:$0xf]
  %v33 = vld [vmem:[%s1 + $0x1c] sm:$0xf]
  %v34 = vld [vmem:[%s1 + $0x20] sm:$0xf]
  %v35 = vld [vmem:[%s1 + $0x24] sm:$0xf]
  %v36 = vld [vmem:[%s1 + $0x28] sm:$0xf]
  %v37 = vld [vmem:[%s1 + $0x2c] sm:$0xf]
  %v38 = vld [vmem:[%s1 + $0x30] sm:$0xf]
  %v39 = vld [vmem:[%s1 + $0x34] sm:$0xf]
  %v40 = vld [vmem:[%s1 + $0x38] sm:$0xf]
  %v41 = vld [vmem:[%s1 + $0x3c] sm:$0xf]
  %v42 = vld [vmem:[%s1 + $0x40] sm:$0xf]
  %v43 = vld [vmem:[%s1 + $0x44] sm:$0xf]
  %v44 = vld [vmem:[%s1 + $0x48] sm:$0xf]
  %v45 = vld [vmem:[%s1 + $0x4c] sm:$0xf]
  %v46 = vld [vmem:[%s1 + $0x50] sm:$0xf]
  %v47 = vld [vmem:[%s1 + $0x54] sm:$0xf]
  %v48 = vld [vmem:[%s1 + $0x58] sm:$0xf]
  %v49 = vld [vmem:[%s1 + $0x5c] sm:$0xf]
  %v50 = vld [vmem:[%s1 + $0x60] sm:$0xf]
  %v51 = vld [vmem:[%s1 + $0x64] sm:$0xf]
  %v52 = vld [vmem:[%s1 + $0x68] sm:$0xf]
  %v53 = vld [vmem:[%s1 + $0x6c] sm:$0xf]
  %v54 = vld [vmem:[%s1 + $0x70] sm:$0xf]
  %v55 = vld [vmem:[%s1 + $0x74] sm:$0xf]
  %v56 = vld [vmem:[%s1 + $0x78] sm:$0xf]
  %v57 = vld [vmem:[%s1 + $0x7c] sm:$0xf]
  %v58 = vld [vmem:[%s1 + $0x80] sm:$0xf]
  %v59 = vld [vmem:[%s1 + $0x84] sm:$0xf]
  %v60 = vld [vmem:[%s1 + $0x88] sm:$0xf]
  %v61 = vld [vmem:[%s1 + $0x8c] sm:$0xf]
  %v62 = vld [vmem:[%s1 + $0x90] sm:$0xf]
  %v63 = vld [vmem:[%s1 + $0x94] sm:$0xf]
  %v64 = vld [vmem:[%s1 + $0x98] sm:$0xf]
  %v65 = vld [vmem:[%s1 + $0x9c] sm:$0xf]
  %v66 = vld [vmem:[%s1 + $0xa0] sm:$0xf]
  %v67 = vld [vmem:[%s1 + $0xa4] sm:$0xf]
  %v68 = vld [vmem:[%s1 + $0xa8] sm:$0xf]
  %v69 = vld [vmem:[%s1 + $0xac] sm:$0xf]
  %v70 = vld [vmem:[%s1 + $0xb0] sm:$0xf]
  %v71 = vld [vmem:[%s1 + $0xb4] sm:$0xf]
  %v72 = vld [vmem:[%s1 + $0xb8] sm:$0xf]
  %v73 = vld [vmem:[%s1 + $0xbc] sm:$0xf]
  %v74 = vld [vmem:[%s1 + $0xc0] sm:$0xf]
  %v75 = vld [vmem:[%s1 + $0xc4] sm:$0xf]
  %v76 = vld [vmem:[%s1 + $0xc8] sm:$0xf]
  %v77 = vld [vmem:[%s1 + $0xcc] sm:$0xf]
  %v78 = vld [vmem:[%s1 + $0xd0] sm:$0xf]
  %v79 = vld [vmem:[%s1 + $0xd4] sm:$0xf]
  %v80 = vld [vmem:[%s1 + $0xd8] sm:$0xf]
  %v81 = vld [vmem:[%s1 + $0xdc] sm:$0xf]
  %v82 = vld [vmem:[%s1 + $0xe0] sm:$0xf]
  %v83 = vld [vmem:[%s1 + $0xe4] sm:$0xf]
  %v84 = vld [vmem:[%s1 + $0xe8] sm:$0xf]
  %v85 = vld [vmem:[%s1 + $0xec] sm:$0xf]
  %v86 = vld [vmem:[%s1 + $0xf0] sm:$0xf]
  %v87 = vld [vmem:[%s1 + $0xf4] sm:$0xf]
  %v88 = vld [vmem:[%s1 + $0xf8] sm:$0xf]
  %v89 = vld [vmem:[%s1 + $0xfc] sm:$0xf]
  %v90 = vld [vmem:[%s1 + $0x100] sm:$0xf]
  %v91 = vld [vmem:[%s1 + $0x104] sm:$0xf]
  %v92 = vld [vmem:[%s1 + $0x108] sm:$0xf]
  %v93 = vld [vmem:[%s1 + $0x10c] sm:$0xf]
  %v94 = vld [vmem:[%s1 + $0x110] sm:$0xf]
  %v95 = vld [vmem:[%s1 + $0x114] sm:$0xf]
  %v96 = vld [vmem:[%s1 + $0x118] sm:$0xf]
  %v97 = vld [vmem:[%s1 + $0x11c] sm:$0xf]
  %v104 = vunpack.c.l.b16 %v20
  %v105 = vunpack.c.h.b16 %v20
  %v106 = vunpack.c.l.b16 %v21
  %v107 = vunpack.c.h.b16 %v21
  %v108 = vunpack.c.l.b16 %v22
  %v109 = vunpack.c.l.b16 %v23
  %v110 = vunpack.c.h.b16 %v23
  %v111 = vunpack.c.l.b16 %v24
  %v112 = vunpack.c.h.b16 %v24
  %v113 = vunpack.c.l.b16 %v25
  %v114 = vpack.c.b16 %v109, %v104
  %v115 = vpack.c.b16 %v110, %v105
  %v116 = vpack.c.b16 %v111, %v106
  %v117 = vpack.c.b16 %v112, %v107
  %v118 = vpack.c.b16 %v113, %v108
  %v195 = vunpack.c.l.b16 %v26
  %v196 = vunpack.c.l.b16 %v27
  %v197 = vunpack.c.l.b16 %v28
  %v198 = vunpack.c.l.b16 %v29
  %v199 = vunpack.c.l.b16 %v30
  %v200 = vunpack.c.l.b16 %v31
  %v201 = vunpack.c.l.b16 %v32
  %v202 = vunpack.c.l.b16 %v33
  %v203 = vunpack.c.l.b16 %v34
  %v204 = vunpack.c.l.b16 %v35
  %v205 = vunpack.c.l.b16 %v36
  %v206 = vunpack.c.l.b16 %v37
  %v207 = vunpack.c.l.b16 %v38
  %v208 = vunpack.c.l.b16 %v39
  %v209 = vunpack.c.l.b16 %v40
  %v210 = vunpack.c.l.b16 %v41
  %v211 = vunpack.c.l.b16 %v42
  %v212 = vunpack.c.l.b16 %v43
  %v213 = vunpack.c.l.b16 %v44
  %v214 = vunpack.c.l.b16 %v45
  %v215 = vunpack.c.l.b16 %v46
  %v216 = vunpack.c.l.b16 %v47
  %v217 = vunpack.c.l.b16 %v48
  %v218 = vunpack.c.l.b16 %v49
  %v219 = vunpack.c.l.b16 %v50
  %v220 = vunpack.c.l.b16 %v51
  %v221 = vunpack.c.l.b16 %v52
  %v222 = vunpack.c.l.b16 %v53
  %v223 = vunpack.c.l.b16 %v54
  %v224 = vunpack.c.l.b16 %v55
  %v225 = vunpack.c.l.b16 %v56
  %v226 = vunpack.c.l.b16 %v57
  %v227 = vunpack.c.l.b16 %v58
  %v228 = vunpack.c.l.b16 %v59
  %v229 = vunpack.c.l.b16 %v60
  %v230 = vunpack.c.l.b16 %v61
  %v231 = vunpack.c.l.b16 %v62
  %v232 = vunpack.c.l.b16 %v63
  %v233 = vunpack.c.l.b16 %v64
  %v234 = vunpack.c.l.b16 %v65
  %v235 = vunpack.c.l.b16 %v66
  %v236 = vunpack.c.l.b16 %v67
  %v237 = vunpack.c.l.b16 %v68
  %v238 = vunpack.c.l.b16 %v69
  %v239 = vunpack.c.l.b16 %v70
  %v240 = vunpack.c.l.b16 %v71
  %v241 = vunpack.c.l.b16 %v72
  %v242 = vunpack.c.l.b16 %v73
  %v243 = vunpack.c.l.b16 %v74
  %v244 = vunpack.c.l.b16 %v75
  %v245 = vunpack.c.l.b16 %v76
  %v246 = vunpack.c.l.b16 %v77
  %v247 = vunpack.c.l.b16 %v78
  %v248 = vunpack.c.l.b16 %v79
  %v249 = vunpack.c.l.b16 %v80
  %v250 = vunpack.c.l.b16 %v81
  %v251 = vunpack.c.l.b16 %v82
  %v252 = vunpack.c.l.b16 %v83
  %v253 = vunpack.c.l.b16 %v84
  %v254 = vunpack.c.l.b16 %v85
  %v255 = vunpack.c.l.b16 %v86
  %v256 = vunpack.c.l.b16 %v87
  %v257 = vunpack.c.l.b16 %v88
  %v258 = vunpack.c.l.b16 %v89
  %v259 = vunpack.c.l.b16 %v90
  %v260 = vunpack.c.l.b16 %v91
  %v261 = vunpack.c.l.b16 %v92
  %v262 = vunpack.c.l.b16 %v93
  %v263 = vunpack.c.l.b16 %v94
  %v264 = vunpack.c.l.b16 %v95
  %v265 = vunpack.c.l.b16 %v96
  %v266 = vunpack.c.l.b16 %v97
  %v267 = vpack.c.b16 %v196, %v195
  %v268 = vpack.c.b16 %v198, %v197
  %v269 = vpack.c.b16 %v200, %v199
  %v270 = vpack.c.b16 %v202, %v201
  %v271 = vpack.c.b16 %v204, %v203
  %v272 = vpack.c.b16 %v206, %v205
  %v273 = vpack.c.b16 %v208, %v207
  %v274 = vpack.c.b16 %v210, %v209
  %v275 = vpack.c.b16 %v212, %v211
  %v276 = vpack.c.b16 %v214, %v213
  %v277 = vpack.c.b16 %v216, %v215
  %v278 = vpack.c.b16 %v218, %v217
  %v279 = vpack.c.b16 %v220, %v219
  %v280 = vpack.c.b16 %v222, %v221
  %v281 = vpack.c.b16 %v224, %v223
  %v282 = vpack.c.b16 %v226, %v225
  %v283 = vpack.c.b16 %v228, %v227
  %v284 = vpack.c.b16 %v230, %v229
  %v285 = vpack.c.b16 %v232, %v231
  %v286 = vpack.c.b16 %v234, %v233
  %v287 = vpack.c.b16 %v236, %v235
  %v288 = vpack.c.b16 %v238, %v237
  %v289 = vpack.c.b16 %v240, %v239
  %v290 = vpack.c.b16 %v242, %v241
  %v291 = vpack.c.b16 %v244, %v243
  %v292 = vpack.c.b16 %v246, %v245
  %v293 = vpack.c.b16 %v248, %v247
  %v294 = vpack.c.b16 %v250, %v249
  %v295 = vpack.c.b16 %v252, %v251
  %v296 = vpack.c.b16 %v254, %v253
  %v297 = vpack.c.b16 %v256, %v255
  %v298 = vpack.c.b16 %v258, %v257
  %v299 = vpack.c.b16 %v260, %v259
  %v300 = vpack.c.b16 %v262, %v261
  %v301 = vpack.c.b16 %v264, %v263
  %v302 = vpack.c.b16 %v266, %v265
  %vm339 = vcmask 523264
  %v341 = vsel %vm339, %v118, 0
  %343 = vmatpush.bf16.msra.mxu0 %v274
  %344 = vmatpush.bf16.msra.mxu0 %v273
  %345 = vmatpush.bf16.msra.mxu0 %v272
  %346 = vmatpush.bf16.msra.mxu0 %v271
  %347 = vmatpush.bf16.msra.mxu0 %v270
  %348 = vmatpush.bf16.msra.mxu0 %v269
  %349 = vmatpush.bf16.msra.mxu0 %v268
  %350 = vmatpush.bf16.msra.mxu0 %v267
  %351 = vmatmul.bf16.gmra.mxu0 %v114
  %v352 = vpop.f32.mrf.mxu0
  %v353 = vadd.f32 0.0, %v352
  %v354 = vpop.f32.mrf.mxu0
  %v355 = vadd.f32 0.0, %v354
  %356 = vdwg.mxu0
  %357 = vmatpush.bf16.msra.mxu0 %v282
  %358 = vmatpush.bf16.msra.mxu0 %v281
  %359 = vmatpush.bf16.msra.mxu0 %v280
  %360 = vmatpush.bf16.msra.mxu0 %v279
  %361 = vmatpush.bf16.msra.mxu0 %v278
  %362 = vmatpush.bf16.msra.mxu0 %v277
  %363 = vmatpush.bf16.msra.mxu0 %v276
  %364 = vmatpush.bf16.msra.mxu0 %v275
  %365 = vmatmul.bf16.gmra.mxu0 %v115
  %v366 = vpop.f32.mrf.mxu0
  %v367 = vadd.f32 %v353, %v366
  %v368 = vpop.f32.mrf.mxu0
  %v369 = vadd.f32 %v355, %v368
  %370 = vdwg.mxu0
  %371 = vmatpush.bf16.msra.mxu0 %v290
  %372 = vmatpush.bf16.msra.mxu0 %v289
  %373 = vmatpush.bf16.msra.mxu0 %v288
  %374 = vmatpush.bf16.msra.mxu0 %v287
  %375 = vmatpush.bf16.msra.mxu0 %v286
  %376 = vmatpush.bf16.msra.mxu0 %v285
  %377 = vmatpush.bf16.msra.mxu0 %v284
  %378 = vmatpush.bf16.msra.mxu0 %v283
  %379 = vmatmul.bf16.gmra.mxu0 %v116
  %v380 = vpop.f32.mrf.mxu0
  %v381 = vadd.f32 %v367, %v380
  %v382 = vpop.f32.mrf.mxu0
  %v383 = vadd.f32 %v369, %v382
  %384 = vdwg.mxu0
  %385 = vmatpush.bf16.msra.mxu0 %v298
  %386 = vmatpush.bf16.msra.mxu0 %v297
  %387 = vmatpush.bf16.msra.mxu0 %v296
  %388 = vmatpush.bf16.msra.mxu0 %v295
  %389 = vmatpush.bf16.msra.mxu0 %v294
  %390 = vmatpush.bf16.msra.mxu0 %v293
  %391 = vmatpush.bf16.msra.mxu0 %v292
  %392 = vmatpush.bf16.msra.mxu0 %v291
  %393 = vmatmul.bf16.gmra.mxu0 %v117
  %v394 = vpop.f32.mrf.mxu0
  %v395 = vadd.f32 %v381, %v394
  %v396 = vpop.f32.mrf.mxu0
  %v397 = vadd.f32 %v383, %v396
  %398 = vdwg.mxu0
  %399 = vmatpush.bf16.msra.mxu0 0
  %400 = vmatpush.bf16.msra.mxu0 0
  %401 = vmatpush.bf16.msra.mxu0 0
  %402 = vmatpush.bf16.msra.mxu0 0
  %403 = vmatpush.bf16.msra.mxu0 %v302
  %404 = vmatpush.bf16.msra.mxu0 %v301
  %405 = vmatpush.bf16.msra.mxu0 %v300
  %406 = vmatpush.bf16.msra.mxu0 %v299
  %407 = vmatmul.bf16.gmra.mxu0 %v341
  %v408 = vpop.f32.mrf.mxu0
  %v409 = vadd.f32 %v395, %v408
  %v410 = vpop.f32.mrf.mxu0
  %v411 = vadd.f32 %v397, %v410
  %412 = vdwg.mxu0
  %v413 = vadd.f32 %v18, %v409
  %v414 = vadd.f32 %v19, %v411
  %415 = vst [vmem:[#allocation2] sm:$0xff] %v413
  %416 = vst [vmem:[#allocation2 + $0x8] sm:$0xff] %v414
  // Predicated region
  $region14: #{_lambda_.36} parent=0 // pred_check
    %p417 = pneg %p12
  $region15: #{_lambda_.36} parent=0 // pred_check_branch
    %419 = sbr.rel (%p417) target = $region17
  $region16: #{_lambda_.36} parent=0 // pred_region
    %v420 = vld [vmem:[#allocation2] sm:$0xff]
    %v421 = vld [vmem:[#allocation2 + $0x8] sm:$0xff]
    %422 = vst [vmem:[%s2] sm:$0xff] %v420
    %423 = vst [vmem:[%s2 + $0x8] sm:$0xff] %v421
  $region17: #{_lambda_.36} parent=0 // pred_fallthru
    _
  // Predicated region
  $region18: #{_lambda_.36} parent=0 // pred_check
    _
  $region19: #{_lambda_.36} parent=0 // pred_check_branch
    %425 = sbr.rel (0) target = $region21
  $region20: #{_lambda_.36} parent=0 // pred_region
    _
  $region21: #{_lambda_.36} parent=0 // pred_fallthru
    _
  // Predicated region
  $region22: #{_lambda_.36} parent=0 // pred_check
    _
  $region23: #{_lambda_.36} parent=0 // pred_check_branch
    %427 = sbr.rel (0) target = $region25
  $region24: #{_lambda_.36} parent=0 // pred_region
    _
  $region25: #{_lambda_.36} parent=0 // pred_fallthru
    _

// kernel: _lambda_.44
$region0: #{_lambda_.44}
  #allocation0 [shape = 'u32[]', space=smem, size = 0x4, offset = 0x4, fixed_abs, tag = 'smem constant byte address 0x4 - core index']
  #allocation1 [shape = 'u32[72,128]{1,0:T(1,128)}', space=vmem, size = 0x9000, scoped, tag = 'internal scratch']
  %s0 = inlined_call_operand.vmem [shape: f32[8,128], index: 0, kind: input, shape index: {}]
  %s1 = inlined_call_operand.vmem [shape: f32[1,128], index: 1, kind: input, shape index: {}]
  %s2 = inlined_call_operand.vmem [shape: f32[1,128], index: 2, kind: input, shape index: {}]
  %s3 = inlined_call_operand.vmem [shape: f32[8,128], index: 3, kind: input, shape index: {}]
  %s4 = inlined_call_operand.vmem [shape: f32[8,128], index: 4, kind: output, shape index: {}]
  %s5 = sld [smem:[#allocation0]]
  $region26: #{_lambda_.44} parent=0
    _
  %s7 = ssub.s32 1, %s5
  %s8 = scalar_select 0, %s7, %s5
  // Predicated region
  $region2: #{_lambda_.44} parent=0 // pred_check
    _
  $region3: #{_lambda_.44} parent=0 // pred_check_branch
    %10 = sbr.rel (0) target = $region5
  $region4: #{_lambda_.44} parent=0 // pred_region
    _
  $region5: #{_lambda_.44} parent=0 // pred_fallthru
    _
  // Predicated region
  $region6: #{_lambda_.44} parent=0 // pred_check
    _
  $region7: #{_lambda_.44} parent=0 // pred_check_branch
    %12 = sbr.rel (0) target = $region9
  $region8: #{_lambda_.44} parent=0 // pred_region
    _
  $region9: #{_lambda_.44} parent=0 // pred_fallthru
    _
  // Predicated region
  $region10: #{_lambda_.44} parent=0 // pred_check
    _
  $region11: #{_lambda_.44} parent=0 // pred_check_branch
    %14 = sbr.rel (0) target = $region13
  $region12: #{_lambda_.44} parent=0 // pred_region
    _
  $region13: #{_lambda_.44} parent=0 // pred_fallthru
    _
  // Predicated region
  $region14: #{_lambda_.44} parent=0 // pred_check
    _
  $region15: #{_lambda_.44} parent=0 // pred_check_branch
    %16 = sbr.rel (0) target = $region17
  $region16: #{_lambda_.44} parent=0 // pred_region
    _
  $region17: #{_lambda_.44} parent=0 // pred_fallthru
    _
  %v17 = vld [vmem:[%s0] sm:$0xff]
  %v18 = vld [vmem:[%s1] sm:$0x1]
  %v20 = vperm.slane %v18, 0
  %v22 = vmul.f32 %v17, %v20
  %v23 = vld [vmem:[%s2] sm:$0x1]
  %v25 = vperm.slane %v23, 0
  %v27 = vadd.f32 %v22, %v25
  %v28 = vld [vmem:[%s3] sm:$0xff]
  %v29 = vadd.f32 %v27, %v28
  %v30 = vmax.f32 %v29, 0.0
  %31 = vst [vmem:[%s4] sm:$0xff] %v30
  // Predicated region
  $region18: #{_lambda_.44} parent=0 // pred_check
    _
  $region19: #{_lambda_.44} parent=0 // pred_check_branch
    %33 = sbr.rel (0) target = $region21
  $region20: #{_lambda_.44} parent=0 // pred_region
    _
  $region21: #{_lambda_.44} parent=0 // pred_fallthru
    _
  // Predicated region
  $region22: #{_lambda_.44} parent=0 // pred_check
    _
  $region23: #{_lambda_.44} parent=0 // pred_check_branch
    %35 = sbr.rel (0) target = $region25
  $region24: #{_lambda_.44} parent=0 // pred_region
    _
  $region25: #{_lambda_.44} parent=0 // pred_fallthru
    _

// kernel: _lambda_.39
$region0: #{_lambda_.39}
  #allocation0 [shape = 'u32[]', space=smem, size = 0x4, offset = 0x4, fixed_abs, tag = 'smem constant byte address 0x4 - core index']
  #allocation1 [shape = 'u32[72,128]{1,0:T(1,128)}', space=vmem, size = 0x9000, scoped, tag = 'internal scratch']
  #allocation2 [shape = 'f32[16,128]{1,0:T(8,128)}', space=vmem, size = 0x2000, scoped, tag = 'scratch operand']
  %s0 = inlined_call_operand.vmem [shape: bf16[16,1152], index: 0, kind: input, shape index: {}]
  %s1 = inlined_call_operand.vmem [shape: bf16[1152,128], index: 1, kind: input, shape index: {}]
  %s2 = inlined_call_operand.vmem [shape: f32[16,128], index: 2, kind: output, shape index: {}]
  %s3 = sld [smem:[#allocation0]]
  $region26: #{_lambda_.39} parent=0
    _
  %s5 = ssub.s32 1, %s3
  %s6 = scalar_select 0, %s5, %s3
  // Predicated region
  $region2: #{_lambda_.39} parent=0 // pred_check
    _
  $region3: #{_lambda_.39} parent=0 // pred_check_branch
    %8 = sbr.rel (0) target = $region5
  $region4: #{_lambda_.39} parent=0 // pred_region
    _
  $region5: #{_lambda_.39} parent=0 // pred_fallthru
    _
  // Predicated region
  $region6: #{_lambda_.39} parent=0 // pred_check
    _
  $region7: #{_lambda_.39} parent=0 // pred_check_branch
    %10 = sbr.rel (0) target = $region9
  $region8: #{_lambda_.39} parent=0 // pred_region
    _
  $region9: #{_lambda_.39} parent=0 // pred_fallthru
    _
  %p11 = scmp.eq.s32.totalorder 0, 0
  // Predicated region
  $region10: #{_lambda_.39} parent=0 // pred_check
    %p12 = pneg %p11
  $region11: #{_lambda_.39} parent=0 // pred_check_branch
    %14 = sbr.rel (%p12) target = $region13
  $region12: #{_lambda_.39} parent=0 // pred_region
    %15 = vst [vmem:[#allocation2] sm:$0xff] 0.0
    %16 = vst [vmem:[#allocation2 + $0x8] sm:$0xff] 0.0
  $region13: #{_lambda_.39} parent=0 // pred_fallthru
    _
  %v17 = vld [vmem:[#allocation2] sm:$0xff]
  %v18 = vld [vmem:[#allocation2 + $0x8] sm:$0xff]
  %v19 = vld [vmem:[%s0] sm:$0xff]
  %v20 = vld [vmem:[%s0 + $0x8] sm:$0xff]
  %v21 = vld [vmem:[%s0 + $0x10] sm:$0xff]
  %v22 = vld [vmem:[%s0 + $0x18] sm:$0xff]
  %v23 = vld [vmem:[%s0 + $0x20] sm:$0xf]
  %v24 = vld [vmem:[%s0 + $0x24] sm:$0xff]
  %v25 = vld [vmem:[%s0 + $0x2c] sm:$0xff]
  %v26 = vld [vmem:[%s0 + $0x34] sm:$0xff]
  %v27 = vld [vmem:[%s0 + $0x3c] sm:$0xff]
  %v28 = vld [vmem:[%s0 + $0x44] sm:$0xf]
  %v29 = vld [vmem:[%s1] sm:$0xf]
  %v30 = vld [vmem:[%s1 + $0x4] sm:$0xf]
  %v31 = vld [vmem:[%s1 + $0x8] sm:$0xf]
  %v32 = vld [vmem:[%s1 + $0xc] sm:$0xf]
  %v33 = vld [vmem:[%s1 + $0x10] sm:$0xf]
  %v34 = vld [vmem:[%s1 + $0x14] sm:$0xf]
  %v35 = vld [vmem:[%s1 + $0x18] sm:$0xf]
  %v36 = vld [vmem:[%s1 + $0x1c] sm:$0xf]
  %v37 = vld [vmem:[%s1 + $0x20] sm:$0xf]
  %v38 = vld [vmem:[%s1 + $0x24] sm:$0xf]
  %v39 = vld [vmem:[%s1 + $0x28] sm:$0xf]
  %v40 = vld [vmem:[%s1 + $0x2c] sm:$0xf]
  %v41 = vld [vmem:[%s1 + $0x30] sm:$0xf]
  %v42 = vld [vmem:[%s1 + $0x34] sm:$0xf]
  %v43 = vld [vmem:[%s1 + $0x38] sm:$0xf]
  %v44 = vld [vmem:[%s1 + $0x3c] sm:$0xf]
  %v45 = vld [vmem:[%s1 + $0x40] sm:$0xf]
  %v46 = vld [vmem:[%s1 + $0x44] sm:$0xf]
  %v47 = vld [vmem:[%s1 + $0x48] sm:$0xf]
  %v48 = vld [vmem:[%s1 + $0x4c] sm:$0xf]
  %v49 = vld [vmem:[%s1 + $0x50] sm:$0xf]
  %v50 = vld [vmem:[%s1 + $0x54] sm:$0xf]
  %v51 = vld [vmem:[%s1 + $0x58] sm:$0xf]
  %v52 = vld [vmem:[%s1 + $0x5c] sm:$0xf]
  %v53 = vld [vmem:[%s1 + $0x60] sm:$0xf]
  %v54 = vld [vmem:[%s1 + $0x64] sm:$0xf]
  %v55 = vld [vmem:[%s1 + $0x68] sm:$0xf]
  %v56 = vld [vmem:[%s1 + $0x6c] sm:$0xf]
  %v57 = vld [vmem:[%s1 + $0x70] sm:$0xf]
  %v58 = vld [vmem:[%s1 + $0x74] sm:$0xf]
  %v59 = vld [vmem:[%s1 + $0x78] sm:$0xf]
  %v60 = vld [vmem:[%s1 + $0x7c] sm:$0xf]
  %v61 = vld [vmem:[%s1 + $0x80] sm:$0xf]
  %v62 = vld [vmem:[%s1 + $0x84] sm:$0xf]
  %v63 = vld [vmem:[%s1 + $0x88] sm:$0xf]
  %v64 = vld [vmem:[%s1 + $0x8c] sm:$0xf]
  %v65 = vld [vmem:[%s1 + $0x90] sm:$0xf]
  %v66 = vld [vmem:[%s1 + $0x94] sm:$0xf]
  %v67 = vld [vmem:[%s1 + $0x98] sm:$0xf]
  %v68 = vld [vmem:[%s1 + $0x9c] sm:$0xf]
  %v69 = vld [vmem:[%s1 + $0xa0] sm:$0xf]
  %v70 = vld [vmem:[%s1 + $0xa4] sm:$0xf]
  %v71 = vld [vmem:[%s1 + $0xa8] sm:$0xf]
  %v72 = vld [vmem:[%s1 + $0xac] sm:$0xf]
  %v73 = vld [vmem:[%s1 + $0xb0] sm:$0xf]
  %v74 = vld [vmem:[%s1 + $0xb4] sm:$0xf]
  %v75 = vld [vmem:[%s1 + $0xb8] sm:$0xf]
  %v76 = vld [vmem:[%s1 + $0xbc] sm:$0xf]
  %v77 = vld [vmem:[%s1 + $0xc0] sm:$0xf]
  %v78 = vld [vmem:[%s1 + $0xc4] sm:$0xf]
  %v79 = vld [vmem:[%s1 + $0xc8] sm:$0xf]
  %v80 = vld [vmem:[%s1 + $0xcc] sm:$0xf]
  %v81 = vld [vmem:[%s1 + $0xd0] sm:$0xf]
  %v82 = vld [vmem:[%s1 + $0xd4] sm:$0xf]
  %v83 = vld [vmem:[%s1 + $0xd8] sm:$0xf]
  %v84 = vld [vmem:[%s1 + $0xdc] sm:$0xf]
  %v85 = vld [vmem:[%s1 + $0xe0] sm:$0xf]
  %v86 = vld [vmem:[%s1 + $0xe4] sm:$0xf]
  %v87 = vld [vmem:[%s1 + $0xe8] sm:$0xf]
  %v88 = vld [vmem:[%s1 + $0xec] sm:$0xf]
  %v89 = vld [vmem:[%s1 + $0xf0] sm:$0xf]
  %v90 = vld [vmem:[%s1 + $0xf4] sm:$0xf]
  %v91 = vld [vmem:[%s1 + $0xf8] sm:$0xf]
  %v92 = vld [vmem:[%s1 + $0xfc] sm:$0xf]
  %v93 = vld [vmem:[%s1 + $0x100] sm:$0xf]
  %v94 = vld [vmem:[%s1 + $0x104] sm:$0xf]
  %v95 = vld [vmem:[%s1 + $0x108] sm:$0xf]
  %v96 = vld [vmem:[%s1 + $0x10c] sm:$0xf]
  %v97 = vld [vmem:[%s1 + $0x110] sm:$0xf]
  %v98 = vld [vmem:[%s1 + $0x114] sm:$0xf]
  %v99 = vld [vmem:[%s1 + $0x118] sm:$0xf]
  %v100 = vld [vmem:[%s1 + $0x11c] sm:$0xf]
  %v101 = vld [vmem:[%s1 + $0x120] sm:$0xf]
  %v102 = vld [vmem:[%s1 + $0x124] sm:$0xf]
  %v103 = vld [vmem:[%s1 + $0x128] sm:$0xf]
  %v104 = vld [vmem:[%s1 + $0x12c] sm:$0xf]
  %v105 = vld [vmem:[%s1 + $0x130] sm:$0xf]
  %v106 = vld [vmem:[%s1 + $0x134] sm:$0xf]
  %v107 = vld [vmem:[%s1 + $0x138] sm:$0xf]
  %v108 = vld [vmem:[%s1 + $0x13c] sm:$0xf]
  %v109 = vld [vmem:[%s1 + $0x140] sm:$0xf]
  %v110 = vld [vmem:[%s1 + $0x144] sm:$0xf]
  %v111 = vld [vmem:[%s1 + $0x148] sm:$0xf]
  %v112 = vld [vmem:[%s1 + $0x14c] sm:$0xf]
  %v113 = vld [vmem:[%s1 + $0x150] sm:$0xf]
  %v114 = vld [vmem:[%s1 + $0x154] sm:$0xf]
  %v115 = vld [vmem:[%s1 + $0x158] sm:$0xf]
  %v116 = vld [vmem:[%s1 + $0x15c] sm:$0xf]
  %v117 = vld [vmem:[%s1 + $0x160] sm:$0xf]
  %v118 = vld [vmem:[%s1 + $0x164] sm:$0xf]
  %v119 = vld [vmem:[%s1 + $0x168] sm:$0xf]
  %v120 = vld [vmem:[%s1 + $0x16c] sm:$0xf]
  %v121 = vld [vmem:[%s1 + $0x170] sm:$0xf]
  %v122 = vld [vmem:[%s1 + $0x174] sm:$0xf]
  %v123 = vld [vmem:[%s1 + $0x178] sm:$0xf]
  %v124 = vld [vmem:[%s1 + $0x17c] sm:$0xf]
  %v125 = vld [vmem:[%s1 + $0x180] sm:$0xf]
  %v126 = vld [vmem:[%s1 + $0x184] sm:$0xf]
  %v127 = vld [vmem:[%s1 + $0x188] sm:$0xf]
  %v128 = vld [vmem:[%s1 + $0x18c] sm:$0xf]
  %v129 = vld [vmem:[%s1 + $0x190] sm:$0xf]
  %v130 = vld [vmem:[%s1 + $0x194] sm:$0xf]
  %v131 = vld [vmem:[%s1 + $0x198] sm:$0xf]
  %v132 = vld [vmem:[%s1 + $0x19c] sm:$0xf]
  %v133 = vld [vmem:[%s1 + $0x1a0] sm:$0xf]
  %v134 = vld [vmem:[%s1 + $0x1a4] sm:$0xf]
  %v135 = vld [vmem:[%s1 + $0x1a8] sm:$0xf]
  %v136 = vld [vmem:[%s1 + $0x1ac] sm:$0xf]
  %v137 = vld [vmem:[%s1 + $0x1b0] sm:$0xf]
  %v138 = vld [vmem:[%s1 + $0x1b4] sm:$0xf]
  %v139 = vld [vmem:[%s1 + $0x1b8] sm:$0xf]
  %v140 = vld [vmem:[%s1 + $0x1bc] sm:$0xf]
  %v141 = vld [vmem:[%s1 + $0x1c0] sm:$0xf]
  %v142 = vld [vmem:[%s1 + $0x1c4] sm:$0xf]
  %v143 = vld [vmem:[%s1 + $0x1c8] sm:$0xf]
  %v144 = vld [vmem:[%s1 + $0x1cc] sm:$0xf]
  %v145 = vld [vmem:[%s1 + $0x1d0] sm:$0xf]
  %v146 = vld [vmem:[%s1 + $0x1d4] sm:$0xf]
  %v147 = vld [vmem:[%s1 + $0x1d8] sm:$0xf]
  %v148 = vld [vmem:[%s1 + $0x1dc] sm:$0xf]
  %v149 = vld [vmem:[%s1 + $0x1e0] sm:$0xf]
  %v150 = vld [vmem:[%s1 + $0x1e4] sm:$0xf]
  %v151 = vld [vmem:[%s1 + $0x1e8] sm:$0xf]
  %v152 = vld [vmem:[%s1 + $0x1ec] sm:$0xf]
  %v153 = vld [vmem:[%s1 + $0x1f0] sm:$0xf]
  %v154 = vld [vmem:[%s1 + $0x1f4] sm:$0xf]
  %v155 = vld [vmem:[%s1 + $0x1f8] sm:$0xf]
  %v156 = vld [vmem:[%s1 + $0x1fc] sm:$0xf]
  %v157 = vld [vmem:[%s1 + $0x200] sm:$0xf]
  %v158 = vld [vmem:[%s1 + $0x204] sm:$0xf]
  %v159 = vld [vmem:[%s1 + $0x208] sm:$0xf]
  %v160 = vld [vmem:[%s1 + $0x20c] sm:$0xf]
  %v161 = vld [vmem:[%s1 + $0x210] sm:$0xf]
  %v162 = vld [vmem:[%s1 + $0x214] sm:$0xf]
  %v163 = vld [vmem:[%s1 + $0x218] sm:$0xf]
  %v164 = vld [vmem:[%s1 + $0x21c] sm:$0xf]
  %v165 = vld [vmem:[%s1 + $0x220] sm:$0xf]
  %v166 = vld [vmem:[%s1 + $0x224] sm:$0xf]
  %v167 = vld [vmem:[%s1 + $0x228] sm:$0xf]
  %v168 = vld [vmem:[%s1 + $0x22c] sm:$0xf]
  %v169 = vld [vmem:[%s1 + $0x230] sm:$0xf]
  %v170 = vld [vmem:[%s1 + $0x234] sm:$0xf]
  %v171 = vld [vmem:[%s1 + $0x238] sm:$0xf]
  %v172 = vld [vmem:[%s1 + $0x23c] sm:$0xf]
  %v183 = vunpack.c.l.b16 %v19
  %v184 = vunpack.c.h.b16 %v19
  %v185 = vunpack.c.l.b16 %v20
  %v186 = vunpack.c.h.b16 %v20
  %v187 = vunpack.c.l.b16 %v21
  %v188 = vunpack.c.h.b16 %v21
  %v189 = vunpack.c.l.b16 %v22
  %v190 = vunpack.c.h.b16 %v22
  %v191 = vunpack.c.l.b16 %v23
  %v192 = vunpack.c.l.b16 %v24
  %v193 = vunpack.c.h.b16 %v24
  %v194 = vunpack.c.l.b16 %v25
  %v195 = vunpack.c.h.b16 %v25
  %v196 = vunpack.c.l.b16 %v26
  %v197 = vunpack.c.h.b16 %v26
  %v198 = vunpack.c.l.b16 %v27
  %v199 = vunpack.c.h.b16 %v27
  %v200 = vunpack.c.l.b16 %v28
  %v201 = vpack.c.b16 %v192, %v183
  %v202 = vpack.c.b16 %v193, %v184
  %v203 = vpack.c.b16 %v194, %v185
  %v204 = vpack.c.b16 %v195, %v186
  %v205 = vpack.c.b16 %v196, %v187
  %v206 = vpack.c.b16 %v197, %v188
  %v207 = vpack.c.b16 %v198, %v189
  %v208 = vpack.c.b16 %v199, %v190
  %v209 = vpack.c.b16 %v200, %v191
  %v363 = vunpack.c.l.b16 %v29
  %v364 = vunpack.c.l.b16 %v30
  %v365 = vunpack.c.l.b16 %v31
  %v366 = vunpack.c.l.b16 %v32
  %v367 = vunpack.c.l.b16 %v33
  %v368 = vunpack.c.l.b16 %v34
  %v369 = vunpack.c.l.b16 %v35
  %v370 = vunpack.c.l.b16 %v36
  %v371 = vunpack.c.l.b16 %v37
  %v372 = vunpack.c.l.b16 %v38
  %v373 = vunpack.c.l.b16 %v39
  %v374 = vunpack.c.l.b16 %v40
  %v375 = vunpack.c.l.b16 %v41
  %v376 = vunpack.c.l.b16 %v42
  %v377 = vunpack.c.l.b16 %v43
  %v378 = vunpack.c.l.b16 %v44
  %v379 = vunpack.c.l.b16 %v45
  %v380 = vunpack.c.l.b16 %v46
  %v381 = vunpack.c.l.b16 %v47
  %v382 = vunpack.c.l.b16 %v48
  %v383 = vunpack.c.l.b16 %v49
  %v384 = vunpack.c.l.b16 %v50
  %v385 = vunpack.c.l.b16 %v51
  %v386 = vunpack.c.l.b16 %v52
  %v387 = vunpack.c.l.b16 %v53
  %v388 = vunpack.c.l.b16 %v54
  %v389 = vunpack.c.l.b16 %v55
  %v390 = vunpack.c.l.b16 %v56
  %v391 = vunpack.c.l.b16 %v57
  %v392 = vunpack.c.l.b16 %v58
  %v393 = vunpack.c.l.b16 %v59
  %v394 = vunpack.c.l.b16 %v60
  %v395 = vunpack.c.l.b16 %v61
  %v396 = vunpack.c.l.b16 %v62
  %v397 = vunpack.c.l.b16 %v63
  %v398 = vunpack.c.l.b16 %v64
  %v399 = vunpack.c.l.b16 %v65
  %v400 = vunpack.c.l.b16 %v66
  %v401 = vunpack.c.l.b16 %v67
  %v402 = vunpack.c.l.b16 %v68
  %v403 = vunpack.c.l.b16 %v69
  %v404 = vunpack.c.l.b16 %v70
  %v405 = vunpack.c.l.b16 %v71
  %v406 = vunpack.c.l.b16 %v72
  %v407 = vunpack.c.l.b16 %v73
  %v408 = vunpack.c.l.b16 %v74
  %v409 = vunpack.c.l.b16 %v75
  %v410 = vunpack.c.l.b16 %v76
  %v411 = vunpack.c.l.b16 %v77
  %v412 = vunpack.c.l.b16 %v78
  %v413 = vunpack.c.l.b16 %v79
  %v414 = vunpack.c.l.b16 %v80
  %v415 = vunpack.c.l.b16 %v81
  %v416 = vunpack.c.l.b16 %v82
  %v417 = vunpack.c.l.b16 %v83
  %v418 = vunpack.c.l.b16 %v84
  %v419 = vunpack.c.l.b16 %v85
  %v420 = vunpack.c.l.b16 %v86
  %v421 = vunpack.c.l.b16 %v87
  %v422 = vunpack.c.l.b16 %v88
  %v423 = vunpack.c.l.b16 %v89
  %v424 = vunpack.c.l.b16 %v90
  %v425 = vunpack.c.l.b16 %v91
  %v426 = vunpack.c.l.b16 %v92
  %v427 = vunpack.c.l.b16 %v93
  %v428 = vunpack.c.l.b16 %v94
  %v429 = vunpack.c.l.b16 %v95
  %v430 = vunpack.c.l.b16 %v96
  %v431 = vunpack.c.l.b16 %v97
  %v432 = vunpack.c.l.b16 %v98
  %v433 = vunpack.c.l.b16 %v99
  %v434 = vunpack.c.l.b16 %v100
  %v435 = vunpack.c.l.b16 %v101
  %v436 = vunpack.c.l.b16 %v102
  %v437 = vunpack.c.l.b16 %v103
  %v438 = vunpack.c.l.b16 %v104
  %v439 = vunpack.c.l.b16 %v105
  %v440 = vunpack.c.l.b16 %v106
  %v441 = vunpack.c.l.b16 %v107
  %v442 = vunpack.c.l.b16 %v108
  %v443 = vunpack.c.l.b16 %v109
  %v444 = vunpack.c.l.b16 %v110
  %v445 = vunpack.c.l.b16 %v111
  %v446 = vunpack.c.l.b16 %v112
  %v447 = vunpack.c.l.b16 %v113
  %v448 = vunpack.c.l.b16 %v114
  %v449 = vunpack.c.l.b16 %v115
  %v450 = vunpack.c.l.b16 %v116
  %v451 = vunpack.c.l.b16 %v117
  %v452 = vunpack.c.l.b16 %v118
  %v453 = vunpack.c.l.b16 %v119
  %v454 = vunpack.c.l.b16 %v120
  %v455 = vunpack.c.l.b16 %v121
  %v456 = vunpack.c.l.b16 %v122
  %v457 = vunpack.c.l.b16 %v123
  %v458 = vunpack.c.l.b16 %v124
  %v459 = vunpack.c.l.b16 %v125
  %v460 = vunpack.c.l.b16 %v126
  %v461 = vunpack.c.l.b16 %v127
  %v462 = vunpack.c.l.b16 %v128
  %v463 = vunpack.c.l.b16 %v129
  %v464 = vunpack.c.l.b16 %v130
  %v465 = vunpack.c.l.b16 %v131
  %v466 = vunpack.c.l.b16 %v132
  %v467 = vunpack.c.l.b16 %v133
  %v468 = vunpack.c.l.b16 %v134
  %v469 = vunpack.c.l.b16 %v135
  %v470 = vunpack.c.l.b16 %v136
  %v471 = vunpack.c.l.b16 %v137
  %v472 = vunpack.c.l.b16 %v138
  %v473 = vunpack.c.l.b16 %v139
  %v474 = vunpack.c.l.b16 %v140
  %v475 = vunpack.c.l.b16 %v141
  %v476 = vunpack.c.l.b16 %v142
  %v477 = vunpack.c.l.b16 %v143
  %v478 = vunpack.c.l.b16 %v144
  %v479 = vunpack.c.l.b16 %v145
  %v480 = vunpack.c.l.b16 %v146
  %v481 = vunpack.c.l.b16 %v147
  %v482 = vunpack.c.l.b16 %v148
  %v483 = vunpack.c.l.b16 %v149
  %v484 = vunpack.c.l.b16 %v150
  %v485 = vunpack.c.l.b16 %v151
  %v486 = vunpack.c.l.b16 %v152
  %v487 = vunpack.c.l.b16 %v153
  %v488 = vunpack.c.l.b16 %v154
  %v489 = vunpack.c.l.b16 %v155
  %v490 = vunpack.c.l.b16 %v156
  %v491 = vunpack.c.l.b16 %v157
  %v492 = vunpack.c.l.b16 %v158
  %v493 = vunpack.c.l.b16 %v159
  %v494 = vunpack.c.l.b16 %v160
  %v495 = vunpack.c.l.b16 %v161
  %v496 = vunpack.c.l.b16 %v162
  %v497 = vunpack.c.l.b16 %v163
  %v498 = vunpack.c.l.b16 %v164
  %v499 = vunpack.c.l.b16 %v165
  %v500 = vunpack.c.l.b16 %v166
  %v501 = vunpack.c.l.b16 %v167
  %v502 = vunpack.c.l.b16 %v168
  %v503 = vunpack.c.l.b16 %v169
  %v504 = vunpack.c.l.b16 %v170
  %v505 = vunpack.c.l.b16 %v171
  %v506 = vunpack.c.l.b16 %v172
  %v507 = vpack.c.b16 %v364, %v363
  %v508 = vpack.c.b16 %v366, %v365
  %v509 = vpack.c.b16 %v368, %v367
  %v510 = vpack.c.b16 %v370, %v369
  %v511 = vpack.c.b16 %v372, %v371
  %v512 = vpack.c.b16 %v374, %v373
  %v513 = vpack.c.b16 %v376, %v375
  %v514 = vpack.c.b16 %v378, %v377
  %v515 = vpack.c.b16 %v380, %v379
  %v516 = vpack.c.b16 %v382, %v381
  %v517 = vpack.c.b16 %v384, %v383
  %v518 = vpack.c.b16 %v386, %v385
  %v519 = vpack.c.b16 %v388, %v387
  %v520 = vpack.c.b16 %v390, %v389
  %v521 = vpack.c.b16 %v392, %v391
  %v522 = vpack.c.b16 %v394, %v393
  %v523 = vpack.c.b16 %v396, %v395
  %v524 = vpack.c.b16 %v398, %v397
  %v525 = vpack.c.b16 %v400, %v399
  %v526 = vpack.c.b16 %v402, %v401
  %v527 = vpack.c.b16 %v404, %v403
  %v528 = vpack.c.b16 %v406, %v405
  %v529 = vpack.c.b16 %v408, %v407
  %v530 = vpack.c.b16 %v410, %v409
  %v531 = vpack.c.b16 %v412, %v411
  %v532 = vpack.c.b16 %v414, %v413
  %v533 = vpack.c.b16 %v416, %v415
  %v534 = vpack.c.b16 %v418, %v417
  %v535 = vpack.c.b16 %v420, %v419
  %v536 = vpack.c.b16 %v422, %v421
  %v537 = vpack.c.b16 %v424, %v423
  %v538 = vpack.c.b16 %v426, %v425
  %v539 = vpack.c.b16 %v428, %v427
  %v540 = vpack.c.b16 %v430, %v429
  %v541 = vpack.c.b16 %v432, %v431
  %v542 = vpack.c.b16 %v434, %v433
  %v543 = vpack.c.b16 %v436, %v435
  %v544 = vpack.c.b16 %v438, %v437
  %v545 = vpack.c.b16 %v440, %v439
  %v546 = vpack.c.b16 %v442, %v441
  %v547 = vpack.c.b16 %v444, %v443
  %v548 = vpack.c.b16 %v446, %v445
  %v549 = vpack.c.b16 %v448, %v447
  %v550 = vpack.c.b16 %v450, %v449
  %v551 = vpack.c.b16 %v452, %v451
  %v552 = vpack.c.b16 %v454, %v453
  %v553 = vpack.c.b16 %v456, %v455
  %v554 = vpack.c.b16 %v458, %v457
  %v555 = vpack.c.b16 %v460, %v459
  %v556 = vpack.c.b16 %v462, %v461
  %v557 = vpack.c.b16 %v464, %v463
  %v558 = vpack.c.b16 %v466, %v465
  %v559 = vpack.c.b16 %v468, %v467
  %v560 = vpack.c.b16 %v470, %v469
  %v561 = vpack.c.b16 %v472, %v471
  %v562 = vpack.c.b16 %v474, %v473
  %v563 = vpack.c.b16 %v476, %v475
  %v564 = vpack.c.b16 %v478, %v477
  %v565 = vpack.c.b16 %v480, %v479
  %v566 = vpack.c.b16 %v482, %v481
  %v567 = vpack.c.b16 %v484, %v483
  %v568 = vpack.c.b16 %v486, %v485
  %v569 = vpack.c.b16 %v488, %v487
  %v570 = vpack.c.b16 %v490, %v489
  %v571 = vpack.c.b16 %v492, %v491
  %v572 = vpack.c.b16 %v494, %v493
  %v573 = vpack.c.b16 %v496, %v495
  %v574 = vpack.c.b16 %v498, %v497
  %v575 = vpack.c.b16 %v500, %v499
  %v576 = vpack.c.b16 %v502, %v501
  %v577 = vpack.c.b16 %v504, %v503
  %v578 = vpack.c.b16 %v506, %v505
  %651 = vmatpush.bf16.msra.mxu0 %v514
  %652 = vmatpush.bf16.msra.mxu0 %v513
  %653 = vmatpush.bf16.msra.mxu0 %v512
  %654 = vmatpush.bf16.msra.mxu0 %v511
  %655 = vmatpush.bf16.msra.mxu0 %v510
  %656 = vmatpush.bf16.msra.mxu0 %v509
  %657 = vmatpush.bf16.msra.mxu0 %v508
  %658 = vmatpush.bf16.msra.mxu0 %v507
  %659 = vmatmul.bf16.gmra.mxu0 %v201
  %v660 = vpop.f32.mrf.mxu0
  %v661 = vadd.f32 0.0, %v660
  %v662 = vpop.f32.mrf.mxu0
  %v663 = vadd.f32 0.0, %v662
  %664 = vdwg.mxu0
  %665 = vmatpush.bf16.msra.mxu0 %v522
  %666 = vmatpush.bf16.msra.mxu0 %v521
  %667 = vmatpush.bf16.msra.mxu0 %v520
  %668 = vmatpush.bf16.msra.mxu0 %v519
  %669 = vmatpush.bf16.msra.mxu0 %v518
  %670 = vmatpush.bf16.msra.mxu0 %v517
  %671 = vmatpush.bf16.msra.mxu0 %v516
  %672 = vmatpush.bf16.msra.mxu0 %v515
  %673 = vmatmul.bf16.gmra.mxu0 %v202
  %v674 = vpop.f32.mrf.mxu0
  %v675 = vadd.f32 %v661, %v674
  %v676 = vpop.f32.mrf.mxu0
  %v677 = vadd.f32 %v663, %v676
  %678 = vdwg.mxu0
  %679 = vmatpush.bf16.msra.mxu0 %v530
  %680 = vmatpush.bf16.msra.mxu0 %v529
  %681 = vmatpush.bf16.msra.mxu0 %v528
  %682 = vmatpush.bf16.msra.mxu0 %v527
  %683 = vmatpush.bf16.msra.mxu0 %v526
  %684 = vmatpush.bf16.msra.mxu0 %v525
  %685 = vmatpush.bf16.msra.mxu0 %v524
  %686 = vmatpush.bf16.msra.mxu0 %v523
  %687 = vmatmul.bf16.gmra.mxu0 %v203
  %v688 = vpop.f32.mrf.mxu0
  %v689 = vadd.f32 %v675, %v688
  %v690 = vpop.f32.mrf.mxu0
  %v691 = vadd.f32 %v677, %v690
  %692 = vdwg.mxu0
  %693 = vmatpush.bf16.msra.mxu0 %v538
  %694 = vmatpush.bf16.msra.mxu0 %v537
  %695 = vmatpush.bf16.msra.mxu0 %v536
  %696 = vmatpush.bf16.msra.mxu0 %v535
  %697 = vmatpush.bf16.msra.mxu0 %v534
  %698 = vmatpush.bf16.msra.mxu0 %v533
  %699 = vmatpush.bf16.msra.mxu0 %v532
  %700 = vmatpush.bf16.msra.mxu0 %v531
  %701 = vmatmul.bf16.gmra.mxu0 %v204
  %v702 = vpop.f32.mrf.mxu0
  %v703 = vadd.f32 %v689, %v702
  %v704 = vpop.f32.mrf.mxu0
  %v705 = vadd.f32 %v691, %v704
  %706 = vdwg.mxu0
  %707 = vmatpush.bf16.msra.mxu0 %v546
  %708 = vmatpush.bf16.msra.mxu0 %v545
  %709 = vmatpush.bf16.msra.mxu0 %v544
  %710 = vmatpush.bf16.msra.mxu0 %v543
  %711 = vmatpush.bf16.msra.mxu0 %v542
  %712 = vmatpush.bf16.msra.mxu0 %v541
  %713 = vmatpush.bf16.msra.mxu0 %v540
  %714 = vmatpush.bf16.msra.mxu0 %v539
  %715 = vmatmul.bf16.gmra.mxu0 %v205
  %v716 = vpop.f32.mrf.mxu0
  %v717 = vadd.f32 %v703, %v716
  %v718 = vpop.f32.mrf.mxu0
  %v719 = vadd.f32 %v705, %v718
  %720 = vdwg.mxu0
  %721 = vmatpush.bf16.msra.mxu0 %v554
  %722 = vmatpush.bf16.msra.mxu0 %v553
  %723 = vmatpush.bf16.msra.mxu0 %v552
  %724 = vmatpush.bf16.msra.mxu0 %v551
  %725 = vmatpush.bf16.msra.mxu0 %v550
  %726 = vmatpush.bf16.msra.mxu0 %v549
  %727 = vmatpush.bf16.msra.mxu0 %v548
  %728 = vmatpush.bf16.msra.mxu0 %v547
  %729 = vmatmul.bf16.gmra.mxu0 %v206
  %v730 = vpop.f32.mrf.mxu0
  %v731 = vadd.f32 %v717, %v730
  %v732 = vpop.f32.mrf.mxu0
  %v733 = vadd.f32 %v719, %v732
  %734 = vdwg.mxu0
  %735 = vmatpush.bf16.msra.mxu0 %v562
  %736 = vmatpush.bf16.msra.mxu0 %v561
  %737 = vmatpush.bf16.msra.mxu0 %v560
  %738 = vmatpush.bf16.msra.mxu0 %v559
  %739 = vmatpush.bf16.msra.mxu0 %v558
  %740 = vmatpush.bf16.msra.mxu0 %v557
  %741 = vmatpush.bf16.msra.mxu0 %v556
  %742 = vmatpush.bf16.msra.mxu0 %v555
  %743 = vmatmul.bf16.gmra.mxu0 %v207
  %v744 = vpop.f32.mrf.mxu0
  %v745 = vadd.f32 %v731, %v744
  %v746 = vpop.f32.mrf.mxu0
  %v747 = vadd.f32 %v733, %v746
  %748 = vdwg.mxu0
  %749 = vmatpush.bf16.msra.mxu0 %v570
  %750 = vmatpush.bf16.msra.mxu0 %v569
  %751 = vmatpush.bf16.msra.mxu0 %v568
  %752 = vmatpush.bf16.msra.mxu0 %v567
  %753 = vmatpush.bf16.msra.mxu0 %v566
  %754 = vmatpush.bf16.msra.mxu0 %v565
  %755 = vmatpush.bf16.msra.mxu0 %v564
  %756 = vmatpush.bf16.msra.mxu0 %v563
  %757 = vmatmul.bf16.gmra.mxu0 %v208
  %v758 = vpop.f32.mrf.mxu0
  %v759 = vadd.f32 %v745, %v758
  %v760 = vpop.f32.mrf.mxu0
  %v761 = vadd.f32 %v747, %v760
  %762 = vdwg.mxu0
  %763 = vmatpush.bf16.msra.mxu0 %v578
  %764 = vmatpush.bf16.msra.mxu0 %v577
  %765 = vmatpush.bf16.msra.mxu0 %v576
  %766 = vmatpush.bf16.msra.mxu0 %v575
  %767 = vmatpush.bf16.msra.mxu0 %v574
  %768 = vmatpush.bf16.msra.mxu0 %v573
  %769 = vmatpush.bf16.msra.mxu0 %v572
  %770 = vmatpush.bf16.msra.mxu0 %v571
  %771 = vmatmul.bf16.gmra.mxu0 %v209
  %v772 = vpop.f32.mrf.mxu0
  %v773 = vadd.f32 %v759, %v772
  %v774 = vpop.f32.mrf.mxu0
  %v775 = vadd.f32 %v761, %v774
  %776 = vdwg.mxu0
  %v777 = vadd.f32 %v17, %v773
  %v778 = vadd.f32 %v18, %v775
  %779 = vst [vmem:[#allocation2] sm:$0xff] %v777
  %780 = vst [vmem:[#allocation2 + $0x8] sm:$0xff] %v778
  // Predicated region
  $region14: #{_lambda_.39} parent=0 // pred_check
    %p781 = pneg %p11
  $region15: #{_lambda_.39} parent=0 // pred_check_branch
    %783 = sbr.rel (%p781) target = $region17
  $region16: #{_lambda_.39} parent=0 // pred_region
    %v784 = vld [vmem:[#allocation2] sm:$0xff]
    %v785 = vld [vmem:[#allocation2 + $0x8] sm:$0xff]
    %786 = vst [vmem:[%s2] sm:$0xff] %v784
    %787 = vst [vmem:[%s2 + $0x8] sm:$0xff] %v785
  $region17: #{_lambda_.39} parent=0 // pred_fallthru
    _
  // Predicated region
  $region18: #{_lambda_.39} parent=0 // pred_check
    _
  $region19: #{_lambda_.39} parent=0 // pred_check_branch
    %789 = sbr.rel (0) target = $region21
  $region20: #{_lambda_.39} parent=0 // pred_region
    _
  $region21: #{_lambda_.39} parent=0 // pred_fallthru
    _
  // Predicated region
  $region22: #{_lambda_.39} parent=0 // pred_check
    _
  $region23: #{_lambda_.39} parent=0 // pred_check_branch
    %791 = sbr.rel (0) target = $region25
  $region24: #{_lambda_.39} parent=0 // pred_region
    _
  $region25: #{_lambda_.39} parent=0 // pred_fallthru
    _

// kernel: _lambda_.49
$region0: #{_lambda_.49}
  #allocation0 [shape = 'u32[]', space=smem, size = 0x4, offset = 0x4, fixed_abs, tag = 'smem constant byte address 0x4 - core index']
  #allocation1 [shape = 'u32[72,128]{1,0:T(1,128)}', space=vmem, size = 0x9000, scoped, tag = 'internal scratch']
  #allocation2 [shape = 'f32[16,256]{1,0:T(8,128)}', space=vmem, size = 0x4000, scoped, tag = 'scratch operand']
  %s0 = inlined_call_operand.vmem [shape: bf16[16,128], index: 0, kind: input, shape index: {}]
  %s1 = inlined_call_operand.vmem [shape: bf16[128,256], index: 1, kind: input, shape index: {}]
  %s2 = inlined_call_operand.vmem [shape: f32[16,256], index: 2, kind: output, shape index: {}]
  %s3 = sld [smem:[#allocation0]]
  $region26: #{_lambda_.49} parent=0
    _
  %s5 = ssub.s32 1, %s3
  %s6 = scalar_select 0, %s5, %s3
  // Predicated region
  $region2: #{_lambda_.49} parent=0 // pred_check
    _
  $region3: #{_lambda_.49} parent=0 // pred_check_branch
    %8 = sbr.rel (0) target = $region5
  $region4: #{_lambda_.49} parent=0 // pred_region
    _
  $region5: #{_lambda_.49} parent=0 // pred_fallthru
    _
  // Predicated region
  $region6: #{_lambda_.49} parent=0 // pred_check
    _
  $region7: #{_lambda_.49} parent=0 // pred_check_branch
    %10 = sbr.rel (0) target = $region9
  $region8: #{_lambda_.49} parent=0 // pred_region
    _
  $region9: #{_lambda_.49} parent=0 // pred_fallthru
    _
  %p11 = scmp.eq.s32.totalorder 0, 0
  // Predicated region
  $region10: #{_lambda_.49} parent=0 // pred_check
    %p12 = pneg %p11
  $region11: #{_lambda_.49} parent=0 // pred_check_branch
    %14 = sbr.rel (%p12) target = $region13
  $region12: #{_lambda_.49} parent=0 // pred_region
    %15 = vst [vmem:[#allocation2] sm:$0xff] 0.0
    %16 = vst [vmem:[#allocation2 + $0x8] sm:$0xff] 0.0
    %17 = vst [vmem:[#allocation2 + $0x10] sm:$0xff] 0.0
    %18 = vst [vmem:[#allocation2 + $0x18] sm:$0xff] 0.0
  $region13: #{_lambda_.49} parent=0 // pred_fallthru
    _
  %v19 = vld [vmem:[#allocation2] sm:$0xff]
  %v20 = vld [vmem:[#allocation2 + $0x8] sm:$0xff]
  %v21 = vld [vmem:[#allocation2 + $0x10] sm:$0xff]
  %v22 = vld [vmem:[#allocation2 + $0x18] sm:$0xff]
  %v23 = vld [vmem:[%s0] sm:$0xf]
  %v24 = vld [vmem:[%s0 + $0x4] sm:$0xf]
  %v25 = vld [vmem:[%s1] sm:$0xff]
  %v26 = vld [vmem:[%s1 + $0x8] sm:$0xff]
  %v27 = vld [vmem:[%s1 + $0x10] sm:$0xff]
  %v28 = vld [vmem:[%s1 + $0x18] sm:$0xff]
  %v29 = vld [vmem:[%s1 + $0x20] sm:$0xff]
  %v30 = vld [vmem:[%s1 + $0x28] sm:$0xff]
  %v31 = vld [vmem:[%s1 + $0x30] sm:$0xff]
  %v32 = vld [vmem:[%s1 + $0x38] sm:$0xff]
  %v33 = vld [vmem:[%s1 + $0x40] sm:$0xff]
  %v34 = vld [vmem:[%s1 + $0x48] sm:$0xff]
  %v35 = vld [vmem:[%s1 + $0x50] sm:$0xff]
  %v36 = vld [vmem:[%s1 + $0x58] sm:$0xff]
  %v37 = vld [vmem:[%s1 + $0x60] sm:$0xff]
  %v38 = vld [vmem:[%s1 + $0x68] sm:$0xff]
  %v39 = vld [vmem:[%s1 + $0x70] sm:$0xff]
  %v40 = vld [vmem:[%s1 + $0x78] sm:$0xff]
  %v43 = vunpack.c.l.b16 %v23
  %v44 = vunpack.c.l.b16 %v24
  %v45 = vpack.c.b16 %v44, %v43
  %v63 = vunpack.c.l.b16 %v25
  %v64 = vunpack.c.h.b16 %v25
  %v65 = vunpack.c.l.b16 %v26
  %v66 = vunpack.c.h.b16 %v26
  %v67 = vunpack.c.l.b16 %v27
  %v68 = vunpack.c.h.b16 %v27
  %v69 = vunpack.c.l.b16 %v28
  %v70 = vunpack.c.h.b16 %v28
  %v71 = vunpack.c.l.b16 %v29
  %v72 = vunpack.c.h.b16 %v29
  %v73 = vunpack.c.l.b16 %v30
  %v74 = vunpack.c.h.b16 %v30
  %v75 = vunpack.c.l.b16 %v31
  %v76 = vunpack.c.h.b16 %v31
  %v77 = vunpack.c.l.b16 %v32
  %v78 = vunpack.c.h.b16 %v32
  %v79 = vunpack.c.l.b16 %v33
  %v80 = vunpack.c.h.b16 %v33
  %v81 = vunpack.c.l.b16 %v34
  %v82 = vunpack.c.h.b16 %v34
  %v83 = vunpack.c.l.b16 %v35
  %v84 = vunpack.c.h.b16 %v35
  %v85 = vunpack.c.l.b16 %v36
  %v86 = vunpack.c.h.b16 %v36
  %v87 = vunpack.c.l.b16 %v37
  %v88 = vunpack.c.h.b16 %v37
  %v89 = vunpack.c.l.b16 %v38
  %v90 = vunpack.c.h.b16 %v38
  %v91 = vunpack.c.l.b16 %v39
  %v92 = vunpack.c.h.b16 %v39
  %v93 = vunpack.c.l.b16 %v40
  %v94 = vunpack.c.h.b16 %v40
  %v95 = vpack.c.b16 %v65, %v63
  %v96 = vpack.c.b16 %v66, %v64
  %v97 = vpack.c.b16 %v69, %v67
  %v98 = vpack.c.b16 %v70, %v68
  %v99 = vpack.c.b16 %v73, %v71
  %v100 = vpack.c.b16 %v74, %v72
  %v101 = vpack.c.b16 %v77, %v75
  %v102 = vpack.c.b16 %v78, %v76
  %v103 = vpack.c.b16 %v81, %v79
  %v104 = vpack.c.b16 %v82, %v80
  %v105 = vpack.c.b16 %v85, %v83
  %v106 = vpack.c.b16 %v86, %v84
  %v107 = vpack.c.b16 %v89, %v87
  %v108 = vpack.c.b16 %v90, %v88
  %v109 = vpack.c.b16 %v93, %v91
  %v110 = vpack.c.b16 %v94, %v92
  %127 = vmatpush.bf16.msra.mxu0 %v109
  %128 = vmatpush.bf16.msra.mxu0 %v107
  %129 = vmatpush.bf16.msra.mxu0 %v105
  %130 = vmatpush.bf16.msra.mxu0 %v103
  %131 = vmatpush.bf16.msra.mxu0 %v101
  %132 = vmatpush.bf16.msra.mxu0 %v99
  %133 = vmatpush.bf16.msra.mxu0 %v97
  %134 = vmatpush.bf16.msra.mxu0 %v95
  %135 = vmatmul.bf16.gmra.mxu0 %v45
  %v136 = vpop.f32.mrf.mxu0
  %v137 = vadd.f32 0.0, %v136
  %v138 = vpop.f32.mrf.mxu0
  %v139 = vadd.f32 0.0, %v138
  %140 = vdwg.mxu0
  %141 = vmatpush.bf16.msra.mxu0 %v110
  %142 = vmatpush.bf16.msra.mxu0 %v108
  %143 = vmatpush.bf16.msra.mxu0 %v106
  %144 = vmatpush.bf16.msra.mxu0 %v104
  %145 = vmatpush.bf16.msra.mxu0 %v102
  %146 = vmatpush.bf16.msra.mxu0 %v100
  %147 = vmatpush.bf16.msra.mxu0 %v98
  %148 = vmatpush.bf16.msra.mxu0 %v96
  %149 = vmatmul.bf16.gmra.mxu0 %v45
  %v150 = vpop.f32.mrf.mxu0
  %v151 = vadd.f32 0.0, %v150
  %v152 = vpop.f32.mrf.mxu0
  %v153 = vadd.f32 0.0, %v152
  %154 = vdwg.mxu0
  %v155 = vadd.f32 %v19, %v137
  %v156 = vadd.f32 %v20, %v151
  %v157 = vadd.f32 %v21, %v139
  %v158 = vadd.f32 %v22, %v153
  %159 = vst [vmem:[#allocation2] sm:$0xff] %v155
  %160 = vst [vmem:[#allocation2 + $0x8] sm:$0xff] %v156
  %161 = vst [vmem:[#allocation2 + $0x10] sm:$0xff] %v157
  %162 = vst [vmem:[#allocation2 + $0x18] sm:$0xff] %v158
  // Predicated region
  $region14: #{_lambda_.49} parent=0 // pred_check
    %p163 = pneg %p11
  $region15: #{_lambda_.49} parent=0 // pred_check_branch
    %165 = sbr.rel (%p163) target = $region17
  $region16: #{_lambda_.49} parent=0 // pred_region
    %v166 = vld [vmem:[#allocation2] sm:$0xff]
    %v167 = vld [vmem:[#allocation2 + $0x8] sm:$0xff]
    %v168 = vld [vmem:[#allocation2 + $0x10] sm:$0xff]
    %v169 = vld [vmem:[#allocation2 + $0x18] sm:$0xff]
    %170 = vst [vmem:[%s2] sm:$0xff] %v166
    %171 = vst [vmem:[%s2 + $0x8] sm:$0xff] %v167
    %172 = vst [vmem:[%s2 + $0x10] sm:$0xff] %v168
    %173 = vst [vmem:[%s2 + $0x18] sm:$0xff] %v169
  $region17: #{_lambda_.49} parent=0 // pred_fallthru
    _
  // Predicated region
  $region18: #{_lambda_.49} parent=0 // pred_check
    _
  $region19: #{_lambda_.49} parent=0 // pred_check_branch
    %175 = sbr.rel (0) target = $region21
  $region20: #{_lambda_.49} parent=0 // pred_region
    _
  $region21: #{_lambda_.49} parent=0 // pred_fallthru
    _
  // Predicated region
  $region22: #{_lambda_.49} parent=0 // pred_check
    _
  $region23: #{_lambda_.49} parent=0 // pred_check_branch
    %177 = sbr.rel (0) target = $region25
  $region24: #{_lambda_.49} parent=0 // pred_region
    _
  $region25: #{_lambda_.49} parent=0 // pred_fallthru
    _

// kernel: _lambda_.50
$region0: #{_lambda_.50}
  #allocation0 [shape = 'u32[]', space=smem, size = 0x4, offset = 0x4, fixed_abs, tag = 'smem constant byte address 0x4 - core index']
  #allocation1 [shape = 'u32[72,128]{1,0:T(1,128)}', space=vmem, size = 0x9000, scoped, tag = 'internal scratch']
  %s0 = inlined_call_operand.vmem [shape: f32[8,256], index: 0, kind: input, shape index: {}]
  %s1 = inlined_call_operand.vmem [shape: f32[1,256], index: 1, kind: output, shape index: {0}]
  %s2 = inlined_call_operand.vmem [shape: f32[1,256], index: 2, kind: output, shape index: {1}]
  %3 = xla_tuple %s1, %s2
  %s4 = sld [smem:[#allocation0]]
  $region26: #{_lambda_.50} parent=0
    _
  %s6 = ssub.s32 1, %s4
  %s7 = scalar_select 0, %s6, %s4
  // Predicated region
  $region2: #{_lambda_.50} parent=0 // pred_check
    _
  $region3: #{_lambda_.50} parent=0 // pred_check_branch
    %9 = sbr.rel (0) target = $region5
  $region4: #{_lambda_.50} parent=0 // pred_region
    _
  $region5: #{_lambda_.50} parent=0 // pred_fallthru
    _
  %p10 = scmp.eq.s32.totalorder 0, 0
  // Predicated region
  $region6: #{_lambda_.50} parent=0 // pred_check
    %p11 = pneg %p10
  $region7: #{_lambda_.50} parent=0 // pred_check_branch
    %13 = sbr.rel (%p11) target = $region9
  $region8: #{_lambda_.50} parent=0 // pred_region
    %v14 = vlaneseq
    %vm15 = vcmp.ge.s32.totalorder %v14, 0
    %vm16 = vcmp.lt.s32.totalorder %v14, 256
    %vm17 = vmand %vm15, %vm16
    %18 = vst.msk [vmem:[%s1] sm:$0x3] %vm17, 0.0
    %19 = vst.msk [vmem:[%s2] sm:$0x3] %vm17, 0.0
  $region9: #{_lambda_.50} parent=0 // pred_fallthru
    _
  %v20 = vld [vmem:[%s0] sm:$0xff]
  %v21 = vld [vmem:[%s0 + $0x8] sm:$0xff]
  %v22 = vld [vmem:[%s1] sm:$0x3]
  %v23 = vrot.slane %v20, 4
  %v24 = vadd.f32 %v20, %v23
  %v25 = vrot.slane %v24, 2
  %v26 = vadd.f32 %v24, %v25
  %v27 = vrot.slane %v26, 1
  %v28 = vadd.f32 %v26, %v27
  %v29 = vrot.slane %v21, 4
  %v30 = vadd.f32 %v21, %v29
  %v31 = vrot.slane %v30, 2
  %v32 = vadd.f32 %v30, %v31
  %v33 = vrot.slane %v32, 1
  %v34 = vadd.f32 %v32, %v33
  %v37 = vrot.slane %v34, 7
  %vm38 = vcmask 1040384
  %v39 = vsel %vm38, %v28, %v37
  %v41 = vadd.f32 %v22, %v39
  %v42 = vlaneseq
  %vm43 = vcmp.ge.s32.totalorder %v42, 0
  %vm44 = vcmp.lt.s32.totalorder %v42, 256
  %vm45 = vmand %vm43, %vm44
  %46 = vst.msk [vmem:[%s1] sm:$0x3] %vm45, %v41
  %v47 = vld [vmem:[%s2] sm:$0x3]
  %v48 = vmul.f32 %v20, %v20
  %v49 = vmul.f32 %v21, %v21
  %v50 = vrot.slane %v48, 4
  %v51 = vadd.f32 %v48, %v50
  %v52 = vrot.slane %v51, 2
  %v53 = vadd.f32 %v51, %v52
  %v54 = vrot.slane %v53, 1
  %v55 = vadd.f32 %v53, %v54
  %v56 = vrot.slane %v49, 4
  %v57 = vadd.f32 %v49, %v56
  %v58 = vrot.slane %v57, 2
  %v59 = vadd.f32 %v57, %v58
  %v60 = vrot.slane %v59, 1
  %v61 = vadd.f32 %v59, %v60
  %v64 = vrot.slane %v61, 7
  %v65 = vsel %vm38, %v55, %v64
  %v67 = vadd.f32 %v47, %v65
  %68 = vst.msk [vmem:[%s2] sm:$0x3] %vm45, %v67
  // Predicated region
  $region10: #{_lambda_.50} parent=0 // pred_check
    _
  $region11: #{_lambda_.50} parent=0 // pred_check_branch
    %70 = sbr.rel (0) target = $region13
  $region12: #{_lambda_.50} parent=0 // pred_region
    _
  $region13: #{_lambda_.50} parent=0 // pred_fallthru
    _
  // Predicated region
  $region14: #{_lambda_.50} parent=0 // pred_check
    _
  $region15: #{_lambda_.50} parent=0 // pred_check_branch
    %72 = sbr.rel (0) target = $region17
  $region16: #{_lambda_.50} parent=0 // pred_region
    _
  $region17: #{_lambda_.50} parent=0 // pred_fallthru
    _
  // Predicated region
  $region18: #{_lambda_.50} parent=0 // pred_check
    _
  $region19: #{_lambda_.50} parent=0 // pred_check_branch
    %74 = sbr.rel (0) target = $region21
  $region20: #{_lambda_.50} parent=0 // pred_region
    _
  $region21: #{_lambda_.50} parent=0 // pred_fallthru
    _
  // Predicated region
  $region22: #{_lambda_.50} parent=0 // pred_check
    _
  $region23: #{_lambda_.50} parent=0 // pred_check_branch
    %76 = sbr.rel (0) target = $region25
  $region24: #{_lambda_.50} parent=0 // pred_region
    _
  $region25: #{_lambda_.50} parent=0 // pred_fallthru
    _

// kernel: _lambda_.45
$region0: #{_lambda_.45}
  #allocation0 [shape = 'u32[]', space=smem, size = 0x4, offset = 0x4, fixed_abs, tag = 'smem constant byte address 0x4 - core index']
  #allocation1 [shape = 'u32[72,128]{1,0:T(1,128)}', space=vmem, size = 0x9000, scoped, tag = 'internal scratch']
  #allocation2 [shape = 'f32[16,256]{1,0:T(8,128)}', space=vmem, size = 0x4000, scoped, tag = 'scratch operand']
  %s0 = inlined_call_operand.vmem [shape: bf16[16,1152], index: 0, kind: input, shape index: {}]
  %s1 = inlined_call_operand.vmem [shape: bf16[1152,256], index: 1, kind: input, shape index: {}]
  %s2 = inlined_call_operand.vmem [shape: f32[16,256], index: 2, kind: output, shape index: {}]
  %s3 = sld [smem:[#allocation0]]
  $region26: #{_lambda_.45} parent=0
    _
  %s5 = ssub.s32 1, %s3
  %s6 = scalar_select 0, %s5, %s3
  // Predicated region
  $region2: #{_lambda_.45} parent=0 // pred_check
    _
  $region3: #{_lambda_.45} parent=0 // pred_check_branch
    %8 = sbr.rel (0) target = $region5
  $region4: #{_lambda_.45} parent=0 // pred_region
    _
  $region5: #{_lambda_.45} parent=0 // pred_fallthru
    _
  // Predicated region
  $region6: #{_lambda_.45} parent=0 // pred_check
    _
  $region7: #{_lambda_.45} parent=0 // pred_check_branch
    %10 = sbr.rel (0) target = $region9
  $region8: #{_lambda_.45} parent=0 // pred_region
    _
  $region9: #{_lambda_.45} parent=0 // pred_fallthru
    _
  %p11 = scmp.eq.s32.totalorder 0, 0
  // Predicated region
  $region10: #{_lambda_.45} parent=0 // pred_check
    %p12 = pneg %p11
  $region11: #{_lambda_.45} parent=0 // pred_check_branch
    %14 = sbr.rel (%p12) target = $region13
  $region12: #{_lambda_.45} parent=0 // pred_region
    %15 = vst [vmem:[#allocation2] sm:$0xff] 0.0
    %16 = vst [vmem:[#allocation2 + $0x8] sm:$0xff] 0.0
    %17 = vst [vmem:[#allocation2 + $0x10] sm:$0xff] 0.0
    %18 = vst [vmem:[#allocation2 + $0x18] sm:$0xff] 0.0
  $region13: #{_lambda_.45} parent=0 // pred_fallthru
    _
  %v19 = vld [vmem:[#allocation2] sm:$0xff]
  %v20 = vld [vmem:[#allocation2 + $0x8] sm:$0xff]
  %v21 = vld [vmem:[#allocation2 + $0x10] sm:$0xff]
  %v22 = vld [vmem:[#allocation2 + $0x18] sm:$0xff]
  %v23 = vld [vmem:[%s0] sm:$0xff]
  %v24 = vld [vmem:[%s0 + $0x8] sm:$0xff]
  %v25 = vld [vmem:[%s0 + $0x10] sm:$0xff]
  %v26 = vld [vmem:[%s0 + $0x18] sm:$0xff]
  %v27 = vld [vmem:[%s0 + $0x20] sm:$0xf]
  %v28 = vld [vmem:[%s0 + $0x24] sm:$0xff]
  %v29 = vld [vmem:[%s0 + $0x2c] sm:$0xff]
  %v30 = vld [vmem:[%s0 + $0x34] sm:$0xff]
  %v31 = vld [vmem:[%s0 + $0x3c] sm:$0xff]
  %v32 = vld [vmem:[%s0 + $0x44] sm:$0xf]
  %v33 = vld [vmem:[%s1] sm:$0xff]
  %v34 = vld [vmem:[%s1 + $0x8] sm:$0xff]
  %v35 = vld [vmem:[%s1 + $0x10] sm:$0xff]
  %v36 = vld [vmem:[%s1 + $0x18] sm:$0xff]
  %v37 = vld [vmem:[%s1 + $0x20] sm:$0xff]
  %v38 = vld [vmem:[%s1 + $0x28] sm:$0xff]
  %v39 = vld [vmem:[%s1 + $0x30] sm:$0xff]
  %v40 = vld [vmem:[%s1 + $0x38] sm:$0xff]
  %v41 = vld [vmem:[%s1 + $0x40] sm:$0xff]
  %v42 = vld [vmem:[%s1 + $0x48] sm:$0xff]
  %v43 = vld [vmem:[%s1 + $0x50] sm:$0xff]
  %v44 = vld [vmem:[%s1 + $0x58] sm:$0xff]
  %v45 = vld [vmem:[%s1 + $0x60] sm:$0xff]
  %v46 = vld [vmem:[%s1 + $0x68] sm:$0xff]
  %v47 = vld [vmem:[%s1 + $0x70] sm:$0xff]
  %v48 = vld [vmem:[%s1 + $0x78] sm:$0xff]
  %v49 = vld [vmem:[%s1 + $0x80] sm:$0xff]
  %v50 = vld [vmem:[%s1 + $0x88] sm:$0xff]
  %v51 = vld [vmem:[%s1 + $0x90] sm:$0xff]
  %v52 = vld [vmem:[%s1 + $0x98] sm:$0xff]
  %v53 = vld [vmem:[%s1 + $0xa0] sm:$0xff]
  %v54 = vld [vmem:[%s1 + $0xa8] sm:$0xff]
  %v55 = vld [vmem:[%s1 + $0xb0] sm:$0xff]
  %v56 = vld [vmem:[%s1 + $0xb8] sm:$0xff]
  %v57 = vld [vmem:[%s1 + $0xc0] sm:$0xff]
  %v58 = vld [vmem:[%s1 + $0xc8] sm:$0xff]
  %v59 = vld [vmem:[%s1 + $0xd0] sm:$0xff]
  %v60 = vld [vmem:[%s1 + $0xd8] sm:$0xff]
  %v61 = vld [vmem:[%s1 + $0xe0] sm:$0xff]
  %v62 = vld [vmem:[%s1 + $0xe8] sm:$0xff]
  %v63 = vld [vmem:[%s1 + $0xf0] sm:$0xff]
  %v64 = vld [vmem:[%s1 + $0xf8] sm:$0xff]
  %v65 = vld [vmem:[%s1 + $0x100] sm:$0xff]
  %v66 = vld [vmem:[%s1 + $0x108] sm:$0xff]
  %v67 = vld [vmem:[%s1 + $0x110] sm:$0xff]
  %v68 = vld [vmem:[%s1 + $0x118] sm:$0xff]
  %v69 = vld [vmem:[%s1 + $0x120] sm:$0xff]
  %v70 = vld [vmem:[%s1 + $0x128] sm:$0xff]
  %v71 = vld [vmem:[%s1 + $0x130] sm:$0xff]
  %v72 = vld [vmem:[%s1 + $0x138] sm:$0xff]
  %v73 = vld [vmem:[%s1 + $0x140] sm:$0xff]
  %v74 = vld [vmem:[%s1 + $0x148] sm:$0xff]
  %v75 = vld [vmem:[%s1 + $0x150] sm:$0xff]
  %v76 = vld [vmem:[%s1 + $0x158] sm:$0xff]
  %v77 = vld [vmem:[%s1 + $0x160] sm:$0xff]
  %v78 = vld [vmem:[%s1 + $0x168] sm:$0xff]
  %v79 = vld [vmem:[%s1 + $0x170] sm:$0xff]
  %v80 = vld [vmem:[%s1 + $0x178] sm:$0xff]
  %v81 = vld [vmem:[%s1 + $0x180] sm:$0xff]
  %v82 = vld [vmem:[%s1 + $0x188] sm:$0xff]
  %v83 = vld [vmem:[%s1 + $0x190] sm:$0xff]
  %v84 = vld [vmem:[%s1 + $0x198] sm:$0xff]
  %v85 = vld [vmem:[%s1 + $0x1a0] sm:$0xff]
  %v86 = vld [vmem:[%s1 + $0x1a8] sm:$0xff]
  %v87 = vld [vmem:[%s1 + $0x1b0] sm:$0xff]
  %v88 = vld [vmem:[%s1 + $0x1b8] sm:$0xff]
  %v89 = vld [vmem:[%s1 + $0x1c0] sm:$0xff]
  %v90 = vld [vmem:[%s1 + $0x1c8] sm:$0xff]
  %v91 = vld [vmem:[%s1 + $0x1d0] sm:$0xff]
  %v92 = vld [vmem:[%s1 + $0x1d8] sm:$0xff]
  %v93 = vld [vmem:[%s1 + $0x1e0] sm:$0xff]
  %v94 = vld [vmem:[%s1 + $0x1e8] sm:$0xff]
  %v95 = vld [vmem:[%s1 + $0x1f0] sm:$0xff]
  %v96 = vld [vmem:[%s1 + $0x1f8] sm:$0xff]
  %v97 = vld [vmem:[%s1 + $0x200] sm:$0xff]
  %v98 = vld [vmem:[%s1 + $0x208] sm:$0xff]
  %v99 = vld [vmem:[%s1 + $0x210] sm:$0xff]
  %v100 = vld [vmem:[%s1 + $0x218] sm:$0xff]
  %v101 = vld [vmem:[%s1 + $0x220] sm:$0xff]
  %v102 = vld [vmem:[%s1 + $0x228] sm:$0xff]
  %v103 = vld [vmem:[%s1 + $0x230] sm:$0xff]
  %v104 = vld [vmem:[%s1 + $0x238] sm:$0xff]
  %v105 = vld [vmem:[%s1 + $0x240] sm:$0xff]
  %v106 = vld [vmem:[%s1 + $0x248] sm:$0xff]
  %v107 = vld [vmem:[%s1 + $0x250] sm:$0xff]
  %v108 = vld [vmem:[%s1 + $0x258] sm:$0xff]
  %v109 = vld [vmem:[%s1 + $0x260] sm:$0xff]
  %v110 = vld [vmem:[%s1 + $0x268] sm:$0xff]
  %v111 = vld [vmem:[%s1 + $0x270] sm:$0xff]
  %v112 = vld [vmem:[%s1 + $0x278] sm:$0xff]
  %v113 = vld [vmem:[%s1 + $0x280] sm:$0xff]
  %v114 = vld [vmem:[%s1 + $0x288] sm:$0xff]
  %v115 = vld [vmem:[%s1 + $0x290] sm:$0xff]
  %v116 = vld [vmem:[%s1 + $0x298] sm:$0xff]
  %v117 = vld [vmem:[%s1 + $0x2a0] sm:$0xff]
  %v118 = vld [vmem:[%s1 + $0x2a8] sm:$0xff]
  %v119 = vld [vmem:[%s1 + $0x2b0] sm:$0xff]
  %v120 = vld [vmem:[%s1 + $0x2b8] sm:$0xff]
  %v121 = vld [vmem:[%s1 + $0x2c0] sm:$0xff]
  %v122 = vld [vmem:[%s1 + $0x2c8] sm:$0xff]
  %v123 = vld [vmem:[%s1 + $0x2d0] sm:$0xff]
  %v124 = vld [vmem:[%s1 + $0x2d8] sm:$0xff]
  %v125 = vld [vmem:[%s1 + $0x2e0] sm:$0xff]
  %v126 = vld [vmem:[%s1 + $0x2e8] sm:$0xff]
  %v127 = vld [vmem:[%s1 + $0x2f0] sm:$0xff]
  %v128 = vld [vmem:[%s1 + $0x2f8] sm:$0xff]
  %v129 = vld [vmem:[%s1 + $0x300] sm:$0xff]
  %v130 = vld [vmem:[%s1 + $0x308] sm:$0xff]
  %v131 = vld [vmem:[%s1 + $0x310] sm:$0xff]
  %v132 = vld [vmem:[%s1 + $0x318] sm:$0xff]
  %v133 = vld [vmem:[%s1 + $0x320] sm:$0xff]
  %v134 = vld [vmem:[%s1 + $0x328] sm:$0xff]
  %v135 = vld [vmem:[%s1 + $0x330] sm:$0xff]
  %v136 = vld [vmem:[%s1 + $0x338] sm:$0xff]
  %v137 = vld [vmem:[%s1 + $0x340] sm:$0xff]
  %v138 = vld [vmem:[%s1 + $0x348] sm:$0xff]
  %v139 = vld [vmem:[%s1 + $0x350] sm:$0xff]
  %v140 = vld [vmem:[%s1 + $0x358] sm:$0xff]
  %v141 = vld [vmem:[%s1 + $0x360] sm:$0xff]
  %v142 = vld [vmem:[%s1 + $0x368] sm:$0xff]
  %v143 = vld [vmem:[%s1 + $0x370] sm:$0xff]
  %v144 = vld [vmem:[%s1 + $0x378] sm:$0xff]
  %v145 = vld [vmem:[%s1 + $0x380] sm:$0xff]
  %v146 = vld [vmem:[%s1 + $0x388] sm:$0xff]
  %v147 = vld [vmem:[%s1 + $0x390] sm:$0xff]
  %v148 = vld [vmem:[%s1 + $0x398] sm:$0xff]
  %v149 = vld [vmem:[%s1 + $0x3a0] sm:$0xff]
  %v150 = vld [vmem:[%s1 + $0x3a8] sm:$0xff]
  %v151 = vld [vmem:[%s1 + $0x3b0] sm:$0xff]
  %v152 = vld [vmem:[%s1 + $0x3b8] sm:$0xff]
  %v153 = vld [vmem:[%s1 + $0x3c0] sm:$0xff]
  %v154 = vld [vmem:[%s1 + $0x3c8] sm:$0xff]
  %v155 = vld [vmem:[%s1 + $0x3d0] sm:$0xff]
  %v156 = vld [vmem:[%s1 + $0x3d8] sm:$0xff]
  %v157 = vld [vmem:[%s1 + $0x3e0] sm:$0xff]
  %v158 = vld [vmem:[%s1 + $0x3e8] sm:$0xff]
  %v159 = vld [vmem:[%s1 + $0x3f0] sm:$0xff]
  %v160 = vld [vmem:[%s1 + $0x3f8] sm:$0xff]
  %v161 = vld [vmem:[%s1 + $0x400] sm:$0xff]
  %v162 = vld [vmem:[%s1 + $0x408] sm:$0xff]
  %v163 = vld [vmem:[%s1 + $0x410] sm:$0xff]
  %v164 = vld [vmem:[%s1 + $0x418] sm:$0xff]
  %v165 = vld [vmem:[%s1 + $0x420] sm:$0xff]
  %v166 = vld [vmem:[%s1 + $0x428] sm:$0xff]
  %v167 = vld [vmem:[%s1 + $0x430] sm:$0xff]
  %v168 = vld [vmem:[%s1 + $0x438] sm:$0xff]
  %v169 = vld [vmem:[%s1 + $0x440] sm:$0xff]
  %v170 = vld [vmem:[%s1 + $0x448] sm:$0xff]
  %v171 = vld [vmem:[%s1 + $0x450] sm:$0xff]
  %v172 = vld [vmem:[%s1 + $0x458] sm:$0xff]
  %v173 = vld [vmem:[%s1 + $0x460] sm:$0xff]
  %v174 = vld [vmem:[%s1 + $0x468] sm:$0xff]
  %v175 = vld [vmem:[%s1 + $0x470] sm:$0xff]
  %v176 = vld [vmem:[%s1 + $0x478] sm:$0xff]
  %v187 = vunpack.c.l.b16 %v23
  %v188 = vunpack.c.h.b16 %v23
  %v189 = vunpack.c.l.b16 %v24
  %v190 = vunpack.c.h.b16 %v24
  %v191 = vunpack.c.l.b16 %v25
  %v192 = vunpack.c.h.b16 %v25
  %v193 = vunpack.c.l.b16 %v26
  %v194 = vunpack.c.h.b16 %v26
  %v195 = vunpack.c.l.b16 %v27
  %v196 = vunpack.c.l.b16 %v28
  %v197 = vunpack.c.h.b16 %v28
  %v198 = vunpack.c.l.b16 %v29
  %v199 = vunpack.c.h.b16 %v29
  %v200 = vunpack.c.l.b16 %v30
  %v201 = vunpack.c.h.b16 %v30
  %v202 = vunpack.c.l.b16 %v31
  %v203 = vunpack.c.h.b16 %v31
  %v204 = vunpack.c.l.b16 %v32
  %v205 = vpack.c.b16 %v196, %v187
  %v206 = vpack.c.b16 %v197, %v188
  %v207 = vpack.c.b16 %v198, %v189
  %v208 = vpack.c.b16 %v199, %v190
  %v209 = vpack.c.b16 %v200, %v191
  %v210 = vpack.c.b16 %v201, %v192
  %v211 = vpack.c.b16 %v202, %v193
  %v212 = vpack.c.b16 %v203, %v194
  %v213 = vpack.c.b16 %v204, %v195
  %v367 = vunpack.c.l.b16 %v33
  %v368 = vunpack.c.h.b16 %v33
  %v369 = vunpack.c.l.b16 %v34
  %v370 = vunpack.c.h.b16 %v34
  %v371 = vunpack.c.l.b16 %v35
  %v372 = vunpack.c.h.b16 %v35
  %v373 = vunpack.c.l.b16 %v36
  %v374 = vunpack.c.h.b16 %v36
  %v375 = vunpack.c.l.b16 %v37
  %v376 = vunpack.c.h.b16 %v37
  %v377 = vunpack.c.l.b16 %v38
  %v378 = vunpack.c.h.b16 %v38
  %v379 = vunpack.c.l.b16 %v39
  %v380 = vunpack.c.h.b16 %v39
  %v381 = vunpack.c.l.b16 %v40
  %v382 = vunpack.c.h.b16 %v40
  %v383 = vunpack.c.l.b16 %v41
  %v384 = vunpack.c.h.b16 %v41
  %v385 = vunpack.c.l.b16 %v42
  %v386 = vunpack.c.h.b16 %v42
  %v387 = vunpack.c.l.b16 %v43
  %v388 = vunpack.c.h.b16 %v43
  %v389 = vunpack.c.l.b16 %v44
  %v390 = vunpack.c.h.b16 %v44
  %v391 = vunpack.c.l.b16 %v45
  %v392 = vunpack.c.h.b16 %v45
  %v393 = vunpack.c.l.b16 %v46
  %v394 = vunpack.c.h.b16 %v46
  %v395 = vunpack.c.l.b16 %v47
  %v396 = vunpack.c.h.b16 %v47
  %v397 = vunpack.c.l.b16 %v48
  %v398 = vunpack.c.h.b16 %v48
  %v399 = vunpack.c.l.b16 %v49
  %v400 = vunpack.c.h.b16 %v49
  %v401 = vunpack.c.l.b16 %v50
  %v402 = vunpack.c.h.b16 %v50
  %v403 = vunpack.c.l.b16 %v51
  %v404 = vunpack.c.h.b16 %v51
  %v405 = vunpack.c.l.b16 %v52
  %v406 = vunpack.c.h.b16 %v52
  %v407 = vunpack.c.l.b16 %v53
  %v408 = vunpack.c.h.b16 %v53
  %v409 = vunpack.c.l.b16 %v54
  %v410 = vunpack.c.h.b16 %v54
  %v411 = vunpack.c.l.b16 %v55
  %v412 = vunpack.c.h.b16 %v55
  %v413 = vunpack.c.l.b16 %v56
  %v414 = vunpack.c.h.b16 %v56
  %v415 = vunpack.c.l.b16 %v57
  %v416 = vunpack.c.h.b16 %v57
  %v417 = vunpack.c.l.b16 %v58
  %v418 = vunpack.c.h.b16 %v58
  %v419 = vunpack.c.l.b16 %v59
  %v420 = vunpack.c.h.b16 %v59
  %v421 = vunpack.c.l.b16 %v60
  %v422 = vunpack.c.h.b16 %v60
  %v423 = vunpack.c.l.b16 %v61
  %v424 = vunpack.c.h.b16 %v61
  %v425 = vunpack.c.l.b16 %v62
  %v426 = vunpack.c.h.b16 %v62
  %v427 = vunpack.c.l.b16 %v63
  %v428 = vunpack.c.h.b16 %v63
  %v429 = vunpack.c.l.b16 %v64
  %v430 = vunpack.c.h.b16 %v64
  %v431 = vunpack.c.l.b16 %v65
  %v432 = vunpack.c.h.b16 %v65
  %v433 = vunpack.c.l.b16 %v66
  %v434 = vunpack.c.h.b16 %v66
  %v435 = vunpack.c.l.b16 %v67
  %v436 = vunpack.c.h.b16 %v67
  %v437 = vunpack.c.l.b16 %v68
  %v438 = vunpack.c.h.b16 %v68
  %v439 = vunpack.c.l.b16 %v69
  %v440 = vunpack.c.h.b16 %v69
  %v441 = vunpack.c.l.b16 %v70
  %v442 = vunpack.c.h.b16 %v70
  %v443 = vunpack.c.l.b16 %v71
  %v444 = vunpack.c.h.b16 %v71
  %v445 = vunpack.c.l.b16 %v72
  %v446 = vunpack.c.h.b16 %v72
  %v447 = vunpack.c.l.b16 %v73
  %v448 = vunpack.c.h.b16 %v73
  %v449 = vunpack.c.l.b16 %v74
  %v450 = vunpack.c.h.b16 %v74
  %v451 = vunpack.c.l.b16 %v75
  %v452 = vunpack.c.h.b16 %v75
  %v453 = vunpack.c.l.b16 %v76
  %v454 = vunpack.c.h.b16 %v76
  %v455 = vunpack.c.l.b16 %v77
  %v456 = vunpack.c.h.b16 %v77
  %v457 = vunpack.c.l.b16 %v78
  %v458 = vunpack.c.h.b16 %v78
  %v459 = vunpack.c.l.b16 %v79
  %v460 = vunpack.c.h.b16 %v79
  %v461 = vunpack.c.l.b16 %v80
  %v462 = vunpack.c.h.b16 %v80
  %v463 = vunpack.c.l.b16 %v81
  %v464 = vunpack.c.h.b16 %v81
  %v465 = vunpack.c.l.b16 %v82
  %v466 = vunpack.c.h.b16 %v82
  %v467 = vunpack.c.l.b16 %v83
  %v468 = vunpack.c.h.b16 %v83
  %v469 = vunpack.c.l.b16 %v84
  %v470 = vunpack.c.h.b16 %v84
  %v471 = vunpack.c.l.b16 %v85
  %v472 = vunpack.c.h.b16 %v85
  %v473 = vunpack.c.l.b16 %v86
  %v474 = vunpack.c.h.b16 %v86
  %v475 = vunpack.c.l.b16 %v87
  %v476 = vunpack.c.h.b16 %v87
  %v477 = vunpack.c.l.b16 %v88
  %v478 = vunpack.c.h.b16 %v88
  %v479 = vunpack.c.l.b16 %v89
  %v480 = vunpack.c.h.b16 %v89
  %v481 = vunpack.c.l.b16 %v90
  %v482 = vunpack.c.h.b16 %v90
  %v483 = vunpack.c.l.b16 %v91
  %v484 = vunpack.c.h.b16 %v91
  %v485 = vunpack.c.l.b16 %v92
  %v486 = vunpack.c.h.b16 %v92
  %v487 = vunpack.c.l.b16 %v93
  %v488 = vunpack.c.h.b16 %v93
  %v489 = vunpack.c.l.b16 %v94
  %v490 = vunpack.c.h.b16 %v94
  %v491 = vunpack.c.l.b16 %v95
  %v492 = vunpack.c.h.b16 %v95
  %v493 = vunpack.c.l.b16 %v96
  %v494 = vunpack.c.h.b16 %v96
  %v495 = vunpack.c.l.b16 %v97
  %v496 = vunpack.c.h.b16 %v97
  %v497 = vunpack.c.l.b16 %v98
  %v498 = vunpack.c.h.b16 %v98
  %v499 = vunpack.c.l.b16 %v99
  %v500 = vunpack.c.h.b16 %v99
  %v501 = vunpack.c.l.b16 %v100
  %v502 = vunpack.c.h.b16 %v100
  %v503 = vunpack.c.l.b16 %v101
  %v504 = vunpack.c.h.b16 %v101
  %v505 = vunpack.c.l.b16 %v102
  %v506 = vunpack.c.h.b16 %v102
  %v507 = vunpack.c.l.b16 %v103
  %v508 = vunpack.c.h.b16 %v103
  %v509 = vunpack.c.l.b16 %v104
  %v510 = vunpack.c.h.b16 %v104
  %v511 = vunpack.c.l.b16 %v105
  %v512 = vunpack.c.h.b16 %v105
  %v513 = vunpack.c.l.b16 %v106
  %v514 = vunpack.c.h.b16 %v106
  %v515 = vunpack.c.l.b16 %v107
  %v516 = vunpack.c.h.b16 %v107
  %v517 = vunpack.c.l.b16 %v108
  %v518 = vunpack.c.h.b16 %v108
  %v519 = vunpack.c.l.b16 %v109
  %v520 = vunpack.c.h.b16 %v109
  %v521 = vunpack.c.l.b16 %v110
  %v522 = vunpack.c.h.b16 %v110
  %v523 = vunpack.c.l.b16 %v111
  %v524 = vunpack.c.h.b16 %v111
  %v525 = vunpack.c.l.b16 %v112
  %v526 = vunpack.c.h.b16 %v112
  %v527 = vunpack.c.l.b16 %v113
  %v528 = vunpack.c.h.b16 %v113
  %v529 = vunpack.c.l.b16 %v114
  %v530 = vunpack.c.h.b16 %v114
  %v531 = vunpack.c.l.b16 %v115
  %v532 = vunpack.c.h.b16 %v115
  %v533 = vunpack.c.l.b16 %v116
  %v534 = vunpack.c.h.b16 %v116
  %v535 = vunpack.c.l.b16 %v117
  %v536 = vunpack.c.h.b16 %v117
  %v537 = vunpack.c.l.b16 %v118
  %v538 = vunpack.c.h.b16 %v118
  %v539 = vunpack.c.l.b16 %v119
  %v540 = vunpack.c.h.b16 %v119
  %v541 = vunpack.c.l.b16 %v120
  %v542 = vunpack.c.h.b16 %v120
  %v543 = vunpack.c.l.b16 %v121
  %v544 = vunpack.c.h.b16 %v121
  %v545 = vunpack.c.l.b16 %v122
  %v546 = vunpack.c.h.b16 %v122
  %v547 = vunpack.c.l.b16 %v123
  %v548 = vunpack.c.h.b16 %v123
  %v549 = vunpack.c.l.b16 %v124
  %v550 = vunpack.c.h.b16 %v124
  %v551 = vunpack.c.l.b16 %v125
  %v552 = vunpack.c.h.b16 %v125
  %v553 = vunpack.c.l.b16 %v126
  %v554 = vunpack.c.h.b16 %v126
  %v555 = vunpack.c.l.b16 %v127
  %v556 = vunpack.c.h.b16 %v127
  %v557 = vunpack.c.l.b16 %v128
  %v558 = vunpack.c.h.b16 %v128
  %v559 = vunpack.c.l.b16 %v129
  %v560 = vunpack.c.h.b16 %v129
  %v561 = vunpack.c.l.b16 %v130
  %v562 = vunpack.c.h.b16 %v130
  %v563 = vunpack.c.l.b16 %v131
  %v564 = vunpack.c.h.b16 %v131
  %v565 = vunpack.c.l.b16 %v132
  %v566 = vunpack.c.h.b16 %v132
  %v567 = vunpack.c.l.b16 %v133
  %v568 = vunpack.c.h.b16 %v133
  %v569 = vunpack.c.l.b16 %v134
  %v570 = vunpack.c.h.b16 %v134
  %v571 = vunpack.c.l.b16 %v135
  %v572 = vunpack.c.h.b16 %v135
  %v573 = vunpack.c.l.b16 %v136
  %v574 = vunpack.c.h.b16 %v136
  %v575 = vunpack.c.l.b16 %v137
  %v576 = vunpack.c.h.b16 %v137
  %v577 = vunpack.c.l.b16 %v138
  %v578 = vunpack.c.h.b16 %v138
  %v579 = vunpack.c.l.b16 %v139
  %v580 = vunpack.c.h.b16 %v139
  %v581 = vunpack.c.l.b16 %v140
  %v582 = vunpack.c.h.b16 %v140
  %v583 = vunpack.c.l.b16 %v141
  %v584 = vunpack.c.h.b16 %v141
  %v585 = vunpack.c.l.b16 %v142
  %v586 = vunpack.c.h.b16 %v142
  %v587 = vunpack.c.l.b16 %v143
  %v588 = vunpack.c.h.b16 %v143
  %v589 = vunpack.c.l.b16 %v144
  %v590 = vunpack.c.h.b16 %v144
  %v591 = vunpack.c.l.b16 %v145
  %v592 = vunpack.c.h.b16 %v145
  %v593 = vunpack.c.l.b16 %v146
  %v594 = vunpack.c.h.b16 %v146
  %v595 = vunpack.c.l.b16 %v147
  %v596 = vunpack.c.h.b16 %v147
  %v597 = vunpack.c.l.b16 %v148
  %v598 = vunpack.c.h.b16 %v148
  %v599 = vunpack.c.l.b16 %v149
  %v600 = vunpack.c.h.b16 %v149
  %v601 = vunpack.c.l.b16 %v150
  %v602 = vunpack.c.h.b16 %v150
  %v603 = vunpack.c.l.b16 %v151
  %v604 = vunpack.c.h.b16 %v151
  %v605 = vunpack.c.l.b16 %v152
  %v606 = vunpack.c.h.b16 %v152
  %v607 = vunpack.c.l.b16 %v153
  %v608 = vunpack.c.h.b16 %v153
  %v609 = vunpack.c.l.b16 %v154
  %v610 = vunpack.c.h.b16 %v154
  %v611 = vunpack.c.l.b16 %v155
  %v612 = vunpack.c.h.b16 %v155
  %v613 = vunpack.c.l.b16 %v156
  %v614 = vunpack.c.h.b16 %v156
  %v615 = vunpack.c.l.b16 %v157
  %v616 = vunpack.c.h.b16 %v157
  %v617 = vunpack.c.l.b16 %v158
  %v618 = vunpack.c.h.b16 %v158
  %v619 = vunpack.c.l.b16 %v159
  %v620 = vunpack.c.h.b16 %v159
  %v621 = vunpack.c.l.b16 %v160
  %v622 = vunpack.c.h.b16 %v160
  %v623 = vunpack.c.l.b16 %v161
  %v624 = vunpack.c.h.b16 %v161
  %v625 = vunpack.c.l.b16 %v162
  %v626 = vunpack.c.h.b16 %v162
  %v627 = vunpack.c.l.b16 %v163
  %v628 = vunpack.c.h.b16 %v163
  %v629 = vunpack.c.l.b16 %v164
  %v630 = vunpack.c.h.b16 %v164
  %v631 = vunpack.c.l.b16 %v165
  %v632 = vunpack.c.h.b16 %v165
  %v633 = vunpack.c.l.b16 %v166
  %v634 = vunpack.c.h.b16 %v166
  %v635 = vunpack.c.l.b16 %v167
  %v636 = vunpack.c.h.b16 %v167
  %v637 = vunpack.c.l.b16 %v168
  %v638 = vunpack.c.h.b16 %v168
  %v639 = vunpack.c.l.b16 %v169
  %v640 = vunpack.c.h.b16 %v169
  %v641 = vunpack.c.l.b16 %v170
  %v642 = vunpack.c.h.b16 %v170
  %v643 = vunpack.c.l.b16 %v171
  %v644 = vunpack.c.h.b16 %v171
  %v645 = vunpack.c.l.b16 %v172
  %v646 = vunpack.c.h.b16 %v172
  %v647 = vunpack.c.l.b16 %v173
  %v648 = vunpack.c.h.b16 %v173
  %v649 = vunpack.c.l.b16 %v174
  %v650 = vunpack.c.h.b16 %v174
  %v651 = vunpack.c.l.b16 %v175
  %v652 = vunpack.c.h.b16 %v175
  %v653 = vunpack.c.l.b16 %v176
  %v654 = vunpack.c.h.b16 %v176
  %v655 = vpack.c.b16 %v369, %v367
  %v656 = vpack.c.b16 %v370, %v368
  %v657 = vpack.c.b16 %v373, %v371
  %v658 = vpack.c.b16 %v374, %v372
  %v659 = vpack.c.b16 %v377, %v375
  %v660 = vpack.c.b16 %v378, %v376
  %v661 = vpack.c.b16 %v381, %v379
  %v662 = vpack.c.b16 %v382, %v380
  %v663 = vpack.c.b16 %v385, %v383
  %v664 = vpack.c.b16 %v386, %v384
  %v665 = vpack.c.b16 %v389, %v387
  %v666 = vpack.c.b16 %v390, %v388
  %v667 = vpack.c.b16 %v393, %v391
  %v668 = vpack.c.b16 %v394, %v392
  %v669 = vpack.c.b16 %v397, %v395
  %v670 = vpack.c.b16 %v398, %v396
  %v671 = vpack.c.b16 %v401, %v399
  %v672 = vpack.c.b16 %v402, %v400
  %v673 = vpack.c.b16 %v405, %v403
  %v674 = vpack.c.b16 %v406, %v404
  %v675 = vpack.c.b16 %v409, %v407
  %v676 = vpack.c.b16 %v410, %v408
  %v677 = vpack.c.b16 %v413, %v411
  %v678 = vpack.c.b16 %v414, %v412
  %v679 = vpack.c.b16 %v417, %v415
  %v680 = vpack.c.b16 %v418, %v416
  %v681 = vpack.c.b16 %v421, %v419
  %v682 = vpack.c.b16 %v422, %v420
  %v683 = vpack.c.b16 %v425, %v423
  %v684 = vpack.c.b16 %v426, %v424
  %v685 = vpack.c.b16 %v429, %v427
  %v686 = vpack.c.b16 %v430, %v428
  %v687 = vpack.c.b16 %v433, %v431
  %v688 = vpack.c.b16 %v434, %v432
  %v689 = vpack.c.b16 %v437, %v435
  %v690 = vpack.c.b16 %v438, %v436
  %v691 = vpack.c.b16 %v441, %v439
  %v692 = vpack.c.b16 %v442, %v440
  %v693 = vpack.c.b16 %v445, %v443
  %v694 = vpack.c.b16 %v446, %v444
  %v695 = vpack.c.b16 %v449, %v447
  %v696 = vpack.c.b16 %v450, %v448
  %v697 = vpack.c.b16 %v453, %v451
  %v698 = vpack.c.b16 %v454, %v452
  %v699 = vpack.c.b16 %v457, %v455
  %v700 = vpack.c.b16 %v458, %v456
  %v701 = vpack.c.b16 %v461, %v459
  %v702 = vpack.c.b16 %v462, %v460
  %v703 = vpack.c.b16 %v465, %v463
  %v704 = vpack.c.b16 %v466, %v464
  %v705 = vpack.c.b16 %v469, %v467
  %v706 = vpack.c.b16 %v470, %v468
  %v707 = vpack.c.b16 %v473, %v471
  %v708 = vpack.c.b16 %v474, %v472
  %v709 = vpack.c.b16 %v477, %v475
  %v710 = vpack.c.b16 %v478, %v476
  %v711 = vpack.c.b16 %v481, %v479
  %v712 = vpack.c.b16 %v482, %v480
  %v713 = vpack.c.b16 %v485, %v483
  %v714 = vpack.c.b16 %v486, %v484
  %v715 = vpack.c.b16 %v489, %v487
  %v716 = vpack.c.b16 %v490, %v488
  %v717 = vpack.c.b16 %v493, %v491
  %v718 = vpack.c.b16 %v494, %v492
  %v719 = vpack.c.b16 %v497, %v495
  %v720 = vpack.c.b16 %v498, %v496
  %v721 = vpack.c.b16 %v501, %v499
  %v722 = vpack.c.b16 %v502, %v500
  %v723 = vpack.c.b16 %v505, %v503
  %v724 = vpack.c.b16 %v506, %v504
  %v725 = vpack.c.b16 %v509, %v507
  %v726 = vpack.c.b16 %v510, %v508
  %v727 = vpack.c.b16 %v513, %v511
  %v728 = vpack.c.b16 %v514, %v512
  %v729 = vpack.c.b16 %v517, %v515
  %v730 = vpack.c.b16 %v518, %v516
  %v731 = vpack.c.b16 %v521, %v519
  %v732 = vpack.c.b16 %v522, %v520
  %v733 = vpack.c.b16 %v525, %v523
  %v734 = vpack.c.b16 %v526, %v524
  %v735 = vpack.c.b16 %v529, %v527
  %v736 = vpack.c.b16 %v530, %v528
  %v737 = vpack.c.b16 %v533, %v531
  %v738 = vpack.c.b16 %v534, %v532
  %v739 = vpack.c.b16 %v537, %v535
  %v740 = vpack.c.b16 %v538, %v536
  %v741 = vpack.c.b16 %v541, %v539
  %v742 = vpack.c.b16 %v542, %v540
  %v743 = vpack.c.b16 %v545, %v543
  %v744 = vpack.c.b16 %v546, %v544
  %v745 = vpack.c.b16 %v549, %v547
  %v746 = vpack.c.b16 %v550, %v548
  %v747 = vpack.c.b16 %v553, %v551
  %v748 = vpack.c.b16 %v554, %v552
  %v749 = vpack.c.b16 %v557, %v555
  %v750 = vpack.c.b16 %v558, %v556
  %v751 = vpack.c.b16 %v561, %v559
  %v752 = vpack.c.b16 %v562, %v560
  %v753 = vpack.c.b16 %v565, %v563
  %v754 = vpack.c.b16 %v566, %v564
  %v755 = vpack.c.b16 %v569, %v567
  %v756 = vpack.c.b16 %v570, %v568
  %v757 = vpack.c.b16 %v573, %v571
  %v758 = vpack.c.b16 %v574, %v572
  %v759 = vpack.c.b16 %v577, %v575
  %v760 = vpack.c.b16 %v578, %v576
  %v761 = vpack.c.b16 %v581, %v579
  %v762 = vpack.c.b16 %v582, %v580
  %v763 = vpack.c.b16 %v585, %v583
  %v764 = vpack.c.b16 %v586, %v584
  %v765 = vpack.c.b16 %v589, %v587
  %v766 = vpack.c.b16 %v590, %v588
  %v767 = vpack.c.b16 %v593, %v591
  %v768 = vpack.c.b16 %v594, %v592
  %v769 = vpack.c.b16 %v597, %v595
  %v770 = vpack.c.b16 %v598, %v596
  %v771 = vpack.c.b16 %v601, %v599
  %v772 = vpack.c.b16 %v602, %v600
  %v773 = vpack.c.b16 %v605, %v603
  %v774 = vpack.c.b16 %v606, %v604
  %v775 = vpack.c.b16 %v609, %v607
  %v776 = vpack.c.b16 %v610, %v608
  %v777 = vpack.c.b16 %v613, %v611
  %v778 = vpack.c.b16 %v614, %v612
  %v779 = vpack.c.b16 %v617, %v615
  %v780 = vpack.c.b16 %v618, %v616
  %v781 = vpack.c.b16 %v621, %v619
  %v782 = vpack.c.b16 %v622, %v620
  %v783 = vpack.c.b16 %v625, %v623
  %v784 = vpack.c.b16 %v626, %v624
  %v785 = vpack.c.b16 %v629, %v627
  %v786 = vpack.c.b16 %v630, %v628
  %v787 = vpack.c.b16 %v633, %v631
  %v788 = vpack.c.b16 %v634, %v632
  %v789 = vpack.c.b16 %v637, %v635
  %v790 = vpack.c.b16 %v638, %v636
  %v791 = vpack.c.b16 %v641, %v639
  %v792 = vpack.c.b16 %v642, %v640
  %v793 = vpack.c.b16 %v645, %v643
  %v794 = vpack.c.b16 %v646, %v644
  %v795 = vpack.c.b16 %v649, %v647
  %v796 = vpack.c.b16 %v650, %v648
  %v797 = vpack.c.b16 %v653, %v651
  %v798 = vpack.c.b16 %v654, %v652
  %943 = vmatpush.bf16.msra.mxu0 %v669
  %944 = vmatpush.bf16.msra.mxu0 %v667
  %945 = vmatpush.bf16.msra.mxu0 %v665
  %946 = vmatpush.bf16.msra.mxu0 %v663
  %947 = vmatpush.bf16.msra.mxu0 %v661
  %948 = vmatpush.bf16.msra.mxu0 %v659
  %949 = vmatpush.bf16.msra.mxu0 %v657
  %950 = vmatpush.bf16.msra.mxu0 %v655
  %951 = vmatmul.bf16.gmra.mxu0 %v205
  %v952 = vpop.f32.mrf.mxu0
  %v953 = vadd.f32 0.0, %v952
  %v954 = vpop.f32.mrf.mxu0
  %v955 = vadd.f32 0.0, %v954
  %956 = vdwg.mxu0
  %957 = vmatpush.bf16.msra.mxu0 %v685
  %958 = vmatpush.bf16.msra.mxu0 %v683
  %959 = vmatpush.bf16.msra.mxu0 %v681
  %960 = vmatpush.bf16.msra.mxu0 %v679
  %961 = vmatpush.bf16.msra.mxu0 %v677
  %962 = vmatpush.bf16.msra.mxu0 %v675
  %963 = vmatpush.bf16.msra.mxu0 %v673
  %964 = vmatpush.bf16.msra.mxu0 %v671
  %965 = vmatmul.bf16.gmra.mxu0 %v206
  %v966 = vpop.f32.mrf.mxu0
  %v967 = vadd.f32 %v953, %v966
  %v968 = vpop.f32.mrf.mxu0
  %v969 = vadd.f32 %v955, %v968
  %970 = vdwg.mxu0
  %971 = vmatpush.bf16.msra.mxu0 %v701
  %972 = vmatpush.bf16.msra.mxu0 %v699
  %973 = vmatpush.bf16.msra.mxu0 %v697
  %974 = vmatpush.bf16.msra.mxu0 %v695
  %975 = vmatpush.bf16.msra.mxu0 %v693
  %976 = vmatpush.bf16.msra.mxu0 %v691
  %977 = vmatpush.bf16.msra.mxu0 %v689
  %978 = vmatpush.bf16.msra.mxu0 %v687
  %979 = vmatmul.bf16.gmra.mxu0 %v207
  %v980 = vpop.f32.mrf.mxu0
  %v981 = vadd.f32 %v967, %v980
  %v982 = vpop.f32.mrf.mxu0
  %v983 = vadd.f32 %v969, %v982
  %984 = vdwg.mxu0
  %985 = vmatpush.bf16.msra.mxu0 %v717
  %986 = vmatpush.bf16.msra.mxu0 %v715
  %987 = vmatpush.bf16.msra.mxu0 %v713
  %988 = vmatpush.bf16.msra.mxu0 %v711
  %989 = vmatpush.bf16.msra.mxu0 %v709
  %990 = vmatpush.bf16.msra.mxu0 %v707
  %991 = vmatpush.bf16.msra.mxu0 %v705
  %992 = vmatpush.bf16.msra.mxu0 %v703
  %993 = vmatmul.bf16.gmra.mxu0 %v208
  %v994 = vpop.f32.mrf.mxu0
  %v995 = vadd.f32 %v981, %v994
  %v996 = vpop.f32.mrf.mxu0
  %v997 = vadd.f32 %v983, %v996
  %998 = vdwg.mxu0
  %999 = vmatpush.bf16.msra.mxu0 %v733
  %1000 = vmatpush.bf16.msra.mxu0 %v731
  %1001 = vmatpush.bf16.msra.mxu0 %v729
  %1002 = vmatpush.bf16.msra.mxu0 %v727
  %1003 = vmatpush.bf16.msra.mxu0 %v725
  %1004 = vmatpush.bf16.msra.mxu0 %v723
  %1005 = vmatpush.bf16.msra.mxu0 %v721
  %1006 = vmatpush.bf16.msra.mxu0 %v719
  %1007 = vmatmul.bf16.gmra.mxu0 %v209
  %v1008 = vpop.f32.mrf.mxu0
  %v1009 = vadd.f32 %v995, %v1008
  %v1010 = vpop.f32.mrf.mxu0
  %v1011 = vadd.f32 %v997, %v1010
  %1012 = vdwg.mxu0
  %1013 = vmatpush.bf16.msra.mxu0 %v749
  %1014 = vmatpush.bf16.msra.mxu0 %v747
  %1015 = vmatpush.bf16.msra.mxu0 %v745
  %1016 = vmatpush.bf16.msra.mxu0 %v743
  %1017 = vmatpush.bf16.msra.mxu0 %v741
  %1018 = vmatpush.bf16.msra.mxu0 %v739
  %1019 = vmatpush.bf16.msra.mxu0 %v737
  %1020 = vmatpush.bf16.msra.mxu0 %v735
  %1021 = vmatmul.bf16.gmra.mxu0 %v210
  %v1022 = vpop.f32.mrf.mxu0
  %v1023 = vadd.f32 %v1009, %v1022
  %v1024 = vpop.f32.mrf.mxu0
  %v1025 = vadd.f32 %v1011, %v1024
  %1026 = vdwg.mxu0
  %1027 = vmatpush.bf16.msra.mxu0 %v765
  %1028 = vmatpush.bf16.msra.mxu0 %v763
  %1029 = vmatpush.bf16.msra.mxu0 %v761
  %1030 = vmatpush.bf16.msra.mxu0 %v759
  %1031 = vmatpush.bf16.msra.mxu0 %v757
  %1032 = vmatpush.bf16.msra.mxu0 %v755
  %1033 = vmatpush.bf16.msra.mxu0 %v753
  %1034 = vmatpush.bf16.msra.mxu0 %v751
  %1035 = vmatmul.bf16.gmra.mxu0 %v211
  %v1036 = vpop.f32.mrf.mxu0
  %v1037 = vadd.f32 %v1023, %v1036
  %v1038 = vpop.f32.mrf.mxu0
  %v1039 = vadd.f32 %v1025, %v1038
  %1040 = vdwg.mxu0
  %1041 = vmatpush.bf16.msra.mxu0 %v781
  %1042 = vmatpush.bf16.msra.mxu0 %v779
  %1043 = vmatpush.bf16.msra.mxu0 %v777
  %1044 = vmatpush.bf16.msra.mxu0 %v775
  %1045 = vmatpush.bf16.msra.mxu0 %v773
  %1046 = vmatpush.bf16.msra.mxu0 %v771
  %1047 = vmatpush.bf16.msra.mxu0 %v769
  %1048 = vmatpush.bf16.msra.mxu0 %v767
  %1049 = vmatmul.bf16.gmra.mxu0 %v212
  %v1050 = vpop.f32.mrf.mxu0
  %v1051 = vadd.f32 %v1037, %v1050
  %v1052 = vpop.f32.mrf.mxu0
  %v1053 = vadd.f32 %v1039, %v1052
  %1054 = vdwg.mxu0
  %1055 = vmatpush.bf16.msra.mxu0 %v797
  %1056 = vmatpush.bf16.msra.mxu0 %v795
  %1057 = vmatpush.bf16.msra.mxu0 %v793
  %1058 = vmatpush.bf16.msra.mxu0 %v791
  %1059 = vmatpush.bf16.msra.mxu0 %v789
  %1060 = vmatpush.bf16.msra.mxu0 %v787
  %1061 = vmatpush.bf16.msra.mxu0 %v785
  %1062 = vmatpush.bf16.msra.mxu0 %v783
  %1063 = vmatmul.bf16.gmra.mxu0 %v213
  %v1064 = vpop.f32.mrf.mxu0
  %v1065 = vadd.f32 %v1051, %v1064
  %v1066 = vpop.f32.mrf.mxu0
  %v1067 = vadd.f32 %v1053, %v1066
  %1068 = vdwg.mxu0
  %1069 = vmatpush.bf16.msra.mxu0 %v670
  %1070 = vmatpush.bf16.msra.mxu0 %v668
  %1071 = vmatpush.bf16.msra.mxu0 %v666
  %1072 = vmatpush.bf16.msra.mxu0 %v664
  %1073 = vmatpush.bf16.msra.mxu0 %v662
  %1074 = vmatpush.bf16.msra.mxu0 %v660
  %1075 = vmatpush.bf16.msra.mxu0 %v658
  %1076 = vmatpush.bf16.msra.mxu0 %v656
  %1077 = vmatmul.bf16.gmra.mxu0 %v205
  %v1078 = vpop.f32.mrf.mxu0
  %v1079 = vadd.f32 0.0, %v1078
  %v1080 = vpop.f32.mrf.mxu0
  %v1081 = vadd.f32 0.0, %v1080
  %1082 = vdwg.mxu0
  %1083 = vmatpush.bf16.msra.mxu0 %v686
  %1084 = vmatpush.bf16.msra.mxu0 %v684
  %1085 = vmatpush.bf16.msra.mxu0 %v682
  %1086 = vmatpush.bf16.msra.mxu0 %v680
  %1087 = vmatpush.bf16.msra.mxu0 %v678
  %1088 = vmatpush.bf16.msra.mxu0 %v676
  %1089 = vmatpush.bf16.msra.mxu0 %v674
  %1090 = vmatpush.bf16.msra.mxu0 %v672
  %1091 = vmatmul.bf16.gmra.mxu0 %v206
  %v1092 = vpop.f32.mrf.mxu0
  %v1093 = vadd.f32 %v1079, %v1092
  %v1094 = vpop.f32.mrf.mxu0
  %v1095 = vadd.f32 %v1081, %v1094
  %1096 = vdwg.mxu0
  %1097 = vmatpush.bf16.msra.mxu0 %v702
  %1098 = vmatpush.bf16.msra.mxu0 %v700
  %1099 = vmatpush.bf16.msra.mxu0 %v698
  %1100 = vmatpush.bf16.msra.mxu0 %v696
  %1101 = vmatpush.bf16.msra.mxu0 %v694
  %1102 = vmatpush.bf16.msra.mxu0 %v692
  %1103 = vmatpush.bf16.msra.mxu0 %v690
  %1104 = vmatpush.bf16.msra.mxu0 %v688
  %1105 = vmatmul.bf16.gmra.mxu0 %v207
  %v1106 = vpop.f32.mrf.mxu0
  %v1107 = vadd.f32 %v1093, %v1106
  %v1108 = vpop.f32.mrf.mxu0
  %v1109 = vadd.f32 %v1095, %v1108
  %1110 = vdwg.mxu0
  %1111 = vmatpush.bf16.msra.mxu0 %v718
  %1112 = vmatpush.bf16.msra.mxu0 %v716
  %1113 = vmatpush.bf16.msra.mxu0 %v714
  %1114 = vmatpush.bf16.msra.mxu0 %v712
  %1115 = vmatpush.bf16.msra.mxu0 %v710
  %1116 = vmatpush.bf16.msra.mxu0 %v708
  %1117 = vmatpush.bf16.msra.mxu0 %v706
  %1118 = vmatpush.bf16.msra.mxu0 %v704
  %1119 = vmatmul.bf16.gmra.mxu0 %v208
  %v1120 = vpop.f32.mrf.mxu0
  %v1121 = vadd.f32 %v1107, %v1120
  %v1122 = vpop.f32.mrf.mxu0
  %v1123 = vadd.f32 %v1109, %v1122
  %1124 = vdwg.mxu0
  %1125 = vmatpush.bf16.msra.mxu0 %v734
  %1126 = vmatpush.bf16.msra.mxu0 %v732
  %1127 = vmatpush.bf16.msra.mxu0 %v730
  %1128 = vmatpush.bf16.msra.mxu0 %v728
  %1129 = vmatpush.bf16.msra.mxu0 %v726
  %1130 = vmatpush.bf16.msra.mxu0 %v724
  %1131 = vmatpush.bf16.msra.mxu0 %v722
  %1132 = vmatpush.bf16.msra.mxu0 %v720
  %1133 = vmatmul.bf16.gmra.mxu0 %v209
  %v1134 = vpop.f32.mrf.mxu0
  %v1135 = vadd.f32 %v1121, %v1134
  %v1136 = vpop.f32.mrf.mxu0
  %v1137 = vadd.f32 %v1123, %v1136
  %1138 = vdwg.mxu0
  %1139 = vmatpush.bf16.msra.mxu0 %v750
  %1140 = vmatpush.bf16.msra.mxu0 %v748
  %1141 = vmatpush.bf16.msra.mxu0 %v746
  %1142 = vmatpush.bf16.msra.mxu0 %v744
  %1143 = vmatpush.bf16.msra.mxu0 %v742
  %1144 = vmatpush.bf16.msra.mxu0 %v740
  %1145 = vmatpush.bf16.msra.mxu0 %v738
  %1146 = vmatpush.bf16.msra.mxu0 %v736
  %1147 = vmatmul.bf16.gmra.mxu0 %v210
  %v1148 = vpop.f32.mrf.mxu0
  %v1149 = vadd.f32 %v1135, %v1148
  %v1150 = vpop.f32.mrf.mxu0
  %v1151 = vadd.f32 %v1137, %v1150
  %1152 = vdwg.mxu0
  %1153 = vmatpush.bf16.msra.mxu0 %v766
  %1154 = vmatpush.bf16.msra.mxu0 %v764
  %1155 = vmatpush.bf16.msra.mxu0 %v762
  %1156 = vmatpush.bf16.msra.mxu0 %v760
  %1157 = vmatpush.bf16.msra.mxu0 %v758
  %1158 = vmatpush.bf16.msra.mxu0 %v756
  %1159 = vmatpush.bf16.msra.mxu0 %v754
  %1160 = vmatpush.bf16.msra.mxu0 %v752
  %1161 = vmatmul.bf16.gmra.mxu0 %v211
  %v1162 = vpop.f32.mrf.mxu0
  %v1163 = vadd.f32 %v1149, %v1162
  %v1164 = vpop.f32.mrf.mxu0
  %v1165 = vadd.f32 %v1151, %v1164
  %1166 = vdwg.mxu0
  %1167 = vmatpush.bf16.msra.mxu0 %v782
  %1168 = vmatpush.bf16.msra.mxu0 %v780
  %1169 = vmatpush.bf16.msra.mxu0 %v778
  %1170 = vmatpush.bf16.msra.mxu0 %v776
  %1171 = vmatpush.bf16.msra.mxu0 %v774
  %1172 = vmatpush.bf16.msra.mxu0 %v772
  %1173 = vmatpush.bf16.msra.mxu0 %v770
  %1174 = vmatpush.bf16.msra.mxu0 %v768
  %1175 = vmatmul.bf16.gmra.mxu0 %v212
  %v1176 = vpop.f32.mrf.mxu0
  %v1177 = vadd.f32 %v1163, %v1176
  %v1178 = vpop.f32.mrf.mxu0
  %v1179 = vadd.f32 %v1165, %v1178
  %1180 = vdwg.mxu0
  %1181 = vmatpush.bf16.msra.mxu0 %v798
  %1182 = vmatpush.bf16.msra.mxu0 %v796
  %1183 = vmatpush.bf16.msra.mxu0 %v794
  %1184 = vmatpush.bf16.msra.mxu0 %v792
  %1185 = vmatpush.bf16.msra.mxu0 %v790
  %1186 = vmatpush.bf16.msra.mxu0 %v788
  %1187 = vmatpush.bf16.msra.mxu0 %v786
  %1188 = vmatpush.bf16.msra.mxu0 %v784
  %1189 = vmatmul.bf16.gmra.mxu0 %v213
  %v1190 = vpop.f32.mrf.mxu0
  %v1191 = vadd.f32 %v1177, %v1190
  %v1192 = vpop.f32.mrf.mxu0
  %v1193 = vadd.f32 %v1179, %v1192
  %1194 = vdwg.mxu0
  %v1195 = vadd.f32 %v19, %v1065
  %v1196 = vadd.f32 %v20, %v1191
  %v1197 = vadd.f32 %v21, %v1067
  %v1198 = vadd.f32 %v22, %v1193
  %1199 = vst [vmem:[#allocation2] sm:$0xff] %v1195
  %1200 = vst [vmem:[#allocation2 + $0x8] sm:$0xff] %v1196
  %1201 = vst [vmem:[#allocation2 + $0x10] sm:$0xff] %v1197
  %1202 = vst [vmem:[#allocation2 + $0x18] sm:$0xff] %v1198
  // Predicated region
  $region14: #{_lambda_.45} parent=0 // pred_check
    %p1203 = pneg %p11
  $region15: #{_lambda_.45} parent=0 // pred_check_branch
    %1205 = sbr.rel (%p1203) target = $region17
  $region16: #{_lambda_.45} parent=0 // pred_region
    %v1206 = vld [vmem:[#allocation2] sm:$0xff]
    %v1207 = vld [vmem:[#allocation2 + $0x8] sm:$0xff]
    %v1208 = vld [vmem:[#allocation2 + $0x10] sm:$0xff]
    %v1209 = vld [vmem:[#allocation2 + $0x18] sm:$0xff]
    %1210 = vst [vmem:[%s2] sm:$0xff] %v1206
    %1211 = vst [vmem:[%s2 + $0x8] sm:$0xff] %v1207
    %1212 = vst [vmem:[%s2 + $0x10] sm:$0xff] %v1208
    %1213 = vst [vmem:[%s2 + $0x18] sm:$0xff] %v1209
  $region17: #{_lambda_.45} parent=0 // pred_fallthru
    _
  // Predicated region
  $region18: #{_lambda_.45} parent=0 // pred_check
    _
  $region19: #{_lambda_.45} parent=0 // pred_check_branch
    %1215 = sbr.rel (0) target = $region21
  $region20: #{_lambda_.45} parent=0 // pred_region
    _
  $region21: #{_lambda_.45} parent=0 // pred_fallthru
    _
  // Predicated region
  $region22: #{_lambda_.45} parent=0 // pred_check
    _
  $region23: #{_lambda_.45} parent=0 // pred_check_branch
    %1217 = sbr.rel (0) target = $region25
  $region24: #{_lambda_.45} parent=0 // pred_region
    _
  $region25: #{_lambda_.45} parent=0 // pred_fallthru
    _

// kernel: _lambda_.51
$region0: #{_lambda_.51}
  #allocation0 [shape = 'u32[]', space=smem, size = 0x4, offset = 0x4, fixed_abs, tag = 'smem constant byte address 0x4 - core index']
  #allocation1 [shape = 'u32[72,128]{1,0:T(1,128)}', space=vmem, size = 0x9000, scoped, tag = 'internal scratch']
  %s0 = inlined_call_operand.vmem [shape: f32[8,256], index: 0, kind: input, shape index: {}]
  %s1 = inlined_call_operand.vmem [shape: f32[1,256], index: 1, kind: input, shape index: {}]
  %s2 = inlined_call_operand.vmem [shape: f32[1,256], index: 2, kind: input, shape index: {}]
  %s3 = inlined_call_operand.vmem [shape: f32[8,256], index: 3, kind: output, shape index: {}]
  %s4 = sld [smem:[#allocation0]]
  $region22: #{_lambda_.51} parent=0
    _
  %s6 = ssub.s32 1, %s4
  %s7 = scalar_select 0, %s6, %s4
  // Predicated region
  $region2: #{_lambda_.51} parent=0 // pred_check
    _
  $region3: #{_lambda_.51} parent=0 // pred_check_branch
    %9 = sbr.rel (0) target = $region5
  $region4: #{_lambda_.51} parent=0 // pred_region
    _
  $region5: #{_lambda_.51} parent=0 // pred_fallthru
    _
  // Predicated region
  $region6: #{_lambda_.51} parent=0 // pred_check
    _
  $region7: #{_lambda_.51} parent=0 // pred_check_branch
    %11 = sbr.rel (0) target = $region9
  $region8: #{_lambda_.51} parent=0 // pred_region
    _
  $region9: #{_lambda_.51} parent=0 // pred_fallthru
    _
  // Predicated region
  $region10: #{_lambda_.51} parent=0 // pred_check
    _
  $region11: #{_lambda_.51} parent=0 // pred_check_branch
    %13 = sbr.rel (0) target = $region13
  $region12: #{_lambda_.51} parent=0 // pred_region
    _
  $region13: #{_lambda_.51} parent=0 // pred_fallthru
    _
  %v14 = vld [vmem:[%s0] sm:$0xff]
  %v15 = vld [vmem:[%s0 + $0x8] sm:$0xff]
  %v16 = vld [vmem:[%s1] sm:$0x3]
  %v18 = vperm.slane %v16, 0
  %v19 = vperm.slane %v16, 1
  %v22 = vmul.f32 %v14, %v18
  %v23 = vmul.f32 %v15, %v19
  %v24 = vld [vmem:[%s2] sm:$0x3]
  %v26 = vperm.slane %v24, 0
  %v27 = vperm.slane %v24, 1
  %v30 = vadd.f32 %v22, %v26
  %v31 = vadd.f32 %v23, %v27
  %32 = vst [vmem:[%s3] sm:$0xff] %v30
  %33 = vst [vmem:[%s3 + $0x8] sm:$0xff] %v31
  // Predicated region
  $region14: #{_lambda_.51} parent=0 // pred_check
    _
  $region15: #{_lambda_.51} parent=0 // pred_check_branch
    %35 = sbr.rel (0) target = $region17
  $region16: #{_lambda_.51} parent=0 // pred_region
    _
  $region17: #{_lambda_.51} parent=0 // pred_fallthru
    _
  // Predicated region
  $region18: #{_lambda_.51} parent=0 // pred_check
    _
  $region19: #{_lambda_.51} parent=0 // pred_check_branch
    %37 = sbr.rel (0) target = $region21
  $region20: #{_lambda_.51} parent=0 // pred_region
    _
  $region21: #{_lambda_.51} parent=0 // pred_fallthru
    _

// kernel: _lambda_.47
$region0: #{_lambda_.47}
  #allocation0 [shape = 'u32[]', space=smem, size = 0x4, offset = 0x4, fixed_abs, tag = 'smem constant byte address 0x4 - core index']
  #allocation1 [shape = 'u32[72,128]{1,0:T(1,128)}', space=vmem, size = 0x9000, scoped, tag = 'internal scratch']
  %s0 = inlined_call_operand.vmem [shape: f32[8,256], index: 0, kind: input, shape index: {}]
  %s1 = inlined_call_operand.vmem [shape: f32[1,256], index: 1, kind: input, shape index: {}]
  %s2 = inlined_call_operand.vmem [shape: f32[1,256], index: 2, kind: input, shape index: {}]
  %s3 = inlined_call_operand.vmem [shape: f32[8,256], index: 3, kind: output, shape index: {}]
  %s4 = sld [smem:[#allocation0]]
  $region22: #{_lambda_.47} parent=0
    _
  %s6 = ssub.s32 1, %s4
  %s7 = scalar_select 0, %s6, %s4
  // Predicated region
  $region2: #{_lambda_.47} parent=0 // pred_check
    _
  $region3: #{_lambda_.47} parent=0 // pred_check_branch
    %9 = sbr.rel (0) target = $region5
  $region4: #{_lambda_.47} parent=0 // pred_region
    _
  $region5: #{_lambda_.47} parent=0 // pred_fallthru
    _
  // Predicated region
  $region6: #{_lambda_.47} parent=0 // pred_check
    _
  $region7: #{_lambda_.47} parent=0 // pred_check_branch
    %11 = sbr.rel (0) target = $region9
  $region8: #{_lambda_.47} parent=0 // pred_region
    _
  $region9: #{_lambda_.47} parent=0 // pred_fallthru
    _
  // Predicated region
  $region10: #{_lambda_.47} parent=0 // pred_check
    _
  $region11: #{_lambda_.47} parent=0 // pred_check_branch
    %13 = sbr.rel (0) target = $region13
  $region12: #{_lambda_.47} parent=0 // pred_region
    _
  $region13: #{_lambda_.47} parent=0 // pred_fallthru
    _
  %v14 = vld [vmem:[%s0] sm:$0xff]
  %v15 = vld [vmem:[%s0 + $0x8] sm:$0xff]
  %v16 = vld [vmem:[%s1] sm:$0x3]
  %v18 = vperm.slane %v16, 0
  %v19 = vperm.slane %v16, 1
  %v22 = vmul.f32 %v14, %v18
  %v23 = vmul.f32 %v15, %v19
  %v24 = vld [vmem:[%s2] sm:$0x3]
  %v26 = vperm.slane %v24, 0
  %v27 = vperm.slane %v24, 1
  %v30 = vadd.f32 %v22, %v26
  %v31 = vadd.f32 %v23, %v27
  %v32 = vmax.f32 %v30, 0.0
  %v33 = vmax.f32 %v31, 0.0
  %34 = vst [vmem:[%s3] sm:$0xff] %v32
  %35 = vst [vmem:[%s3 + $0x8] sm:$0xff] %v33
  // Predicated region
  $region14: #{_lambda_.47} parent=0 // pred_check
    _
  $region15: #{_lambda_.47} parent=0 // pred_check_branch
    %37 = sbr.rel (0) target = $region17
  $region16: #{_lambda_.47} parent=0 // pred_region
    _
  $region17: #{_lambda_.47} parent=0 // pred_fallthru
    _
  // Predicated region
  $region18: #{_lambda_.47} parent=0 // pred_check
    _
  $region19: #{_lambda_.47} parent=0 // pred_check_branch
    %39 = sbr.rel (0) target = $region21
  $region20: #{_lambda_.47} parent=0 // pred_region
    _
  $region21: #{_lambda_.47} parent=0 // pred_fallthru
    _

// kernel: _lambda_.53
$region0: #{_lambda_.53}
  #allocation0 [shape = 'u32[]', space=smem, size = 0x4, offset = 0x4, fixed_abs, tag = 'smem constant byte address 0x4 - core index']
  #allocation1 [shape = 'u32[72,128]{1,0:T(1,128)}', space=vmem, size = 0x9000, scoped, tag = 'internal scratch']
  %s0 = inlined_call_operand.vmem [shape: f32[8,256], index: 0, kind: input, shape index: {}]
  %s1 = inlined_call_operand.vmem [shape: f32[1,256], index: 1, kind: input, shape index: {}]
  %s2 = inlined_call_operand.vmem [shape: f32[1,256], index: 2, kind: input, shape index: {}]
  %s3 = inlined_call_operand.vmem [shape: f32[8,256], index: 3, kind: input, shape index: {}]
  %s4 = inlined_call_operand.vmem [shape: f32[8,256], index: 4, kind: output, shape index: {}]
  %s5 = sld [smem:[#allocation0]]
  $region26: #{_lambda_.53} parent=0
    _
  %s7 = ssub.s32 1, %s5
  %s8 = scalar_select 0, %s7, %s5
  // Predicated region
  $region2: #{_lambda_.53} parent=0 // pred_check
    _
  $region3: #{_lambda_.53} parent=0 // pred_check_branch
    %10 = sbr.rel (0) target = $region5
  $region4: #{_lambda_.53} parent=0 // pred_region
    _
  $region5: #{_lambda_.53} parent=0 // pred_fallthru
    _
  // Predicated region
  $region6: #{_lambda_.53} parent=0 // pred_check
    _
  $region7: #{_lambda_.53} parent=0 // pred_check_branch
    %12 = sbr.rel (0) target = $region9
  $region8: #{_lambda_.53} parent=0 // pred_region
    _
  $region9: #{_lambda_.53} parent=0 // pred_fallthru
    _
  // Predicated region
  $region10: #{_lambda_.53} parent=0 // pred_check
    _
  $region11: #{_lambda_.53} parent=0 // pred_check_branch
    %14 = sbr.rel (0) target = $region13
  $region12: #{_lambda_.53} parent=0 // pred_region
    _
  $region13: #{_lambda_.53} parent=0 // pred_fallthru
    _
  // Predicated region
  $region14: #{_lambda_.53} parent=0 // pred_check
    _
  $region15: #{_lambda_.53} parent=0 // pred_check_branch
    %16 = sbr.rel (0) target = $region17
  $region16: #{_lambda_.53} parent=0 // pred_region
    _
  $region17: #{_lambda_.53} parent=0 // pred_fallthru
    _
  %v17 = vld [vmem:[%s0] sm:$0xff]
  %v18 = vld [vmem:[%s0 + $0x8] sm:$0xff]
  %v19 = vld [vmem:[%s1] sm:$0x3]
  %v21 = vperm.slane %v19, 0
  %v22 = vperm.slane %v19, 1
  %v25 = vmul.f32 %v17, %v21
  %v26 = vmul.f32 %v18, %v22
  %v27 = vld [vmem:[%s2] sm:$0x3]
  %v29 = vperm.slane %v27, 0
  %v30 = vperm.slane %v27, 1
  %v33 = vadd.f32 %v25, %v29
  %v34 = vadd.f32 %v26, %v30
  %v35 = vld [vmem:[%s3] sm:$0xff]
  %v36 = vld [vmem:[%s3 + $0x8] sm:$0xff]
  %v37 = vadd.f32 %v33, %v35
  %v38 = vadd.f32 %v34, %v36
  %v39 = vmax.f32 %v37, 0.0
  %v40 = vmax.f32 %v38, 0.0
  %41 = vst [vmem:[%s4] sm:$0xff] %v39
  %42 = vst [vmem:[%s4 + $0x8] sm:$0xff] %v40
  // Predicated region
  $region18: #{_lambda_.53} parent=0 // pred_check
    _
  $region19: #{_lambda_.53} parent=0 // pred_check_branch
    %44 = sbr.rel (0) target = $region21
  $region20: #{_lambda_.53} parent=0 // pred_region
    _
  $region21: #{_lambda_.53} parent=0 // pred_fallthru
    _
  // Predicated region
  $region22: #{_lambda_.53} parent=0 // pred_check
    _
  $region23: #{_lambda_.53} parent=0 // pred_check_branch
    %46 = sbr.rel (0) target = $region25
  $region24: #{_lambda_.53} parent=0 // pred_region
    _
  $region25: #{_lambda_.53} parent=0 // pred_fallthru
    _

// kernel: _lambda_.48
$region0: #{_lambda_.48}
  #allocation0 [shape = 'u32[]', space=smem, size = 0x4, offset = 0x4, fixed_abs, tag = 'smem constant byte address 0x4 - core index']
  #allocation1 [shape = 'u32[72,128]{1,0:T(1,128)}', space=vmem, size = 0x9000, scoped, tag = 'internal scratch']
  #allocation2 [shape = 'f32[16,256]{1,0:T(8,128)}', space=vmem, size = 0x4000, scoped, tag = 'scratch operand']
  %s0 = inlined_call_operand.vmem [shape: bf16[16,2560], index: 0, kind: input, shape index: {}]
  %s1 = inlined_call_operand.vmem [shape: bf16[2560,256], index: 1, kind: input, shape index: {}]
  %s2 = inlined_call_operand.vmem [shape: f32[16,256], index: 2, kind: output, shape index: {}]
  %s3 = sld [smem:[#allocation0]]
  $region72: #{_lambda_.48} parent=0
    _
  %s5 = ssub.s32 1, %s3
  %s6 = scalar_select 0, %s5, %s3
  $region1: #{_lambda_.48} parent=0
    #allocation3 [shape = 'u8[32768]{0}', space=vmem, size = 0x8000, scoped, tag = 'input window, operand 0']
    loop: start=0, step=1, limit=7
    $region2: #{_lambda_.48} parent=1 // loop_pre_header
      _
    $region3: #{_lambda_.48} parent=1 // loop_header
      %s8 = sphi 0, %s12
      %p9 = scmp.ge.s32.totalorder %s8, 7
      %s15 = sphi 0, %s34
      %s16 = sphi 0, %s30
      %s17 = sphi 0, %s26
      %s18 = sphi 0, %s15
      %s19 = sphi 0, %s16
      %s20 = sphi 0, %s17
      %s21 = sphi 0, %s18
      %s22 = sphi 0, %s19
      %s23 = sphi 0, %s20
      %s39 = sphi 0, %s41
      %s42 = sphi 0, %s39
      %s43 = sphi 0, %s42
      %s59 = sphi 0, %s43
      %s67 = sphi 0, %s69
      %s70 = sphi 0, %s67
      %s71 = sphi 0, %s70
      %s87 = sphi 0, %s71
      %s95 = sphi 0, %s97
      %s98 = sphi 0, %s95
      %s99 = sphi 0, %s98
      %s115 = sphi 0, %s99
    $region4: #{_lambda_.48} parent=1 // loop_header_branch
      %11 = sbr.rel (%p9) target = $region8
    $region5: #{_lambda_.48} parent=1 // loop_body
      %s13 = ssub.s32 %s8, 1
      %s14 = ssub.s32 %s8, 2
      %s24 = sadd.s32 1, %s17
      %p25 = scmp.ge.s32.totalorder %s24, 5
      %s26 = scalar_select %p25, 0, %s24
      %s27 = sadd.s32 1, %s16
      %s28 = scalar_select %p25, %s27, %s16
      %p29 = scmp.ge.s32.totalorder %s28, 1
      %s30 = scalar_select %p29, 0, %s28
      %s31 = sadd.s32 1, %s15
      %s32 = scalar_select %p29, %s31, %s15
      %p33 = scmp.ge.s32.totalorder %s32, 1
      %s34 = scalar_select %p33, 0, %s32
      %s35 = ssub.s32 %s15, %s34
      %s36 = ssub.s32 %s17, %s26
      %s37 = sor.u32 %s35, %s36
      %p38 = scmp.eq.s32.totalorder %s37, 0
      %s40 = sadd.s32 %s39, 1
      %s41 = scalar_select %p38, %s39, %s40
      %p44 = pneg %p38
      %p45 = scmp.eq.s32.totalorder %s8, 4
      %p46 = por %p44, %p45
      %p47 = scmp.ne.s32.totalorder %s39, %s42
      %p48 = scmp.eq.s32.totalorder %s8, 0
      %p49 = por %p47, %p48
      %p50 = scmp.ne.s32.totalorder %s39, %s42
      %p51 = scmp.eq.s32.totalorder %s13, 4
      %p52 = por %p50, %p51
      %p53 = scmp.ne.s32.totalorder %s42, %s43
      %p54 = scmp.eq.s32.totalorder %s13, 0
      %p55 = por %p53, %p54
      %p56 = scmp.ne.s32.totalorder %s42, %s43
      %p57 = scmp.eq.s32.totalorder %s14, 4
      %p58 = por %p56, %p57
      %p60 = scmp.ne.s32.totalorder %s43, %s59
      %p61 = scmp.eq.s32.totalorder %s14, 0
      %p62 = por %p60, %p61
      %s63 = ssub.s32 %s17, %s26
      %s64 = ssub.s32 %s16, %s30
      %s65 = sor.u32 %s63, %s64
      %p66 = scmp.eq.s32.totalorder %s65, 0
      %s68 = sadd.s32 %s67, 1
      %s69 = scalar_select %p66, %s67, %s68
      %p72 = pneg %p66
      %p73 = scmp.eq.s32.totalorder %s8, 4
      %p74 = por %p72, %p73
      %p75 = scmp.ne.s32.totalorder %s67, %s70
      %p76 = scmp.eq.s32.totalorder %s8, 0
      %p77 = por %p75, %p76
      %p78 = scmp.ne.s32.totalorder %s67, %s70
      %p79 = scmp.eq.s32.totalorder %s13, 4
      %p80 = por %p78, %p79
      %p81 = scmp.ne.s32.totalorder %s70, %s71
      %p82 = scmp.eq.s32.totalorder %s13, 0
      %p83 = por %p81, %p82
      %p84 = scmp.ne.s32.totalorder %s70, %s71
      %p85 = scmp.eq.s32.totalorder %s14, 4
      %p86 = por %p84, %p85
      %p88 = scmp.ne.s32.totalorder %s71, %s87
      %p89 = scmp.eq.s32.totalorder %s14, 0
      %p90 = por %p88, %p89
      %s91 = ssub.s32 %s15, %s34
      %s92 = ssub.s32 %s16, %s30
      %s93 = sor.u32 %s91, %s92
      %p94 = scmp.eq.s32.totalorder %s93, 0
      %s96 = sadd.s32 %s95, 1
      %s97 = scalar_select %p94, %s95, %s96
      %p100 = pneg %p94
      %p101 = scmp.eq.s32.totalorder %s8, 4
      %p102 = por %p100, %p101
      %p103 = scmp.ne.s32.totalorder %s95, %s98
      %p104 = scmp.eq.s32.totalorder %s8, 0
      %p105 = por %p103, %p104
      %p106 = scmp.ne.s32.totalorder %s95, %s98
      %p107 = scmp.eq.s32.totalorder %s13, 4
      %p108 = por %p106, %p107
      %p109 = scmp.ne.s32.totalorder %s98, %s99
      %p110 = scmp.eq.s32.totalorder %s13, 0
      %p111 = por %p109, %p110
      %p112 = scmp.ne.s32.totalorder %s98, %s99
      %p113 = scmp.eq.s32.totalorder %s14, 4
      %p114 = por %p112, %p113
      %p116 = scmp.ne.s32.totalorder %s99, %s115
      %p117 = scmp.eq.s32.totalorder %s14, 0
      %p118 = por %p116, %p117
      %p119 = scmp.le.s32.totalorder 1, %s8
      %p120 = scmp.lt.s32.totalorder %s8, 6
      %p121 = pnand %p119, %p120
      %p122 = pneg %p121
      // Predicated region
      $region9: #{_lambda_.48} parent=5 // pred_check
        _
      $region10: #{_lambda_.48} parent=5 // pred_check_branch
        %124 = sbr.rel (%p121) target = $region12
      $region11: #{_lambda_.48} parent=5 // pred_region
        %s125 = ssub.s32 %s8, 1
      $region12: #{_lambda_.48} parent=5 // pred_fallthru
        _
      %p126 = scmp.lt.s32.totalorder %s8, 5
      // Predicated region
      $region13: #{_lambda_.48} parent=5 // pred_check
        %p127 = pneg %p126
      $region14: #{_lambda_.48} parent=5 // pred_check_branch
        %129 = sbr.rel (%p127) target = $region16
      $region15: #{_lambda_.48} parent=5 // pred_region
        // Predicated region
        $region17: #{_lambda_.48} parent=15 // pred_check
          %p130 = pneg %p49
        $region18: #{_lambda_.48} parent=15 // pred_check_branch
          %132 = sbr.rel (%p130) target = $region20
        $region19: #{_lambda_.48} parent=15 // pred_region
          %s133 = sand.u32 %s39, 1
          %s134 = sand.u32 %s39, 1
          %s135 = smul.addr %s134, 32
          %s136 = scalar_lea.vmem [#allocation3], %s135
          %s137 = smul.u32 2, %s15
          %s138 = smul.u32 4, %s17
          %s139 = smul.addr %s137, 20
          %s140 = sadd.s32 %s138, %s139
          %s141 = smul.addr %s140, 4
          %s142 = scalar_lea.vmem %s0, %s141
          // Predicated region
          $region21: #{_lambda_.48} parent=19 // pred_check
            _
          $region22: #{_lambda_.48} parent=19 // pred_check_branch
            %144 = sbr.rel (0) target = $region24
          $region23: #{_lambda_.48} parent=19 // pred_region
            // Predicated region
            $region25: #{_lambda_.48} parent=23 // pred_check
              _
            $region26: #{_lambda_.48} parent=23 // pred_check_branch
              %146 = sbr.rel (0) target = $region28
            $region27: #{_lambda_.48} parent=23 // pred_region
              loop: start=0, step=1, limit=1
              $region29: #{_lambda_.48} parent=27 // loop_pre_header
                _
              $region30: #{_lambda_.48} parent=27 // loop_header
                %s148 = sphi 0, %s152
                %p149 = scmp.ge.s32.totalorder %s148, 1
                %s153 = sphi %s142, %s142
                %s154 = sphi %s136, %s136
              $region31: #{_lambda_.48} parent=27 // loop_header_branch
                %151 = sbr.rel (%p149) target = $region35
              $region32: #{_lambda_.48} parent=27 // loop_body
                %v155 = vld [vmem:[%s153] sm:$0xff]
                %156 = vst [vmem:[%s154] sm:$0xff] %v155
                %v157 = vld [vmem:[%s153 + $0x8] sm:$0xff]
                %158 = vst [vmem:[%s154 + $0x8] sm:$0xff] %v157
                %v159 = vld [vmem:[%s153 + $0x50] sm:$0xff]
                %160 = vst [vmem:[%s154 + $0x10] sm:$0xff] %v159
                %v161 = vld [vmem:[%s153 + $0x58] sm:$0xff]
                %162 = vst [vmem:[%s154 + $0x18] sm:$0xff] %v161
              $region33: #{_lambda_.48} parent=27 // loop_footer
                %s152 = sadd.s32 1, %s148
              $region34: #{_lambda_.48} parent=27 // loop_footer_branch
                %147 = sbr.rel target = $region30
              $region35: #{_lambda_.48} parent=27 // loop_exit
                _
            $region28: #{_lambda_.48} parent=23 // pred_fallthru
              _
            // Predicated region
            $region36: #{_lambda_.48} parent=23 // pred_check
              _
            $region37: #{_lambda_.48} parent=23 // pred_check_branch
              %164 = sbr.rel target = $region39
            $region38: #{_lambda_.48} parent=23 // pred_region
              _
            $region39: #{_lambda_.48} parent=23 // pred_fallthru
              _
          $region24: #{_lambda_.48} parent=19 // pred_fallthru
            _
          %165 = vnop
        $region20: #{_lambda_.48} parent=15 // pred_fallthru
          _
        // Predicated region
        $region40: #{_lambda_.48} parent=15 // pred_check
          %p166 = pneg %p77
        $region41: #{_lambda_.48} parent=15 // pred_check_branch
          %168 = sbr.rel (%p166) target = $region43
        $region42: #{_lambda_.48} parent=15 // pred_region
          %s169 = smul.u32 64, %s17
          %s170 = smul.u32 2, %s16
          %p171 = scmp.lt.s32.totalorder %s169, 319
          %s172 = scalar_select %p171, %s169, 319
          %p173 = scmp.lt.s32.totalorder %s170, 1
          %s174 = scalar_select %p173, %s170, 1
          %s175 = smul.addr %s172, 2
          %s176 = sadd.s32 %s174, %s175
          %s177 = smul.addr %s176, 4
          %s178 = scalar_lea.vmem %s1, %s177
          %s179 = smul.u32 64, %s17
          %s180 = smul.u32 2, %s16
        $region43: #{_lambda_.48} parent=15 // pred_fallthru
          _
      $region16: #{_lambda_.48} parent=5 // pred_fallthru
        _
      %p181 = scmp.le.s32.totalorder 1, %s8
      %p182 = scmp.lt.s32.totalorder %s8, 6
      %p183 = pnand %p181, %p182
      %p184 = pneg %p183
      // Predicated region
      $region44: #{_lambda_.48} parent=5 // pred_check
        _
      $region45: #{_lambda_.48} parent=5 // pred_check_branch
        %186 = sbr.rel (%p183) target = $region47
      $region46: #{_lambda_.48} parent=5 // pred_region
        %s187 = ssub.s32 %s8, 1
        %s188 = sand.u32 %s42, 1
        %s189 = sand.u32 %s42, 1
        %s190 = smul.addr %s189, 32
        %s191 = scalar_lea.vmem [#allocation3], %s190
        // Predicated region
        $region48: #{_lambda_.48} parent=46 // pred_check
          %p192 = pneg %p55
        $region49: #{_lambda_.48} parent=46 // pred_check_branch
          %194 = sbr.rel (%p192) target = $region51
        $region50: #{_lambda_.48} parent=46 // pred_region
          _
        $region51: #{_lambda_.48} parent=46 // pred_fallthru
          _
        %s195 = sand.u32 %s42, 1
        %s196 = sand.u32 %s42, 1
        %s197 = smul.addr %s196, 32
        %s198 = scalar_lea.vmem [#allocation3], %s197
        %p199 = pneg %p55
        %p200 = pneg %p52
        %s201 = smul.u32 64, %s20
        %s202 = smul.u32 2, %s19
        %p203 = scmp.lt.s32.totalorder %s201, 319
        %s204 = scalar_select %p203, %s201, 319
        %p205 = scmp.lt.s32.totalorder %s202, 1
        %s206 = scalar_select %p205, %s202, 1
        %s207 = smul.addr %s204, 2
        %s208 = sadd.s32 %s206, %s207
        %s209 = smul.addr %s208, 4
        %s210 = scalar_lea.vmem %s1, %s209
        %p211 = pneg %p83
        %p212 = pneg %p80
        %p213 = pneg %p111
        %p214 = pneg %p108
        %s215 = smul.u32 2, %s18
        %s216 = smul.u32 2, %s19
        %p217 = scmp.lt.s32.totalorder %s215, 1
        %s218 = scalar_select %p217, %s215, 1
        %p219 = scmp.lt.s32.totalorder %s216, 1
        %s220 = scalar_select %p219, %s216, 1
        %s221 = smul.addr %s218, 2
        %s222 = sadd.s32 %s220, %s221
        %s223 = smul.addr %s222, 8
        %s224 = scalar_lea.vmem %s2, %s223
        %s225 = smul.u32 2, %s18
        %s226 = smul.u32 4, %s20
        %s227 = smul.u32 64, %s20
        %s228 = smul.u32 2, %s19
        %p229 = scmp.lt.s32.totalorder %s227, 319
        %s230 = scalar_select %p229, %s227, 319
        %p231 = scmp.lt.s32.totalorder %s228, 1
        %s232 = scalar_select %p231, %s228, 1
        %s233 = smul.addr %s230, 2
        %s234 = sadd.s32 %s232, %s233
        %s235 = smul.addr %s234, 4
        %s236 = scalar_lea.vmem %s1, %s235
        %s237 = smul.u32 64, %s20
        %s238 = smul.u32 2, %s19
        %s239 = smul.u32 2, %s18
        %s240 = smul.u32 2, %s19
        %p241 = scmp.lt.s32.totalorder %s239, 1
        %s242 = scalar_select %p241, %s239, 1
        %p243 = scmp.lt.s32.totalorder %s240, 1
        %s244 = scalar_select %p243, %s240, 1
        %s245 = smul.addr %s242, 2
        %s246 = sadd.s32 %s244, %s245
        %s247 = smul.addr %s246, 8
        %s248 = scalar_lea.vmem %s2, %s247
        %s249 = smul.u32 2, %s18
        %s250 = smul.u32 2, %s19
        %p251 = scmp.eq.s32.totalorder %s20, 0
        // Predicated region
        $region52: #{_lambda_.48} parent=46 // pred_check
          %p252 = pneg %p251
        $region53: #{_lambda_.48} parent=46 // pred_check_branch
          %254 = sbr.rel (%p252) target = $region55
        $region54: #{_lambda_.48} parent=46 // pred_region
          %255 = vst [vmem:[#allocation2] sm:$0xff] 0.0
          %256 = vst [vmem:[#allocation2 + $0x8] sm:$0xff] 0.0
          %257 = vst [vmem:[#allocation2 + $0x10] sm:$0xff] 0.0
          %258 = vst [vmem:[#allocation2 + $0x18] sm:$0xff] 0.0
        $region55: #{_lambda_.48} parent=46 // pred_fallthru
          _
        %v259 = vld [vmem:[#allocation2] sm:$0xff]
        %v260 = vld [vmem:[#allocation2 + $0x8] sm:$0xff]
        %v261 = vld [vmem:[#allocation2 + $0x10] sm:$0xff]
        %v262 = vld [vmem:[#allocation2 + $0x18] sm:$0xff]
        %v263 = vld [vmem:[%s191] sm:$0xff]
        %v264 = vld [vmem:[%s191 + $0x8] sm:$0xff]
        %v265 = vld [vmem:[%s191 + $0x10] sm:$0xff]
        %v266 = vld [vmem:[%s191 + $0x18] sm:$0xff]
        %v267 = vld [vmem:[%s236] sm:$0xff]
        %v268 = vld [vmem:[%s236 + $0x8] sm:$0xff]
        %v269 = vld [vmem:[%s236 + $0x10] sm:$0xff]
        %v270 = vld [vmem:[%s236 + $0x18] sm:$0xff]
        %v271 = vld [vmem:[%s236 + $0x20] sm:$0xff]
        %v272 = vld [vmem:[%s236 + $0x28] sm:$0xff]
        %v273 = vld [vmem:[%s236 + $0x30] sm:$0xff]
        %v274 = vld [vmem:[%s236 + $0x38] sm:$0xff]
        %v275 = vld [vmem:[%s236 + $0x40] sm:$0xff]
        %v276 = vld [vmem:[%s236 + $0x48] sm:$0xff]
        %v277 = vld [vmem:[%s236 + $0x50] sm:$0xff]
        %v278 = vld [vmem:[%s236 + $0x58] sm:$0xff]
        %v279 = vld [vmem:[%s236 + $0x60] sm:$0xff]
        %v280 = vld [vmem:[%s236 + $0x68] sm:$0xff]
        %v281 = vld [vmem:[%s236 + $0x70] sm:$0xff]
        %v282 = vld [vmem:[%s236 + $0x78] sm:$0xff]
        %v283 = vld [vmem:[%s236 + $0x80] sm:$0xff]
        %v284 = vld [vmem:[%s236 + $0x88] sm:$0xff]
        %v285 = vld [vmem:[%s236 + $0x90] sm:$0xff]
        %v286 = vld [vmem:[%s236 + $0x98] sm:$0xff]
        %v287 = vld [vmem:[%s236 + $0xa0] sm:$0xff]
        %v288 = vld [vmem:[%s236 + $0xa8] sm:$0xff]
        %v289 = vld [vmem:[%s236 + $0xb0] sm:$0xff]
        %v290 = vld [vmem:[%s236 + $0xb8] sm:$0xff]
        %v291 = vld [vmem:[%s236 + $0xc0] sm:$0xff]
        %v292 = vld [vmem:[%s236 + $0xc8] sm:$0xff]
        %v293 = vld [vmem:[%s236 + $0xd0] sm:$0xff]
        %v294 = vld [vmem:[%s236 + $0xd8] sm:$0xff]
        %v295 = vld [vmem:[%s236 + $0xe0] sm:$0xff]
        %v296 = vld [vmem:[%s236 + $0xe8] sm:$0xff]
        %v297 = vld [vmem:[%s236 + $0xf0] sm:$0xff]
        %v298 = vld [vmem:[%s236 + $0xf8] sm:$0xff]
        %v299 = vld [vmem:[%s236 + $0x100] sm:$0xff]
        %v300 = vld [vmem:[%s236 + $0x108] sm:$0xff]
        %v301 = vld [vmem:[%s236 + $0x110] sm:$0xff]
        %v302 = vld [vmem:[%s236 + $0x118] sm:$0xff]
        %v303 = vld [vmem:[%s236 + $0x120] sm:$0xff]
        %v304 = vld [vmem:[%s236 + $0x128] sm:$0xff]
        %v305 = vld [vmem:[%s236 + $0x130] sm:$0xff]
        %v306 = vld [vmem:[%s236 + $0x138] sm:$0xff]
        %v307 = vld [vmem:[%s236 + $0x140] sm:$0xff]
        %v308 = vld [vmem:[%s236 + $0x148] sm:$0xff]
        %v309 = vld [vmem:[%s236 + $0x150] sm:$0xff]
        %v310 = vld [vmem:[%s236 + $0x158] sm:$0xff]
        %v311 = vld [vmem:[%s236 + $0x160] sm:$0xff]
        %v312 = vld [vmem:[%s236 + $0x168] sm:$0xff]
        %v313 = vld [vmem:[%s236 + $0x170] sm:$0xff]
        %v314 = vld [vmem:[%s236 + $0x178] sm:$0xff]
        %v315 = vld [vmem:[%s236 + $0x180] sm:$0xff]
        %v316 = vld [vmem:[%s236 + $0x188] sm:$0xff]
        %v317 = vld [vmem:[%s236 + $0x190] sm:$0xff]
        %v318 = vld [vmem:[%s236 + $0x198] sm:$0xff]
        %v319 = vld [vmem:[%s236 + $0x1a0] sm:$0xff]
        %v320 = vld [vmem:[%s236 + $0x1a8] sm:$0xff]
        %v321 = vld [vmem:[%s236 + $0x1b0] sm:$0xff]
        %v322 = vld [vmem:[%s236 + $0x1b8] sm:$0xff]
        %v323 = vld [vmem:[%s236 + $0x1c0] sm:$0xff]
        %v324 = vld [vmem:[%s236 + $0x1c8] sm:$0xff]
        %v325 = vld [vmem:[%s236 + $0x1d0] sm:$0xff]
        %v326 = vld [vmem:[%s236 + $0x1d8] sm:$0xff]
        %v327 = vld [vmem:[%s236 + $0x1e0] sm:$0xff]
        %v328 = vld [vmem:[%s236 + $0x1e8] sm:$0xff]
        %v329 = vld [vmem:[%s236 + $0x1f0] sm:$0xff]
        %v330 = vld [vmem:[%s236 + $0x1f8] sm:$0xff]
        %v335 = vunpack.c.l.b16 %v263
        %v336 = vunpack.c.h.b16 %v263
        %v337 = vunpack.c.l.b16 %v264
        %v338 = vunpack.c.h.b16 %v264
        %v339 = vunpack.c.l.b16 %v265
        %v340 = vunpack.c.h.b16 %v265
        %v341 = vunpack.c.l.b16 %v266
        %v342 = vunpack.c.h.b16 %v266
        %v343 = vpack.c.b16 %v339, %v335
        %v344 = vpack.c.b16 %v340, %v336
        %v345 = vpack.c.b16 %v341, %v337
        %v346 = vpack.c.b16 %v342, %v338
        %v415 = vunpack.c.l.b16 %v267
        %v416 = vunpack.c.h.b16 %v267
        %v417 = vunpack.c.l.b16 %v268
        %v418 = vunpack.c.h.b16 %v268
        %v419 = vunpack.c.l.b16 %v269
        %v420 = vunpack.c.h.b16 %v269
        %v421 = vunpack.c.l.b16 %v270
        %v422 = vunpack.c.h.b16 %v270
        %v423 = vunpack.c.l.b16 %v271
        %v424 = vunpack.c.h.b16 %v271
        %v425 = vunpack.c.l.b16 %v272
        %v426 = vunpack.c.h.b16 %v272
        %v427 = vunpack.c.l.b16 %v273
        %v428 = vunpack.c.h.b16 %v273
        %v429 = vunpack.c.l.b16 %v274
        %v430 = vunpack.c.h.b16 %v274
        %v431 = vunpack.c.l.b16 %v275
        %v432 = vunpack.c.h.b16 %v275
        %v433 = vunpack.c.l.b16 %v276
        %v434 = vunpack.c.h.b16 %v276
        %v435 = vunpack.c.l.b16 %v277
        %v436 = vunpack.c.h.b16 %v277
        %v437 = vunpack.c.l.b16 %v278
        %v438 = vunpack.c.h.b16 %v278
        %v439 = vunpack.c.l.b16 %v279
        %v440 = vunpack.c.h.b16 %v279
        %v441 = vunpack.c.l.b16 %v280
        %v442 = vunpack.c.h.b16 %v280
        %v443 = vunpack.c.l.b16 %v281
        %v444 = vunpack.c.h.b16 %v281
        %v445 = vunpack.c.l.b16 %v282
        %v446 = vunpack.c.h.b16 %v282
        %v447 = vunpack.c.l.b16 %v283
        %v448 = vunpack.c.h.b16 %v283
        %v449 = vunpack.c.l.b16 %v284
        %v450 = vunpack.c.h.b16 %v284
        %v451 = vunpack.c.l.b16 %v285
        %v452 = vunpack.c.h.b16 %v285
        %v453 = vunpack.c.l.b16 %v286
        %v454 = vunpack.c.h.b16 %v286
        %v455 = vunpack.c.l.b16 %v287
        %v456 = vunpack.c.h.b16 %v287
        %v457 = vunpack.c.l.b16 %v288
        %v458 = vunpack.c.h.b16 %v288
        %v459 = vunpack.c.l.b16 %v289
        %v460 = vunpack.c.h.b16 %v289
        %v461 = vunpack.c.l.b16 %v290
        %v462 = vunpack.c.h.b16 %v290
        %v463 = vunpack.c.l.b16 %v291
        %v464 = vunpack.c.h.b16 %v291
        %v465 = vunpack.c.l.b16 %v292
        %v466 = vunpack.c.h.b16 %v292
        %v467 = vunpack.c.l.b16 %v293
        %v468 = vunpack.c.h.b16 %v293
        %v469 = vunpack.c.l.b16 %v294
        %v470 = vunpack.c.h.b16 %v294
        %v471 = vunpack.c.l.b16 %v295
        %v472 = vunpack.c.h.b16 %v295
        %v473 = vunpack.c.l.b16 %v296
        %v474 = vunpack.c.h.b16 %v296
        %v475 = vunpack.c.l.b16 %v297
        %v476 = vunpack.c.h.b16 %v297
        %v477 = vunpack.c.l.b16 %v298
        %v478 = vunpack.c.h.b16 %v298
        %v479 = vunpack.c.l.b16 %v299
        %v480 = vunpack.c.h.b16 %v299
        %v481 = vunpack.c.l.b16 %v300
        %v482 = vunpack.c.h.b16 %v300
        %v483 = vunpack.c.l.b16 %v301
        %v484 = vunpack.c.h.b16 %v301
        %v485 = vunpack.c.l.b16 %v302
        %v486 = vunpack.c.h.b16 %v302
        %v487 = vunpack.c.l.b16 %v303
        %v488 = vunpack.c.h.b16 %v303
        %v489 = vunpack.c.l.b16 %v304
        %v490 = vunpack.c.h.b16 %v304
        %v491 = vunpack.c.l.b16 %v305
        %v492 = vunpack.c.h.b16 %v305
        %v493 = vunpack.c.l.b16 %v306
        %v494 = vunpack.c.h.b16 %v306
        %v495 = vunpack.c.l.b16 %v307
        %v496 = vunpack.c.h.b16 %v307
        %v497 = vunpack.c.l.b16 %v308
        %v498 = vunpack.c.h.b16 %v308
        %v499 = vunpack.c.l.b16 %v309
        %v500 = vunpack.c.h.b16 %v309
        %v501 = vunpack.c.l.b16 %v310
        %v502 = vunpack.c.h.b16 %v310
        %v503 = vunpack.c.l.b16 %v311
        %v504 = vunpack.c.h.b16 %v311
        %v505 = vunpack.c.l.b16 %v312
        %v506 = vunpack.c.h.b16 %v312
        %v507 = vunpack.c.l.b16 %v313
        %v508 = vunpack.c.h.b16 %v313
        %v509 = vunpack.c.l.b16 %v314
        %v510 = vunpack.c.h.b16 %v314
        %v511 = vunpack.c.l.b16 %v315
        %v512 = vunpack.c.h.b16 %v315
        %v513 = vunpack.c.l.b16 %v316
        %v514 = vunpack.c.h.b16 %v316
        %v515 = vunpack.c.l.b16 %v317
        %v516 = vunpack.c.h.b16 %v317
        %v517 = vunpack.c.l.b16 %v318
        %v518 = vunpack.c.h.b16 %v318
        %v519 = vunpack.c.l.b16 %v319
        %v520 = vunpack.c.h.b16 %v319
        %v521 = vunpack.c.l.b16 %v320
        %v522 = vunpack.c.h.b16 %v320
        %v523 = vunpack.c.l.b16 %v321
        %v524 = vunpack.c.h.b16 %v321
        %v525 = vunpack.c.l.b16 %v322
        %v526 = vunpack.c.h.b16 %v322
        %v527 = vunpack.c.l.b16 %v323
        %v528 = vunpack.c.h.b16 %v323
        %v529 = vunpack.c.l.b16 %v324
        %v530 = vunpack.c.h.b16 %v324
        %v531 = vunpack.c.l.b16 %v325
        %v532 = vunpack.c.h.b16 %v325
        %v533 = vunpack.c.l.b16 %v326
        %v534 = vunpack.c.h.b16 %v326
        %v535 = vunpack.c.l.b16 %v327
        %v536 = vunpack.c.h.b16 %v327
        %v537 = vunpack.c.l.b16 %v328
        %v538 = vunpack.c.h.b16 %v328
        %v539 = vunpack.c.l.b16 %v329
        %v540 = vunpack.c.h.b16 %v329
        %v541 = vunpack.c.l.b16 %v330
        %v542 = vunpack.c.h.b16 %v330
        %v543 = vpack.c.b16 %v417, %v415
        %v544 = vpack.c.b16 %v418, %v416
        %v545 = vpack.c.b16 %v421, %v419
        %v546 = vpack.c.b16 %v422, %v420
        %v547 = vpack.c.b16 %v425, %v423
        %v548 = vpack.c.b16 %v426, %v424
        %v549 = vpack.c.b16 %v429, %v427
        %v550 = vpack.c.b16 %v430, %v428
        %v551 = vpack.c.b16 %v433, %v431
        %v552 = vpack.c.b16 %v434, %v432
        %v553 = vpack.c.b16 %v437, %v435
        %v554 = vpack.c.b16 %v438, %v436
        %v555 = vpack.c.b16 %v441, %v439
        %v556 = vpack.c.b16 %v442, %v440
        %v557 = vpack.c.b16 %v445, %v443
        %v558 = vpack.c.b16 %v446, %v444
        %v559 = vpack.c.b16 %v449, %v447
        %v560 = vpack.c.b16 %v450, %v448
        %v561 = vpack.c.b16 %v453, %v451
        %v562 = vpack.c.b16 %v454, %v452
        %v563 = vpack.c.b16 %v457, %v455
        %v564 = vpack.c.b16 %v458, %v456
        %v565 = vpack.c.b16 %v461, %v459
        %v566 = vpack.c.b16 %v462, %v460
        %v567 = vpack.c.b16 %v465, %v463
        %v568 = vpack.c.b16 %v466, %v464
        %v569 = vpack.c.b16 %v469, %v467
        %v570 = vpack.c.b16 %v470, %v468
        %v571 = vpack.c.b16 %v473, %v471
        %v572 = vpack.c.b16 %v474, %v472
        %v573 = vpack.c.b16 %v477, %v475
        %v574 = vpack.c.b16 %v478, %v476
        %v575 = vpack.c.b16 %v481, %v479
        %v576 = vpack.c.b16 %v482, %v480
        %v577 = vpack.c.b16 %v485, %v483
        %v578 = vpack.c.b16 %v486, %v484
        %v579 = vpack.c.b16 %v489, %v487
        %v580 = vpack.c.b16 %v490, %v488
        %v581 = vpack.c.b16 %v493, %v491
        %v582 = vpack.c.b16 %v494, %v492
        %v583 = vpack.c.b16 %v497, %v495
        %v584 = vpack.c.b16 %v498, %v496
        %v585 = vpack.c.b16 %v501, %v499
        %v586 = vpack.c.b16 %v502, %v500
        %v587 = vpack.c.b16 %v505, %v503
        %v588 = vpack.c.b16 %v506, %v504
        %v589 = vpack.c.b16 %v509, %v507
        %v590 = vpack.c.b16 %v510, %v508
        %v591 = vpack.c.b16 %v513, %v511
        %v592 = vpack.c.b16 %v514, %v512
        %v593 = vpack.c.b16 %v517, %v515
        %v594 = vpack.c.b16 %v518, %v516
        %v595 = vpack.c.b16 %v521, %v519
        %v596 = vpack.c.b16 %v522, %v520
        %v597 = vpack.c.b16 %v525, %v523
        %v598 = vpack.c.b16 %v526, %v524
        %v599 = vpack.c.b16 %v529, %v527
        %v600 = vpack.c.b16 %v530, %v528
        %v601 = vpack.c.b16 %v533, %v531
        %v602 = vpack.c.b16 %v534, %v532
        %v603 = vpack.c.b16 %v537, %v535
        %v604 = vpack.c.b16 %v538, %v536
        %v605 = vpack.c.b16 %v541, %v539
        %v606 = vpack.c.b16 %v542, %v540
        %671 = vmatpush.bf16.msra.mxu0 %v557
        %672 = vmatpush.bf16.msra.mxu0 %v555
        %673 = vmatpush.bf16.msra.mxu0 %v553
        %674 = vmatpush.bf16.msra.mxu0 %v551
        %675 = vmatpush.bf16.msra.mxu0 %v549
        %676 = vmatpush.bf16.msra.mxu0 %v547
        %677 = vmatpush.bf16.msra.mxu0 %v545
        %678 = vmatpush.bf16.msra.mxu0 %v543
        %679 = vmatmul.bf16.gmra.mxu0 %v343
        %v680 = vpop.f32.mrf.mxu0
        %v681 = vadd.f32 0.0, %v680
        %v682 = vpop.f32.mrf.mxu0
        %v683 = vadd.f32 0.0, %v682
        %684 = vdwg.mxu0
        %685 = vmatpush.bf16.msra.mxu0 %v573
        %686 = vmatpush.bf16.msra.mxu0 %v571
        %687 = vmatpush.bf16.msra.mxu0 %v569
        %688 = vmatpush.bf16.msra.mxu0 %v567
        %689 = vmatpush.bf16.msra.mxu0 %v565
        %690 = vmatpush.bf16.msra.mxu0 %v563
        %691 = vmatpush.bf16.msra.mxu0 %v561
        %692 = vmatpush.bf16.msra.mxu0 %v559
        %693 = vmatmul.bf16.gmra.mxu0 %v344
        %v694 = vpop.f32.mrf.mxu0
        %v695 = vadd.f32 %v681, %v694
        %v696 = vpop.f32.mrf.mxu0
        %v697 = vadd.f32 %v683, %v696
        %698 = vdwg.mxu0
        %699 = vmatpush.bf16.msra.mxu0 %v589
        %700 = vmatpush.bf16.msra.mxu0 %v587
        %701 = vmatpush.bf16.msra.mxu0 %v585
        %702 = vmatpush.bf16.msra.mxu0 %v583
        %703 = vmatpush.bf16.msra.mxu0 %v581
        %704 = vmatpush.bf16.msra.mxu0 %v579
        %705 = vmatpush.bf16.msra.mxu0 %v577
        %706 = vmatpush.bf16.msra.mxu0 %v575
        %707 = vmatmul.bf16.gmra.mxu0 %v345
        %v708 = vpop.f32.mrf.mxu0
        %v709 = vadd.f32 %v695, %v708
        %v710 = vpop.f32.mrf.mxu0
        %v711 = vadd.f32 %v697, %v710
        %712 = vdwg.mxu0
        %713 = vmatpush.bf16.msra.mxu0 %v605
        %714 = vmatpush.bf16.msra.mxu0 %v603
        %715 = vmatpush.bf16.msra.mxu0 %v601
        %716 = vmatpush.bf16.msra.mxu0 %v599
        %717 = vmatpush.bf16.msra.mxu0 %v597
        %718 = vmatpush.bf16.msra.mxu0 %v595
        %719 = vmatpush.bf16.msra.mxu0 %v593
        %720 = vmatpush.bf16.msra.mxu0 %v591
        %721 = vmatmul.bf16.gmra.mxu0 %v346
        %v722 = vpop.f32.mrf.mxu0
        %v723 = vadd.f32 %v709, %v722
        %v724 = vpop.f32.mrf.mxu0
        %v725 = vadd.f32 %v711, %v724
        %726 = vdwg.mxu0
        %727 = vmatpush.bf16.msra.mxu0 %v558
        %728 = vmatpush.bf16.msra.mxu0 %v556
        %729 = vmatpush.bf16.msra.mxu0 %v554
        %730 = vmatpush.bf16.msra.mxu0 %v552
        %731 = vmatpush.bf16.msra.mxu0 %v550
        %732 = vmatpush.bf16.msra.mxu0 %v548
        %733 = vmatpush.bf16.msra.mxu0 %v546
        %734 = vmatpush.bf16.msra.mxu0 %v544
        %735 = vmatmul.bf16.gmra.mxu0 %v343
        %v736 = vpop.f32.mrf.mxu0
        %v737 = vadd.f32 0.0, %v736
        %v738 = vpop.f32.mrf.mxu0
        %v739 = vadd.f32 0.0, %v738
        %740 = vdwg.mxu0
        %741 = vmatpush.bf16.msra.mxu0 %v574
        %742 = vmatpush.bf16.msra.mxu0 %v572
        %743 = vmatpush.bf16.msra.mxu0 %v570
        %744 = vmatpush.bf16.msra.mxu0 %v568
        %745 = vmatpush.bf16.msra.mxu0 %v566
        %746 = vmatpush.bf16.msra.mxu0 %v564
        %747 = vmatpush.bf16.msra.mxu0 %v562
        %748 = vmatpush.bf16.msra.mxu0 %v560
        %749 = vmatmul.bf16.gmra.mxu0 %v344
        %v750 = vpop.f32.mrf.mxu0
        %v751 = vadd.f32 %v737, %v750
        %v752 = vpop.f32.mrf.mxu0
        %v753 = vadd.f32 %v739, %v752
        %754 = vdwg.mxu0
        %755 = vmatpush.bf16.msra.mxu0 %v590
        %756 = vmatpush.bf16.msra.mxu0 %v588
        %757 = vmatpush.bf16.msra.mxu0 %v586
        %758 = vmatpush.bf16.msra.mxu0 %v584
        %759 = vmatpush.bf16.msra.mxu0 %v582
        %760 = vmatpush.bf16.msra.mxu0 %v580
        %761 = vmatpush.bf16.msra.mxu0 %v578
        %762 = vmatpush.bf16.msra.mxu0 %v576
        %763 = vmatmul.bf16.gmra.mxu0 %v345
        %v764 = vpop.f32.mrf.mxu0
        %v765 = vadd.f32 %v751, %v764
        %v766 = vpop.f32.mrf.mxu0
        %v767 = vadd.f32 %v753, %v766
        %768 = vdwg.mxu0
        %769 = vmatpush.bf16.msra.mxu0 %v606
        %770 = vmatpush.bf16.msra.mxu0 %v604
        %771 = vmatpush.bf16.msra.mxu0 %v602
        %772 = vmatpush.bf16.msra.mxu0 %v600
        %773 = vmatpush.bf16.msra.mxu0 %v598
        %774 = vmatpush.bf16.msra.mxu0 %v596
        %775 = vmatpush.bf16.msra.mxu0 %v594
        %776 = vmatpush.bf16.msra.mxu0 %v592
        %777 = vmatmul.bf16.gmra.mxu0 %v346
        %v778 = vpop.f32.mrf.mxu0
        %v779 = vadd.f32 %v765, %v778
        %v780 = vpop.f32.mrf.mxu0
        %v781 = vadd.f32 %v767, %v780
        %782 = vdwg.mxu0
        %v783 = vadd.f32 %v259, %v723
        %v784 = vadd.f32 %v260, %v779
        %v785 = vadd.f32 %v261, %v725
        %v786 = vadd.f32 %v262, %v781
        %787 = vst [vmem:[#allocation2] sm:$0xff] %v783
        %788 = vst [vmem:[#allocation2 + $0x8] sm:$0xff] %v784
        %789 = vst [vmem:[#allocation2 + $0x10] sm:$0xff] %v785
        %790 = vst [vmem:[#allocation2 + $0x18] sm:$0xff] %v786
        %p791 = scmp.eq.s32.totalorder %s20, 4
        // Predicated region
        $region56: #{_lambda_.48} parent=46 // pred_check
          %p792 = pneg %p791
        $region57: #{_lambda_.48} parent=46 // pred_check_branch
          %794 = sbr.rel (%p792) target = $region59
        $region58: #{_lambda_.48} parent=46 // pred_region
          %v795 = vld [vmem:[#allocation2] sm:$0xff]
          %v796 = vld [vmem:[#allocation2 + $0x8] sm:$0xff]
          %v797 = vld [vmem:[#allocation2 + $0x10] sm:$0xff]
          %v798 = vld [vmem:[#allocation2 + $0x18] sm:$0xff]
          %799 = vst [vmem:[%s248] sm:$0xff] %v795
          %800 = vst [vmem:[%s248 + $0x8] sm:$0xff] %v796
          %801 = vst [vmem:[%s248 + $0x10] sm:$0xff] %v797
          %802 = vst [vmem:[%s248 + $0x18] sm:$0xff] %v798
        $region59: #{_lambda_.48} parent=46 // pred_fallthru
          _
        %s803 = smul.u32 2, %s18
        %s804 = smul.u32 2, %s19
        %p805 = scmp.lt.s32.totalorder %s803, 1
        %s806 = scalar_select %p805, %s803, 1
        %p807 = scmp.lt.s32.totalorder %s804, 1
        %s808 = scalar_select %p807, %s804, 1
        %s809 = smul.addr %s806, 2
        %s810 = sadd.s32 %s808, %s809
        %s811 = smul.addr %s810, 8
        %s812 = scalar_lea.vmem %s2, %s811
        // Predicated region
        $region60: #{_lambda_.48} parent=46 // pred_check
          %p813 = pneg %p108
        $region61: #{_lambda_.48} parent=46 // pred_check_branch
          %815 = sbr.rel (%p813) target = $region63
        $region62: #{_lambda_.48} parent=46 // pred_region
          %s816 = smul.u32 2, %s18
          %s817 = smul.u32 2, %s19
        $region63: #{_lambda_.48} parent=46 // pred_fallthru
          _
        // Predicated region
        $region64: #{_lambda_.48} parent=46 // pred_check
          %p818 = pneg %p108
        $region65: #{_lambda_.48} parent=46 // pred_check_branch
          %820 = sbr.rel (%p818) target = $region67
        $region66: #{_lambda_.48} parent=46 // pred_region
          %s821 = smul.u32 2, %s18
          %s822 = smul.u32 2, %s19
          %p823 = scmp.lt.s32.totalorder %s821, 1
          %s824 = scalar_select %p823, %s821, 1
          %p825 = scmp.lt.s32.totalorder %s822, 1
          %s826 = scalar_select %p825, %s822, 1
          %s827 = smul.addr %s824, 2
          %s828 = sadd.s32 %s826, %s827
          %s829 = smul.addr %s828, 8
          %s830 = scalar_lea.vmem %s2, %s829
        $region67: #{_lambda_.48} parent=46 // pred_fallthru
          _
      $region47: #{_lambda_.48} parent=5 // pred_fallthru
        _
      %p831 = scmp.le.s32.totalorder 2, %s8
      // Predicated region
      $region68: #{_lambda_.48} parent=5 // pred_check
        %p832 = pneg %p831
      $region69: #{_lambda_.48} parent=5 // pred_check_branch
        %834 = sbr.rel (%p832) target = $region71
      $region70: #{_lambda_.48} parent=5 // pred_region
        %s835 = ssub.s32 %s8, 2
      $region71: #{_lambda_.48} parent=5 // pred_fallthru
        _
    $region6: #{_lambda_.48} parent=1 // loop_footer
      %s12 = sadd.s32 1, %s8
    $region7: #{_lambda_.48} parent=1 // loop_footer_branch
      %7 = sbr.rel target = $region3
    $region8: #{_lambda_.48} parent=1 // loop_exit
      _

</llo_original>
